<compile_context>
chip_gen: v7x
topology: tpu7x:2x2x1
jax: 0.10.0
libtpu: 0.0.40
codegen_flags: <defaults>
</compile_context>

<pallas_src>
import functools

import numpy as np
import jax
import jax.numpy as jnp
from jax.experimental import pallas as pl
from jax.experimental.pallas import tpu as pltpu


# ============================================================================
# In-kernel helpers
# ============================================================================
def _shift_rows(a, n_batch, hdim, dh):
    """Per-sample row shift with zero fill: z[(n, h), :] = a[(n, h+dh), :] (0 if OOB).

    Rows of `a` are grouped (n, h) with h in [0, hdim).  `dh` is a static int.
    Implemented with static row slices + concats only (robust Mosaic lowering).
    """
    if dh == 0:
        return a
    c = a.shape[1]
    zpad = jnp.zeros((abs(dh), c), a.dtype)
    parts = []
    for n in range(n_batch):
        blk = a[n * hdim:(n + 1) * hdim, :]
        if dh > 0:
            parts.append(jnp.concatenate([blk[dh:, :], zpad], axis=0))
        else:
            parts.append(jnp.concatenate([zpad, blk[:hdim + dh, :]], axis=0))
    return parts[0] if n_batch == 1 else jnp.concatenate(parts, axis=0)


# ============================================================================
# The fused forward kernel (whole network in one pallas_call)
# ============================================================================
def _alex_kernel(p1_ref, w1_ref, b1_ref,
                 w2_hbm, b2_ref, w3_hbm, b3_ref, w4_hbm, b4_ref, w5_hbm, b5_ref,
                 wf1_ref, bf1_ref, wf2_ref, bf2_ref, wf3_ref, bf3_ref,
                 o_ref,
                 w2_v, w3_v, w4_v, w5_v, sems, *, n_batch):
    f32 = jnp.float32

    # ---- kick off all big-weight DMAs; they overlap the stem / early layers ----
    cp2 = pltpu.make_async_copy(w2_hbm, w2_v, sems.at[0]); cp2.start()
    cp3 = pltpu.make_async_copy(w3_hbm, w3_v, sems.at[1]); cp3.start()
    cp4 = pltpu.make_async_copy(w4_hbm, w4_v, sems.at[2]); cp4.start()
    cp5 = pltpu.make_async_copy(w5_hbm, w5_v, sems.at[3]); cp5.start()

    def mm(a, w):  # bf16 x bf16 MXU matmul with f32 accumulation
        return jnp.dot(a.astype(jnp.bfloat16), w, preferred_element_type=f32)

    relu = lambda v: jnp.maximum(v, 0.0)

    # ---- stem: conv1(11x11,s4,p5) + bias + ReLU + 2x2 max-pool (ONE matmul) ----
    # p1 rows are (oh%2, n, oh//2); w1 columns are (ow%2, ow//2, oc).
    # relu(max_pool(conv)+b) == max_pool(relu(conv+b)) since bias is shared
    # across pooled positions and relu is monotone.
    yc = mm(p1_ref[...], w1_ref[...])                      # (2*N*4, 512) f32
    yw = jnp.maximum(yc[:, :256], yc[:, 256:])             # pool over ow (aligned cols)
    half = 4 * n_batch
    a1 = relu(jnp.maximum(yw[:half, :], yw[half:, :]) + b1_ref[...])
    # a1: (N*4, 256)  rows (n, h in 0..3), cols (w in 0..3, c in 0..63)

    # ---- conv2 (5x5, p2) as 5 h-shifted matmuls + fused pool + bias + ReLU ----
    cp2.wait()
    acc = None
    for ki in range(5):
        z = _shift_rows(a1, n_batch, 4, ki - 2)
        part = mm(z, w2_v[ki * 256:(ki + 1) * 256, :])     # (N*4, 768)
        acc = part if acc is None else acc + part
    yw2 = jnp.maximum(acc[:, :384], acc[:, 384:])          # pool over ow -> (N*4, 384)
    rows = []
    for n in range(n_batch):                               # pool over oh + fold h->cols
        r = yw2[n * 4:(n + 1) * 4, :]
        top = jnp.maximum(r[0:1, :], r[1:2, :])
        bot = jnp.maximum(r[2:3, :], r[3:4, :])
        rows.append(jnp.concatenate([top, bot], axis=1))   # (1, 768) cols (ph, pw, oc)
    a2f = rows[0] if n_batch == 1 else jnp.concatenate(rows, axis=0)
    a2 = relu(a2f + b2_ref[...])                           # (N, 768)

    # ---- conv3 / conv4 (3x3, p1 on 2x2 maps -> exact dense linear maps) ----
    cp3.wait()
    a3 = relu(mm(a2, w3_v[...]) + b3_ref[...])             # (N, 1536)
    cp4.wait()
    a4 = relu(mm(a3, w4_v[...]) + b4_ref[...])             # (N, 1024)

    # ---- conv5 + 2x2 max-pool (columns grouped by position -> aligned maxes) ----
    cp5.wait()
    y5 = mm(a4, w5_v[...])                                 # (N, 1024) cols (pos, oc)
    p5 = jnp.maximum(jnp.maximum(y5[:, :256], y5[:, 256:512]),
                     jnp.maximum(y5[:, 512:768], y5[:, 768:]))
    a5 = relu(p5 + b5_ref[...])                            # (N, 256)

    # ---- classifier (Dropout(p=0.05) is identity in eval-mode forward) ----
    h1 = relu(mm(a5, wf1_ref[...]) + bf1_ref[...])         # (N, 128)
    h2 = relu(mm(h1, wf2_ref[...]) + bf2_ref[...])         # (N, 128)
    o_ref[...] = mm(h2, wf3_ref[...]) + bf3_ref[...]       # logits in [:, :10]


# ============================================================================
# pallas_call wrapper / forward pass
# ============================================================================
def _full_spec(shape):
    shape = tuple(int(s) for s in shape)
    return pl.BlockSpec(shape, lambda: (0,) * len(shape))


_ANY_SPEC = pl.BlockSpec(memory_space=pl.ANY)


def _stem_lhs(x):
    """x: (N,1,32,32) f32 -> (2*N*4, 512) bf16 stem LHS.

    Row (oh%2, n, oh//2) holds the 11 padded image rows 4*oh .. 4*oh+10 (all 42
    columns) flattened as (ki, iw); columns 462..511 are zero padding.
    Minimal XLA glue: one pad, 8 static slices + stack, reshape, pad, cast.
    """
    N = x.shape[0]
    xp = jnp.pad(x[:, 0].astype(jnp.float32), ((0, 0), (5, 5), (5, 5)))  # (N,42,42)
    strips = jnp.stack([xp[:, 4 * o:4 * o + 11, :] for o in range(8)], axis=1)
    strips = strips.reshape(N, 4, 2, 11 * 42)          # (n, ph, oh%2, 462)
    strips = strips.transpose(2, 0, 1, 3).reshape(2 * N * 4, 11 * 42)
    return jnp.pad(strips, ((0, 0), (0, 512 - 11 * 42))).astype(jnp.bfloat16)


def alex_fmnist_forward(params, x):
    """Forward pass of alex_fmnist.  x: (N, 1, 32, 32) f32 -> (N, 10) logits."""
    N = x.shape[0]
    p1 = _stem_lhs(x)

    args = (p1, params["w1"], params["b1"],
            params["w2"], params["b2"],
            params["w3"], params["b3"],
            params["w4"], params["b4"],
            params["w5"], params["b5"],
            params["wf1"], params["bf1"],
            params["wf2"], params["bf2"],
            params["wf3"], params["bf3"])
    hbm_idx = {3, 5, 7, 9}  # w2, w3, w4, w5 stay in HBM, prefetched manually
    in_specs = [_ANY_SPEC if i in hbm_idx else _full_spec(a.shape)
                for i, a in enumerate(args)]

    out = pl.pallas_call(
        functools.partial(_alex_kernel, n_batch=N),
        out_shape=jax.ShapeDtypeStruct((N, 128), jnp.float32),
        in_specs=in_specs,
        out_specs=_full_spec((N, 128)),
        scratch_shapes=[
            pltpu.VMEM((5 * 256, 768), jnp.bfloat16),     # conv2 weight buffer
            pltpu.VMEM((768, 1536), jnp.bfloat16),        # conv3
            pltpu.VMEM((1536, 1024), jnp.bfloat16),       # conv4
            pltpu.VMEM((1024, 1024), jnp.bfloat16),       # conv5
            pltpu.SemaphoreType.DMA((4,)),
        ],
        compiler_params=pltpu.CompilerParams(vmem_limit_bytes=32 * 1024 * 1024),
    )(*args)
    return out[:N, :10]


# ============================================================================
# One-time (hoisted) weight preprocessing
# ============================================================================
def init_raw_params(key):
    """Torch-layout parameters (deterministic, synthetic)."""
    ks = jax.random.split(key, 16)

    def conv_w(k, oc, ic, kh, kw):
        return jax.random.normal(k, (oc, ic, kh, kw), jnp.float32) / np.sqrt(ic * kh * kw)

    def lin_w(k, o, i):
        return jax.random.normal(k, (o, i), jnp.float32) / np.sqrt(i)

    return {
        "c1_w": conv_w(ks[0], 64, 1, 11, 11),  "c1_b": 0.01 * jax.random.normal(ks[1], (64,)),
        "c2_w": conv_w(ks[2], 192, 64, 5, 5),  "c2_b": 0.01 * jax.random.normal(ks[3], (192,)),
        "c3_w": conv_w(ks[4], 384, 192, 3, 3), "c3_b": 0.01 * jax.random.normal(ks[5], (384,)),
        "c4_w": conv_w(ks[6], 256, 384, 3, 3), "c4_b": 0.01 * jax.random.normal(ks[7], (256,)),
        "c5_w": conv_w(ks[8], 256, 256, 3, 3), "c5_b": 0.01 * jax.random.normal(ks[9], (256,)),
        "f1_w": lin_w(ks[10], 128, 256),       "f1_b": 0.01 * jax.random.normal(ks[11], (128,)),
        "f2_w": lin_w(ks[12], 128, 128),       "f2_b": 0.01 * jax.random.normal(ks[13], (128,)),
        "f3_w": lin_w(ks[14], 10, 128),        "f3_b": 0.01 * jax.random.normal(ks[15], (10,)),
    }


def preprocess_params(raw):
    """Hoisted, one-time weight layout folding + bf16 casts (nothing runs per forward)."""
    r = {k: np.asarray(v, dtype=np.float32) for k, v in raw.items()}

    # ---- conv1 stem weight: rows (ki, iw) of the padded 11x42 strip, cols (ow%2, ow//2, oc)
    c1 = r["c1_w"]                                          # (64, 1, 11, 11)
    W1 = np.zeros((512, 512), np.float32)
    for ow in range(8):
        cb = (ow % 2) * 256 + (ow // 2) * 64
        for ki in range(11):
            rb = ki * 42 + 4 * ow
            W1[rb:rb + 11, cb:cb + 64] = c1[:, 0, ki, :].T  # (kj, oc)
    b1 = np.tile(r["c1_b"], 4)[None, :]                     # (1, 256) cols (pw, oc)

    # ---- conv2: 5 h-tap blocks of (w*ci -> (ow%2, ow//2, oc)); raw weight, no expansion
    c2 = r["c2_w"]                                          # (192, 64, 5, 5)
    W2 = np.zeros((5 * 256, 768), np.float32)
    for ki in range(5):
        for ow in range(4):
            cb = (ow % 2) * 384 + (ow // 2) * 192
            for iw in range(4):
                kj = iw - ow + 2
                if 0 <= kj < 5:
                    rb = ki * 256 + iw * 64
                    W2[rb:rb + 64, cb:cb + 192] = c2[:, :, ki, kj].T   # (ci, oc)
    b2 = np.tile(r["c2_b"], 4)[None, :]                     # (1, 768) cols (ph, pw, oc)

    # ---- conv3/4/5 on 2x2 maps: exact dense linear maps (no structural zeros)
    def expand3x3(w, cin, ocn):
        # in cols (ih, iw, ci); out cols (oh, ow, oc)
        M = np.zeros((4 * cin, 4 * ocn), np.float32)
        for oh in range(2):
            for ow in range(2):
                oc0 = (oh * 2 + ow) * ocn
                for ih in range(2):
                    for iw in range(2):
                        ki, kj = ih - oh + 1, iw - ow + 1
                        ri = (ih * 2 + iw) * cin
                        M[ri:ri + cin, oc0:oc0 + ocn] = w[:, :, ki, kj].T
        return M

    W3 = expand3x3(r["c3_w"], 192, 384)                     # (768, 1536)
    W4 = expand3x3(r["c4_w"], 384, 256)                     # (1536, 1024)
    W5 = expand3x3(r["c5_w"], 256, 256)                     # (1024, 1024), out cols (pos, oc)
    b3 = np.tile(r["c3_b"], 4)[None, :]
    b4 = np.tile(r["c4_b"], 4)[None, :]
    b5 = r["c5_b"][None, :]                                  # applied after the pool

    Wf1 = r["f1_w"].T                                        # (256, 128)
    Wf2 = r["f2_w"].T                                        # (128, 128)
    Wf3 = np.zeros((128, 128), np.float32); Wf3[:, :10] = r["f3_w"].T
    bf1 = r["f1_b"][None, :]
    bf2 = r["f2_b"][None, :]
    bf3 = np.zeros((1, 128), np.float32); bf3[0, :10] = r["f3_b"]

    bf16 = lambda a: jnp.asarray(a, dtype=jnp.bfloat16)
    f32 = lambda a: jnp.asarray(a, dtype=jnp.float32)
    return {
        "w1": bf16(W1), "b1": f32(b1),
        "w2": bf16(W2), "b2": f32(b2),
        "w3": bf16(W3), "b3": f32(b3),
        "w4": bf16(W4), "b4": f32(b4),
        "w5": bf16(W5), "b5": f32(b5),
        "wf1": bf16(Wf1), "bf1": f32(bf1),
        "wf2": bf16(Wf2), "bf2": f32(bf2),
        "wf3": bf16(Wf3), "bf3": f32(bf3),
    }


# ============================================================================
# Pure-JAX float32 reference (numerical sanity check only)
# ============================================================================
def reference_forward(raw, x):
    def conv(y, w, b, stride, pad):
        y = jax.lax.conv_general_dilated(
            y, w, window_strides=(stride, stride),
            padding=((pad, pad), (pad, pad)),
            dimension_numbers=("NCHW", "OIHW", "NCHW"))
        return y + b.reshape(1, -1, 1, 1)

    def pool(y):
        return jax.lax.reduce_window(y, -jnp.inf, jax.lax.max,
                                     (1, 1, 2, 2), (1, 1, 2, 2), "VALID")

    relu = jax.nn.relu
    y = pool(relu(conv(x, raw["c1_w"], raw["c1_b"], 4, 5)))
    y = pool(relu(conv(y, raw["c2_w"], raw["c2_b"], 1, 2)))
    y = relu(conv(y, raw["c3_w"], raw["c3_b"], 1, 1))
    y = relu(conv(y, raw["c4_w"], raw["c4_b"], 1, 1))
    y = pool(relu(conv(y, raw["c5_w"], raw["c5_b"], 1, 1)))
    y = y.reshape(y.shape[0], -1)
    y = relu(y @ raw["f1_w"].T + raw["f1_b"])
    y = relu(y @ raw["f2_w"].T + raw["f2_b"])
    return y @ raw["f3_w"].T + raw["f3_b"]


if __name__ == "__main__":
    key = jax.random.PRNGKey(0)
    k_params, k_x = jax.random.split(key)
    raw = init_raw_params(k_params)
    params = preprocess_params(raw)

    # FMNIST-style input resized to 32x32 so the flattened feature dim is 256,
    # matching nn.Linear(256, 128) in the classifier.
    x = jax.random.normal(k_x, (2, 1, 32, 32), jnp.float32)

    fwd = jax.jit(alex_fmnist_forward)
    logits = jax.block_until_ready(fwd(params, x))

    assert logits.shape == (2, 10), logits.shape
    assert bool(jnp.all(jnp.isfinite(logits)))

    # numerical check vs pure-JAX f32 reference (tolerance covers the
    # intentional bf16-operand / f32-accumulate matmul numerics).
    ref = reference_forward(raw, x)
    err = float(jnp.max(jnp.abs(logits - ref)))
    scale = max(1.0, float(jnp.max(jnp.abs(ref))))
    assert err <= 0.02 + 0.08 * scale, (err, scale)

    print("KERNEL_OK")
</pallas_src>

<mosaic_0001>
module attributes {stable_mosaic.version = 11 : i64} {
  func.func @_alex_kernel(%arg0: memref<16x512xbf16, #tpu.memory_space<vmem>>, %arg1: memref<512x512xbf16, #tpu.memory_space<vmem>>, %arg2: memref<1x256xf32, #tpu.memory_space<vmem>>, %arg3: memref<1280x768xbf16, #tpu.memory_space<any>>, %arg4: memref<1x768xf32, #tpu.memory_space<vmem>>, %arg5: memref<768x1536xbf16, #tpu.memory_space<any>>, %arg6: memref<1x1536xf32, #tpu.memory_space<vmem>>, %arg7: memref<1536x1024xbf16, #tpu.memory_space<any>>, %arg8: memref<1x1024xf32, #tpu.memory_space<vmem>>, %arg9: memref<1024x1024xbf16, #tpu.memory_space<any>>, %arg10: memref<1x256xf32, #tpu.memory_space<vmem>>, %arg11: memref<256x128xbf16, #tpu.memory_space<vmem>>, %arg12: memref<1x128xf32, #tpu.memory_space<vmem>>, %arg13: memref<128x128xbf16, #tpu.memory_space<vmem>>, %arg14: memref<1x128xf32, #tpu.memory_space<vmem>>, %arg15: memref<128x128xbf16, #tpu.memory_space<vmem>>, %arg16: memref<1x128xf32, #tpu.memory_space<vmem>>, %arg17: memref<2x128xf32, #tpu.memory_space<vmem>>, %arg18: memref<1280x768xbf16, #tpu.memory_space<vmem>>, %arg19: memref<768x1536xbf16, #tpu.memory_space<vmem>>, %arg20: memref<1536x1024xbf16, #tpu.memory_space<vmem>>, %arg21: memref<1024x1024xbf16, #tpu.memory_space<vmem>>, %arg22: memref<4x!tpu.dma_semaphore, #tpu.memory_space<semaphore_mem>>) attributes {dimension_semantics = [], scalar_prefetch = 0 : i64, scratch_operands = 5 : i64, tpu.core_type = #tpu.core_type<tc>} {
    %c0_i32 = arith.constant 0 : i32
    %0 = tpu.memref_slice %arg22[%c0_i32] : memref<4x!tpu.dma_semaphore, #tpu.memory_space<semaphore_mem>> -> memref<1x!tpu.dma_semaphore, #tpu.memory_space<semaphore_mem>>
    %1 = tpu.memref_squeeze %0 : memref<1x!tpu.dma_semaphore, #tpu.memory_space<semaphore_mem>> -> memref<!tpu.dma_semaphore, #tpu.memory_space<semaphore_mem>>
    tpu.enqueue_dma source(%arg3 : memref<1280x768xbf16, #tpu.memory_space<any>>) target(%arg18 : memref<1280x768xbf16, #tpu.memory_space<vmem>>) target_semaphore(%1 : memref<!tpu.dma_semaphore, #tpu.memory_space<semaphore_mem>>)
    %c1_i32 = arith.constant 1 : i32
    %2 = tpu.memref_slice %arg22[%c1_i32] : memref<4x!tpu.dma_semaphore, #tpu.memory_space<semaphore_mem>> -> memref<1x!tpu.dma_semaphore, #tpu.memory_space<semaphore_mem>>
    %3 = tpu.memref_squeeze %2 : memref<1x!tpu.dma_semaphore, #tpu.memory_space<semaphore_mem>> -> memref<!tpu.dma_semaphore, #tpu.memory_space<semaphore_mem>>
    tpu.enqueue_dma source(%arg5 : memref<768x1536xbf16, #tpu.memory_space<any>>) target(%arg19 : memref<768x1536xbf16, #tpu.memory_space<vmem>>) target_semaphore(%3 : memref<!tpu.dma_semaphore, #tpu.memory_space<semaphore_mem>>)
    %c2_i32 = arith.constant 2 : i32
    %4 = tpu.memref_slice %arg22[%c2_i32] : memref<4x!tpu.dma_semaphore, #tpu.memory_space<semaphore_mem>> -> memref<1x!tpu.dma_semaphore, #tpu.memory_space<semaphore_mem>>
    %5 = tpu.memref_squeeze %4 : memref<1x!tpu.dma_semaphore, #tpu.memory_space<semaphore_mem>> -> memref<!tpu.dma_semaphore, #tpu.memory_space<semaphore_mem>>
    tpu.enqueue_dma source(%arg7 : memref<1536x1024xbf16, #tpu.memory_space<any>>) target(%arg20 : memref<1536x1024xbf16, #tpu.memory_space<vmem>>) target_semaphore(%5 : memref<!tpu.dma_semaphore, #tpu.memory_space<semaphore_mem>>)
    %c3_i32 = arith.constant 3 : i32
    %6 = tpu.memref_slice %arg22[%c3_i32] : memref<4x!tpu.dma_semaphore, #tpu.memory_space<semaphore_mem>> -> memref<1x!tpu.dma_semaphore, #tpu.memory_space<semaphore_mem>>
    %7 = tpu.memref_squeeze %6 : memref<1x!tpu.dma_semaphore, #tpu.memory_space<semaphore_mem>> -> memref<!tpu.dma_semaphore, #tpu.memory_space<semaphore_mem>>
    tpu.enqueue_dma source(%arg9 : memref<1024x1024xbf16, #tpu.memory_space<any>>) target(%arg21 : memref<1024x1024xbf16, #tpu.memory_space<vmem>>) target_semaphore(%7 : memref<!tpu.dma_semaphore, #tpu.memory_space<semaphore_mem>>)
    %c0 = arith.constant 0 : index
    %c0_0 = arith.constant 0 : index
    %8 = vector.load %arg0[%c0, %c0_0] : memref<16x512xbf16, #tpu.memory_space<vmem>>, vector<16x512xbf16>
    %c0_1 = arith.constant 0 : index
    %c0_2 = arith.constant 0 : index
    %9 = vector.load %arg1[%c0_1, %c0_2] : memref<512x512xbf16, #tpu.memory_space<vmem>>, vector<512x512xbf16>
    %cst = arith.constant dense<0.000000e+00> : vector<16x512xf32>
    %10 = tpu.matmul %8, %9, %cst {dimension_numbers = #tpu.dot_dimension_numbers<[1], [0], [0], [1], [0, 0, 1, 1], [], []>} : vector<16x512xbf16>, vector<512x512xbf16>, vector<16x512xf32> -> vector<16x512xf32>
    %11 = vector.extract_strided_slice %10 {offsets = [0, 0], sizes = [16, 256], strides = [1, 1]} : vector<16x512xf32> to vector<16x256xf32>
    %12 = vector.extract_strided_slice %10 {offsets = [0, 256], sizes = [16, 256], strides = [1, 1]} : vector<16x512xf32> to vector<16x256xf32>
    %13 = arith.maximumf %11, %12 : vector<16x256xf32>
    %14 = vector.extract_strided_slice %13 {offsets = [0, 0], sizes = [8, 256], strides = [1, 1]} : vector<16x256xf32> to vector<8x256xf32>
    %15 = vector.extract_strided_slice %13 {offsets = [8, 0], sizes = [8, 256], strides = [1, 1]} : vector<16x256xf32> to vector<8x256xf32>
    %16 = arith.maximumf %14, %15 : vector<8x256xf32>
    %c0_3 = arith.constant 0 : index
    %c0_4 = arith.constant 0 : index
    %17 = vector.load %arg2[%c0_3, %c0_4] : memref<1x256xf32, #tpu.memory_space<vmem>>, vector<1x256xf32>
    %18 = vector.broadcast %17 : vector<1x256xf32> to vector<8x256xf32>
    %19 = arith.addf %16, %18 : vector<8x256xf32>
    %cst_5 = arith.constant 0.000000e+00 : f32
    %20 = vector.broadcast %cst_5 : f32 to vector<8x256xf32>
    %21 = arith.maximumf %19, %20 : vector<8x256xf32>
    %c0_i32_6 = arith.constant 0 : i32
    %22 = tpu.memref_slice %arg22[%c0_i32_6] : memref<4x!tpu.dma_semaphore, #tpu.memory_space<semaphore_mem>> -> memref<1x!tpu.dma_semaphore, #tpu.memory_space<semaphore_mem>>
    %23 = tpu.memref_squeeze %22 : memref<1x!tpu.dma_semaphore, #tpu.memory_space<semaphore_mem>> -> memref<!tpu.dma_semaphore, #tpu.memory_space<semaphore_mem>>
    tpu.wait_dma2 semaphore(%23 : memref<!tpu.dma_semaphore, #tpu.memory_space<semaphore_mem>>) src(%arg3 : memref<1280x768xbf16, #tpu.memory_space<any>>) dst(%arg18 : memref<1280x768xbf16, #tpu.memory_space<vmem>>)
    %cst_7 = arith.constant 0.000000e+00 : f32
    %24 = vector.broadcast %cst_7 : f32 to vector<2x256xf32>
    %25 = vector.extract_strided_slice %21 {offsets = [0, 0], sizes = [4, 256], strides = [1, 1]} : vector<8x256xf32> to vector<4x256xf32>
    %26 = vector.extract_strided_slice %25 {offsets = [0, 0], sizes = [2, 256], strides = [1, 1]} : vector<4x256xf32> to vector<2x256xf32>
    %27 = tpu.concatenate %24, %26 in 0 : vector<2x256xf32>, vector<2x256xf32> -> vector<4x256xf32>
    %28 = vector.extract_strided_slice %21 {offsets = [4, 0], sizes = [4, 256], strides = [1, 1]} : vector<8x256xf32> to vector<4x256xf32>
    %29 = vector.extract_strided_slice %28 {offsets = [0, 0], sizes = [2, 256], strides = [1, 1]} : vector<4x256xf32> to vector<2x256xf32>
    %30 = tpu.concatenate %24, %29 in 0 : vector<2x256xf32>, vector<2x256xf32> -> vector<4x256xf32>
    %31 = tpu.concatenate %27, %30 in 0 : vector<4x256xf32>, vector<4x256xf32> -> vector<8x256xf32>
    %c0_8 = arith.constant 0 : index
    %c0_9 = arith.constant 0 : index
    %32 = vector.load %arg18[%c0_8, %c0_9] : memref<1280x768xbf16, #tpu.memory_space<vmem>>, vector<256x768xbf16>
    %33 = arith.truncf %31 : vector<8x256xf32> to vector<8x256xbf16>
    %cst_10 = arith.constant dense<0.000000e+00> : vector<8x768xf32>
    %34 = tpu.matmul %33, %32, %cst_10 {dimension_numbers = #tpu.dot_dimension_numbers<[1], [0], [0], [1], [0, 0, 1, 1], [], []>} : vector<8x256xbf16>, vector<256x768xbf16>, vector<8x768xf32> -> vector<8x768xf32>
    %cst_11 = arith.constant 0.000000e+00 : f32
    %35 = vector.broadcast %cst_11 : f32 to vector<1x256xf32>
    %36 = vector.extract_strided_slice %21 {offsets = [0, 0], sizes = [4, 256], strides = [1, 1]} : vector<8x256xf32> to vector<4x256xf32>
    %37 = vector.extract_strided_slice %36 {offsets = [0, 0], sizes = [3, 256], strides = [1, 1]} : vector<4x256xf32> to vector<3x256xf32>
    %38 = tpu.concatenate %35, %37 in 0 : vector<1x256xf32>, vector<3x256xf32> -> vector<4x256xf32>
    %39 = vector.extract_strided_slice %21 {offsets = [4, 0], sizes = [4, 256], strides = [1, 1]} : vector<8x256xf32> to vector<4x256xf32>
    %40 = vector.extract_strided_slice %39 {offsets = [0, 0], sizes = [3, 256], strides = [1, 1]} : vector<4x256xf32> to vector<3x256xf32>
    %41 = tpu.concatenate %35, %40 in 0 : vector<1x256xf32>, vector<3x256xf32> -> vector<4x256xf32>
    %42 = tpu.concatenate %38, %41 in 0 : vector<4x256xf32>, vector<4x256xf32> -> vector<8x256xf32>
    %c256 = arith.constant 256 : index
    %c0_12 = arith.constant 0 : index
    %43 = vector.load %arg18[%c256, %c0_12] : memref<1280x768xbf16, #tpu.memory_space<vmem>>, vector<256x768xbf16>
    %44 = arith.truncf %42 : vector<8x256xf32> to vector<8x256xbf16>
    %cst_13 = arith.constant dense<0.000000e+00> : vector<8x768xf32>
    %45 = tpu.matmul %44, %43, %cst_13 {dimension_numbers = #tpu.dot_dimension_numbers<[1], [0], [0], [1], [0, 0, 1, 1], [], []>} : vector<8x256xbf16>, vector<256x768xbf16>, vector<8x768xf32> -> vector<8x768xf32>
    %46 = arith.addf %34, %45 : vector<8x768xf32>
    %c512 = arith.constant 512 : index
    %c0_14 = arith.constant 0 : index
    %47 = vector.load %arg18[%c512, %c0_14] : memref<1280x768xbf16, #tpu.memory_space<vmem>>, vector<256x768xbf16>
    %48 = arith.truncf %21 : vector<8x256xf32> to vector<8x256xbf16>
    %cst_15 = arith.constant dense<0.000000e+00> : vector<8x768xf32>
    %49 = tpu.matmul %48, %47, %cst_15 {dimension_numbers = #tpu.dot_dimension_numbers<[1], [0], [0], [1], [0, 0, 1, 1], [], []>} : vector<8x256xbf16>, vector<256x768xbf16>, vector<8x768xf32> -> vector<8x768xf32>
    %50 = arith.addf %46, %49 : vector<8x768xf32>
    %cst_16 = arith.constant 0.000000e+00 : f32
    %51 = vector.broadcast %cst_16 : f32 to vector<1x256xf32>
    %52 = vector.extract_strided_slice %21 {offsets = [0, 0], sizes = [4, 256], strides = [1, 1]} : vector<8x256xf32> to vector<4x256xf32>
    %53 = vector.extract_strided_slice %52 {offsets = [1, 0], sizes = [3, 256], strides = [1, 1]} : vector<4x256xf32> to vector<3x256xf32>
    %54 = tpu.concatenate %53, %51 in 0 : vector<3x256xf32>, vector<1x256xf32> -> vector<4x256xf32>
    %55 = vector.extract_strided_slice %21 {offsets = [4, 0], sizes = [4, 256], strides = [1, 1]} : vector<8x256xf32> to vector<4x256xf32>
    %56 = vector.extract_strided_slice %55 {offsets = [1, 0], sizes = [3, 256], strides = [1, 1]} : vector<4x256xf32> to vector<3x256xf32>
    %57 = tpu.concatenate %56, %51 in 0 : vector<3x256xf32>, vector<1x256xf32> -> vector<4x256xf32>
    %58 = tpu.concatenate %54, %57 in 0 : vector<4x256xf32>, vector<4x256xf32> -> vector<8x256xf32>
    %c768 = arith.constant 768 : index
    %c0_17 = arith.constant 0 : index
    %59 = vector.load %arg18[%c768, %c0_17] : memref<1280x768xbf16, #tpu.memory_space<vmem>>, vector<256x768xbf16>
    %60 = arith.truncf %58 : vector<8x256xf32> to vector<8x256xbf16>
    %cst_18 = arith.constant dense<0.000000e+00> : vector<8x768xf32>
    %61 = tpu.matmul %60, %59, %cst_18 {dimension_numbers = #tpu.dot_dimension_numbers<[1], [0], [0], [1], [0, 0, 1, 1], [], []>} : vector<8x256xbf16>, vector<256x768xbf16>, vector<8x768xf32> -> vector<8x768xf32>
    %62 = arith.addf %50, %61 : vector<8x768xf32>
    %cst_19 = arith.constant 0.000000e+00 : f32
    %63 = vector.broadcast %cst_19 : f32 to vector<2x256xf32>
    %64 = vector.extract_strided_slice %21 {offsets = [0, 0], sizes = [4, 256], strides = [1, 1]} : vector<8x256xf32> to vector<4x256xf32>
    %65 = vector.extract_strided_slice %64 {offsets = [2, 0], sizes = [2, 256], strides = [1, 1]} : vector<4x256xf32> to vector<2x256xf32>
    %66 = tpu.concatenate %65, %63 in 0 : vector<2x256xf32>, vector<2x256xf32> -> vector<4x256xf32>
    %67 = vector.extract_strided_slice %21 {offsets = [4, 0], sizes = [4, 256], strides = [1, 1]} : vector<8x256xf32> to vector<4x256xf32>
    %68 = vector.extract_strided_slice %67 {offsets = [2, 0], sizes = [2, 256], strides = [1, 1]} : vector<4x256xf32> to vector<2x256xf32>
    %69 = tpu.concatenate %68, %63 in 0 : vector<2x256xf32>, vector<2x256xf32> -> vector<4x256xf32>
    %70 = tpu.concatenate %66, %69 in 0 : vector<4x256xf32>, vector<4x256xf32> -> vector<8x256xf32>
    %c1024 = arith.constant 1024 : index
    %c0_20 = arith.constant 0 : index
    %71 = vector.load %arg18[%c1024, %c0_20] : memref<1280x768xbf16, #tpu.memory_space<vmem>>, vector<256x768xbf16>
    %72 = arith.truncf %70 : vector<8x256xf32> to vector<8x256xbf16>
    %cst_21 = arith.constant dense<0.000000e+00> : vector<8x768xf32>
    %73 = tpu.matmul %72, %71, %cst_21 {dimension_numbers = #tpu.dot_dimension_numbers<[1], [0], [0], [1], [0, 0, 1, 1], [], []>} : vector<8x256xbf16>, vector<256x768xbf16>, vector<8x768xf32> -> vector<8x768xf32>
    %74 = arith.addf %62, %73 : vector<8x768xf32>
    %75 = vector.extract_strided_slice %74 {offsets = [0, 0], sizes = [8, 384], strides = [1, 1]} : vector<8x768xf32> to vector<8x384xf32>
    %76 = vector.extract_strided_slice %74 {offsets = [0, 384], sizes = [8, 384], strides = [1, 1]} : vector<8x768xf32> to vector<8x384xf32>
    %77 = arith.maximumf %75, %76 : vector<8x384xf32>
    %78 = vector.extract_strided_slice %77 {offsets = [0, 0], sizes = [4, 384], strides = [1, 1]} : vector<8x384xf32> to vector<4x384xf32>
    %79 = vector.extract_strided_slice %78 {offsets = [0, 0], sizes = [1, 384], strides = [1, 1]} : vector<4x384xf32> to vector<1x384xf32>
    %80 = vector.extract_strided_slice %78 {offsets = [1, 0], sizes = [1, 384], strides = [1, 1]} : vector<4x384xf32> to vector<1x384xf32>
    %81 = arith.maximumf %79, %80 : vector<1x384xf32>
    %82 = vector.extract_strided_slice %78 {offsets = [2, 0], sizes = [1, 384], strides = [1, 1]} : vector<4x384xf32> to vector<1x384xf32>
    %83 = vector.extract_strided_slice %78 {offsets = [3, 0], sizes = [1, 384], strides = [1, 1]} : vector<4x384xf32> to vector<1x384xf32>
    %84 = arith.maximumf %82, %83 : vector<1x384xf32>
    %85 = tpu.concatenate %81, %84 in 1 : vector<1x384xf32>, vector<1x384xf32> -> vector<1x768xf32>
    %86 = vector.extract_strided_slice %77 {offsets = [4, 0], sizes = [4, 384], strides = [1, 1]} : vector<8x384xf32> to vector<4x384xf32>
    %87 = vector.extract_strided_slice %86 {offsets = [0, 0], sizes = [1, 384], strides = [1, 1]} : vector<4x384xf32> to vector<1x384xf32>
    %88 = vector.extract_strided_slice %86 {offsets = [1, 0], sizes = [1, 384], strides = [1, 1]} : vector<4x384xf32> to vector<1x384xf32>
    %89 = arith.maximumf %87, %88 : vector<1x384xf32>
    %90 = vector.extract_strided_slice %86 {offsets = [2, 0], sizes = [1, 384], strides = [1, 1]} : vector<4x384xf32> to vector<1x384xf32>
    %91 = vector.extract_strided_slice %86 {offsets = [3, 0], sizes = [1, 384], strides = [1, 1]} : vector<4x384xf32> to vector<1x384xf32>
    %92 = arith.maximumf %90, %91 : vector<1x384xf32>
    %93 = tpu.concatenate %89, %92 in 1 : vector<1x384xf32>, vector<1x384xf32> -> vector<1x768xf32>
    %94 = tpu.concatenate %85, %93 in 0 : vector<1x768xf32>, vector<1x768xf32> -> vector<2x768xf32>
    %c0_22 = arith.constant 0 : index
    %c0_23 = arith.constant 0 : index
    %95 = vector.load %arg4[%c0_22, %c0_23] : memref<1x768xf32, #tpu.memory_space<vmem>>, vector<1x768xf32>
    %96 = vector.broadcast %95 : vector<1x768xf32> to vector<2x768xf32>
    %97 = arith.addf %94, %96 : vector<2x768xf32>
    %cst_24 = arith.constant 0.000000e+00 : f32
    %98 = vector.broadcast %cst_24 : f32 to vector<2x768xf32>
    %99 = arith.maximumf %97, %98 : vector<2x768xf32>
    %c1_i32_25 = arith.constant 1 : i32
    %100 = tpu.memref_slice %arg22[%c1_i32_25] : memref<4x!tpu.dma_semaphore, #tpu.memory_space<semaphore_mem>> -> memref<1x!tpu.dma_semaphore, #tpu.memory_space<semaphore_mem>>
    %101 = tpu.memref_squeeze %100 : memref<1x!tpu.dma_semaphore, #tpu.memory_space<semaphore_mem>> -> memref<!tpu.dma_semaphore, #tpu.memory_space<semaphore_mem>>
    tpu.wait_dma2 semaphore(%101 : memref<!tpu.dma_semaphore, #tpu.memory_space<semaphore_mem>>) src(%arg5 : memref<768x1536xbf16, #tpu.memory_space<any>>) dst(%arg19 : memref<768x1536xbf16, #tpu.memory_space<vmem>>)
    %c0_26 = arith.constant 0 : index
    %c0_27 = arith.constant 0 : index
    %102 = vector.load %arg19[%c0_26, %c0_27] : memref<768x1536xbf16, #tpu.memory_space<vmem>>, vector<768x1536xbf16>
    %103 = arith.truncf %99 : vector<2x768xf32> to vector<2x768xbf16>
    %cst_28 = arith.constant dense<0.000000e+00> : vector<2x1536xf32>
    %104 = tpu.matmul %103, %102, %cst_28 {dimension_numbers = #tpu.dot_dimension_numbers<[1], [0], [0], [1], [0, 0, 1, 1], [], []>} : vector<2x768xbf16>, vector<768x1536xbf16>, vector<2x1536xf32> -> vector<2x1536xf32>
    %c0_29 = arith.constant 0 : index
    %c0_30 = arith.constant 0 : index
    %105 = vector.load %arg6[%c0_29, %c0_30] : memref<1x1536xf32, #tpu.memory_space<vmem>>, vector<1x1536xf32>
    %106 = vector.broadcast %105 : vector<1x1536xf32> to vector<2x1536xf32>
    %107 = arith.addf %104, %106 : vector<2x1536xf32>
    %cst_31 = arith.constant 0.000000e+00 : f32
    %108 = vector.broadcast %cst_31 : f32 to vector<2x1536xf32>
    %109 = arith.maximumf %107, %108 : vector<2x1536xf32>
    %c2_i32_32 = arith.constant 2 : i32
    %110 = tpu.memref_slice %arg22[%c2_i32_32] : memref<4x!tpu.dma_semaphore, #tpu.memory_space<semaphore_mem>> -> memref<1x!tpu.dma_semaphore, #tpu.memory_space<semaphore_mem>>
    %111 = tpu.memref_squeeze %110 : memref<1x!tpu.dma_semaphore, #tpu.memory_space<semaphore_mem>> -> memref<!tpu.dma_semaphore, #tpu.memory_space<semaphore_mem>>
    tpu.wait_dma2 semaphore(%111 : memref<!tpu.dma_semaphore, #tpu.memory_space<semaphore_mem>>) src(%arg7 : memref<1536x1024xbf16, #tpu.memory_space<any>>) dst(%arg20 : memref<1536x1024xbf16, #tpu.memory_space<vmem>>)
    %c0_33 = arith.constant 0 : index
    %c0_34 = arith.constant 0 : index
    %112 = vector.load %arg20[%c0_33, %c0_34] : memref<1536x1024xbf16, #tpu.memory_space<vmem>>, vector<1536x1024xbf16>
    %113 = arith.truncf %109 : vector<2x1536xf32> to vector<2x1536xbf16>
    %cst_35 = arith.constant dense<0.000000e+00> : vector<2x1024xf32>
    %114 = tpu.matmul %113, %112, %cst_35 {dimension_numbers = #tpu.dot_dimension_numbers<[1], [0], [0], [1], [0, 0, 1, 1], [], []>} : vector<2x1536xbf16>, vector<1536x1024xbf16>, vector<2x1024xf32> -> vector<2x1024xf32>
    %c0_36 = arith.constant 0 : index
    %c0_37 = arith.constant 0 : index
    %115 = vector.load %arg8[%c0_36, %c0_37] : memref<1x1024xf32, #tpu.memory_space<vmem>>, vector<1x1024xf32>
    %116 = vector.broadcast %115 : vector<1x1024xf32> to vector<2x1024xf32>
    %117 = arith.addf %114, %116 : vector<2x1024xf32>
    %cst_38 = arith.constant 0.000000e+00 : f32
    %118 = vector.broadcast %cst_38 : f32 to vector<2x1024xf32>
    %119 = arith.maximumf %117, %118 : vector<2x1024xf32>
    %c3_i32_39 = arith.constant 3 : i32
    %120 = tpu.memref_slice %arg22[%c3_i32_39] : memref<4x!tpu.dma_semaphore, #tpu.memory_space<semaphore_mem>> -> memref<1x!tpu.dma_semaphore, #tpu.memory_space<semaphore_mem>>
    %121 = tpu.memref_squeeze %120 : memref<1x!tpu.dma_semaphore, #tpu.memory_space<semaphore_mem>> -> memref<!tpu.dma_semaphore, #tpu.memory_space<semaphore_mem>>
    tpu.wait_dma2 semaphore(%121 : memref<!tpu.dma_semaphore, #tpu.memory_space<semaphore_mem>>) src(%arg9 : memref<1024x1024xbf16, #tpu.memory_space<any>>) dst(%arg21 : memref<1024x1024xbf16, #tpu.memory_space<vmem>>)
    %c0_40 = arith.constant 0 : index
    %c0_41 = arith.constant 0 : index
    %122 = vector.load %arg21[%c0_40, %c0_41] : memref<1024x1024xbf16, #tpu.memory_space<vmem>>, vector<1024x1024xbf16>
    %123 = arith.truncf %119 : vector<2x1024xf32> to vector<2x1024xbf16>
    %cst_42 = arith.constant dense<0.000000e+00> : vector<2x1024xf32>
    %124 = tpu.matmul %123, %122, %cst_42 {dimension_numbers = #tpu.dot_dimension_numbers<[1], [0], [0], [1], [0, 0, 1, 1], [], []>} : vector<2x1024xbf16>, vector<1024x1024xbf16>, vector<2x1024xf32> -> vector<2x1024xf32>
    %125 = vector.extract_strided_slice %124 {offsets = [0, 0], sizes = [2, 256], strides = [1, 1]} : vector<2x1024xf32> to vector<2x256xf32>
    %126 = vector.extract_strided_slice %124 {offsets = [0, 256], sizes = [2, 256], strides = [1, 1]} : vector<2x1024xf32> to vector<2x256xf32>
    %127 = arith.maximumf %125, %126 : vector<2x256xf32>
    %128 = vector.extract_strided_slice %124 {offsets = [0, 512], sizes = [2, 256], strides = [1, 1]} : vector<2x1024xf32> to vector<2x256xf32>
    %129 = vector.extract_strided_slice %124 {offsets = [0, 768], sizes = [2, 256], strides = [1, 1]} : vector<2x1024xf32> to vector<2x256xf32>
    %130 = arith.maximumf %128, %129 : vector<2x256xf32>
    %131 = arith.maximumf %127, %130 : vector<2x256xf32>
    %c0_43 = arith.constant 0 : index
    %c0_44 = arith.constant 0 : index
    %132 = vector.load %arg10[%c0_43, %c0_44] : memref<1x256xf32, #tpu.memory_space<vmem>>, vector<1x256xf32>
    %133 = vector.broadcast %132 : vector<1x256xf32> to vector<2x256xf32>
    %134 = arith.addf %131, %133 : vector<2x256xf32>
    %cst_45 = arith.constant 0.000000e+00 : f32
    %135 = vector.broadcast %cst_45 : f32 to vector<2x256xf32>
    %136 = arith.maximumf %134, %135 : vector<2x256xf32>
    %c0_46 = arith.constant 0 : index
    %c0_47 = arith.constant 0 : index
    %137 = vector.load %arg11[%c0_46, %c0_47] : memref<256x128xbf16, #tpu.memory_space<vmem>>, vector<256x128xbf16>
    %138 = arith.truncf %136 : vector<2x256xf32> to vector<2x256xbf16>
    %cst_48 = arith.constant dense<0.000000e+00> : vector<2x128xf32>
    %139 = tpu.matmul %138, %137, %cst_48 {dimension_numbers = #tpu.dot_dimension_numbers<[1], [0], [0], [1], [0, 0, 1, 1], [], []>} : vector<2x256xbf16>, vector<256x128xbf16>, vector<2x128xf32> -> vector<2x128xf32>
    %c0_49 = arith.constant 0 : index
    %c0_50 = arith.constant 0 : index
    %140 = vector.load %arg12[%c0_49, %c0_50] : memref<1x128xf32, #tpu.memory_space<vmem>>, vector<1x128xf32>
    %141 = vector.broadcast %140 : vector<1x128xf32> to vector<2x128xf32>
    %142 = arith.addf %139, %141 : vector<2x128xf32>
    %cst_51 = arith.constant 0.000000e+00 : f32
    %143 = vector.broadcast %cst_51 : f32 to vector<2x128xf32>
    %144 = arith.maximumf %142, %143 : vector<2x128xf32>
    %c0_52 = arith.constant 0 : index
    %c0_53 = arith.constant 0 : index
    %145 = vector.load %arg13[%c0_52, %c0_53] : memref<128x128xbf16, #tpu.memory_space<vmem>>, vector<128x128xbf16>
    %146 = arith.truncf %144 : vector<2x128xf32> to vector<2x128xbf16>
    %cst_54 = arith.constant dense<0.000000e+00> : vector<2x128xf32>
    %147 = tpu.matmul %146, %145, %cst_54 {dimension_numbers = #tpu.dot_dimension_numbers<[1], [0], [0], [1], [0, 0, 1, 1], [], []>} : vector<2x128xbf16>, vector<128x128xbf16>, vector<2x128xf32> -> vector<2x128xf32>
    %c0_55 = arith.constant 0 : index
    %c0_56 = arith.constant 0 : index
    %148 = vector.load %arg14[%c0_55, %c0_56] : memref<1x128xf32, #tpu.memory_space<vmem>>, vector<1x128xf32>
    %149 = vector.broadcast %148 : vector<1x128xf32> to vector<2x128xf32>
    %150 = arith.addf %147, %149 : vector<2x128xf32>
    %cst_57 = arith.constant 0.000000e+00 : f32
    %151 = vector.broadcast %cst_57 : f32 to vector<2x128xf32>
    %152 = arith.maximumf %150, %151 : vector<2x128xf32>
    %c0_58 = arith.constant 0 : index
    %c0_59 = arith.constant 0 : index
    %153 = vector.load %arg15[%c0_58, %c0_59] : memref<128x128xbf16, #tpu.memory_space<vmem>>, vector<128x128xbf16>
    %154 = arith.truncf %152 : vector<2x128xf32> to vector<2x128xbf16>
    %cst_60 = arith.constant dense<0.000000e+00> : vector<2x128xf32>
    %155 = tpu.matmul %154, %153, %cst_60 {dimension_numbers = #tpu.dot_dimension_numbers<[1], [0], [0], [1], [0, 0, 1, 1], [], []>} : vector<2x128xbf16>, vector<128x128xbf16>, vector<2x128xf32> -> vector<2x128xf32>
    %c0_61 = arith.constant 0 : index
    %c0_62 = arith.constant 0 : index
    %156 = vector.load %arg16[%c0_61, %c0_62] : memref<1x128xf32, #tpu.memory_space<vmem>>, vector<1x128xf32>
    %157 = vector.broadcast %156 : vector<1x128xf32> to vector<2x128xf32>
    %158 = arith.addf %155, %157 : vector<2x128xf32>
    %c0_63 = arith.constant 0 : index
    %c0_64 = arith.constant 0 : index
    %159 = vector.load %arg17[%c0_63, %c0_64] : memref<2x128xf32, #tpu.memory_space<vmem>>, vector<2x128xf32>
    tpu.vector_store %arg17[%c0_63, %c0_64], %158 {strides = array<i32>} : memref<2x128xf32, #tpu.memory_space<vmem>>, vector<2x128xf32>,
    return
  }
}

</mosaic_0001>

<llo_original>
// kernel: alex_fmnist_forward.1
$region0: #{alex_fmnist_forward.1}
  #allocation0 [shape = 'u32[]', space=smem, size = 0x4, offset = 0x4, fixed_abs, tag = 'smem constant byte address 0x4 - core index']
  #allocation1 [shape = 'u32[144,128]{1,0:T(1,128)}', space=vmem, size = 0x12000, scoped, tag = 'internal scratch']
  #allocation2 [shape = 'bf16[1280,768]{1,0:T(16,128)(2,1)}', space=vmem, size = 0x1e0000, scoped, tag = 'scratch operand']
  #allocation3 [shape = 'bf16[768,1536]{1,0:T(16,128)(2,1)}', space=vmem, size = 0x240000, scoped, tag = 'scratch operand']
  #allocation4 [shape = 'bf16[1536,1024]{1,0:T(16,128)(2,1)}', space=vmem, size = 0x300000, scoped, tag = 'scratch operand']
  #allocation5 [shape = 'bf16[1024,1024]{1,0:T(16,128)(2,1)}', space=vmem, size = 0x200000, scoped, tag = 'scratch operand']
  #allocation6 [shape = 's32[4]{0}', space=sflag, size = 0x10, scoped, tag = 'scratch operand']
  #allocation28 [shape = 's32[]', space=sflag, size = 0x4, offset = 0, fixed_abs, tag = 'sflag constant byte address 0x0 - dummy sync flag']
  #allocation30 [shape = 's32[]', space=sflag, size = 0x4, offset = 0, fixed_abs, tag = 'sflag constant byte address 0x0 - dummy sync flag']
  #allocation32 [shape = 's32[]', space=sflag, size = 0x4, offset = 0, fixed_abs, tag = 'sflag constant byte address 0x0 - dummy sync flag']
  #allocation34 [shape = 's32[]', space=sflag, size = 0x4, offset = 0, fixed_abs, tag = 'sflag constant byte address 0x0 - dummy sync flag']
  %s0 = inlined_call_operand.vmem [shape: bf16[16,512], index: 0, kind: input, shape index: {}]
  %s1 = inlined_call_operand.hbm [shape: bf16[512,512], index: 1, kind: input, shape index: {}]
  %s2 = inlined_call_operand.hbm [shape: f32[1,256], index: 2, kind: input, shape index: {}]
  %s3 = inlined_call_operand.hbm [shape: bf16[1280,768], index: 3, kind: input, shape index: {}]
  %s4 = inlined_call_operand.hbm [shape: f32[1,768], index: 4, kind: input, shape index: {}]
  %s5 = inlined_call_operand.hbm [shape: bf16[768,1536], index: 5, kind: input, shape index: {}]
  %s6 = inlined_call_operand.hbm [shape: f32[1,1536], index: 6, kind: input, shape index: {}]
  %s7 = inlined_call_operand.hbm [shape: bf16[1536,1024], index: 7, kind: input, shape index: {}]
  %s8 = inlined_call_operand.hbm [shape: f32[1,1024], index: 8, kind: input, shape index: {}]
  %s9 = inlined_call_operand.hbm [shape: bf16[1024,1024], index: 9, kind: input, shape index: {}]
  %s10 = inlined_call_operand.hbm [shape: f32[1,256], index: 10, kind: input, shape index: {}]
  %s11 = inlined_call_operand.hbm [shape: bf16[256,128], index: 11, kind: input, shape index: {}]
  %s12 = inlined_call_operand.hbm [shape: f32[1,128], index: 12, kind: input, shape index: {}]
  %s13 = inlined_call_operand.hbm [shape: bf16[128,128], index: 13, kind: input, shape index: {}]
  %s14 = inlined_call_operand.hbm [shape: f32[1,128], index: 14, kind: input, shape index: {}]
  %s15 = inlined_call_operand.hbm [shape: bf16[128,128], index: 15, kind: input, shape index: {}]
  %s16 = inlined_call_operand.hbm [shape: f32[1,128], index: 16, kind: input, shape index: {}]
  %s17 = inlined_call_operand.hbm [shape: f32[2,128], index: 17, kind: output, shape index: {}]
  %s18 = sld [smem:[#allocation0]]
  $region110: #{alex_fmnist_forward.1} parent=0
    _
  %s20 = ssub.s32 1, %s18
  %s21 = scalar_select 0, %s20, %s18
  $region1: #{alex_fmnist_forward.1} parent=0
    #allocation7 [shape = 'u8[524288]{0}', space=vmem, size = 0x80000, scoped, tag = 'input window, operand 1, single buffered']
    #allocation8 [shape = 's32[1]{0}', space=sflag, size = 0x4, scoped, tag = 'scoped memory for alex_fmnist_forward.1']
    #allocation9 [shape = 's32[1]{0}', space=sflag, size = 0x4, scoped, tag = 'scoped memory for alex_fmnist_forward.1']
    #allocation10 [shape = 'u8[1024]{0}', space=vmem, size = 0x400, scoped, tag = 'input window, operand 2, single buffered']
    #allocation11 [shape = 's32[1]{0}', space=sflag, size = 0x4, scoped, tag = 'scoped memory for alex_fmnist_forward.1']
    #allocation12 [shape = 'u8[3072]{0}', space=vmem, size = 0xc00, scoped, tag = 'input window, operand 4, single buffered']
    #allocation13 [shape = 'u8[6144]{0}', space=vmem, size = 0x1800, scoped, tag = 'input window, operand 6, single buffered']
    #allocation14 [shape = 's32[1]{0}', space=sflag, size = 0x4, scoped, tag = 'scoped memory for alex_fmnist_forward.1']
    #allocation15 [shape = 'u8[4096]{0}', space=vmem, size = 0x1000, scoped, tag = 'input window, operand 8, single buffered']
    #allocation16 [shape = 'u8[1024]{0}', space=vmem, size = 0x400, scoped, tag = 'input window, operand 10, single buffered']
    #allocation17 [shape = 's32[1]{0}', space=sflag, size = 0x4, scoped, tag = 'scoped memory for alex_fmnist_forward.1']
    #allocation18 [shape = 'u8[65536]{0}', space=vmem, size = 0x10000, scoped, tag = 'input window, operand 11, single buffered']
    #allocation19 [shape = 'u8[512]{0}', space=vmem, size = 0x400, scoped, tag = 'input window, operand 12, single buffered']
    #allocation20 [shape = 's32[1]{0}', space=sflag, size = 0x4, scoped, tag = 'scoped memory for alex_fmnist_forward.1']
    #allocation21 [shape = 'u8[32768]{0}', space=vmem, size = 0x8000, scoped, tag = 'input window, operand 13, single buffered']
    #allocation22 [shape = 'u8[512]{0}', space=vmem, size = 0x400, scoped, tag = 'input window, operand 14, single buffered']
    #allocation23 [shape = 's32[1]{0}', space=sflag, size = 0x4, scoped, tag = 'scoped memory for alex_fmnist_forward.1']
    #allocation24 [shape = 'u8[32768]{0}', space=vmem, size = 0x8000, scoped, tag = 'input window, operand 15, single buffered']
    #allocation25 [shape = 'u8[512]{0}', space=vmem, size = 0x400, scoped, tag = 'input window, operand 16, single buffered']
    #allocation26 [shape = 's32[1]{0}', space=sflag, size = 0x4, scoped, tag = 'scoped memory for alex_fmnist_forward.1']
    #allocation27 [shape = 'u8[1024]{0}', space=vmem, size = 0x400, scoped, tag = 'output window, operand 0, single buffered']
    #allocation29 [shape = 'u32[9]{0}', space=smem, size = 0x24, scoped, tag = 'DMA stride descriptor']
    #allocation31 [shape = 'u32[9]{0}', space=smem, size = 0x24, scoped, tag = 'DMA stride descriptor']
    #allocation33 [shape = 'u32[9]{0}', space=smem, size = 0x24, scoped, tag = 'DMA stride descriptor']
    #allocation35 [shape = 'u32[9]{0}', space=smem, size = 0x24, scoped, tag = 'DMA stride descriptor']
    %22 = vsyncpa [#allocation8], 0
    %23 = vsyncpa [#allocation11], 0
    %24 = vsyncpa [#allocation14], 0
    %25 = vsyncpa [#allocation17], 0
    %26 = vsyncpa [#allocation20], 0
    %27 = vsyncpa [#allocation23], 0
    %28 = vsyncpa [#allocation26], 0
    %29 = vsyncpa [#allocation9], 0
    // Predicated region
    $region2: #{alex_fmnist_forward.1} parent=1 // pred_check
      _
    $region3: #{alex_fmnist_forward.1} parent=1 // pred_check_branch
      %31 = sbr.rel (0) target = $region5
    $region4: #{alex_fmnist_forward.1} parent=1 // pred_region
      _
    $region5: #{alex_fmnist_forward.1} parent=1 // pred_fallthru
      _
    // Predicated region
    $region6: #{alex_fmnist_forward.1} parent=1 // pred_check
      _
    $region7: #{alex_fmnist_forward.1} parent=1 // pred_check_branch
      %33 = sbr.rel (0) target = $region9
    $region8: #{alex_fmnist_forward.1} parent=1 // pred_region
      %s35 = ssub.s32 16384, 16384
      %36 = vsyncadd [#allocation8], %s35
      %s37 = sshll.u32 [#allocation7], 4
      %s38 = int_to_ptr.vmem [resolvable:$true] %s37
      %43 = dma.hbm_to_vmem [thread:$0]  %s1, 16384, %s38, [#allocation8], 256, 256, 16
    $region9: #{alex_fmnist_forward.1} parent=1 // pred_fallthru
      _
    // Predicated region
    $region10: #{alex_fmnist_forward.1} parent=1 // pred_check
      _
    $region11: #{alex_fmnist_forward.1} parent=1 // pred_check_branch
      %45 = sbr.rel (0) target = $region13
    $region12: #{alex_fmnist_forward.1} parent=1 // pred_region
      %s47 = ssub.s32 32, 32
      %48 = vsyncadd [#allocation11], %s47
      %s50 = sshll.u32 [#allocation10], 4
      %s51 = int_to_ptr.vmem [resolvable:$true] %s50
      %53 = dma.hbm_to_vmem [thread:$0]  %s2, 32, %s51, [#allocation11]
    $region13: #{alex_fmnist_forward.1} parent=1 // pred_fallthru
      _
    // Predicated region
    $region14: #{alex_fmnist_forward.1} parent=1 // pred_check
      _
    $region15: #{alex_fmnist_forward.1} parent=1 // pred_check_branch
      %55 = sbr.rel (0) target = $region17
    $region16: #{alex_fmnist_forward.1} parent=1 // pred_region
      %s57 = ssub.s32 96, 96
      %58 = vsyncadd [#allocation11], %s57
      %s60 = sshll.u32 [#allocation12], 4
      %s61 = int_to_ptr.vmem [resolvable:$true] %s60
      %63 = dma.hbm_to_vmem [thread:$0]  %s4, 96, %s61, [#allocation11]
    $region17: #{alex_fmnist_forward.1} parent=1 // pred_fallthru
      _
    // Predicated region
    $region18: #{alex_fmnist_forward.1} parent=1 // pred_check
      _
    $region19: #{alex_fmnist_forward.1} parent=1 // pred_check_branch
      %65 = sbr.rel (0) target = $region21
    $region20: #{alex_fmnist_forward.1} parent=1 // pred_region
      %s67 = ssub.s32 192, 192
      %68 = vsyncadd [#allocation14], %s67
      %s70 = sshll.u32 [#allocation13], 4
      %s71 = int_to_ptr.vmem [resolvable:$true] %s70
      %73 = dma.hbm_to_vmem [thread:$0]  %s6, 192, %s71, [#allocation14]
    $region21: #{alex_fmnist_forward.1} parent=1 // pred_fallthru
      _
    // Predicated region
    $region22: #{alex_fmnist_forward.1} parent=1 // pred_check
      _
    $region23: #{alex_fmnist_forward.1} parent=1 // pred_check_branch
      %75 = sbr.rel (0) target = $region25
    $region24: #{alex_fmnist_forward.1} parent=1 // pred_region
      %s77 = ssub.s32 128, 128
      %78 = vsyncadd [#allocation14], %s77
      %s80 = sshll.u32 [#allocation15], 4
      %s81 = int_to_ptr.vmem [resolvable:$true] %s80
      %83 = dma.hbm_to_vmem [thread:$0]  %s8, 128, %s81, [#allocation14]
    $region25: #{alex_fmnist_forward.1} parent=1 // pred_fallthru
      _
    // Predicated region
    $region26: #{alex_fmnist_forward.1} parent=1 // pred_check
      _
    $region27: #{alex_fmnist_forward.1} parent=1 // pred_check_branch
      %85 = sbr.rel (0) target = $region29
    $region28: #{alex_fmnist_forward.1} parent=1 // pred_region
      %s87 = ssub.s32 32, 32
      %88 = vsyncadd [#allocation17], %s87
      %s90 = sshll.u32 [#allocation16], 4
      %s91 = int_to_ptr.vmem [resolvable:$true] %s90
      %93 = dma.hbm_to_vmem [thread:$0]  %s10, 32, %s91, [#allocation17]
    $region29: #{alex_fmnist_forward.1} parent=1 // pred_fallthru
      _
    // Predicated region
    $region30: #{alex_fmnist_forward.1} parent=1 // pred_check
      _
    $region31: #{alex_fmnist_forward.1} parent=1 // pred_check_branch
      %95 = sbr.rel (0) target = $region33
    $region32: #{alex_fmnist_forward.1} parent=1 // pred_region
      %s97 = ssub.s32 2048, 2048
      %98 = vsyncadd [#allocation17], %s97
      %s99 = sshll.u32 [#allocation18], 4
      %s100 = int_to_ptr.vmem [resolvable:$true] %s99
      %105 = dma.hbm_to_vmem [thread:$0]  %s11, 2048, %s100, [#allocation17], 64, 64, 4
    $region33: #{alex_fmnist_forward.1} parent=1 // pred_fallthru
      _
    // Predicated region
    $region34: #{alex_fmnist_forward.1} parent=1 // pred_check
      _
    $region35: #{alex_fmnist_forward.1} parent=1 // pred_check_branch
      %107 = sbr.rel (0) target = $region37
    $region36: #{alex_fmnist_forward.1} parent=1 // pred_region
      %s109 = ssub.s32 16, 16
      %110 = vsyncadd [#allocation20], %s109
      %s112 = sshll.u32 [#allocation19], 4
      %s113 = int_to_ptr.vmem [resolvable:$true] %s112
      %115 = dma.hbm_to_vmem [thread:$0]  %s12, 16, %s113, [#allocation20]
    $region37: #{alex_fmnist_forward.1} parent=1 // pred_fallthru
      _
    // Predicated region
    $region38: #{alex_fmnist_forward.1} parent=1 // pred_check
      _
    $region39: #{alex_fmnist_forward.1} parent=1 // pred_check_branch
      %117 = sbr.rel (0) target = $region41
    $region40: #{alex_fmnist_forward.1} parent=1 // pred_region
      %s119 = ssub.s32 1024, 1024
      %120 = vsyncadd [#allocation20], %s119
      %s121 = sshll.u32 [#allocation21], 4
      %s122 = int_to_ptr.vmem [resolvable:$true] %s121
      %127 = dma.hbm_to_vmem [thread:$0]  %s13, 1024, %s122, [#allocation20], 64, 64, 4
    $region41: #{alex_fmnist_forward.1} parent=1 // pred_fallthru
      _
    // Predicated region
    $region42: #{alex_fmnist_forward.1} parent=1 // pred_check
      _
    $region43: #{alex_fmnist_forward.1} parent=1 // pred_check_branch
      %129 = sbr.rel (0) target = $region45
    $region44: #{alex_fmnist_forward.1} parent=1 // pred_region
      %s131 = ssub.s32 16, 16
      %132 = vsyncadd [#allocation23], %s131
      %s134 = sshll.u32 [#allocation22], 4
      %s135 = int_to_ptr.vmem [resolvable:$true] %s134
      %137 = dma.hbm_to_vmem [thread:$0]  %s14, 16, %s135, [#allocation23]
    $region45: #{alex_fmnist_forward.1} parent=1 // pred_fallthru
      _
    // Predicated region
    $region46: #{alex_fmnist_forward.1} parent=1 // pred_check
      _
    $region47: #{alex_fmnist_forward.1} parent=1 // pred_check_branch
      %139 = sbr.rel (0) target = $region49
    $region48: #{alex_fmnist_forward.1} parent=1 // pred_region
      %s141 = ssub.s32 1024, 1024
      %142 = vsyncadd [#allocation23], %s141
      %s143 = sshll.u32 [#allocation24], 4
      %s144 = int_to_ptr.vmem [resolvable:$true] %s143
      %149 = dma.hbm_to_vmem [thread:$0]  %s15, 1024, %s144, [#allocation23], 64, 64, 4
    $region49: #{alex_fmnist_forward.1} parent=1 // pred_fallthru
      _
    // Predicated region
    $region50: #{alex_fmnist_forward.1} parent=1 // pred_check
      _
    $region51: #{alex_fmnist_forward.1} parent=1 // pred_check_branch
      %151 = sbr.rel (0) target = $region53
    $region52: #{alex_fmnist_forward.1} parent=1 // pred_region
      %s153 = ssub.s32 16, 16
      %154 = vsyncadd [#allocation26], %s153
      %s156 = sshll.u32 [#allocation25], 4
      %s157 = int_to_ptr.vmem [resolvable:$true] %s156
      %159 = dma.hbm_to_vmem [thread:$0]  %s16, 16, %s157, [#allocation26]
    $region53: #{alex_fmnist_forward.1} parent=1 // pred_fallthru
      _
    // Predicated region
    $region54: #{alex_fmnist_forward.1} parent=1 // pred_check
      _
    $region55: #{alex_fmnist_forward.1} parent=1 // pred_check_branch
      %161 = sbr.rel (0) target = $region57
    $region56: #{alex_fmnist_forward.1} parent=1 // pred_region
      %162 = dma.done [#allocation8], 16384
    $region57: #{alex_fmnist_forward.1} parent=1 // pred_fallthru
      _
    // Predicated region
    $region58: #{alex_fmnist_forward.1} parent=1 // pred_check
      _
    $region59: #{alex_fmnist_forward.1} parent=1 // pred_check_branch
      %164 = sbr.rel (0) target = $region61
    $region60: #{alex_fmnist_forward.1} parent=1 // pred_region
      %165 = dma.done [#allocation11], 32
    $region61: #{alex_fmnist_forward.1} parent=1 // pred_fallthru
      _
    // Predicated region
    $region62: #{alex_fmnist_forward.1} parent=1 // pred_check
      _
    $region63: #{alex_fmnist_forward.1} parent=1 // pred_check_branch
      %167 = sbr.rel (0) target = $region65
    $region64: #{alex_fmnist_forward.1} parent=1 // pred_region
      %168 = dma.done [#allocation11], 96
    $region65: #{alex_fmnist_forward.1} parent=1 // pred_fallthru
      _
    // Predicated region
    $region66: #{alex_fmnist_forward.1} parent=1 // pred_check
      _
    $region67: #{alex_fmnist_forward.1} parent=1 // pred_check_branch
      %170 = sbr.rel (0) target = $region69
    $region68: #{alex_fmnist_forward.1} parent=1 // pred_region
      %171 = dma.done [#allocation14], 192
    $region69: #{alex_fmnist_forward.1} parent=1 // pred_fallthru
      _
    // Predicated region
    $region70: #{alex_fmnist_forward.1} parent=1 // pred_check
      _
    $region71: #{alex_fmnist_forward.1} parent=1 // pred_check_branch
      %173 = sbr.rel (0) target = $region73
    $region72: #{alex_fmnist_forward.1} parent=1 // pred_region
      %174 = dma.done [#allocation14], 128
    $region73: #{alex_fmnist_forward.1} parent=1 // pred_fallthru
      _
    // Predicated region
    $region74: #{alex_fmnist_forward.1} parent=1 // pred_check
      _
    $region75: #{alex_fmnist_forward.1} parent=1 // pred_check_branch
      %176 = sbr.rel (0) target = $region77
    $region76: #{alex_fmnist_forward.1} parent=1 // pred_region
      %177 = dma.done [#allocation17], 32
    $region77: #{alex_fmnist_forward.1} parent=1 // pred_fallthru
      _
    // Predicated region
    $region78: #{alex_fmnist_forward.1} parent=1 // pred_check
      _
    $region79: #{alex_fmnist_forward.1} parent=1 // pred_check_branch
      %179 = sbr.rel (0) target = $region81
    $region80: #{alex_fmnist_forward.1} parent=1 // pred_region
      %180 = dma.done [#allocation17], 2048
    $region81: #{alex_fmnist_forward.1} parent=1 // pred_fallthru
      _
    // Predicated region
    $region82: #{alex_fmnist_forward.1} parent=1 // pred_check
      _
    $region83: #{alex_fmnist_forward.1} parent=1 // pred_check_branch
      %182 = sbr.rel (0) target = $region85
    $region84: #{alex_fmnist_forward.1} parent=1 // pred_region
      %183 = dma.done [#allocation20], 16
    $region85: #{alex_fmnist_forward.1} parent=1 // pred_fallthru
      _
    // Predicated region
    $region86: #{alex_fmnist_forward.1} parent=1 // pred_check
      _
    $region87: #{alex_fmnist_forward.1} parent=1 // pred_check_branch
      %185 = sbr.rel (0) target = $region89
    $region88: #{alex_fmnist_forward.1} parent=1 // pred_region
      %186 = dma.done [#allocation20], 1024
    $region89: #{alex_fmnist_forward.1} parent=1 // pred_fallthru
      _
    // Predicated region
    $region90: #{alex_fmnist_forward.1} parent=1 // pred_check
      _
    $region91: #{alex_fmnist_forward.1} parent=1 // pred_check_branch
      %188 = sbr.rel (0) target = $region93
    $region92: #{alex_fmnist_forward.1} parent=1 // pred_region
      %189 = dma.done [#allocation23], 16
    $region93: #{alex_fmnist_forward.1} parent=1 // pred_fallthru
      _
    // Predicated region
    $region94: #{alex_fmnist_forward.1} parent=1 // pred_check
      _
    $region95: #{alex_fmnist_forward.1} parent=1 // pred_check_branch
      %191 = sbr.rel (0) target = $region97
    $region96: #{alex_fmnist_forward.1} parent=1 // pred_region
      %192 = dma.done [#allocation23], 1024
    $region97: #{alex_fmnist_forward.1} parent=1 // pred_fallthru
      _
    // Predicated region
    $region98: #{alex_fmnist_forward.1} parent=1 // pred_check
      _
    $region99: #{alex_fmnist_forward.1} parent=1 // pred_check_branch
      %194 = sbr.rel (0) target = $region101
    $region100: #{alex_fmnist_forward.1} parent=1 // pred_region
      %195 = dma.done [#allocation26], 16
    $region101: #{alex_fmnist_forward.1} parent=1 // pred_fallthru
      _
    %s198 = sshll.u32 1, 14
    %s199 = sxor.u32 4294967295, %s198
    %s201 = sld [smem:[#allocation0]]
    %s202 = sadd.s32 2, %s201
    %s204 = sshll.u32 7, 26
    %s205 = sxor.u32 4294967295, %s204
    %s206 = sand.u32 0, %s205
    %s207 = sshll.u32 %s202, 26
    %s208 = sor.u32 %s206, %s207
    %s209 = sshll.u32 [#allocation2], 4
    %s210 = int_to_ptr.vmem [resolvable:$true] %s209
    %213 = sst [smem:[#allocation29]] 768
    %s214 = scalar_lea.smem [#allocation29], 1
    %215 = sst [smem:[%s214]] 768
    %s216 = scalar_lea.smem [#allocation29], 2
    %217 = sst [smem:[%s216]] 6
    %s218 = scalar_lea.smem [#allocation29], 3
    %219 = sst [smem:[%s218]] 64
    %s220 = scalar_lea.smem [#allocation29], 4
    %221 = sst [smem:[%s220]] 128
    %s222 = scalar_lea.smem [#allocation29], 5
    %223 = sst [smem:[%s222]] 2
    %s224 = scalar_lea.smem [#allocation29], 6
    %225 = sst [smem:[%s224]] 384
    %s226 = scalar_lea.smem [#allocation29], 7
    %227 = sst [smem:[%s226]] 64
    %s228 = scalar_lea.smem [#allocation29], 8
    %229 = sst [smem:[%s228]] 4
    %231 = dma.general %s3, 61440, %s210, [#allocation6], [#allocation28], [#allocation29], %s208, 0
    %s232 = scalar_lea.sflag [#allocation6], 1
    %s234 = sshll.u32 1, 14
    %s235 = sxor.u32 4294967295, %s234
    %s237 = sadd.s32 2, %s201
    %s239 = sshll.u32 7, 26
    %s240 = sxor.u32 4294967295, %s239
    %s241 = sand.u32 0, %s240
    %s242 = sshll.u32 %s237, 26
    %s243 = sor.u32 %s241, %s242
    %s244 = sshll.u32 [#allocation3], 4
    %s245 = int_to_ptr.vmem [resolvable:$true] %s244
    %248 = sst [smem:[#allocation31]] 1536
    %s249 = scalar_lea.smem [#allocation31], 1
    %250 = sst [smem:[%s249]] 1536
    %s251 = scalar_lea.smem [#allocation31], 2
    %252 = sst [smem:[%s251]] 12
    %s253 = scalar_lea.smem [#allocation31], 3
    %254 = sst [smem:[%s253]] 64
    %s255 = scalar_lea.smem [#allocation31], 4
    %256 = sst [smem:[%s255]] 128
    %s257 = scalar_lea.smem [#allocation31], 5
    %258 = sst [smem:[%s257]] 2
    %s259 = scalar_lea.smem [#allocation31], 6
    %260 = sst [smem:[%s259]] 768
    %s261 = scalar_lea.smem [#allocation31], 7
    %262 = sst [smem:[%s261]] 64
    %s263 = scalar_lea.smem [#allocation31], 8
    %264 = sst [smem:[%s263]] 4
    %266 = dma.general %s5, 73728, %s245, %s232, [#allocation30], [#allocation31], %s243, 0
    %s267 = scalar_lea.sflag [#allocation6], 2
    %s269 = sshll.u32 1, 14
    %s270 = sxor.u32 4294967295, %s269
    %s272 = sadd.s32 2, %s201
    %s274 = sshll.u32 7, 26
    %s275 = sxor.u32 4294967295, %s274
    %s276 = sand.u32 0, %s275
    %s277 = sshll.u32 %s272, 26
    %s278 = sor.u32 %s276, %s277
    %s279 = sshll.u32 [#allocation4], 4
    %s280 = int_to_ptr.vmem [resolvable:$true] %s279
    %283 = sst [smem:[#allocation33]] 1024
    %s284 = scalar_lea.smem [#allocation33], 1
    %285 = sst [smem:[%s284]] 1024
    %s286 = scalar_lea.smem [#allocation33], 2
    %287 = sst [smem:[%s286]] 8
    %s288 = scalar_lea.smem [#allocation33], 3
    %289 = sst [smem:[%s288]] 64
    %s290 = scalar_lea.smem [#allocation33], 4
    %291 = sst [smem:[%s290]] 128
    %s292 = scalar_lea.smem [#allocation33], 5
    %293 = sst [smem:[%s292]] 2
    %s294 = scalar_lea.smem [#allocation33], 6
    %295 = sst [smem:[%s294]] 512
    %s296 = scalar_lea.smem [#allocation33], 7
    %297 = sst [smem:[%s296]] 64
    %s298 = scalar_lea.smem [#allocation33], 8
    %299 = sst [smem:[%s298]] 4
    %301 = dma.general %s7, 98304, %s280, %s267, [#allocation32], [#allocation33], %s278, 0
    %s302 = scalar_lea.sflag [#allocation6], 3
    %s304 = sshll.u32 1, 14
    %s305 = sxor.u32 4294967295, %s304
    %s307 = sadd.s32 2, %s201
    %s309 = sshll.u32 7, 26
    %s310 = sxor.u32 4294967295, %s309
    %s311 = sand.u32 0, %s310
    %s312 = sshll.u32 %s307, 26
    %s313 = sor.u32 %s311, %s312
    %s314 = sshll.u32 [#allocation5], 4
    %s315 = int_to_ptr.vmem [resolvable:$true] %s314
    %318 = sst [smem:[#allocation35]] 1024
    %s319 = scalar_lea.smem [#allocation35], 1
    %320 = sst [smem:[%s319]] 1024
    %s321 = scalar_lea.smem [#allocation35], 2
    %322 = sst [smem:[%s321]] 8
    %s323 = scalar_lea.smem [#allocation35], 3
    %324 = sst [smem:[%s323]] 64
    %s325 = scalar_lea.smem [#allocation35], 4
    %326 = sst [smem:[%s325]] 128
    %s327 = scalar_lea.smem [#allocation35], 5
    %328 = sst [smem:[%s327]] 2
    %s329 = scalar_lea.smem [#allocation35], 6
    %330 = sst [smem:[%s329]] 512
    %s331 = scalar_lea.smem [#allocation35], 7
    %332 = sst [smem:[%s331]] 64
    %s333 = scalar_lea.smem [#allocation35], 8
    %334 = sst [smem:[%s333]] 4
    %336 = dma.general %s9, 65536, %s315, %s302, [#allocation34], [#allocation35], %s313, 0
    %v337 = vld [vmem:[%s0] sm:$0xff]
    %v338 = vld [vmem:[%s0 + $0x8] sm:$0xff]
    %v339 = vld [vmem:[%s0 + $0x10] sm:$0xff]
    %v340 = vld [vmem:[%s0 + $0x18] sm:$0xff]
    %v341 = vld [vmem:[#allocation7] sm:$0xff]
    %v342 = vld [vmem:[#allocation7 + $0x8] sm:$0xff]
    %v343 = vld [vmem:[#allocation7 + $0x10] sm:$0xff]
    %v344 = vld [vmem:[#allocation7 + $0x18] sm:$0xff]
    %v345 = vld [vmem:[#allocation7 + $0x20] sm:$0xff]
    %v346 = vld [vmem:[#allocation7 + $0x28] sm:$0xff]
    %v347 = vld [vmem:[#allocation7 + $0x30] sm:$0xff]
    %v348 = vld [vmem:[#allocation7 + $0x38] sm:$0xff]
    %v349 = vld [vmem:[#allocation7 + $0x40] sm:$0xff]
    %v350 = vld [vmem:[#allocation7 + $0x48] sm:$0xff]
    %v351 = vld [vmem:[#allocation7 + $0x50] sm:$0xff]
    %v352 = vld [vmem:[#allocation7 + $0x58] sm:$0xff]
    %v353 = vld [vmem:[#allocation7 + $0x60] sm:$0xff]
    %v354 = vld [vmem:[#allocation7 + $0x68] sm:$0xff]
    %v355 = vld [vmem:[#allocation7 + $0x70] sm:$0xff]
    %v356 = vld [vmem:[#allocation7 + $0x78] sm:$0xff]
    %v357 = vld [vmem:[#allocation7 + $0x80] sm:$0xff]
    %v358 = vld [vmem:[#allocation7 + $0x88] sm:$0xff]
    %v359 = vld [vmem:[#allocation7 + $0x90] sm:$0xff]
    %v360 = vld [vmem:[#allocation7 + $0x98] sm:$0xff]
    %v361 = vld [vmem:[#allocation7 + $0xa0] sm:$0xff]
    %v362 = vld [vmem:[#allocation7 + $0xa8] sm:$0xff]
    %v363 = vld [vmem:[#allocation7 + $0xb0] sm:$0xff]
    %v364 = vld [vmem:[#allocation7 + $0xb8] sm:$0xff]
    %v365 = vld [vmem:[#allocation7 + $0xc0] sm:$0xff]
    %v366 = vld [vmem:[#allocation7 + $0xc8] sm:$0xff]
    %v367 = vld [vmem:[#allocation7 + $0xd0] sm:$0xff]
    %v368 = vld [vmem:[#allocation7 + $0xd8] sm:$0xff]
    %v369 = vld [vmem:[#allocation7 + $0xe0] sm:$0xff]
    %v370 = vld [vmem:[#allocation7 + $0xe8] sm:$0xff]
    %v371 = vld [vmem:[#allocation7 + $0xf0] sm:$0xff]
    %v372 = vld [vmem:[#allocation7 + $0xf8] sm:$0xff]
    %v373 = vld [vmem:[#allocation7 + $0x100] sm:$0xff]
    %v374 = vld [vmem:[#allocation7 + $0x108] sm:$0xff]
    %v375 = vld [vmem:[#allocation7 + $0x110] sm:$0xff]
    %v376 = vld [vmem:[#allocation7 + $0x118] sm:$0xff]
    %v377 = vld [vmem:[#allocation7 + $0x120] sm:$0xff]
    %v378 = vld [vmem:[#allocation7 + $0x128] sm:$0xff]
    %v379 = vld [vmem:[#allocation7 + $0x130] sm:$0xff]
    %v380 = vld [vmem:[#allocation7 + $0x138] sm:$0xff]
    %v381 = vld [vmem:[#allocation7 + $0x140] sm:$0xff]
    %v382 = vld [vmem:[#allocation7 + $0x148] sm:$0xff]
    %v383 = vld [vmem:[#allocation7 + $0x150] sm:$0xff]
    %v384 = vld [vmem:[#allocation7 + $0x158] sm:$0xff]
    %v385 = vld [vmem:[#allocation7 + $0x160] sm:$0xff]
    %v386 = vld [vmem:[#allocation7 + $0x168] sm:$0xff]
    %v387 = vld [vmem:[#allocation7 + $0x170] sm:$0xff]
    %v388 = vld [vmem:[#allocation7 + $0x178] sm:$0xff]
    %v389 = vld [vmem:[#allocation7 + $0x180] sm:$0xff]
    %v390 = vld [vmem:[#allocation7 + $0x188] sm:$0xff]
    %v391 = vld [vmem:[#allocation7 + $0x190] sm:$0xff]
    %v392 = vld [vmem:[#allocation7 + $0x198] sm:$0xff]
    %v393 = vld [vmem:[#allocation7 + $0x1a0] sm:$0xff]
    %v394 = vld [vmem:[#allocation7 + $0x1a8] sm:$0xff]
    %v395 = vld [vmem:[#allocation7 + $0x1b0] sm:$0xff]
    %v396 = vld [vmem:[#allocation7 + $0x1b8] sm:$0xff]
    %v397 = vld [vmem:[#allocation7 + $0x1c0] sm:$0xff]
    %v398 = vld [vmem:[#allocation7 + $0x1c8] sm:$0xff]
    %v399 = vld [vmem:[#allocation7 + $0x1d0] sm:$0xff]
    %v400 = vld [vmem:[#allocation7 + $0x1d8] sm:$0xff]
    %v401 = vld [vmem:[#allocation7 + $0x1e0] sm:$0xff]
    %v402 = vld [vmem:[#allocation7 + $0x1e8] sm:$0xff]
    %v403 = vld [vmem:[#allocation7 + $0x1f0] sm:$0xff]
    %v404 = vld [vmem:[#allocation7 + $0x1f8] sm:$0xff]
    %v405 = vld [vmem:[#allocation7 + $0x200] sm:$0xff]
    %v406 = vld [vmem:[#allocation7 + $0x208] sm:$0xff]
    %v407 = vld [vmem:[#allocation7 + $0x210] sm:$0xff]
    %v408 = vld [vmem:[#allocation7 + $0x218] sm:$0xff]
    %v409 = vld [vmem:[#allocation7 + $0x220] sm:$0xff]
    %v410 = vld [vmem:[#allocation7 + $0x228] sm:$0xff]
    %v411 = vld [vmem:[#allocation7 + $0x230] sm:$0xff]
    %v412 = vld [vmem:[#allocation7 + $0x238] sm:$0xff]
    %v413 = vld [vmem:[#allocation7 + $0x240] sm:$0xff]
    %v414 = vld [vmem:[#allocation7 + $0x248] sm:$0xff]
    %v415 = vld [vmem:[#allocation7 + $0x250] sm:$0xff]
    %v416 = vld [vmem:[#allocation7 + $0x258] sm:$0xff]
    %v417 = vld [vmem:[#allocation7 + $0x260] sm:$0xff]
    %v418 = vld [vmem:[#allocation7 + $0x268] sm:$0xff]
    %v419 = vld [vmem:[#allocation7 + $0x270] sm:$0xff]
    %v420 = vld [vmem:[#allocation7 + $0x278] sm:$0xff]
    %v421 = vld [vmem:[#allocation7 + $0x280] sm:$0xff]
    %v422 = vld [vmem:[#allocation7 + $0x288] sm:$0xff]
    %v423 = vld [vmem:[#allocation7 + $0x290] sm:$0xff]
    %v424 = vld [vmem:[#allocation7 + $0x298] sm:$0xff]
    %v425 = vld [vmem:[#allocation7 + $0x2a0] sm:$0xff]
    %v426 = vld [vmem:[#allocation7 + $0x2a8] sm:$0xff]
    %v427 = vld [vmem:[#allocation7 + $0x2b0] sm:$0xff]
    %v428 = vld [vmem:[#allocation7 + $0x2b8] sm:$0xff]
    %v429 = vld [vmem:[#allocation7 + $0x2c0] sm:$0xff]
    %v430 = vld [vmem:[#allocation7 + $0x2c8] sm:$0xff]
    %v431 = vld [vmem:[#allocation7 + $0x2d0] sm:$0xff]
    %v432 = vld [vmem:[#allocation7 + $0x2d8] sm:$0xff]
    %v433 = vld [vmem:[#allocation7 + $0x2e0] sm:$0xff]
    %v434 = vld [vmem:[#allocation7 + $0x2e8] sm:$0xff]
    %v435 = vld [vmem:[#allocation7 + $0x2f0] sm:$0xff]
    %v436 = vld [vmem:[#allocation7 + $0x2f8] sm:$0xff]
    %v437 = vld [vmem:[#allocation7 + $0x300] sm:$0xff]
    %v438 = vld [vmem:[#allocation7 + $0x308] sm:$0xff]
    %v439 = vld [vmem:[#allocation7 + $0x310] sm:$0xff]
    %v440 = vld [vmem:[#allocation7 + $0x318] sm:$0xff]
    %v441 = vld [vmem:[#allocation7 + $0x320] sm:$0xff]
    %v442 = vld [vmem:[#allocation7 + $0x328] sm:$0xff]
    %v443 = vld [vmem:[#allocation7 + $0x330] sm:$0xff]
    %v444 = vld [vmem:[#allocation7 + $0x338] sm:$0xff]
    %v445 = vld [vmem:[#allocation7 + $0x340] sm:$0xff]
    %v446 = vld [vmem:[#allocation7 + $0x348] sm:$0xff]
    %v447 = vld [vmem:[#allocation7 + $0x350] sm:$0xff]
    %v448 = vld [vmem:[#allocation7 + $0x358] sm:$0xff]
    %v449 = vld [vmem:[#allocation7 + $0x360] sm:$0xff]
    %v450 = vld [vmem:[#allocation7 + $0x368] sm:$0xff]
    %v451 = vld [vmem:[#allocation7 + $0x370] sm:$0xff]
    %v452 = vld [vmem:[#allocation7 + $0x378] sm:$0xff]
    %v453 = vld [vmem:[#allocation7 + $0x380] sm:$0xff]
    %v454 = vld [vmem:[#allocation7 + $0x388] sm:$0xff]
    %v455 = vld [vmem:[#allocation7 + $0x390] sm:$0xff]
    %v456 = vld [vmem:[#allocation7 + $0x398] sm:$0xff]
    %v457 = vld [vmem:[#allocation7 + $0x3a0] sm:$0xff]
    %v458 = vld [vmem:[#allocation7 + $0x3a8] sm:$0xff]
    %v459 = vld [vmem:[#allocation7 + $0x3b0] sm:$0xff]
    %v460 = vld [vmem:[#allocation7 + $0x3b8] sm:$0xff]
    %v461 = vld [vmem:[#allocation7 + $0x3c0] sm:$0xff]
    %v462 = vld [vmem:[#allocation7 + $0x3c8] sm:$0xff]
    %v463 = vld [vmem:[#allocation7 + $0x3d0] sm:$0xff]
    %v464 = vld [vmem:[#allocation7 + $0x3d8] sm:$0xff]
    %v465 = vld [vmem:[#allocation7 + $0x3e0] sm:$0xff]
    %v466 = vld [vmem:[#allocation7 + $0x3e8] sm:$0xff]
    %v467 = vld [vmem:[#allocation7 + $0x3f0] sm:$0xff]
    %v468 = vld [vmem:[#allocation7 + $0x3f8] sm:$0xff]
    %v473 = vunpack.c.l.b16 %v337
    %v474 = vunpack.c.h.b16 %v337
    %v475 = vunpack.c.l.b16 %v338
    %v476 = vunpack.c.h.b16 %v338
    %v477 = vunpack.c.l.b16 %v339
    %v478 = vunpack.c.h.b16 %v339
    %v479 = vunpack.c.l.b16 %v340
    %v480 = vunpack.c.h.b16 %v340
    %v481 = vpack.c.b16 %v477, %v473
    %v482 = vpack.c.b16 %v478, %v474
    %v483 = vpack.c.b16 %v479, %v475
    %v484 = vpack.c.b16 %v480, %v476
    %v617 = vunpack.c.l.b16 %v341
    %v618 = vunpack.c.h.b16 %v341
    %v619 = vunpack.c.l.b16 %v342
    %v620 = vunpack.c.h.b16 %v342
    %v621 = vunpack.c.l.b16 %v343
    %v622 = vunpack.c.h.b16 %v343
    %v623 = vunpack.c.l.b16 %v344
    %v624 = vunpack.c.h.b16 %v344
    %v625 = vunpack.c.l.b16 %v345
    %v626 = vunpack.c.h.b16 %v345
    %v627 = vunpack.c.l.b16 %v346
    %v628 = vunpack.c.h.b16 %v346
    %v629 = vunpack.c.l.b16 %v347
    %v630 = vunpack.c.h.b16 %v347
    %v631 = vunpack.c.l.b16 %v348
    %v632 = vunpack.c.h.b16 %v348
    %v633 = vunpack.c.l.b16 %v349
    %v634 = vunpack.c.h.b16 %v349
    %v635 = vunpack.c.l.b16 %v350
    %v636 = vunpack.c.h.b16 %v350
    %v637 = vunpack.c.l.b16 %v351
    %v638 = vunpack.c.h.b16 %v351
    %v639 = vunpack.c.l.b16 %v352
    %v640 = vunpack.c.h.b16 %v352
    %v641 = vunpack.c.l.b16 %v353
    %v642 = vunpack.c.h.b16 %v353
    %v643 = vunpack.c.l.b16 %v354
    %v644 = vunpack.c.h.b16 %v354
    %v645 = vunpack.c.l.b16 %v355
    %v646 = vunpack.c.h.b16 %v355
    %v647 = vunpack.c.l.b16 %v356
    %v648 = vunpack.c.h.b16 %v356
    %v649 = vunpack.c.l.b16 %v357
    %v650 = vunpack.c.h.b16 %v357
    %v651 = vunpack.c.l.b16 %v358
    %v652 = vunpack.c.h.b16 %v358
    %v653 = vunpack.c.l.b16 %v359
    %v654 = vunpack.c.h.b16 %v359
    %v655 = vunpack.c.l.b16 %v360
    %v656 = vunpack.c.h.b16 %v360
    %v657 = vunpack.c.l.b16 %v361
    %v658 = vunpack.c.h.b16 %v361
    %v659 = vunpack.c.l.b16 %v362
    %v660 = vunpack.c.h.b16 %v362
    %v661 = vunpack.c.l.b16 %v363
    %v662 = vunpack.c.h.b16 %v363
    %v663 = vunpack.c.l.b16 %v364
    %v664 = vunpack.c.h.b16 %v364
    %v665 = vunpack.c.l.b16 %v365
    %v666 = vunpack.c.h.b16 %v365
    %v667 = vunpack.c.l.b16 %v366
    %v668 = vunpack.c.h.b16 %v366
    %v669 = vunpack.c.l.b16 %v367
    %v670 = vunpack.c.h.b16 %v367
    %v671 = vunpack.c.l.b16 %v368
    %v672 = vunpack.c.h.b16 %v368
    %v673 = vunpack.c.l.b16 %v369
    %v674 = vunpack.c.h.b16 %v369
    %v675 = vunpack.c.l.b16 %v370
    %v676 = vunpack.c.h.b16 %v370
    %v677 = vunpack.c.l.b16 %v371
    %v678 = vunpack.c.h.b16 %v371
    %v679 = vunpack.c.l.b16 %v372
    %v680 = vunpack.c.h.b16 %v372
    %v681 = vunpack.c.l.b16 %v373
    %v682 = vunpack.c.h.b16 %v373
    %v683 = vunpack.c.l.b16 %v374
    %v684 = vunpack.c.h.b16 %v374
    %v685 = vunpack.c.l.b16 %v375
    %v686 = vunpack.c.h.b16 %v375
    %v687 = vunpack.c.l.b16 %v376
    %v688 = vunpack.c.h.b16 %v376
    %v689 = vunpack.c.l.b16 %v377
    %v690 = vunpack.c.h.b16 %v377
    %v691 = vunpack.c.l.b16 %v378
    %v692 = vunpack.c.h.b16 %v378
    %v693 = vunpack.c.l.b16 %v379
    %v694 = vunpack.c.h.b16 %v379
    %v695 = vunpack.c.l.b16 %v380
    %v696 = vunpack.c.h.b16 %v380
    %v697 = vunpack.c.l.b16 %v381
    %v698 = vunpack.c.h.b16 %v381
    %v699 = vunpack.c.l.b16 %v382
    %v700 = vunpack.c.h.b16 %v382
    %v701 = vunpack.c.l.b16 %v383
    %v702 = vunpack.c.h.b16 %v383
    %v703 = vunpack.c.l.b16 %v384
    %v704 = vunpack.c.h.b16 %v384
    %v705 = vunpack.c.l.b16 %v385
    %v706 = vunpack.c.h.b16 %v385
    %v707 = vunpack.c.l.b16 %v386
    %v708 = vunpack.c.h.b16 %v386
    %v709 = vunpack.c.l.b16 %v387
    %v710 = vunpack.c.h.b16 %v387
    %v711 = vunpack.c.l.b16 %v388
    %v712 = vunpack.c.h.b16 %v388
    %v713 = vunpack.c.l.b16 %v389
    %v714 = vunpack.c.h.b16 %v389
    %v715 = vunpack.c.l.b16 %v390
    %v716 = vunpack.c.h.b16 %v390
    %v717 = vunpack.c.l.b16 %v391
    %v718 = vunpack.c.h.b16 %v391
    %v719 = vunpack.c.l.b16 %v392
    %v720 = vunpack.c.h.b16 %v392
    %v721 = vunpack.c.l.b16 %v393
    %v722 = vunpack.c.h.b16 %v393
    %v723 = vunpack.c.l.b16 %v394
    %v724 = vunpack.c.h.b16 %v394
    %v725 = vunpack.c.l.b16 %v395
    %v726 = vunpack.c.h.b16 %v395
    %v727 = vunpack.c.l.b16 %v396
    %v728 = vunpack.c.h.b16 %v396
    %v729 = vunpack.c.l.b16 %v397
    %v730 = vunpack.c.h.b16 %v397
    %v731 = vunpack.c.l.b16 %v398
    %v732 = vunpack.c.h.b16 %v398
    %v733 = vunpack.c.l.b16 %v399
    %v734 = vunpack.c.h.b16 %v399
    %v735 = vunpack.c.l.b16 %v400
    %v736 = vunpack.c.h.b16 %v400
    %v737 = vunpack.c.l.b16 %v401
    %v738 = vunpack.c.h.b16 %v401
    %v739 = vunpack.c.l.b16 %v402
    %v740 = vunpack.c.h.b16 %v402
    %v741 = vunpack.c.l.b16 %v403
    %v742 = vunpack.c.h.b16 %v403
    %v743 = vunpack.c.l.b16 %v404
    %v744 = vunpack.c.h.b16 %v404
    %v745 = vunpack.c.l.b16 %v405
    %v746 = vunpack.c.h.b16 %v405
    %v747 = vunpack.c.l.b16 %v406
    %v748 = vunpack.c.h.b16 %v406
    %v749 = vunpack.c.l.b16 %v407
    %v750 = vunpack.c.h.b16 %v407
    %v751 = vunpack.c.l.b16 %v408
    %v752 = vunpack.c.h.b16 %v408
    %v753 = vunpack.c.l.b16 %v409
    %v754 = vunpack.c.h.b16 %v409
    %v755 = vunpack.c.l.b16 %v410
    %v756 = vunpack.c.h.b16 %v410
    %v757 = vunpack.c.l.b16 %v411
    %v758 = vunpack.c.h.b16 %v411
    %v759 = vunpack.c.l.b16 %v412
    %v760 = vunpack.c.h.b16 %v412
    %v761 = vunpack.c.l.b16 %v413
    %v762 = vunpack.c.h.b16 %v413
    %v763 = vunpack.c.l.b16 %v414
    %v764 = vunpack.c.h.b16 %v414
    %v765 = vunpack.c.l.b16 %v415
    %v766 = vunpack.c.h.b16 %v415
    %v767 = vunpack.c.l.b16 %v416
    %v768 = vunpack.c.h.b16 %v416
    %v769 = vunpack.c.l.b16 %v417
    %v770 = vunpack.c.h.b16 %v417
    %v771 = vunpack.c.l.b16 %v418
    %v772 = vunpack.c.h.b16 %v418
    %v773 = vunpack.c.l.b16 %v419
    %v774 = vunpack.c.h.b16 %v419
    %v775 = vunpack.c.l.b16 %v420
    %v776 = vunpack.c.h.b16 %v420
    %v777 = vunpack.c.l.b16 %v421
    %v778 = vunpack.c.h.b16 %v421
    %v779 = vunpack.c.l.b16 %v422
    %v780 = vunpack.c.h.b16 %v422
    %v781 = vunpack.c.l.b16 %v423
    %v782 = vunpack.c.h.b16 %v423
    %v783 = vunpack.c.l.b16 %v424
    %v784 = vunpack.c.h.b16 %v424
    %v785 = vunpack.c.l.b16 %v425
    %v786 = vunpack.c.h.b16 %v425
    %v787 = vunpack.c.l.b16 %v426
    %v788 = vunpack.c.h.b16 %v426
    %v789 = vunpack.c.l.b16 %v427
    %v790 = vunpack.c.h.b16 %v427
    %v791 = vunpack.c.l.b16 %v428
    %v792 = vunpack.c.h.b16 %v428
    %v793 = vunpack.c.l.b16 %v429
    %v794 = vunpack.c.h.b16 %v429
    %v795 = vunpack.c.l.b16 %v430
    %v796 = vunpack.c.h.b16 %v430
    %v797 = vunpack.c.l.b16 %v431
    %v798 = vunpack.c.h.b16 %v431
    %v799 = vunpack.c.l.b16 %v432
    %v800 = vunpack.c.h.b16 %v432
    %v801 = vunpack.c.l.b16 %v433
    %v802 = vunpack.c.h.b16 %v433
    %v803 = vunpack.c.l.b16 %v434
    %v804 = vunpack.c.h.b16 %v434
    %v805 = vunpack.c.l.b16 %v435
    %v806 = vunpack.c.h.b16 %v435
    %v807 = vunpack.c.l.b16 %v436
    %v808 = vunpack.c.h.b16 %v436
    %v809 = vunpack.c.l.b16 %v437
    %v810 = vunpack.c.h.b16 %v437
    %v811 = vunpack.c.l.b16 %v438
    %v812 = vunpack.c.h.b16 %v438
    %v813 = vunpack.c.l.b16 %v439
    %v814 = vunpack.c.h.b16 %v439
    %v815 = vunpack.c.l.b16 %v440
    %v816 = vunpack.c.h.b16 %v440
    %v817 = vunpack.c.l.b16 %v441
    %v818 = vunpack.c.h.b16 %v441
    %v819 = vunpack.c.l.b16 %v442
    %v820 = vunpack.c.h.b16 %v442
    %v821 = vunpack.c.l.b16 %v443
    %v822 = vunpack.c.h.b16 %v443
    %v823 = vunpack.c.l.b16 %v444
    %v824 = vunpack.c.h.b16 %v444
    %v825 = vunpack.c.l.b16 %v445
    %v826 = vunpack.c.h.b16 %v445
    %v827 = vunpack.c.l.b16 %v446
    %v828 = vunpack.c.h.b16 %v446
    %v829 = vunpack.c.l.b16 %v447
    %v830 = vunpack.c.h.b16 %v447
    %v831 = vunpack.c.l.b16 %v448
    %v832 = vunpack.c.h.b16 %v448
    %v833 = vunpack.c.l.b16 %v449
    %v834 = vunpack.c.h.b16 %v449
    %v835 = vunpack.c.l.b16 %v450
    %v836 = vunpack.c.h.b16 %v450
    %v837 = vunpack.c.l.b16 %v451
    %v838 = vunpack.c.h.b16 %v451
    %v839 = vunpack.c.l.b16 %v452
    %v840 = vunpack.c.h.b16 %v452
    %v841 = vunpack.c.l.b16 %v453
    %v842 = vunpack.c.h.b16 %v453
    %v843 = vunpack.c.l.b16 %v454
    %v844 = vunpack.c.h.b16 %v454
    %v845 = vunpack.c.l.b16 %v455
    %v846 = vunpack.c.h.b16 %v455
    %v847 = vunpack.c.l.b16 %v456
    %v848 = vunpack.c.h.b16 %v456
    %v849 = vunpack.c.l.b16 %v457
    %v850 = vunpack.c.h.b16 %v457
    %v851 = vunpack.c.l.b16 %v458
    %v852 = vunpack.c.h.b16 %v458
    %v853 = vunpack.c.l.b16 %v459
    %v854 = vunpack.c.h.b16 %v459
    %v855 = vunpack.c.l.b16 %v460
    %v856 = vunpack.c.h.b16 %v460
    %v857 = vunpack.c.l.b16 %v461
    %v858 = vunpack.c.h.b16 %v461
    %v859 = vunpack.c.l.b16 %v462
    %v860 = vunpack.c.h.b16 %v462
    %v861 = vunpack.c.l.b16 %v463
    %v862 = vunpack.c.h.b16 %v463
    %v863 = vunpack.c.l.b16 %v464
    %v864 = vunpack.c.h.b16 %v464
    %v865 = vunpack.c.l.b16 %v465
    %v866 = vunpack.c.h.b16 %v465
    %v867 = vunpack.c.l.b16 %v466
    %v868 = vunpack.c.h.b16 %v466
    %v869 = vunpack.c.l.b16 %v467
    %v870 = vunpack.c.h.b16 %v467
    %v871 = vunpack.c.l.b16 %v468
    %v872 = vunpack.c.h.b16 %v468
    %v873 = vpack.c.b16 %v621, %v617
    %v874 = vpack.c.b16 %v622, %v618
    %v875 = vpack.c.b16 %v623, %v619
    %v876 = vpack.c.b16 %v624, %v620
    %v877 = vpack.c.b16 %v629, %v625
    %v878 = vpack.c.b16 %v630, %v626
    %v879 = vpack.c.b16 %v631, %v627
    %v880 = vpack.c.b16 %v632, %v628
    %v881 = vpack.c.b16 %v637, %v633
    %v882 = vpack.c.b16 %v638, %v634
    %v883 = vpack.c.b16 %v639, %v635
    %v884 = vpack.c.b16 %v640, %v636
    %v885 = vpack.c.b16 %v645, %v641
    %v886 = vpack.c.b16 %v646, %v642
    %v887 = vpack.c.b16 %v647, %v643
    %v888 = vpack.c.b16 %v648, %v644
    %v889 = vpack.c.b16 %v653, %v649
    %v890 = vpack.c.b16 %v654, %v650
    %v891 = vpack.c.b16 %v655, %v651
    %v892 = vpack.c.b16 %v656, %v652
    %v893 = vpack.c.b16 %v661, %v657
    %v894 = vpack.c.b16 %v662, %v658
    %v895 = vpack.c.b16 %v663, %v659
    %v896 = vpack.c.b16 %v664, %v660
    %v897 = vpack.c.b16 %v669, %v665
    %v898 = vpack.c.b16 %v670, %v666
    %v899 = vpack.c.b16 %v671, %v667
    %v900 = vpack.c.b16 %v672, %v668
    %v901 = vpack.c.b16 %v677, %v673
    %v902 = vpack.c.b16 %v678, %v674
    %v903 = vpack.c.b16 %v679, %v675
    %v904 = vpack.c.b16 %v680, %v676
    %v905 = vpack.c.b16 %v685, %v681
    %v906 = vpack.c.b16 %v686, %v682
    %v907 = vpack.c.b16 %v687, %v683
    %v908 = vpack.c.b16 %v688, %v684
    %v909 = vpack.c.b16 %v693, %v689
    %v910 = vpack.c.b16 %v694, %v690
    %v911 = vpack.c.b16 %v695, %v691
    %v912 = vpack.c.b16 %v696, %v692
    %v913 = vpack.c.b16 %v701, %v697
    %v914 = vpack.c.b16 %v702, %v698
    %v915 = vpack.c.b16 %v703, %v699
    %v916 = vpack.c.b16 %v704, %v700
    %v917 = vpack.c.b16 %v709, %v705
    %v918 = vpack.c.b16 %v710, %v706
    %v919 = vpack.c.b16 %v711, %v707
    %v920 = vpack.c.b16 %v712, %v708
    %v921 = vpack.c.b16 %v717, %v713
    %v922 = vpack.c.b16 %v718, %v714
    %v923 = vpack.c.b16 %v719, %v715
    %v924 = vpack.c.b16 %v720, %v716
    %v925 = vpack.c.b16 %v725, %v721
    %v926 = vpack.c.b16 %v726, %v722
    %v927 = vpack.c.b16 %v727, %v723
    %v928 = vpack.c.b16 %v728, %v724
    %v929 = vpack.c.b16 %v733, %v729
    %v930 = vpack.c.b16 %v734, %v730
    %v931 = vpack.c.b16 %v735, %v731
    %v932 = vpack.c.b16 %v736, %v732
    %v933 = vpack.c.b16 %v741, %v737
    %v934 = vpack.c.b16 %v742, %v738
    %v935 = vpack.c.b16 %v743, %v739
    %v936 = vpack.c.b16 %v744, %v740
    %v937 = vpack.c.b16 %v749, %v745
    %v938 = vpack.c.b16 %v750, %v746
    %v939 = vpack.c.b16 %v751, %v747
    %v940 = vpack.c.b16 %v752, %v748
    %v941 = vpack.c.b16 %v757, %v753
    %v942 = vpack.c.b16 %v758, %v754
    %v943 = vpack.c.b16 %v759, %v755
    %v944 = vpack.c.b16 %v760, %v756
    %v945 = vpack.c.b16 %v765, %v761
    %v946 = vpack.c.b16 %v766, %v762
    %v947 = vpack.c.b16 %v767, %v763
    %v948 = vpack.c.b16 %v768, %v764
    %v949 = vpack.c.b16 %v773, %v769
    %v950 = vpack.c.b16 %v774, %v770
    %v951 = vpack.c.b16 %v775, %v771
    %v952 = vpack.c.b16 %v776, %v772
    %v953 = vpack.c.b16 %v781, %v777
    %v954 = vpack.c.b16 %v782, %v778
    %v955 = vpack.c.b16 %v783, %v779
    %v956 = vpack.c.b16 %v784, %v780
    %v957 = vpack.c.b16 %v789, %v785
    %v958 = vpack.c.b16 %v790, %v786
    %v959 = vpack.c.b16 %v791, %v787
    %v960 = vpack.c.b16 %v792, %v788
    %v961 = vpack.c.b16 %v797, %v793
    %v962 = vpack.c.b16 %v798, %v794
    %v963 = vpack.c.b16 %v799, %v795
    %v964 = vpack.c.b16 %v800, %v796
    %v965 = vpack.c.b16 %v805, %v801
    %v966 = vpack.c.b16 %v806, %v802
    %v967 = vpack.c.b16 %v807, %v803
    %v968 = vpack.c.b16 %v808, %v804
    %v969 = vpack.c.b16 %v813, %v809
    %v970 = vpack.c.b16 %v814, %v810
    %v971 = vpack.c.b16 %v815, %v811
    %v972 = vpack.c.b16 %v816, %v812
    %v973 = vpack.c.b16 %v821, %v817
    %v974 = vpack.c.b16 %v822, %v818
    %v975 = vpack.c.b16 %v823, %v819
    %v976 = vpack.c.b16 %v824, %v820
    %v977 = vpack.c.b16 %v829, %v825
    %v978 = vpack.c.b16 %v830, %v826
    %v979 = vpack.c.b16 %v831, %v827
    %v980 = vpack.c.b16 %v832, %v828
    %v981 = vpack.c.b16 %v837, %v833
    %v982 = vpack.c.b16 %v838, %v834
    %v983 = vpack.c.b16 %v839, %v835
    %v984 = vpack.c.b16 %v840, %v836
    %v985 = vpack.c.b16 %v845, %v841
    %v986 = vpack.c.b16 %v846, %v842
    %v987 = vpack.c.b16 %v847, %v843
    %v988 = vpack.c.b16 %v848, %v844
    %v989 = vpack.c.b16 %v853, %v849
    %v990 = vpack.c.b16 %v854, %v850
    %v991 = vpack.c.b16 %v855, %v851
    %v992 = vpack.c.b16 %v856, %v852
    %v993 = vpack.c.b16 %v861, %v857
    %v994 = vpack.c.b16 %v862, %v858
    %v995 = vpack.c.b16 %v863, %v859
    %v996 = vpack.c.b16 %v864, %v860
    %v997 = vpack.c.b16 %v869, %v865
    %v998 = vpack.c.b16 %v870, %v866
    %v999 = vpack.c.b16 %v871, %v867
    %v1000 = vpack.c.b16 %v872, %v868
    %1129 = vmatprep.subr.bf16.mxu0 %v874
    %1130 = vmatpush1.bf16.msra.mxu0 %v873
    %1131 = vmatprep.subr.bf16.mxu0 %v878
    %1132 = vmatpush1.bf16.msra.mxu0 %v877
    %1133 = vmatprep.subr.bf16.mxu0 %v882
    %1134 = vmatpush1.bf16.msra.mxu0 %v881
    %1135 = vmatprep.subr.bf16.mxu0 %v886
    %1136 = vmatpush1.bf16.msra.mxu0 %v885
    %1137 = vmatprep.subr.bf16.mxu0 %v890
    %1138 = vmatpush1.bf16.msra.mxu0 %v889
    %1139 = vmatprep.subr.bf16.mxu0 %v894
    %1140 = vmatpush1.bf16.msra.mxu0 %v893
    %1141 = vmatprep.subr.bf16.mxu0 %v898
    %1142 = vmatpush1.bf16.msra.mxu0 %v897
    %1143 = vmatprep.subr.bf16.mxu0 %v902
    %1144 = vmatpush1.bf16.msra.mxu0 %v901
    %1145 = vmatprep.subr.bf16.mxu0 %v906
    %1146 = vmatpush1.bf16.msra.mxu0 %v905
    %1147 = vmatprep.subr.bf16.mxu0 %v910
    %1148 = vmatpush1.bf16.msra.mxu0 %v909
    %1149 = vmatprep.subr.bf16.mxu0 %v914
    %1150 = vmatpush1.bf16.msra.mxu0 %v913
    %1151 = vmatprep.subr.bf16.mxu0 %v918
    %1152 = vmatpush1.bf16.msra.mxu0 %v917
    %1153 = vmatprep.subr.bf16.mxu0 %v922
    %1154 = vmatpush1.bf16.msra.mxu0 %v921
    %1155 = vmatprep.subr.bf16.mxu0 %v926
    %1156 = vmatpush1.bf16.msra.mxu0 %v925
    %1157 = vmatprep.subr.bf16.mxu0 %v930
    %1158 = vmatpush1.bf16.msra.mxu0 %v929
    %1159 = vmatprep.subr.bf16.mxu0 %v934
    %1160 = vmatpush1.bf16.msra.mxu0 %v933
    %1161 = vmatprep.mubr.bf16.mxu0 %v482
    %1162 = vmatmul.mubr.bf16.gmra.mrb[0].mxu0 %v481
    %v1163 = vpop.f32.mrb[0].mxu0
    %v1164 = vadd.f32 0.0, %v1163
    %v1165 = vpop.f32.mrb[0].mxu0
    %v1166 = vadd.f32 0.0, %v1165
    %v1167 = vpop.f32.mrb[0].mxu0
    %v1168 = vadd.f32 0.0, %v1167
    %v1169 = vpop.f32.mrb[0].mxu0
    %v1170 = vadd.f32 0.0, %v1169
    %1171 = vdwg.mxu0
    %1172 = vmatprep.subr.bf16.mxu0 %v938
    %1173 = vmatpush1.bf16.msra.mxu0 %v937
    %1174 = vmatprep.subr.bf16.mxu0 %v942
    %1175 = vmatpush1.bf16.msra.mxu0 %v941
    %1176 = vmatprep.subr.bf16.mxu0 %v946
    %1177 = vmatpush1.bf16.msra.mxu0 %v945
    %1178 = vmatprep.subr.bf16.mxu0 %v950
    %1179 = vmatpush1.bf16.msra.mxu0 %v949
    %1180 = vmatprep.subr.bf16.mxu0 %v954
    %1181 = vmatpush1.bf16.msra.mxu0 %v953
    %1182 = vmatprep.subr.bf16.mxu0 %v958
    %1183 = vmatpush1.bf16.msra.mxu0 %v957
    %1184 = vmatprep.subr.bf16.mxu0 %v962
    %1185 = vmatpush1.bf16.msra.mxu0 %v961
    %1186 = vmatprep.subr.bf16.mxu0 %v966
    %1187 = vmatpush1.bf16.msra.mxu0 %v965
    %1188 = vmatprep.subr.bf16.mxu0 %v970
    %1189 = vmatpush1.bf16.msra.mxu0 %v969
    %1190 = vmatprep.subr.bf16.mxu0 %v974
    %1191 = vmatpush1.bf16.msra.mxu0 %v973
    %1192 = vmatprep.subr.bf16.mxu0 %v978
    %1193 = vmatpush1.bf16.msra.mxu0 %v977
    %1194 = vmatprep.subr.bf16.mxu0 %v982
    %1195 = vmatpush1.bf16.msra.mxu0 %v981
    %1196 = vmatprep.subr.bf16.mxu0 %v986
    %1197 = vmatpush1.bf16.msra.mxu0 %v985
    %1198 = vmatprep.subr.bf16.mxu0 %v990
    %1199 = vmatpush1.bf16.msra.mxu0 %v989
    %1200 = vmatprep.subr.bf16.mxu0 %v994
    %1201 = vmatpush1.bf16.msra.mxu0 %v993
    %1202 = vmatprep.subr.bf16.mxu0 %v998
    %1203 = vmatpush1.bf16.msra.mxu0 %v997
    %1204 = vmatprep.mubr.bf16.mxu0 %v484
    %1205 = vmatmul.mubr.bf16.gmra.mrb[0].mxu0 %v483
    %v1206 = vpop.f32.mrb[0].mxu0
    %v1207 = vadd.f32 %v1164, %v1206
    %v1208 = vpop.f32.mrb[0].mxu0
    %v1209 = vadd.f32 %v1166, %v1208
    %v1210 = vpop.f32.mrb[0].mxu0
    %v1211 = vadd.f32 %v1168, %v1210
    %v1212 = vpop.f32.mrb[0].mxu0
    %v1213 = vadd.f32 %v1170, %v1212
    %1214 = vdwg.mxu0
    %1215 = vmatprep.subr.bf16.mxu0 %v876
    %1216 = vmatpush1.bf16.msra.mxu0 %v875
    %1217 = vmatprep.subr.bf16.mxu0 %v880
    %1218 = vmatpush1.bf16.msra.mxu0 %v879
    %1219 = vmatprep.subr.bf16.mxu0 %v884
    %1220 = vmatpush1.bf16.msra.mxu0 %v883
    %1221 = vmatprep.subr.bf16.mxu0 %v888
    %1222 = vmatpush1.bf16.msra.mxu0 %v887
    %1223 = vmatprep.subr.bf16.mxu0 %v892
    %1224 = vmatpush1.bf16.msra.mxu0 %v891
    %1225 = vmatprep.subr.bf16.mxu0 %v896
    %1226 = vmatpush1.bf16.msra.mxu0 %v895
    %1227 = vmatprep.subr.bf16.mxu0 %v900
    %1228 = vmatpush1.bf16.msra.mxu0 %v899
    %1229 = vmatprep.subr.bf16.mxu0 %v904
    %1230 = vmatpush1.bf16.msra.mxu0 %v903
    %1231 = vmatprep.subr.bf16.mxu0 %v908
    %1232 = vmatpush1.bf16.msra.mxu0 %v907
    %1233 = vmatprep.subr.bf16.mxu0 %v912
    %1234 = vmatpush1.bf16.msra.mxu0 %v911
    %1235 = vmatprep.subr.bf16.mxu0 %v916
    %1236 = vmatpush1.bf16.msra.mxu0 %v915
    %1237 = vmatprep.subr.bf16.mxu0 %v920
    %1238 = vmatpush1.bf16.msra.mxu0 %v919
    %1239 = vmatprep.subr.bf16.mxu0 %v924
    %1240 = vmatpush1.bf16.msra.mxu0 %v923
    %1241 = vmatprep.subr.bf16.mxu0 %v928
    %1242 = vmatpush1.bf16.msra.mxu0 %v927
    %1243 = vmatprep.subr.bf16.mxu0 %v932
    %1244 = vmatpush1.bf16.msra.mxu0 %v931
    %1245 = vmatprep.subr.bf16.mxu0 %v936
    %1246 = vmatpush1.bf16.msra.mxu0 %v935
    %1247 = vmatprep.mubr.bf16.mxu0 %v482
    %1248 = vmatmul.mubr.bf16.gmra.mrb[0].mxu0 %v481
    %v1249 = vpop.f32.mrb[0].mxu0
    %v1250 = vadd.f32 0.0, %v1249
    %v1251 = vpop.f32.mrb[0].mxu0
    %v1252 = vadd.f32 0.0, %v1251
    %v1253 = vpop.f32.mrb[0].mxu0
    %v1254 = vadd.f32 0.0, %v1253
    %v1255 = vpop.f32.mrb[0].mxu0
    %v1256 = vadd.f32 0.0, %v1255
    %1257 = vdwg.mxu0
    %1258 = vmatprep.subr.bf16.mxu0 %v940
    %1259 = vmatpush1.bf16.msra.mxu0 %v939
    %1260 = vmatprep.subr.bf16.mxu0 %v944
    %1261 = vmatpush1.bf16.msra.mxu0 %v943
    %1262 = vmatprep.subr.bf16.mxu0 %v948
    %1263 = vmatpush1.bf16.msra.mxu0 %v947
    %1264 = vmatprep.subr.bf16.mxu0 %v952
    %1265 = vmatpush1.bf16.msra.mxu0 %v951
    %1266 = vmatprep.subr.bf16.mxu0 %v956
    %1267 = vmatpush1.bf16.msra.mxu0 %v955
    %1268 = vmatprep.subr.bf16.mxu0 %v960
    %1269 = vmatpush1.bf16.msra.mxu0 %v959
    %1270 = vmatprep.subr.bf16.mxu0 %v964
    %1271 = vmatpush1.bf16.msra.mxu0 %v963
    %1272 = vmatprep.subr.bf16.mxu0 %v968
    %1273 = vmatpush1.bf16.msra.mxu0 %v967
    %1274 = vmatprep.subr.bf16.mxu0 %v972
    %1275 = vmatpush1.bf16.msra.mxu0 %v971
    %1276 = vmatprep.subr.bf16.mxu0 %v976
    %1277 = vmatpush1.bf16.msra.mxu0 %v975
    %1278 = vmatprep.subr.bf16.mxu0 %v980
    %1279 = vmatpush1.bf16.msra.mxu0 %v979
    %1280 = vmatprep.subr.bf16.mxu0 %v984
    %1281 = vmatpush1.bf16.msra.mxu0 %v983
    %1282 = vmatprep.subr.bf16.mxu0 %v988
    %1283 = vmatpush1.bf16.msra.mxu0 %v987
    %1284 = vmatprep.subr.bf16.mxu0 %v992
    %1285 = vmatpush1.bf16.msra.mxu0 %v991
    %1286 = vmatprep.subr.bf16.mxu0 %v996
    %1287 = vmatpush1.bf16.msra.mxu0 %v995
    %1288 = vmatprep.subr.bf16.mxu0 %v1000
    %1289 = vmatpush1.bf16.msra.mxu0 %v999
    %1290 = vmatprep.mubr.bf16.mxu0 %v484
    %1291 = vmatmul.mubr.bf16.gmra.mrb[0].mxu0 %v483
    %v1292 = vpop.f32.mrb[0].mxu0
    %v1293 = vadd.f32 %v1250, %v1292
    %v1294 = vpop.f32.mrb[0].mxu0
    %v1295 = vadd.f32 %v1252, %v1294
    %v1296 = vpop.f32.mrb[0].mxu0
    %v1297 = vadd.f32 %v1254, %v1296
    %v1298 = vpop.f32.mrb[0].mxu0
    %v1299 = vadd.f32 %v1256, %v1298
    %1300 = vdwg.mxu0
    %v1301 = vmax.f32 %v1207, %v1293
    %v1302 = vmax.f32 %v1209, %v1295
    %v1303 = vmax.f32 %v1211, %v1297
    %v1304 = vmax.f32 %v1213, %v1299
    %v1305 = vmax.f32 %v1301, %v1303
    %v1306 = vmax.f32 %v1302, %v1304
    %v1307 = vld [vmem:[#allocation10] sm:$0x3]
    %v1309 = vlaneseq
    %v1310 = vshrl.u32 %v1309, 7
    %v1311 = vsub.s32 0, %v1310
    %v1312 = vrot.slane %v1307, %v1311
    %v1313 = vlaneseq
    %v1314 = vshrl.u32 %v1313, 7
    %v1315 = vsub.s32 1, %v1314
    %v1316 = vrot.slane %v1307, %v1315
    %v1319 = vadd.f32 %v1305, %v1312
    %v1320 = vadd.f32 %v1306, %v1316
    %v1321 = vmax.f32 %v1319, 0.0
    %v1322 = vmax.f32 %v1320, 0.0
    %s1323 = smul.u32 4, 160
    %s1324 = smul.u32 %s1323, 6
    %s1325 = sshll.u32 %s1324, 4
    %1326 = dma.done [#allocation6], %s1325
    %v1329 = vrot.slane %v1321, 6
    %v1330 = vrot.slane %v1322, 6
    %vm1333 = vcmask 1041408
    %v1334 = vsel %vm1333, 0.0, %v1329
    %v1335 = vsel %vm1333, 0.0, %v1330
    %v1336 = vrot.slane %v1321, 2
    %v1337 = vrot.slane %v1322, 2
    %v1340 = vsel %vm1333, 0.0, %v1336
    %v1341 = vsel %vm1333, 0.0, %v1337
    %v1344 = vrot.slane %v1340, 4
    %v1345 = vrot.slane %v1341, 4
    %vm1348 = vcmask 1043456
    %v1349 = vsel %vm1348, %v1334, %v1344
    %v1350 = vsel %vm1348, %v1335, %v1345
    %v1351 = vld [vmem:[#allocation2] sm:$0xff]
    %v1352 = vld [vmem:[#allocation2 + $0x8] sm:$0xff]
    %v1353 = vld [vmem:[#allocation2 + $0x10] sm:$0xff]
    %v1354 = vld [vmem:[#allocation2 + $0x18] sm:$0xff]
    %v1355 = vld [vmem:[#allocation2 + $0x20] sm:$0xff]
    %v1356 = vld [vmem:[#allocation2 + $0x28] sm:$0xff]
    %v1357 = vld [vmem:[#allocation2 + $0x30] sm:$0xff]
    %v1358 = vld [vmem:[#allocation2 + $0x38] sm:$0xff]
    %v1359 = vld [vmem:[#allocation2 + $0x40] sm:$0xff]
    %v1360 = vld [vmem:[#allocation2 + $0x48] sm:$0xff]
    %v1361 = vld [vmem:[#allocation2 + $0x50] sm:$0xff]
    %v1362 = vld [vmem:[#allocation2 + $0x58] sm:$0xff]
    %v1363 = vld [vmem:[#allocation2 + $0x60] sm:$0xff]
    %v1364 = vld [vmem:[#allocation2 + $0x68] sm:$0xff]
    %v1365 = vld [vmem:[#allocation2 + $0x70] sm:$0xff]
    %v1366 = vld [vmem:[#allocation2 + $0x78] sm:$0xff]
    %v1367 = vld [vmem:[#allocation2 + $0x80] sm:$0xff]
    %v1368 = vld [vmem:[#allocation2 + $0x88] sm:$0xff]
    %v1369 = vld [vmem:[#allocation2 + $0x90] sm:$0xff]
    %v1370 = vld [vmem:[#allocation2 + $0x98] sm:$0xff]
    %v1371 = vld [vmem:[#allocation2 + $0xa0] sm:$0xff]
    %v1372 = vld [vmem:[#allocation2 + $0xa8] sm:$0xff]
    %v1373 = vld [vmem:[#allocation2 + $0xb0] sm:$0xff]
    %v1374 = vld [vmem:[#allocation2 + $0xb8] sm:$0xff]
    %v1375 = vld [vmem:[#allocation2 + $0xc0] sm:$0xff]
    %v1376 = vld [vmem:[#allocation2 + $0xc8] sm:$0xff]
    %v1377 = vld [vmem:[#allocation2 + $0xd0] sm:$0xff]
    %v1378 = vld [vmem:[#allocation2 + $0xd8] sm:$0xff]
    %v1379 = vld [vmem:[#allocation2 + $0xe0] sm:$0xff]
    %v1380 = vld [vmem:[#allocation2 + $0xe8] sm:$0xff]
    %v1381 = vld [vmem:[#allocation2 + $0xf0] sm:$0xff]
    %v1382 = vld [vmem:[#allocation2 + $0xf8] sm:$0xff]
    %v1383 = vld [vmem:[#allocation2 + $0x100] sm:$0xff]
    %v1384 = vld [vmem:[#allocation2 + $0x108] sm:$0xff]
    %v1385 = vld [vmem:[#allocation2 + $0x110] sm:$0xff]
    %v1386 = vld [vmem:[#allocation2 + $0x118] sm:$0xff]
    %v1387 = vld [vmem:[#allocation2 + $0x120] sm:$0xff]
    %v1388 = vld [vmem:[#allocation2 + $0x128] sm:$0xff]
    %v1389 = vld [vmem:[#allocation2 + $0x130] sm:$0xff]
    %v1390 = vld [vmem:[#allocation2 + $0x138] sm:$0xff]
    %v1391 = vld [vmem:[#allocation2 + $0x140] sm:$0xff]
    %v1392 = vld [vmem:[#allocation2 + $0x148] sm:$0xff]
    %v1393 = vld [vmem:[#allocation2 + $0x150] sm:$0xff]
    %v1394 = vld [vmem:[#allocation2 + $0x158] sm:$0xff]
    %v1395 = vld [vmem:[#allocation2 + $0x160] sm:$0xff]
    %v1396 = vld [vmem:[#allocation2 + $0x168] sm:$0xff]
    %v1397 = vld [vmem:[#allocation2 + $0x170] sm:$0xff]
    %v1398 = vld [vmem:[#allocation2 + $0x178] sm:$0xff]
    %v1399 = vld [vmem:[#allocation2 + $0x180] sm:$0xff]
    %v1400 = vld [vmem:[#allocation2 + $0x188] sm:$0xff]
    %v1401 = vld [vmem:[#allocation2 + $0x190] sm:$0xff]
    %v1402 = vld [vmem:[#allocation2 + $0x198] sm:$0xff]
    %v1403 = vld [vmem:[#allocation2 + $0x1a0] sm:$0xff]
    %v1404 = vld [vmem:[#allocation2 + $0x1a8] sm:$0xff]
    %v1405 = vld [vmem:[#allocation2 + $0x1b0] sm:$0xff]
    %v1406 = vld [vmem:[#allocation2 + $0x1b8] sm:$0xff]
    %v1407 = vld [vmem:[#allocation2 + $0x1c0] sm:$0xff]
    %v1408 = vld [vmem:[#allocation2 + $0x1c8] sm:$0xff]
    %v1409 = vld [vmem:[#allocation2 + $0x1d0] sm:$0xff]
    %v1410 = vld [vmem:[#allocation2 + $0x1d8] sm:$0xff]
    %v1411 = vld [vmem:[#allocation2 + $0x1e0] sm:$0xff]
    %v1412 = vld [vmem:[#allocation2 + $0x1e8] sm:$0xff]
    %v1413 = vld [vmem:[#allocation2 + $0x1f0] sm:$0xff]
    %v1414 = vld [vmem:[#allocation2 + $0x1f8] sm:$0xff]
    %v1415 = vld [vmem:[#allocation2 + $0x200] sm:$0xff]
    %v1416 = vld [vmem:[#allocation2 + $0x208] sm:$0xff]
    %v1417 = vld [vmem:[#allocation2 + $0x210] sm:$0xff]
    %v1418 = vld [vmem:[#allocation2 + $0x218] sm:$0xff]
    %v1419 = vld [vmem:[#allocation2 + $0x220] sm:$0xff]
    %v1420 = vld [vmem:[#allocation2 + $0x228] sm:$0xff]
    %v1421 = vld [vmem:[#allocation2 + $0x230] sm:$0xff]
    %v1422 = vld [vmem:[#allocation2 + $0x238] sm:$0xff]
    %v1423 = vld [vmem:[#allocation2 + $0x240] sm:$0xff]
    %v1424 = vld [vmem:[#allocation2 + $0x248] sm:$0xff]
    %v1425 = vld [vmem:[#allocation2 + $0x250] sm:$0xff]
    %v1426 = vld [vmem:[#allocation2 + $0x258] sm:$0xff]
    %v1427 = vld [vmem:[#allocation2 + $0x260] sm:$0xff]
    %v1428 = vld [vmem:[#allocation2 + $0x268] sm:$0xff]
    %v1429 = vld [vmem:[#allocation2 + $0x270] sm:$0xff]
    %v1430 = vld [vmem:[#allocation2 + $0x278] sm:$0xff]
    %v1431 = vld [vmem:[#allocation2 + $0x280] sm:$0xff]
    %v1432 = vld [vmem:[#allocation2 + $0x288] sm:$0xff]
    %v1433 = vld [vmem:[#allocation2 + $0x290] sm:$0xff]
    %v1434 = vld [vmem:[#allocation2 + $0x298] sm:$0xff]
    %v1435 = vld [vmem:[#allocation2 + $0x2a0] sm:$0xff]
    %v1436 = vld [vmem:[#allocation2 + $0x2a8] sm:$0xff]
    %v1437 = vld [vmem:[#allocation2 + $0x2b0] sm:$0xff]
    %v1438 = vld [vmem:[#allocation2 + $0x2b8] sm:$0xff]
    %v1439 = vld [vmem:[#allocation2 + $0x2c0] sm:$0xff]
    %v1440 = vld [vmem:[#allocation2 + $0x2c8] sm:$0xff]
    %v1441 = vld [vmem:[#allocation2 + $0x2d0] sm:$0xff]
    %v1442 = vld [vmem:[#allocation2 + $0x2d8] sm:$0xff]
    %v1443 = vld [vmem:[#allocation2 + $0x2e0] sm:$0xff]
    %v1444 = vld [vmem:[#allocation2 + $0x2e8] sm:$0xff]
    %v1445 = vld [vmem:[#allocation2 + $0x2f0] sm:$0xff]
    %v1446 = vld [vmem:[#allocation2 + $0x2f8] sm:$0xff]
    %v1447 = vpack.c.bf16 %v1349, %v1349
    %v1448 = vpack.c.bf16 %v1350, %v1350
    %v1449 = vrot.slane %v1321, 7
    %v1450 = vrot.slane %v1322, 7
    %vm1453 = vcmask 1040384
    %v1454 = vsel %vm1453, 0.0, %v1449
    %v1455 = vsel %vm1453, 0.0, %v1450
    %v1456 = vrot.slane %v1321, 3
    %v1457 = vrot.slane %v1322, 3
    %v1460 = vsel %vm1453, 0.0, %v1456
    %v1461 = vsel %vm1453, 0.0, %v1457
    %v1464 = vrot.slane %v1460, 4
    %v1465 = vrot.slane %v1461, 4
    %v1468 = vsel %vm1348, %v1454, %v1464
    %v1469 = vsel %vm1348, %v1455, %v1465
    %v1470 = vld [vmem:[#allocation2 + $0x300] sm:$0xff]
    %v1471 = vld [vmem:[#allocation2 + $0x308] sm:$0xff]
    %v1472 = vld [vmem:[#allocation2 + $0x310] sm:$0xff]
    %v1473 = vld [vmem:[#allocation2 + $0x318] sm:$0xff]
    %v1474 = vld [vmem:[#allocation2 + $0x320] sm:$0xff]
    %v1475 = vld [vmem:[#allocation2 + $0x328] sm:$0xff]
    %v1476 = vld [vmem:[#allocation2 + $0x330] sm:$0xff]
    %v1477 = vld [vmem:[#allocation2 + $0x338] sm:$0xff]
    %v1478 = vld [vmem:[#allocation2 + $0x340] sm:$0xff]
    %v1479 = vld [vmem:[#allocation2 + $0x348] sm:$0xff]
    %v1480 = vld [vmem:[#allocation2 + $0x350] sm:$0xff]
    %v1481 = vld [vmem:[#allocation2 + $0x358] sm:$0xff]
    %v1482 = vld [vmem:[#allocation2 + $0x360] sm:$0xff]
    %v1483 = vld [vmem:[#allocation2 + $0x368] sm:$0xff]
    %v1484 = vld [vmem:[#allocation2 + $0x370] sm:$0xff]
    %v1485 = vld [vmem:[#allocation2 + $0x378] sm:$0xff]
    %v1486 = vld [vmem:[#allocation2 + $0x380] sm:$0xff]
    %v1487 = vld [vmem:[#allocation2 + $0x388] sm:$0xff]
    %v1488 = vld [vmem:[#allocation2 + $0x390] sm:$0xff]
    %v1489 = vld [vmem:[#allocation2 + $0x398] sm:$0xff]
    %v1490 = vld [vmem:[#allocation2 + $0x3a0] sm:$0xff]
    %v1491 = vld [vmem:[#allocation2 + $0x3a8] sm:$0xff]
    %v1492 = vld [vmem:[#allocation2 + $0x3b0] sm:$0xff]
    %v1493 = vld [vmem:[#allocation2 + $0x3b8] sm:$0xff]
    %v1494 = vld [vmem:[#allocation2 + $0x3c0] sm:$0xff]
    %v1495 = vld [vmem:[#allocation2 + $0x3c8] sm:$0xff]
    %v1496 = vld [vmem:[#allocation2 + $0x3d0] sm:$0xff]
    %v1497 = vld [vmem:[#allocation2 + $0x3d8] sm:$0xff]
    %v1498 = vld [vmem:[#allocation2 + $0x3e0] sm:$0xff]
    %v1499 = vld [vmem:[#allocation2 + $0x3e8] sm:$0xff]
    %v1500 = vld [vmem:[#allocation2 + $0x3f0] sm:$0xff]
    %v1501 = vld [vmem:[#allocation2 + $0x3f8] sm:$0xff]
    %v1502 = vld [vmem:[#allocation2 + $0x400] sm:$0xff]
    %v1503 = vld [vmem:[#allocation2 + $0x408] sm:$0xff]
    %v1504 = vld [vmem:[#allocation2 + $0x410] sm:$0xff]
    %v1505 = vld [vmem:[#allocation2 + $0x418] sm:$0xff]
    %v1506 = vld [vmem:[#allocation2 + $0x420] sm:$0xff]
    %v1507 = vld [vmem:[#allocation2 + $0x428] sm:$0xff]
    %v1508 = vld [vmem:[#allocation2 + $0x430] sm:$0xff]
    %v1509 = vld [vmem:[#allocation2 + $0x438] sm:$0xff]
    %v1510 = vld [vmem:[#allocation2 + $0x440] sm:$0xff]
    %v1511 = vld [vmem:[#allocation2 + $0x448] sm:$0xff]
    %v1512 = vld [vmem:[#allocation2 + $0x450] sm:$0xff]
    %v1513 = vld [vmem:[#allocation2 + $0x458] sm:$0xff]
    %v1514 = vld [vmem:[#allocation2 + $0x460] sm:$0xff]
    %v1515 = vld [vmem:[#allocation2 + $0x468] sm:$0xff]
    %v1516 = vld [vmem:[#allocation2 + $0x470] sm:$0xff]
    %v1517 = vld [vmem:[#allocation2 + $0x478] sm:$0xff]
    %v1518 = vld [vmem:[#allocation2 + $0x480] sm:$0xff]
    %v1519 = vld [vmem:[#allocation2 + $0x488] sm:$0xff]
    %v1520 = vld [vmem:[#allocation2 + $0x490] sm:$0xff]
    %v1521 = vld [vmem:[#allocation2 + $0x498] sm:$0xff]
    %v1522 = vld [vmem:[#allocation2 + $0x4a0] sm:$0xff]
    %v1523 = vld [vmem:[#allocation2 + $0x4a8] sm:$0xff]
    %v1524 = vld [vmem:[#allocation2 + $0x4b0] sm:$0xff]
    %v1525 = vld [vmem:[#allocation2 + $0x4b8] sm:$0xff]
    %v1526 = vld [vmem:[#allocation2 + $0x4c0] sm:$0xff]
    %v1527 = vld [vmem:[#allocation2 + $0x4c8] sm:$0xff]
    %v1528 = vld [vmem:[#allocation2 + $0x4d0] sm:$0xff]
    %v1529 = vld [vmem:[#allocation2 + $0x4d8] sm:$0xff]
    %v1530 = vld [vmem:[#allocation2 + $0x4e0] sm:$0xff]
    %v1531 = vld [vmem:[#allocation2 + $0x4e8] sm:$0xff]
    %v1532 = vld [vmem:[#allocation2 + $0x4f0] sm:$0xff]
    %v1533 = vld [vmem:[#allocation2 + $0x4f8] sm:$0xff]
    %v1534 = vld [vmem:[#allocation2 + $0x500] sm:$0xff]
    %v1535 = vld [vmem:[#allocation2 + $0x508] sm:$0xff]
    %v1536 = vld [vmem:[#allocation2 + $0x510] sm:$0xff]
    %v1537 = vld [vmem:[#allocation2 + $0x518] sm:$0xff]
    %v1538 = vld [vmem:[#allocation2 + $0x520] sm:$0xff]
    %v1539 = vld [vmem:[#allocation2 + $0x528] sm:$0xff]
    %v1540 = vld [vmem:[#allocation2 + $0x530] sm:$0xff]
    %v1541 = vld [vmem:[#allocation2 + $0x538] sm:$0xff]
    %v1542 = vld [vmem:[#allocation2 + $0x540] sm:$0xff]
    %v1543 = vld [vmem:[#allocation2 + $0x548] sm:$0xff]
    %v1544 = vld [vmem:[#allocation2 + $0x550] sm:$0xff]
    %v1545 = vld [vmem:[#allocation2 + $0x558] sm:$0xff]
    %v1546 = vld [vmem:[#allocation2 + $0x560] sm:$0xff]
    %v1547 = vld [vmem:[#allocation2 + $0x568] sm:$0xff]
    %v1548 = vld [vmem:[#allocation2 + $0x570] sm:$0xff]
    %v1549 = vld [vmem:[#allocation2 + $0x578] sm:$0xff]
    %v1550 = vld [vmem:[#allocation2 + $0x580] sm:$0xff]
    %v1551 = vld [vmem:[#allocation2 + $0x588] sm:$0xff]
    %v1552 = vld [vmem:[#allocation2 + $0x590] sm:$0xff]
    %v1553 = vld [vmem:[#allocation2 + $0x598] sm:$0xff]
    %v1554 = vld [vmem:[#allocation2 + $0x5a0] sm:$0xff]
    %v1555 = vld [vmem:[#allocation2 + $0x5a8] sm:$0xff]
    %v1556 = vld [vmem:[#allocation2 + $0x5b0] sm:$0xff]
    %v1557 = vld [vmem:[#allocation2 + $0x5b8] sm:$0xff]
    %v1558 = vld [vmem:[#allocation2 + $0x5c0] sm:$0xff]
    %v1559 = vld [vmem:[#allocation2 + $0x5c8] sm:$0xff]
    %v1560 = vld [vmem:[#allocation2 + $0x5d0] sm:$0xff]
    %v1561 = vld [vmem:[#allocation2 + $0x5d8] sm:$0xff]
    %v1562 = vld [vmem:[#allocation2 + $0x5e0] sm:$0xff]
    %v1563 = vld [vmem:[#allocation2 + $0x5e8] sm:$0xff]
    %v1564 = vld [vmem:[#allocation2 + $0x5f0] sm:$0xff]
    %v1565 = vld [vmem:[#allocation2 + $0x5f8] sm:$0xff]
    %v1566 = vpack.c.bf16 %v1468, %v1468
    %v1567 = vpack.c.bf16 %v1469, %v1469
    %1568 = vmatprep.subr.bf16.mxu0 %v1471
    %1569 = vmatpush1.bf16.msra.mxu0 %v1470
    %1570 = vmatprep.subr.bf16.mxu0 %v1477
    %1571 = vmatpush1.bf16.msra.mxu0 %v1476
    %1572 = vmatprep.subr.bf16.mxu0 %v1483
    %1573 = vmatpush1.bf16.msra.mxu0 %v1482
    %1574 = vmatprep.subr.bf16.mxu0 %v1489
    %1575 = vmatpush1.bf16.msra.mxu0 %v1488
    %1576 = vmatprep.subr.bf16.mxu0 %v1495
    %1577 = vmatpush1.bf16.msra.mxu0 %v1494
    %1578 = vmatprep.subr.bf16.mxu0 %v1501
    %1579 = vmatpush1.bf16.msra.mxu0 %v1500
    %1580 = vmatprep.subr.bf16.mxu0 %v1507
    %1581 = vmatpush1.bf16.msra.mxu0 %v1506
    %1582 = vmatprep.subr.bf16.mxu0 %v1513
    %1583 = vmatpush1.bf16.msra.mxu0 %v1512
    %1584 = vmatprep.subr.bf16.mxu0 %v1519
    %1585 = vmatpush1.bf16.msra.mxu0 %v1518
    %1586 = vmatprep.subr.bf16.mxu0 %v1525
    %1587 = vmatpush1.bf16.msra.mxu0 %v1524
    %1588 = vmatprep.subr.bf16.mxu0 %v1531
    %1589 = vmatpush1.bf16.msra.mxu0 %v1530
    %1590 = vmatprep.subr.bf16.mxu0 %v1537
    %1591 = vmatpush1.bf16.msra.mxu0 %v1536
    %1592 = vmatprep.subr.bf16.mxu0 %v1543
    %1593 = vmatpush1.bf16.msra.mxu0 %v1542
    %1594 = vmatprep.subr.bf16.mxu0 %v1549
    %1595 = vmatpush1.bf16.msra.mxu0 %v1548
    %1596 = vmatprep.subr.bf16.mxu0 %v1555
    %1597 = vmatpush1.bf16.msra.mxu0 %v1554
    %1598 = vmatprep.subr.bf16.mxu0 %v1561
    %1599 = vmatpush1.bf16.msra.mxu0 %v1560
    %1600 = vmatprep.mubr.bf16.mxu0 %v1567
    %1601 = vmatmul.mubr.bf16.gmra.mrb[0].mxu0 %v1566
    %v1602 = vpop.f32.mrb[0].mxu0
    %v1603 = vadd.f32 0.0, %v1602
    %v1604 = vpop.f32.mrb[0].mxu0
    %v1605 = vadd.f32 0.0, %v1604
    %v1606 = vpop.f32.mrb[0].mxu0
    %v1607 = vpop.f32.mrb[0].mxu0
    %1608 = vdwg.mxu0
    %1609 = vmatprep.subr.bf16.mxu0 %v1473
    %1610 = vmatpush1.bf16.msra.mxu0 %v1472
    %1611 = vmatprep.subr.bf16.mxu0 %v1479
    %1612 = vmatpush1.bf16.msra.mxu0 %v1478
    %1613 = vmatprep.subr.bf16.mxu0 %v1485
    %1614 = vmatpush1.bf16.msra.mxu0 %v1484
    %1615 = vmatprep.subr.bf16.mxu0 %v1491
    %1616 = vmatpush1.bf16.msra.mxu0 %v1490
    %1617 = vmatprep.subr.bf16.mxu0 %v1497
    %1618 = vmatpush1.bf16.msra.mxu0 %v1496
    %1619 = vmatprep.subr.bf16.mxu0 %v1503
    %1620 = vmatpush1.bf16.msra.mxu0 %v1502
    %1621 = vmatprep.subr.bf16.mxu0 %v1509
    %1622 = vmatpush1.bf16.msra.mxu0 %v1508
    %1623 = vmatprep.subr.bf16.mxu0 %v1515
    %1624 = vmatpush1.bf16.msra.mxu0 %v1514
    %1625 = vmatprep.subr.bf16.mxu0 %v1521
    %1626 = vmatpush1.bf16.msra.mxu0 %v1520
    %1627 = vmatprep.subr.bf16.mxu0 %v1527
    %1628 = vmatpush1.bf16.msra.mxu0 %v1526
    %1629 = vmatprep.subr.bf16.mxu0 %v1533
    %1630 = vmatpush1.bf16.msra.mxu0 %v1532
    %1631 = vmatprep.subr.bf16.mxu0 %v1539
    %1632 = vmatpush1.bf16.msra.mxu0 %v1538
    %1633 = vmatprep.subr.bf16.mxu0 %v1545
    %1634 = vmatpush1.bf16.msra.mxu0 %v1544
    %1635 = vmatprep.subr.bf16.mxu0 %v1551
    %1636 = vmatpush1.bf16.msra.mxu0 %v1550
    %1637 = vmatprep.subr.bf16.mxu0 %v1557
    %1638 = vmatpush1.bf16.msra.mxu0 %v1556
    %1639 = vmatprep.subr.bf16.mxu0 %v1563
    %1640 = vmatpush1.bf16.msra.mxu0 %v1562
    %1641 = vmatprep.mubr.bf16.mxu0 %v1567
    %1642 = vmatmul.mubr.bf16.gmra.mrb[0].mxu0 %v1566
    %v1643 = vpop.f32.mrb[0].mxu0
    %v1644 = vadd.f32 0.0, %v1643
    %v1645 = vpop.f32.mrb[0].mxu0
    %v1646 = vadd.f32 0.0, %v1645
    %v1647 = vpop.f32.mrb[0].mxu0
    %v1648 = vpop.f32.mrb[0].mxu0
    %1649 = vdwg.mxu0
    %1650 = vmatprep.subr.bf16.mxu0 %v1475
    %1651 = vmatpush1.bf16.msra.mxu0 %v1474
    %1652 = vmatprep.subr.bf16.mxu0 %v1481
    %1653 = vmatpush1.bf16.msra.mxu0 %v1480
    %1654 = vmatprep.subr.bf16.mxu0 %v1487
    %1655 = vmatpush1.bf16.msra.mxu0 %v1486
    %1656 = vmatprep.subr.bf16.mxu0 %v1493
    %1657 = vmatpush1.bf16.msra.mxu0 %v1492
    %1658 = vmatprep.subr.bf16.mxu0 %v1499
    %1659 = vmatpush1.bf16.msra.mxu0 %v1498
    %1660 = vmatprep.subr.bf16.mxu0 %v1505
    %1661 = vmatpush1.bf16.msra.mxu0 %v1504
    %1662 = vmatprep.subr.bf16.mxu0 %v1511
    %1663 = vmatpush1.bf16.msra.mxu0 %v1510
    %1664 = vmatprep.subr.bf16.mxu0 %v1517
    %1665 = vmatpush1.bf16.msra.mxu0 %v1516
    %1666 = vmatprep.subr.bf16.mxu0 %v1523
    %1667 = vmatpush1.bf16.msra.mxu0 %v1522
    %1668 = vmatprep.subr.bf16.mxu0 %v1529
    %1669 = vmatpush1.bf16.msra.mxu0 %v1528
    %1670 = vmatprep.subr.bf16.mxu0 %v1535
    %1671 = vmatpush1.bf16.msra.mxu0 %v1534
    %1672 = vmatprep.subr.bf16.mxu0 %v1541
    %1673 = vmatpush1.bf16.msra.mxu0 %v1540
    %1674 = vmatprep.subr.bf16.mxu0 %v1547
    %1675 = vmatpush1.bf16.msra.mxu0 %v1546
    %1676 = vmatprep.subr.bf16.mxu0 %v1553
    %1677 = vmatpush1.bf16.msra.mxu0 %v1552
    %1678 = vmatprep.subr.bf16.mxu0 %v1559
    %1679 = vmatpush1.bf16.msra.mxu0 %v1558
    %1680 = vmatprep.subr.bf16.mxu0 %v1565
    %1681 = vmatpush1.bf16.msra.mxu0 %v1564
    %1682 = vmatprep.mubr.bf16.mxu0 %v1567
    %1683 = vmatmul.mubr.bf16.gmra.mrb[0].mxu0 %v1566
    %v1684 = vpop.f32.mrb[0].mxu0
    %v1685 = vadd.f32 0.0, %v1684
    %v1686 = vpop.f32.mrb[0].mxu0
    %v1687 = vadd.f32 0.0, %v1686
    %v1688 = vpop.f32.mrb[0].mxu0
    %v1689 = vpop.f32.mrb[0].mxu0
    %1690 = vdwg.mxu0
    %1691 = vmatprep.subr.bf16.mxu0 %v1352
    %1692 = vmatpush1.bf16.msra.mxu0 %v1351
    %1693 = vmatprep.subr.bf16.mxu0 %v1358
    %1694 = vmatpush1.bf16.msra.mxu0 %v1357
    %1695 = vmatprep.subr.bf16.mxu0 %v1364
    %1696 = vmatpush1.bf16.msra.mxu0 %v1363
    %1697 = vmatprep.subr.bf16.mxu0 %v1370
    %1698 = vmatpush1.bf16.msra.mxu0 %v1369
    %1699 = vmatprep.subr.bf16.mxu0 %v1376
    %1700 = vmatpush1.bf16.msra.mxu0 %v1375
    %1701 = vmatprep.subr.bf16.mxu0 %v1382
    %1702 = vmatpush1.bf16.msra.mxu0 %v1381
    %1703 = vmatprep.subr.bf16.mxu0 %v1388
    %1704 = vmatpush1.bf16.msra.mxu0 %v1387
    %1705 = vmatprep.subr.bf16.mxu0 %v1394
    %1706 = vmatpush1.bf16.msra.mxu0 %v1393
    %1707 = vmatprep.subr.bf16.mxu0 %v1400
    %1708 = vmatpush1.bf16.msra.mxu0 %v1399
    %1709 = vmatprep.subr.bf16.mxu0 %v1406
    %1710 = vmatpush1.bf16.msra.mxu0 %v1405
    %1711 = vmatprep.subr.bf16.mxu0 %v1412
    %1712 = vmatpush1.bf16.msra.mxu0 %v1411
    %1713 = vmatprep.subr.bf16.mxu0 %v1418
    %1714 = vmatpush1.bf16.msra.mxu0 %v1417
    %1715 = vmatprep.subr.bf16.mxu0 %v1424
    %1716 = vmatpush1.bf16.msra.mxu0 %v1423
    %1717 = vmatprep.subr.bf16.mxu0 %v1430
    %1718 = vmatpush1.bf16.msra.mxu0 %v1429
    %1719 = vmatprep.subr.bf16.mxu0 %v1436
    %1720 = vmatpush1.bf16.msra.mxu0 %v1435
    %1721 = vmatprep.subr.bf16.mxu0 %v1442
    %1722 = vmatpush1.bf16.msra.mxu0 %v1441
    %1723 = vmatprep.mubr.bf16.mxu0 %v1448
    %1724 = vmatmul.mubr.bf16.gmra.mrb[0].mxu0 %v1447
    %v1725 = vpop.f32.mrb[0].mxu0
    %v1726 = vadd.f32 %v1603, %v1725
    %v1727 = vpop.f32.mrb[0].mxu0
    %v1728 = vadd.f32 %v1605, %v1727
    %v1729 = vpop.f32.mrb[0].mxu0
    %v1730 = vpop.f32.mrb[0].mxu0
    %1731 = vdwg.mxu0
    %1732 = vmatprep.subr.bf16.mxu0 %v1354
    %1733 = vmatpush1.bf16.msra.mxu0 %v1353
    %1734 = vmatprep.subr.bf16.mxu0 %v1360
    %1735 = vmatpush1.bf16.msra.mxu0 %v1359
    %1736 = vmatprep.subr.bf16.mxu0 %v1366
    %1737 = vmatpush1.bf16.msra.mxu0 %v1365
    %1738 = vmatprep.subr.bf16.mxu0 %v1372
    %1739 = vmatpush1.bf16.msra.mxu0 %v1371
    %1740 = vmatprep.subr.bf16.mxu0 %v1378
    %1741 = vmatpush1.bf16.msra.mxu0 %v1377
    %1742 = vmatprep.subr.bf16.mxu0 %v1384
    %1743 = vmatpush1.bf16.msra.mxu0 %v1383
    %1744 = vmatprep.subr.bf16.mxu0 %v1390
    %1745 = vmatpush1.bf16.msra.mxu0 %v1389
    %1746 = vmatprep.subr.bf16.mxu0 %v1396
    %1747 = vmatpush1.bf16.msra.mxu0 %v1395
    %1748 = vmatprep.subr.bf16.mxu0 %v1402
    %1749 = vmatpush1.bf16.msra.mxu0 %v1401
    %1750 = vmatprep.subr.bf16.mxu0 %v1408
    %1751 = vmatpush1.bf16.msra.mxu0 %v1407
    %1752 = vmatprep.subr.bf16.mxu0 %v1414
    %1753 = vmatpush1.bf16.msra.mxu0 %v1413
    %1754 = vmatprep.subr.bf16.mxu0 %v1420
    %1755 = vmatpush1.bf16.msra.mxu0 %v1419
    %1756 = vmatprep.subr.bf16.mxu0 %v1426
    %1757 = vmatpush1.bf16.msra.mxu0 %v1425
    %1758 = vmatprep.subr.bf16.mxu0 %v1432
    %1759 = vmatpush1.bf16.msra.mxu0 %v1431
    %1760 = vmatprep.subr.bf16.mxu0 %v1438
    %1761 = vmatpush1.bf16.msra.mxu0 %v1437
    %1762 = vmatprep.subr.bf16.mxu0 %v1444
    %1763 = vmatpush1.bf16.msra.mxu0 %v1443
    %1764 = vmatprep.mubr.bf16.mxu0 %v1448
    %1765 = vmatmul.mubr.bf16.gmra.mrb[0].mxu0 %v1447
    %v1766 = vpop.f32.mrb[0].mxu0
    %v1767 = vadd.f32 %v1644, %v1766
    %v1768 = vpop.f32.mrb[0].mxu0
    %v1769 = vadd.f32 %v1646, %v1768
    %v1770 = vpop.f32.mrb[0].mxu0
    %v1771 = vpop.f32.mrb[0].mxu0
    %1772 = vdwg.mxu0
    %1773 = vmatprep.subr.bf16.mxu0 %v1356
    %1774 = vmatpush1.bf16.msra.mxu0 %v1355
    %1775 = vmatprep.subr.bf16.mxu0 %v1362
    %1776 = vmatpush1.bf16.msra.mxu0 %v1361
    %1777 = vmatprep.subr.bf16.mxu0 %v1368
    %1778 = vmatpush1.bf16.msra.mxu0 %v1367
    %1779 = vmatprep.subr.bf16.mxu0 %v1374
    %1780 = vmatpush1.bf16.msra.mxu0 %v1373
    %1781 = vmatprep.subr.bf16.mxu0 %v1380
    %1782 = vmatpush1.bf16.msra.mxu0 %v1379
    %1783 = vmatprep.subr.bf16.mxu0 %v1386
    %1784 = vmatpush1.bf16.msra.mxu0 %v1385
    %1785 = vmatprep.subr.bf16.mxu0 %v1392
    %1786 = vmatpush1.bf16.msra.mxu0 %v1391
    %1787 = vmatprep.subr.bf16.mxu0 %v1398
    %1788 = vmatpush1.bf16.msra.mxu0 %v1397
    %1789 = vmatprep.subr.bf16.mxu0 %v1404
    %1790 = vmatpush1.bf16.msra.mxu0 %v1403
    %1791 = vmatprep.subr.bf16.mxu0 %v1410
    %1792 = vmatpush1.bf16.msra.mxu0 %v1409
    %1793 = vmatprep.subr.bf16.mxu0 %v1416
    %1794 = vmatpush1.bf16.msra.mxu0 %v1415
    %1795 = vmatprep.subr.bf16.mxu0 %v1422
    %1796 = vmatpush1.bf16.msra.mxu0 %v1421
    %1797 = vmatprep.subr.bf16.mxu0 %v1428
    %1798 = vmatpush1.bf16.msra.mxu0 %v1427
    %1799 = vmatprep.subr.bf16.mxu0 %v1434
    %1800 = vmatpush1.bf16.msra.mxu0 %v1433
    %1801 = vmatprep.subr.bf16.mxu0 %v1440
    %1802 = vmatpush1.bf16.msra.mxu0 %v1439
    %1803 = vmatprep.subr.bf16.mxu0 %v1446
    %1804 = vmatpush1.bf16.msra.mxu0 %v1445
    %1805 = vmatprep.mubr.bf16.mxu0 %v1448
    %1806 = vmatmul.mubr.bf16.gmra.mrb[0].mxu0 %v1447
    %v1807 = vpop.f32.mrb[0].mxu0
    %v1808 = vadd.f32 %v1685, %v1807
    %v1809 = vpop.f32.mrb[0].mxu0
    %v1810 = vadd.f32 %v1687, %v1809
    %v1811 = vpop.f32.mrb[0].mxu0
    %v1812 = vpop.f32.mrb[0].mxu0
    %1813 = vdwg.mxu0
    %v1814 = vld [vmem:[#allocation2 + $0x600] sm:$0xff]
    %v1815 = vld [vmem:[#allocation2 + $0x608] sm:$0xff]
    %v1816 = vld [vmem:[#allocation2 + $0x610] sm:$0xff]
    %v1817 = vld [vmem:[#allocation2 + $0x618] sm:$0xff]
    %v1818 = vld [vmem:[#allocation2 + $0x620] sm:$0xff]
    %v1819 = vld [vmem:[#allocation2 + $0x628] sm:$0xff]
    %v1820 = vld [vmem:[#allocation2 + $0x630] sm:$0xff]
    %v1821 = vld [vmem:[#allocation2 + $0x638] sm:$0xff]
    %v1822 = vld [vmem:[#allocation2 + $0x640] sm:$0xff]
    %v1823 = vld [vmem:[#allocation2 + $0x648] sm:$0xff]
    %v1824 = vld [vmem:[#allocation2 + $0x650] sm:$0xff]
    %v1825 = vld [vmem:[#allocation2 + $0x658] sm:$0xff]
    %v1826 = vld [vmem:[#allocation2 + $0x660] sm:$0xff]
    %v1827 = vld [vmem:[#allocation2 + $0x668] sm:$0xff]
    %v1828 = vld [vmem:[#allocation2 + $0x670] sm:$0xff]
    %v1829 = vld [vmem:[#allocation2 + $0x678] sm:$0xff]
    %v1830 = vld [vmem:[#allocation2 + $0x680] sm:$0xff]
    %v1831 = vld [vmem:[#allocation2 + $0x688] sm:$0xff]
    %v1832 = vld [vmem:[#allocation2 + $0x690] sm:$0xff]
    %v1833 = vld [vmem:[#allocation2 + $0x698] sm:$0xff]
    %v1834 = vld [vmem:[#allocation2 + $0x6a0] sm:$0xff]
    %v1835 = vld [vmem:[#allocation2 + $0x6a8] sm:$0xff]
    %v1836 = vld [vmem:[#allocation2 + $0x6b0] sm:$0xff]
    %v1837 = vld [vmem:[#allocation2 + $0x6b8] sm:$0xff]
    %v1838 = vld [vmem:[#allocation2 + $0x6c0] sm:$0xff]
    %v1839 = vld [vmem:[#allocation2 + $0x6c8] sm:$0xff]
    %v1840 = vld [vmem:[#allocation2 + $0x6d0] sm:$0xff]
    %v1841 = vld [vmem:[#allocation2 + $0x6d8] sm:$0xff]
    %v1842 = vld [vmem:[#allocation2 + $0x6e0] sm:$0xff]
    %v1843 = vld [vmem:[#allocation2 + $0x6e8] sm:$0xff]
    %v1844 = vld [vmem:[#allocation2 + $0x6f0] sm:$0xff]
    %v1845 = vld [vmem:[#allocation2 + $0x6f8] sm:$0xff]
    %v1846 = vld [vmem:[#allocation2 + $0x700] sm:$0xff]
    %v1847 = vld [vmem:[#allocation2 + $0x708] sm:$0xff]
    %v1848 = vld [vmem:[#allocation2 + $0x710] sm:$0xff]
    %v1849 = vld [vmem:[#allocation2 + $0x718] sm:$0xff]
    %v1850 = vld [vmem:[#allocation2 + $0x720] sm:$0xff]
    %v1851 = vld [vmem:[#allocation2 + $0x728] sm:$0xff]
    %v1852 = vld [vmem:[#allocation2 + $0x730] sm:$0xff]
    %v1853 = vld [vmem:[#allocation2 + $0x738] sm:$0xff]
    %v1854 = vld [vmem:[#allocation2 + $0x740] sm:$0xff]
    %v1855 = vld [vmem:[#allocation2 + $0x748] sm:$0xff]
    %v1856 = vld [vmem:[#allocation2 + $0x750] sm:$0xff]
    %v1857 = vld [vmem:[#allocation2 + $0x758] sm:$0xff]
    %v1858 = vld [vmem:[#allocation2 + $0x760] sm:$0xff]
    %v1859 = vld [vmem:[#allocation2 + $0x768] sm:$0xff]
    %v1860 = vld [vmem:[#allocation2 + $0x770] sm:$0xff]
    %v1861 = vld [vmem:[#allocation2 + $0x778] sm:$0xff]
    %v1862 = vld [vmem:[#allocation2 + $0x780] sm:$0xff]
    %v1863 = vld [vmem:[#allocation2 + $0x788] sm:$0xff]
    %v1864 = vld [vmem:[#allocation2 + $0x790] sm:$0xff]
    %v1865 = vld [vmem:[#allocation2 + $0x798] sm:$0xff]
    %v1866 = vld [vmem:[#allocation2 + $0x7a0] sm:$0xff]
    %v1867 = vld [vmem:[#allocation2 + $0x7a8] sm:$0xff]
    %v1868 = vld [vmem:[#allocation2 + $0x7b0] sm:$0xff]
    %v1869 = vld [vmem:[#allocation2 + $0x7b8] sm:$0xff]
    %v1870 = vld [vmem:[#allocation2 + $0x7c0] sm:$0xff]
    %v1871 = vld [vmem:[#allocation2 + $0x7c8] sm:$0xff]
    %v1872 = vld [vmem:[#allocation2 + $0x7d0] sm:$0xff]
    %v1873 = vld [vmem:[#allocation2 + $0x7d8] sm:$0xff]
    %v1874 = vld [vmem:[#allocation2 + $0x7e0] sm:$0xff]
    %v1875 = vld [vmem:[#allocation2 + $0x7e8] sm:$0xff]
    %v1876 = vld [vmem:[#allocation2 + $0x7f0] sm:$0xff]
    %v1877 = vld [vmem:[#allocation2 + $0x7f8] sm:$0xff]
    %v1878 = vld [vmem:[#allocation2 + $0x800] sm:$0xff]
    %v1879 = vld [vmem:[#allocation2 + $0x808] sm:$0xff]
    %v1880 = vld [vmem:[#allocation2 + $0x810] sm:$0xff]
    %v1881 = vld [vmem:[#allocation2 + $0x818] sm:$0xff]
    %v1882 = vld [vmem:[#allocation2 + $0x820] sm:$0xff]
    %v1883 = vld [vmem:[#allocation2 + $0x828] sm:$0xff]
    %v1884 = vld [vmem:[#allocation2 + $0x830] sm:$0xff]
    %v1885 = vld [vmem:[#allocation2 + $0x838] sm:$0xff]
    %v1886 = vld [vmem:[#allocation2 + $0x840] sm:$0xff]
    %v1887 = vld [vmem:[#allocation2 + $0x848] sm:$0xff]
    %v1888 = vld [vmem:[#allocation2 + $0x850] sm:$0xff]
    %v1889 = vld [vmem:[#allocation2 + $0x858] sm:$0xff]
    %v1890 = vld [vmem:[#allocation2 + $0x860] sm:$0xff]
    %v1891 = vld [vmem:[#allocation2 + $0x868] sm:$0xff]
    %v1892 = vld [vmem:[#allocation2 + $0x870] sm:$0xff]
    %v1893 = vld [vmem:[#allocation2 + $0x878] sm:$0xff]
    %v1894 = vld [vmem:[#allocation2 + $0x880] sm:$0xff]
    %v1895 = vld [vmem:[#allocation2 + $0x888] sm:$0xff]
    %v1896 = vld [vmem:[#allocation2 + $0x890] sm:$0xff]
    %v1897 = vld [vmem:[#allocation2 + $0x898] sm:$0xff]
    %v1898 = vld [vmem:[#allocation2 + $0x8a0] sm:$0xff]
    %v1899 = vld [vmem:[#allocation2 + $0x8a8] sm:$0xff]
    %v1900 = vld [vmem:[#allocation2 + $0x8b0] sm:$0xff]
    %v1901 = vld [vmem:[#allocation2 + $0x8b8] sm:$0xff]
    %v1902 = vld [vmem:[#allocation2 + $0x8c0] sm:$0xff]
    %v1903 = vld [vmem:[#allocation2 + $0x8c8] sm:$0xff]
    %v1904 = vld [vmem:[#allocation2 + $0x8d0] sm:$0xff]
    %v1905 = vld [vmem:[#allocation2 + $0x8d8] sm:$0xff]
    %v1906 = vld [vmem:[#allocation2 + $0x8e0] sm:$0xff]
    %v1907 = vld [vmem:[#allocation2 + $0x8e8] sm:$0xff]
    %v1908 = vld [vmem:[#allocation2 + $0x8f0] sm:$0xff]
    %v1909 = vld [vmem:[#allocation2 + $0x8f8] sm:$0xff]
    %v1910 = vpack.c.bf16 %v1321, %v1321
    %v1911 = vpack.c.bf16 %v1322, %v1322
    %1912 = vmatprep.subr.bf16.mxu0 %v1815
    %1913 = vmatpush1.bf16.msra.mxu0 %v1814
    %1914 = vmatprep.subr.bf16.mxu0 %v1821
    %1915 = vmatpush1.bf16.msra.mxu0 %v1820
    %1916 = vmatprep.subr.bf16.mxu0 %v1827
    %1917 = vmatpush1.bf16.msra.mxu0 %v1826
    %1918 = vmatprep.subr.bf16.mxu0 %v1833
    %1919 = vmatpush1.bf16.msra.mxu0 %v1832
    %1920 = vmatprep.subr.bf16.mxu0 %v1839
    %1921 = vmatpush1.bf16.msra.mxu0 %v1838
    %1922 = vmatprep.subr.bf16.mxu0 %v1845
    %1923 = vmatpush1.bf16.msra.mxu0 %v1844
    %1924 = vmatprep.subr.bf16.mxu0 %v1851
    %1925 = vmatpush1.bf16.msra.mxu0 %v1850
    %1926 = vmatprep.subr.bf16.mxu0 %v1857
    %1927 = vmatpush1.bf16.msra.mxu0 %v1856
    %1928 = vmatprep.subr.bf16.mxu0 %v1863
    %1929 = vmatpush1.bf16.msra.mxu0 %v1862
    %1930 = vmatprep.subr.bf16.mxu0 %v1869
    %1931 = vmatpush1.bf16.msra.mxu0 %v1868
    %1932 = vmatprep.subr.bf16.mxu0 %v1875
    %1933 = vmatpush1.bf16.msra.mxu0 %v1874
    %1934 = vmatprep.subr.bf16.mxu0 %v1881
    %1935 = vmatpush1.bf16.msra.mxu0 %v1880
    %1936 = vmatprep.subr.bf16.mxu0 %v1887
    %1937 = vmatpush1.bf16.msra.mxu0 %v1886
    %1938 = vmatprep.subr.bf16.mxu0 %v1893
    %1939 = vmatpush1.bf16.msra.mxu0 %v1892
    %1940 = vmatprep.subr.bf16.mxu0 %v1899
    %1941 = vmatpush1.bf16.msra.mxu0 %v1898
    %1942 = vmatprep.subr.bf16.mxu0 %v1905
    %1943 = vmatpush1.bf16.msra.mxu0 %v1904
    %1944 = vmatprep.mubr.bf16.mxu0 %v1911
    %1945 = vmatmul.mubr.bf16.gmra.mrb[0].mxu0 %v1910
    %v1946 = vpop.f32.mrb[0].mxu0
    %v1947 = vadd.f32 0.0, %v1946
    %v1948 = vpop.f32.mrb[0].mxu0
    %v1949 = vadd.f32 0.0, %v1948
    %v1950 = vpop.f32.mrb[0].mxu0
    %v1951 = vpop.f32.mrb[0].mxu0
    %1952 = vdwg.mxu0
    %1953 = vmatprep.subr.bf16.mxu0 %v1817
    %1954 = vmatpush1.bf16.msra.mxu0 %v1816
    %1955 = vmatprep.subr.bf16.mxu0 %v1823
    %1956 = vmatpush1.bf16.msra.mxu0 %v1822
    %1957 = vmatprep.subr.bf16.mxu0 %v1829
    %1958 = vmatpush1.bf16.msra.mxu0 %v1828
    %1959 = vmatprep.subr.bf16.mxu0 %v1835
    %1960 = vmatpush1.bf16.msra.mxu0 %v1834
    %1961 = vmatprep.subr.bf16.mxu0 %v1841
    %1962 = vmatpush1.bf16.msra.mxu0 %v1840
    %1963 = vmatprep.subr.bf16.mxu0 %v1847
    %1964 = vmatpush1.bf16.msra.mxu0 %v1846
    %1965 = vmatprep.subr.bf16.mxu0 %v1853
    %1966 = vmatpush1.bf16.msra.mxu0 %v1852
    %1967 = vmatprep.subr.bf16.mxu0 %v1859
    %1968 = vmatpush1.bf16.msra.mxu0 %v1858
    %1969 = vmatprep.subr.bf16.mxu0 %v1865
    %1970 = vmatpush1.bf16.msra.mxu0 %v1864
    %1971 = vmatprep.subr.bf16.mxu0 %v1871
    %1972 = vmatpush1.bf16.msra.mxu0 %v1870
    %1973 = vmatprep.subr.bf16.mxu0 %v1877
    %1974 = vmatpush1.bf16.msra.mxu0 %v1876
    %1975 = vmatprep.subr.bf16.mxu0 %v1883
    %1976 = vmatpush1.bf16.msra.mxu0 %v1882
    %1977 = vmatprep.subr.bf16.mxu0 %v1889
    %1978 = vmatpush1.bf16.msra.mxu0 %v1888
    %1979 = vmatprep.subr.bf16.mxu0 %v1895
    %1980 = vmatpush1.bf16.msra.mxu0 %v1894
    %1981 = vmatprep.subr.bf16.mxu0 %v1901
    %1982 = vmatpush1.bf16.msra.mxu0 %v1900
    %1983 = vmatprep.subr.bf16.mxu0 %v1907
    %1984 = vmatpush1.bf16.msra.mxu0 %v1906
    %1985 = vmatprep.mubr.bf16.mxu0 %v1911
    %1986 = vmatmul.mubr.bf16.gmra.mrb[0].mxu0 %v1910
    %v1987 = vpop.f32.mrb[0].mxu0
    %v1988 = vadd.f32 0.0, %v1987
    %v1989 = vpop.f32.mrb[0].mxu0
    %v1990 = vadd.f32 0.0, %v1989
    %v1991 = vpop.f32.mrb[0].mxu0
    %v1992 = vpop.f32.mrb[0].mxu0
    %1993 = vdwg.mxu0
    %1994 = vmatprep.subr.bf16.mxu0 %v1819
    %1995 = vmatpush1.bf16.msra.mxu0 %v1818
    %1996 = vmatprep.subr.bf16.mxu0 %v1825
    %1997 = vmatpush1.bf16.msra.mxu0 %v1824
    %1998 = vmatprep.subr.bf16.mxu0 %v1831
    %1999 = vmatpush1.bf16.msra.mxu0 %v1830
    %2000 = vmatprep.subr.bf16.mxu0 %v1837
    %2001 = vmatpush1.bf16.msra.mxu0 %v1836
    %2002 = vmatprep.subr.bf16.mxu0 %v1843
    %2003 = vmatpush1.bf16.msra.mxu0 %v1842
    %2004 = vmatprep.subr.bf16.mxu0 %v1849
    %2005 = vmatpush1.bf16.msra.mxu0 %v1848
    %2006 = vmatprep.subr.bf16.mxu0 %v1855
    %2007 = vmatpush1.bf16.msra.mxu0 %v1854
    %2008 = vmatprep.subr.bf16.mxu0 %v1861
    %2009 = vmatpush1.bf16.msra.mxu0 %v1860
    %2010 = vmatprep.subr.bf16.mxu0 %v1867
    %2011 = vmatpush1.bf16.msra.mxu0 %v1866
    %2012 = vmatprep.subr.bf16.mxu0 %v1873
    %2013 = vmatpush1.bf16.msra.mxu0 %v1872
    %2014 = vmatprep.subr.bf16.mxu0 %v1879
    %2015 = vmatpush1.bf16.msra.mxu0 %v1878
    %2016 = vmatprep.subr.bf16.mxu0 %v1885
    %2017 = vmatpush1.bf16.msra.mxu0 %v1884
    %2018 = vmatprep.subr.bf16.mxu0 %v1891
    %2019 = vmatpush1.bf16.msra.mxu0 %v1890
    %2020 = vmatprep.subr.bf16.mxu0 %v1897
    %2021 = vmatpush1.bf16.msra.mxu0 %v1896
    %2022 = vmatprep.subr.bf16.mxu0 %v1903
    %2023 = vmatpush1.bf16.msra.mxu0 %v1902
    %2024 = vmatprep.subr.bf16.mxu0 %v1909
    %2025 = vmatpush1.bf16.msra.mxu0 %v1908
    %2026 = vmatprep.mubr.bf16.mxu0 %v1911
    %2027 = vmatmul.mubr.bf16.gmra.mrb[0].mxu0 %v1910
    %v2028 = vpop.f32.mrb[0].mxu0
    %v2029 = vadd.f32 0.0, %v2028
    %v2030 = vpop.f32.mrb[0].mxu0
    %v2031 = vadd.f32 0.0, %v2030
    %v2032 = vpop.f32.mrb[0].mxu0
    %v2033 = vpop.f32.mrb[0].mxu0
    %2034 = vdwg.mxu0
    %v2035 = vadd.f32 %v1726, %v1947
    %v2036 = vadd.f32 %v1728, %v1949
    %v2037 = vadd.f32 %v1767, %v1988
    %v2038 = vadd.f32 %v1769, %v1990
    %v2039 = vadd.f32 %v1808, %v2029
    %v2040 = vadd.f32 %v1810, %v2031
    %v2041 = vrot.slane %v1321, 1
    %v2042 = vrot.slane %v1322, 1
    %vm2045 = vcmask 1042432
    %v2046 = vsel %vm2045, %v2041, 0.0
    %v2047 = vsel %vm2045, %v2042, 0.0
    %v2048 = vrot.slane %v1321, 5
    %v2049 = vrot.slane %v1322, 5
    %v2052 = vsel %vm2045, %v2048, 0.0
    %v2053 = vsel %vm2045, %v2049, 0.0
    %v2056 = vrot.slane %v2052, 4
    %v2057 = vrot.slane %v2053, 4
    %v2060 = vsel %vm1348, %v2046, %v2056
    %v2061 = vsel %vm1348, %v2047, %v2057
    %v2062 = vld [vmem:[#allocation2 + $0x900] sm:$0xff]
    %v2063 = vld [vmem:[#allocation2 + $0x908] sm:$0xff]
    %v2064 = vld [vmem:[#allocation2 + $0x910] sm:$0xff]
    %v2065 = vld [vmem:[#allocation2 + $0x918] sm:$0xff]
    %v2066 = vld [vmem:[#allocation2 + $0x920] sm:$0xff]
    %v2067 = vld [vmem:[#allocation2 + $0x928] sm:$0xff]
    %v2068 = vld [vmem:[#allocation2 + $0x930] sm:$0xff]
    %v2069 = vld [vmem:[#allocation2 + $0x938] sm:$0xff]
    %v2070 = vld [vmem:[#allocation2 + $0x940] sm:$0xff]
    %v2071 = vld [vmem:[#allocation2 + $0x948] sm:$0xff]
    %v2072 = vld [vmem:[#allocation2 + $0x950] sm:$0xff]
    %v2073 = vld [vmem:[#allocation2 + $0x958] sm:$0xff]
    %v2074 = vld [vmem:[#allocation2 + $0x960] sm:$0xff]
    %v2075 = vld [vmem:[#allocation2 + $0x968] sm:$0xff]
    %v2076 = vld [vmem:[#allocation2 + $0x970] sm:$0xff]
    %v2077 = vld [vmem:[#allocation2 + $0x978] sm:$0xff]
    %v2078 = vld [vmem:[#allocation2 + $0x980] sm:$0xff]
    %v2079 = vld [vmem:[#allocation2 + $0x988] sm:$0xff]
    %v2080 = vld [vmem:[#allocation2 + $0x990] sm:$0xff]
    %v2081 = vld [vmem:[#allocation2 + $0x998] sm:$0xff]
    %v2082 = vld [vmem:[#allocation2 + $0x9a0] sm:$0xff]
    %v2083 = vld [vmem:[#allocation2 + $0x9a8] sm:$0xff]
    %v2084 = vld [vmem:[#allocation2 + $0x9b0] sm:$0xff]
    %v2085 = vld [vmem:[#allocation2 + $0x9b8] sm:$0xff]
    %v2086 = vld [vmem:[#allocation2 + $0x9c0] sm:$0xff]
    %v2087 = vld [vmem:[#allocation2 + $0x9c8] sm:$0xff]
    %v2088 = vld [vmem:[#allocation2 + $0x9d0] sm:$0xff]
    %v2089 = vld [vmem:[#allocation2 + $0x9d8] sm:$0xff]
    %v2090 = vld [vmem:[#allocation2 + $0x9e0] sm:$0xff]
    %v2091 = vld [vmem:[#allocation2 + $0x9e8] sm:$0xff]
    %v2092 = vld [vmem:[#allocation2 + $0x9f0] sm:$0xff]
    %v2093 = vld [vmem:[#allocation2 + $0x9f8] sm:$0xff]
    %v2094 = vld [vmem:[#allocation2 + $0xa00] sm:$0xff]
    %v2095 = vld [vmem:[#allocation2 + $0xa08] sm:$0xff]
    %v2096 = vld [vmem:[#allocation2 + $0xa10] sm:$0xff]
    %v2097 = vld [vmem:[#allocation2 + $0xa18] sm:$0xff]
    %v2098 = vld [vmem:[#allocation2 + $0xa20] sm:$0xff]
    %v2099 = vld [vmem:[#allocation2 + $0xa28] sm:$0xff]
    %v2100 = vld [vmem:[#allocation2 + $0xa30] sm:$0xff]
    %v2101 = vld [vmem:[#allocation2 + $0xa38] sm:$0xff]
    %v2102 = vld [vmem:[#allocation2 + $0xa40] sm:$0xff]
    %v2103 = vld [vmem:[#allocation2 + $0xa48] sm:$0xff]
    %v2104 = vld [vmem:[#allocation2 + $0xa50] sm:$0xff]
    %v2105 = vld [vmem:[#allocation2 + $0xa58] sm:$0xff]
    %v2106 = vld [vmem:[#allocation2 + $0xa60] sm:$0xff]
    %v2107 = vld [vmem:[#allocation2 + $0xa68] sm:$0xff]
    %v2108 = vld [vmem:[#allocation2 + $0xa70] sm:$0xff]
    %v2109 = vld [vmem:[#allocation2 + $0xa78] sm:$0xff]
    %v2110 = vld [vmem:[#allocation2 + $0xa80] sm:$0xff]
    %v2111 = vld [vmem:[#allocation2 + $0xa88] sm:$0xff]
    %v2112 = vld [vmem:[#allocation2 + $0xa90] sm:$0xff]
    %v2113 = vld [vmem:[#allocation2 + $0xa98] sm:$0xff]
    %v2114 = vld [vmem:[#allocation2 + $0xaa0] sm:$0xff]
    %v2115 = vld [vmem:[#allocation2 + $0xaa8] sm:$0xff]
    %v2116 = vld [vmem:[#allocation2 + $0xab0] sm:$0xff]
    %v2117 = vld [vmem:[#allocation2 + $0xab8] sm:$0xff]
    %v2118 = vld [vmem:[#allocation2 + $0xac0] sm:$0xff]
    %v2119 = vld [vmem:[#allocation2 + $0xac8] sm:$0xff]
    %v2120 = vld [vmem:[#allocation2 + $0xad0] sm:$0xff]
    %v2121 = vld [vmem:[#allocation2 + $0xad8] sm:$0xff]
    %v2122 = vld [vmem:[#allocation2 + $0xae0] sm:$0xff]
    %v2123 = vld [vmem:[#allocation2 + $0xae8] sm:$0xff]
    %v2124 = vld [vmem:[#allocation2 + $0xaf0] sm:$0xff]
    %v2125 = vld [vmem:[#allocation2 + $0xaf8] sm:$0xff]
    %v2126 = vld [vmem:[#allocation2 + $0xb00] sm:$0xff]
    %v2127 = vld [vmem:[#allocation2 + $0xb08] sm:$0xff]
    %v2128 = vld [vmem:[#allocation2 + $0xb10] sm:$0xff]
    %v2129 = vld [vmem:[#allocation2 + $0xb18] sm:$0xff]
    %v2130 = vld [vmem:[#allocation2 + $0xb20] sm:$0xff]
    %v2131 = vld [vmem:[#allocation2 + $0xb28] sm:$0xff]
    %v2132 = vld [vmem:[#allocation2 + $0xb30] sm:$0xff]
    %v2133 = vld [vmem:[#allocation2 + $0xb38] sm:$0xff]
    %v2134 = vld [vmem:[#allocation2 + $0xb40] sm:$0xff]
    %v2135 = vld [vmem:[#allocation2 + $0xb48] sm:$0xff]
    %v2136 = vld [vmem:[#allocation2 + $0xb50] sm:$0xff]
    %v2137 = vld [vmem:[#allocation2 + $0xb58] sm:$0xff]
    %v2138 = vld [vmem:[#allocation2 + $0xb60] sm:$0xff]
    %v2139 = vld [vmem:[#allocation2 + $0xb68] sm:$0xff]
    %v2140 = vld [vmem:[#allocation2 + $0xb70] sm:$0xff]
    %v2141 = vld [vmem:[#allocation2 + $0xb78] sm:$0xff]
    %v2142 = vld [vmem:[#allocation2 + $0xb80] sm:$0xff]
    %v2143 = vld [vmem:[#allocation2 + $0xb88] sm:$0xff]
    %v2144 = vld [vmem:[#allocation2 + $0xb90] sm:$0xff]
    %v2145 = vld [vmem:[#allocation2 + $0xb98] sm:$0xff]
    %v2146 = vld [vmem:[#allocation2 + $0xba0] sm:$0xff]
    %v2147 = vld [vmem:[#allocation2 + $0xba8] sm:$0xff]
    %v2148 = vld [vmem:[#allocation2 + $0xbb0] sm:$0xff]
    %v2149 = vld [vmem:[#allocation2 + $0xbb8] sm:$0xff]
    %v2150 = vld [vmem:[#allocation2 + $0xbc0] sm:$0xff]
    %v2151 = vld [vmem:[#allocation2 + $0xbc8] sm:$0xff]
    %v2152 = vld [vmem:[#allocation2 + $0xbd0] sm:$0xff]
    %v2153 = vld [vmem:[#allocation2 + $0xbd8] sm:$0xff]
    %v2154 = vld [vmem:[#allocation2 + $0xbe0] sm:$0xff]
    %v2155 = vld [vmem:[#allocation2 + $0xbe8] sm:$0xff]
    %v2156 = vld [vmem:[#allocation2 + $0xbf0] sm:$0xff]
    %v2157 = vld [vmem:[#allocation2 + $0xbf8] sm:$0xff]
    %v2158 = vpack.c.bf16 %v2060, %v2060
    %v2159 = vpack.c.bf16 %v2061, %v2061
    %2160 = vmatprep.subr.bf16.mxu0 %v2063
    %2161 = vmatpush1.bf16.msra.mxu0 %v2062
    %2162 = vmatprep.subr.bf16.mxu0 %v2069
    %2163 = vmatpush1.bf16.msra.mxu0 %v2068
    %2164 = vmatprep.subr.bf16.mxu0 %v2075
    %2165 = vmatpush1.bf16.msra.mxu0 %v2074
    %2166 = vmatprep.subr.bf16.mxu0 %v2081
    %2167 = vmatpush1.bf16.msra.mxu0 %v2080
    %2168 = vmatprep.subr.bf16.mxu0 %v2087
    %2169 = vmatpush1.bf16.msra.mxu0 %v2086
    %2170 = vmatprep.subr.bf16.mxu0 %v2093
    %2171 = vmatpush1.bf16.msra.mxu0 %v2092
    %2172 = vmatprep.subr.bf16.mxu0 %v2099
    %2173 = vmatpush1.bf16.msra.mxu0 %v2098
    %2174 = vmatprep.subr.bf16.mxu0 %v2105
    %2175 = vmatpush1.bf16.msra.mxu0 %v2104
    %2176 = vmatprep.subr.bf16.mxu0 %v2111
    %2177 = vmatpush1.bf16.msra.mxu0 %v2110
    %2178 = vmatprep.subr.bf16.mxu0 %v2117
    %2179 = vmatpush1.bf16.msra.mxu0 %v2116
    %2180 = vmatprep.subr.bf16.mxu0 %v2123
    %2181 = vmatpush1.bf16.msra.mxu0 %v2122
    %2182 = vmatprep.subr.bf16.mxu0 %v2129
    %2183 = vmatpush1.bf16.msra.mxu0 %v2128
    %2184 = vmatprep.subr.bf16.mxu0 %v2135
    %2185 = vmatpush1.bf16.msra.mxu0 %v2134
    %2186 = vmatprep.subr.bf16.mxu0 %v2141
    %2187 = vmatpush1.bf16.msra.mxu0 %v2140
    %2188 = vmatprep.subr.bf16.mxu0 %v2147
    %2189 = vmatpush1.bf16.msra.mxu0 %v2146
    %2190 = vmatprep.subr.bf16.mxu0 %v2153
    %2191 = vmatpush1.bf16.msra.mxu0 %v2152
    %2192 = vmatprep.mubr.bf16.mxu0 %v2159
    %2193 = vmatmul.mubr.bf16.gmra.mrb[0].mxu0 %v2158
    %v2194 = vpop.f32.mrb[0].mxu0
    %v2195 = vadd.f32 0.0, %v2194
    %v2196 = vpop.f32.mrb[0].mxu0
    %v2197 = vadd.f32 0.0, %v2196
    %v2198 = vpop.f32.mrb[0].mxu0
    %v2199 = vpop.f32.mrb[0].mxu0
    %2200 = vdwg.mxu0
    %2201 = vmatprep.subr.bf16.mxu0 %v2065
    %2202 = vmatpush1.bf16.msra.mxu0 %v2064
    %2203 = vmatprep.subr.bf16.mxu0 %v2071
    %2204 = vmatpush1.bf16.msra.mxu0 %v2070
    %2205 = vmatprep.subr.bf16.mxu0 %v2077
    %2206 = vmatpush1.bf16.msra.mxu0 %v2076
    %2207 = vmatprep.subr.bf16.mxu0 %v2083
    %2208 = vmatpush1.bf16.msra.mxu0 %v2082
    %2209 = vmatprep.subr.bf16.mxu0 %v2089
    %2210 = vmatpush1.bf16.msra.mxu0 %v2088
    %2211 = vmatprep.subr.bf16.mxu0 %v2095
    %2212 = vmatpush1.bf16.msra.mxu0 %v2094
    %2213 = vmatprep.subr.bf16.mxu0 %v2101
    %2214 = vmatpush1.bf16.msra.mxu0 %v2100
    %2215 = vmatprep.subr.bf16.mxu0 %v2107
    %2216 = vmatpush1.bf16.msra.mxu0 %v2106
    %2217 = vmatprep.subr.bf16.mxu0 %v2113
    %2218 = vmatpush1.bf16.msra.mxu0 %v2112
    %2219 = vmatprep.subr.bf16.mxu0 %v2119
    %2220 = vmatpush1.bf16.msra.mxu0 %v2118
    %2221 = vmatprep.subr.bf16.mxu0 %v2125
    %2222 = vmatpush1.bf16.msra.mxu0 %v2124
    %2223 = vmatprep.subr.bf16.mxu0 %v2131
    %2224 = vmatpush1.bf16.msra.mxu0 %v2130
    %2225 = vmatprep.subr.bf16.mxu0 %v2137
    %2226 = vmatpush1.bf16.msra.mxu0 %v2136
    %2227 = vmatprep.subr.bf16.mxu0 %v2143
    %2228 = vmatpush1.bf16.msra.mxu0 %v2142
    %2229 = vmatprep.subr.bf16.mxu0 %v2149
    %2230 = vmatpush1.bf16.msra.mxu0 %v2148
    %2231 = vmatprep.subr.bf16.mxu0 %v2155
    %2232 = vmatpush1.bf16.msra.mxu0 %v2154
    %2233 = vmatprep.mubr.bf16.mxu0 %v2159
    %2234 = vmatmul.mubr.bf16.gmra.mrb[0].mxu0 %v2158
    %v2235 = vpop.f32.mrb[0].mxu0
    %v2236 = vadd.f32 0.0, %v2235
    %v2237 = vpop.f32.mrb[0].mxu0
    %v2238 = vadd.f32 0.0, %v2237
    %v2239 = vpop.f32.mrb[0].mxu0
    %v2240 = vpop.f32.mrb[0].mxu0
    %2241 = vdwg.mxu0
    %2242 = vmatprep.subr.bf16.mxu0 %v2067
    %2243 = vmatpush1.bf16.msra.mxu0 %v2066
    %2244 = vmatprep.subr.bf16.mxu0 %v2073
    %2245 = vmatpush1.bf16.msra.mxu0 %v2072
    %2246 = vmatprep.subr.bf16.mxu0 %v2079
    %2247 = vmatpush1.bf16.msra.mxu0 %v2078
    %2248 = vmatprep.subr.bf16.mxu0 %v2085
    %2249 = vmatpush1.bf16.msra.mxu0 %v2084
    %2250 = vmatprep.subr.bf16.mxu0 %v2091
    %2251 = vmatpush1.bf16.msra.mxu0 %v2090
    %2252 = vmatprep.subr.bf16.mxu0 %v2097
    %2253 = vmatpush1.bf16.msra.mxu0 %v2096
    %2254 = vmatprep.subr.bf16.mxu0 %v2103
    %2255 = vmatpush1.bf16.msra.mxu0 %v2102
    %2256 = vmatprep.subr.bf16.mxu0 %v2109
    %2257 = vmatpush1.bf16.msra.mxu0 %v2108
    %2258 = vmatprep.subr.bf16.mxu0 %v2115
    %2259 = vmatpush1.bf16.msra.mxu0 %v2114
    %2260 = vmatprep.subr.bf16.mxu0 %v2121
    %2261 = vmatpush1.bf16.msra.mxu0 %v2120
    %2262 = vmatprep.subr.bf16.mxu0 %v2127
    %2263 = vmatpush1.bf16.msra.mxu0 %v2126
    %2264 = vmatprep.subr.bf16.mxu0 %v2133
    %2265 = vmatpush1.bf16.msra.mxu0 %v2132
    %2266 = vmatprep.subr.bf16.mxu0 %v2139
    %2267 = vmatpush1.bf16.msra.mxu0 %v2138
    %2268 = vmatprep.subr.bf16.mxu0 %v2145
    %2269 = vmatpush1.bf16.msra.mxu0 %v2144
    %2270 = vmatprep.subr.bf16.mxu0 %v2151
    %2271 = vmatpush1.bf16.msra.mxu0 %v2150
    %2272 = vmatprep.subr.bf16.mxu0 %v2157
    %2273 = vmatpush1.bf16.msra.mxu0 %v2156
    %2274 = vmatprep.mubr.bf16.mxu0 %v2159
    %2275 = vmatmul.mubr.bf16.gmra.mrb[0].mxu0 %v2158
    %v2276 = vpop.f32.mrb[0].mxu0
    %v2277 = vadd.f32 0.0, %v2276
    %v2278 = vpop.f32.mrb[0].mxu0
    %v2279 = vadd.f32 0.0, %v2278
    %v2280 = vpop.f32.mrb[0].mxu0
    %v2281 = vpop.f32.mrb[0].mxu0
    %2282 = vdwg.mxu0
    %v2283 = vadd.f32 %v2035, %v2195
    %v2284 = vadd.f32 %v2036, %v2197
    %v2285 = vadd.f32 %v2037, %v2236
    %v2286 = vadd.f32 %v2038, %v2238
    %v2287 = vadd.f32 %v2039, %v2277
    %v2288 = vadd.f32 %v2040, %v2279
    %v2289 = vsel %vm1333, %v1336, 0.0
    %v2290 = vsel %vm1333, %v1337, 0.0
    %v2291 = vsel %vm1333, %v1329, 0.0
    %v2292 = vsel %vm1333, %v1330, 0.0
    %v2295 = vrot.slane %v2291, 4
    %v2296 = vrot.slane %v2292, 4
    %v2299 = vsel %vm1348, %v2289, %v2295
    %v2300 = vsel %vm1348, %v2290, %v2296
    %v2301 = vld [vmem:[#allocation2 + $0xc00] sm:$0xff]
    %v2302 = vld [vmem:[#allocation2 + $0xc08] sm:$0xff]
    %v2303 = vld [vmem:[#allocation2 + $0xc10] sm:$0xff]
    %v2304 = vld [vmem:[#allocation2 + $0xc18] sm:$0xff]
    %v2305 = vld [vmem:[#allocation2 + $0xc20] sm:$0xff]
    %v2306 = vld [vmem:[#allocation2 + $0xc28] sm:$0xff]
    %v2307 = vld [vmem:[#allocation2 + $0xc30] sm:$0xff]
    %v2308 = vld [vmem:[#allocation2 + $0xc38] sm:$0xff]
    %v2309 = vld [vmem:[#allocation2 + $0xc40] sm:$0xff]
    %v2310 = vld [vmem:[#allocation2 + $0xc48] sm:$0xff]
    %v2311 = vld [vmem:[#allocation2 + $0xc50] sm:$0xff]
    %v2312 = vld [vmem:[#allocation2 + $0xc58] sm:$0xff]
    %v2313 = vld [vmem:[#allocation2 + $0xc60] sm:$0xff]
    %v2314 = vld [vmem:[#allocation2 + $0xc68] sm:$0xff]
    %v2315 = vld [vmem:[#allocation2 + $0xc70] sm:$0xff]
    %v2316 = vld [vmem:[#allocation2 + $0xc78] sm:$0xff]
    %v2317 = vld [vmem:[#allocation2 + $0xc80] sm:$0xff]
    %v2318 = vld [vmem:[#allocation2 + $0xc88] sm:$0xff]
    %v2319 = vld [vmem:[#allocation2 + $0xc90] sm:$0xff]
    %v2320 = vld [vmem:[#allocation2 + $0xc98] sm:$0xff]
    %v2321 = vld [vmem:[#allocation2 + $0xca0] sm:$0xff]
    %v2322 = vld [vmem:[#allocation2 + $0xca8] sm:$0xff]
    %v2323 = vld [vmem:[#allocation2 + $0xcb0] sm:$0xff]
    %v2324 = vld [vmem:[#allocation2 + $0xcb8] sm:$0xff]
    %v2325 = vld [vmem:[#allocation2 + $0xcc0] sm:$0xff]
    %v2326 = vld [vmem:[#allocation2 + $0xcc8] sm:$0xff]
    %v2327 = vld [vmem:[#allocation2 + $0xcd0] sm:$0xff]
    %v2328 = vld [vmem:[#allocation2 + $0xcd8] sm:$0xff]
    %v2329 = vld [vmem:[#allocation2 + $0xce0] sm:$0xff]
    %v2330 = vld [vmem:[#allocation2 + $0xce8] sm:$0xff]
    %v2331 = vld [vmem:[#allocation2 + $0xcf0] sm:$0xff]
    %v2332 = vld [vmem:[#allocation2 + $0xcf8] sm:$0xff]
    %v2333 = vld [vmem:[#allocation2 + $0xd00] sm:$0xff]
    %v2334 = vld [vmem:[#allocation2 + $0xd08] sm:$0xff]
    %v2335 = vld [vmem:[#allocation2 + $0xd10] sm:$0xff]
    %v2336 = vld [vmem:[#allocation2 + $0xd18] sm:$0xff]
    %v2337 = vld [vmem:[#allocation2 + $0xd20] sm:$0xff]
    %v2338 = vld [vmem:[#allocation2 + $0xd28] sm:$0xff]
    %v2339 = vld [vmem:[#allocation2 + $0xd30] sm:$0xff]
    %v2340 = vld [vmem:[#allocation2 + $0xd38] sm:$0xff]
    %v2341 = vld [vmem:[#allocation2 + $0xd40] sm:$0xff]
    %v2342 = vld [vmem:[#allocation2 + $0xd48] sm:$0xff]
    %v2343 = vld [vmem:[#allocation2 + $0xd50] sm:$0xff]
    %v2344 = vld [vmem:[#allocation2 + $0xd58] sm:$0xff]
    %v2345 = vld [vmem:[#allocation2 + $0xd60] sm:$0xff]
    %v2346 = vld [vmem:[#allocation2 + $0xd68] sm:$0xff]
    %v2347 = vld [vmem:[#allocation2 + $0xd70] sm:$0xff]
    %v2348 = vld [vmem:[#allocation2 + $0xd78] sm:$0xff]
    %v2349 = vld [vmem:[#allocation2 + $0xd80] sm:$0xff]
    %v2350 = vld [vmem:[#allocation2 + $0xd88] sm:$0xff]
    %v2351 = vld [vmem:[#allocation2 + $0xd90] sm:$0xff]
    %v2352 = vld [vmem:[#allocation2 + $0xd98] sm:$0xff]
    %v2353 = vld [vmem:[#allocation2 + $0xda0] sm:$0xff]
    %v2354 = vld [vmem:[#allocation2 + $0xda8] sm:$0xff]
    %v2355 = vld [vmem:[#allocation2 + $0xdb0] sm:$0xff]
    %v2356 = vld [vmem:[#allocation2 + $0xdb8] sm:$0xff]
    %v2357 = vld [vmem:[#allocation2 + $0xdc0] sm:$0xff]
    %v2358 = vld [vmem:[#allocation2 + $0xdc8] sm:$0xff]
    %v2359 = vld [vmem:[#allocation2 + $0xdd0] sm:$0xff]
    %v2360 = vld [vmem:[#allocation2 + $0xdd8] sm:$0xff]
    %v2361 = vld [vmem:[#allocation2 + $0xde0] sm:$0xff]
    %v2362 = vld [vmem:[#allocation2 + $0xde8] sm:$0xff]
    %v2363 = vld [vmem:[#allocation2 + $0xdf0] sm:$0xff]
    %v2364 = vld [vmem:[#allocation2 + $0xdf8] sm:$0xff]
    %v2365 = vld [vmem:[#allocation2 + $0xe00] sm:$0xff]
    %v2366 = vld [vmem:[#allocation2 + $0xe08] sm:$0xff]
    %v2367 = vld [vmem:[#allocation2 + $0xe10] sm:$0xff]
    %v2368 = vld [vmem:[#allocation2 + $0xe18] sm:$0xff]
    %v2369 = vld [vmem:[#allocation2 + $0xe20] sm:$0xff]
    %v2370 = vld [vmem:[#allocation2 + $0xe28] sm:$0xff]
    %v2371 = vld [vmem:[#allocation2 + $0xe30] sm:$0xff]
    %v2372 = vld [vmem:[#allocation2 + $0xe38] sm:$0xff]
    %v2373 = vld [vmem:[#allocation2 + $0xe40] sm:$0xff]
    %v2374 = vld [vmem:[#allocation2 + $0xe48] sm:$0xff]
    %v2375 = vld [vmem:[#allocation2 + $0xe50] sm:$0xff]
    %v2376 = vld [vmem:[#allocation2 + $0xe58] sm:$0xff]
    %v2377 = vld [vmem:[#allocation2 + $0xe60] sm:$0xff]
    %v2378 = vld [vmem:[#allocation2 + $0xe68] sm:$0xff]
    %v2379 = vld [vmem:[#allocation2 + $0xe70] sm:$0xff]
    %v2380 = vld [vmem:[#allocation2 + $0xe78] sm:$0xff]
    %v2381 = vld [vmem:[#allocation2 + $0xe80] sm:$0xff]
    %v2382 = vld [vmem:[#allocation2 + $0xe88] sm:$0xff]
    %v2383 = vld [vmem:[#allocation2 + $0xe90] sm:$0xff]
    %v2384 = vld [vmem:[#allocation2 + $0xe98] sm:$0xff]
    %v2385 = vld [vmem:[#allocation2 + $0xea0] sm:$0xff]
    %v2386 = vld [vmem:[#allocation2 + $0xea8] sm:$0xff]
    %v2387 = vld [vmem:[#allocation2 + $0xeb0] sm:$0xff]
    %v2388 = vld [vmem:[#allocation2 + $0xeb8] sm:$0xff]
    %v2389 = vld [vmem:[#allocation2 + $0xec0] sm:$0xff]
    %v2390 = vld [vmem:[#allocation2 + $0xec8] sm:$0xff]
    %v2391 = vld [vmem:[#allocation2 + $0xed0] sm:$0xff]
    %v2392 = vld [vmem:[#allocation2 + $0xed8] sm:$0xff]
    %v2393 = vld [vmem:[#allocation2 + $0xee0] sm:$0xff]
    %v2394 = vld [vmem:[#allocation2 + $0xee8] sm:$0xff]
    %v2395 = vld [vmem:[#allocation2 + $0xef0] sm:$0xff]
    %v2396 = vld [vmem:[#allocation2 + $0xef8] sm:$0xff]
    %v2397 = vpack.c.bf16 %v2299, %v2299
    %v2398 = vpack.c.bf16 %v2300, %v2300
    %2399 = vmatprep.subr.bf16.mxu0 %v2302
    %2400 = vmatpush1.bf16.msra.mxu0 %v2301
    %2401 = vmatprep.subr.bf16.mxu0 %v2308
    %2402 = vmatpush1.bf16.msra.mxu0 %v2307
    %2403 = vmatprep.subr.bf16.mxu0 %v2314
    %2404 = vmatpush1.bf16.msra.mxu0 %v2313
    %2405 = vmatprep.subr.bf16.mxu0 %v2320
    %2406 = vmatpush1.bf16.msra.mxu0 %v2319
    %2407 = vmatprep.subr.bf16.mxu0 %v2326
    %2408 = vmatpush1.bf16.msra.mxu0 %v2325
    %2409 = vmatprep.subr.bf16.mxu0 %v2332
    %2410 = vmatpush1.bf16.msra.mxu0 %v2331
    %2411 = vmatprep.subr.bf16.mxu0 %v2338
    %2412 = vmatpush1.bf16.msra.mxu0 %v2337
    %2413 = vmatprep.subr.bf16.mxu0 %v2344
    %2414 = vmatpush1.bf16.msra.mxu0 %v2343
    %2415 = vmatprep.subr.bf16.mxu0 %v2350
    %2416 = vmatpush1.bf16.msra.mxu0 %v2349
    %2417 = vmatprep.subr.bf16.mxu0 %v2356
    %2418 = vmatpush1.bf16.msra.mxu0 %v2355
    %2419 = vmatprep.subr.bf16.mxu0 %v2362
    %2420 = vmatpush1.bf16.msra.mxu0 %v2361
    %2421 = vmatprep.subr.bf16.mxu0 %v2368
    %2422 = vmatpush1.bf16.msra.mxu0 %v2367
    %2423 = vmatprep.subr.bf16.mxu0 %v2374
    %2424 = vmatpush1.bf16.msra.mxu0 %v2373
    %2425 = vmatprep.subr.bf16.mxu0 %v2380
    %2426 = vmatpush1.bf16.msra.mxu0 %v2379
    %2427 = vmatprep.subr.bf16.mxu0 %v2386
    %2428 = vmatpush1.bf16.msra.mxu0 %v2385
    %2429 = vmatprep.subr.bf16.mxu0 %v2392
    %2430 = vmatpush1.bf16.msra.mxu0 %v2391
    %2431 = vmatprep.mubr.bf16.mxu0 %v2398
    %2432 = vmatmul.mubr.bf16.gmra.mrb[0].mxu0 %v2397
    %v2433 = vpop.f32.mrb[0].mxu0
    %v2434 = vadd.f32 0.0, %v2433
    %v2435 = vpop.f32.mrb[0].mxu0
    %v2436 = vadd.f32 0.0, %v2435
    %v2437 = vpop.f32.mrb[0].mxu0
    %v2438 = vpop.f32.mrb[0].mxu0
    %2439 = vdwg.mxu0
    %2440 = vmatprep.subr.bf16.mxu0 %v2304
    %2441 = vmatpush1.bf16.msra.mxu0 %v2303
    %2442 = vmatprep.subr.bf16.mxu0 %v2310
    %2443 = vmatpush1.bf16.msra.mxu0 %v2309
    %2444 = vmatprep.subr.bf16.mxu0 %v2316
    %2445 = vmatpush1.bf16.msra.mxu0 %v2315
    %2446 = vmatprep.subr.bf16.mxu0 %v2322
    %2447 = vmatpush1.bf16.msra.mxu0 %v2321
    %2448 = vmatprep.subr.bf16.mxu0 %v2328
    %2449 = vmatpush1.bf16.msra.mxu0 %v2327
    %2450 = vmatprep.subr.bf16.mxu0 %v2334
    %2451 = vmatpush1.bf16.msra.mxu0 %v2333
    %2452 = vmatprep.subr.bf16.mxu0 %v2340
    %2453 = vmatpush1.bf16.msra.mxu0 %v2339
    %2454 = vmatprep.subr.bf16.mxu0 %v2346
    %2455 = vmatpush1.bf16.msra.mxu0 %v2345
    %2456 = vmatprep.subr.bf16.mxu0 %v2352
    %2457 = vmatpush1.bf16.msra.mxu0 %v2351
    %2458 = vmatprep.subr.bf16.mxu0 %v2358
    %2459 = vmatpush1.bf16.msra.mxu0 %v2357
    %2460 = vmatprep.subr.bf16.mxu0 %v2364
    %2461 = vmatpush1.bf16.msra.mxu0 %v2363
    %2462 = vmatprep.subr.bf16.mxu0 %v2370
    %2463 = vmatpush1.bf16.msra.mxu0 %v2369
    %2464 = vmatprep.subr.bf16.mxu0 %v2376
    %2465 = vmatpush1.bf16.msra.mxu0 %v2375
    %2466 = vmatprep.subr.bf16.mxu0 %v2382
    %2467 = vmatpush1.bf16.msra.mxu0 %v2381
    %2468 = vmatprep.subr.bf16.mxu0 %v2388
    %2469 = vmatpush1.bf16.msra.mxu0 %v2387
    %2470 = vmatprep.subr.bf16.mxu0 %v2394
    %2471 = vmatpush1.bf16.msra.mxu0 %v2393
    %2472 = vmatprep.mubr.bf16.mxu0 %v2398
    %2473 = vmatmul.mubr.bf16.gmra.mrb[0].mxu0 %v2397
    %v2474 = vpop.f32.mrb[0].mxu0
    %v2475 = vadd.f32 0.0, %v2474
    %v2476 = vpop.f32.mrb[0].mxu0
    %v2477 = vadd.f32 0.0, %v2476
    %v2478 = vpop.f32.mrb[0].mxu0
    %v2479 = vpop.f32.mrb[0].mxu0
    %2480 = vdwg.mxu0
    %2481 = vmatprep.subr.bf16.mxu0 %v2306
    %2482 = vmatpush1.bf16.msra.mxu0 %v2305
    %2483 = vmatprep.subr.bf16.mxu0 %v2312
    %2484 = vmatpush1.bf16.msra.mxu0 %v2311
    %2485 = vmatprep.subr.bf16.mxu0 %v2318
    %2486 = vmatpush1.bf16.msra.mxu0 %v2317
    %2487 = vmatprep.subr.bf16.mxu0 %v2324
    %2488 = vmatpush1.bf16.msra.mxu0 %v2323
    %2489 = vmatprep.subr.bf16.mxu0 %v2330
    %2490 = vmatpush1.bf16.msra.mxu0 %v2329
    %2491 = vmatprep.subr.bf16.mxu0 %v2336
    %2492 = vmatpush1.bf16.msra.mxu0 %v2335
    %2493 = vmatprep.subr.bf16.mxu0 %v2342
    %2494 = vmatpush1.bf16.msra.mxu0 %v2341
    %2495 = vmatprep.subr.bf16.mxu0 %v2348
    %2496 = vmatpush1.bf16.msra.mxu0 %v2347
    %2497 = vmatprep.subr.bf16.mxu0 %v2354
    %2498 = vmatpush1.bf16.msra.mxu0 %v2353
    %2499 = vmatprep.subr.bf16.mxu0 %v2360
    %2500 = vmatpush1.bf16.msra.mxu0 %v2359
    %2501 = vmatprep.subr.bf16.mxu0 %v2366
    %2502 = vmatpush1.bf16.msra.mxu0 %v2365
    %2503 = vmatprep.subr.bf16.mxu0 %v2372
    %2504 = vmatpush1.bf16.msra.mxu0 %v2371
    %2505 = vmatprep.subr.bf16.mxu0 %v2378
    %2506 = vmatpush1.bf16.msra.mxu0 %v2377
    %2507 = vmatprep.subr.bf16.mxu0 %v2384
    %2508 = vmatpush1.bf16.msra.mxu0 %v2383
    %2509 = vmatprep.subr.bf16.mxu0 %v2390
    %2510 = vmatpush1.bf16.msra.mxu0 %v2389
    %2511 = vmatprep.subr.bf16.mxu0 %v2396
    %2512 = vmatpush1.bf16.msra.mxu0 %v2395
    %2513 = vmatprep.mubr.bf16.mxu0 %v2398
    %2514 = vmatmul.mubr.bf16.gmra.mrb[0].mxu0 %v2397
    %v2515 = vpop.f32.mrb[0].mxu0
    %v2516 = vadd.f32 0.0, %v2515
    %v2517 = vpop.f32.mrb[0].mxu0
    %v2518 = vadd.f32 0.0, %v2517
    %v2519 = vpop.f32.mrb[0].mxu0
    %v2520 = vpop.f32.mrb[0].mxu0
    %2521 = vdwg.mxu0
    %v2522 = vadd.f32 %v2283, %v2434
    %v2523 = vadd.f32 %v2284, %v2436
    %v2524 = vadd.f32 %v2285, %v2475
    %v2525 = vadd.f32 %v2286, %v2477
    %v2526 = vadd.f32 %v2287, %v2516
    %v2527 = vadd.f32 %v2288, %v2518
    %v2528 = vmax.f32 %v2522, %v2525
    %v2529 = vmax.f32 %v2523, %v2526
    %v2530 = vmax.f32 %v2524, %v2527
    %v2534 = vrot.slane %v2528, 1
    %v2535 = vrot.slane %v2529, 1
    %v2536 = vrot.slane %v2530, 1
    %v2540 = vmax.f32 %v2528, %v2534
    %v2541 = vmax.f32 %v2529, %v2535
    %v2542 = vmax.f32 %v2530, %v2536
    %v2546 = vrot.slane %v2540, 2
    %v2547 = vrot.slane %v2541, 2
    %v2548 = vrot.slane %v2542, 2
    %v2552 = vrot.slane %v2540, 3
    %v2553 = vrot.slane %v2541, 3
    %v2554 = vrot.slane %v2542, 3
    %v2555 = vrot.slane %v2546, 3
    %v2556 = vrot.slane %v2547, 3
    %v2557 = vrot.slane %v2548, 3
    %v2564 = vsel %vm1453, %v2540, %v2552
    %v2565 = vsel %vm1453, %v2541, %v2553
    %v2566 = vsel %vm1453, %v2542, %v2554
    %v2567 = vsel %vm1453, %v2546, %v2555
    %v2568 = vsel %vm1453, %v2547, %v2556
    %v2569 = vsel %vm1453, %v2548, %v2557
    %v2570 = vld [vmem:[#allocation12] sm:$0x3f]
    %v2572 = vlaneseq
    %v2573 = vshrl.u32 %v2572, 7
    %v2574 = vsub.s32 0, %v2573
    %v2575 = vrot.slane %v2570, %v2574
    %v2576 = vlaneseq
    %v2577 = vshrl.u32 %v2576, 7
    %v2578 = vsub.s32 1, %v2577
    %v2579 = vrot.slane %v2570, %v2578
    %v2580 = vlaneseq
    %v2581 = vshrl.u32 %v2580, 7
    %v2582 = vsub.s32 2, %v2581
    %v2583 = vrot.slane %v2570, %v2582
    %v2584 = vlaneseq
    %v2585 = vshrl.u32 %v2584, 7
    %v2586 = vsub.s32 3, %v2585
    %v2587 = vrot.slane %v2570, %v2586
    %v2588 = vlaneseq
    %v2589 = vshrl.u32 %v2588, 7
    %v2590 = vsub.s32 4, %v2589
    %v2591 = vrot.slane %v2570, %v2590
    %v2592 = vlaneseq
    %v2593 = vshrl.u32 %v2592, 7
    %v2594 = vsub.s32 5, %v2593
    %v2595 = vrot.slane %v2570, %v2594
    %v2602 = vadd.f32 %v2564, %v2575
    %v2603 = vadd.f32 %v2565, %v2579
    %v2604 = vadd.f32 %v2566, %v2583
    %v2605 = vadd.f32 %v2567, %v2587
    %v2606 = vadd.f32 %v2568, %v2591
    %v2607 = vadd.f32 %v2569, %v2595
    %v2608 = vmax.f32 %v2602, 0.0
    %v2609 = vmax.f32 %v2603, 0.0
    %v2610 = vmax.f32 %v2604, 0.0
    %v2611 = vmax.f32 %v2605, 0.0
    %v2612 = vmax.f32 %v2606, 0.0
    %v2613 = vmax.f32 %v2607, 0.0
    %s2614 = smul.u32 4, 96
    %s2615 = smul.u32 %s2614, 12
    %s2616 = sshll.u32 %s2615, 4
    %2617 = dma.done %s232, %s2616
    %v2618 = vld [vmem:[#allocation3] sm:$0xff]
    %v2619 = vld [vmem:[#allocation3 + $0x8] sm:$0xff]
    %v2620 = vld [vmem:[#allocation3 + $0x10] sm:$0xff]
    %v2621 = vld [vmem:[#allocation3 + $0x18] sm:$0xff]
    %v2622 = vld [vmem:[#allocation3 + $0x20] sm:$0xff]
    %v2623 = vld [vmem:[#allocation3 + $0x28] sm:$0xff]
    %v2624 = vld [vmem:[#allocation3 + $0x30] sm:$0xff]
    %v2625 = vld [vmem:[#allocation3 + $0x38] sm:$0xff]
    %v2626 = vld [vmem:[#allocation3 + $0x40] sm:$0xff]
    %v2627 = vld [vmem:[#allocation3 + $0x48] sm:$0xff]
    %v2628 = vld [vmem:[#allocation3 + $0x50] sm:$0xff]
    %v2629 = vld [vmem:[#allocation3 + $0x58] sm:$0xff]
    %v2630 = vld [vmem:[#allocation3 + $0x60] sm:$0xff]
    %v2631 = vld [vmem:[#allocation3 + $0x68] sm:$0xff]
    %v2632 = vld [vmem:[#allocation3 + $0x70] sm:$0xff]
    %v2633 = vld [vmem:[#allocation3 + $0x78] sm:$0xff]
    %v2634 = vld [vmem:[#allocation3 + $0x80] sm:$0xff]
    %v2635 = vld [vmem:[#allocation3 + $0x88] sm:$0xff]
    %v2636 = vld [vmem:[#allocation3 + $0x90] sm:$0xff]
    %v2637 = vld [vmem:[#allocation3 + $0x98] sm:$0xff]
    %v2638 = vld [vmem:[#allocation3 + $0xa0] sm:$0xff]
    %v2639 = vld [vmem:[#allocation3 + $0xa8] sm:$0xff]
    %v2640 = vld [vmem:[#allocation3 + $0xb0] sm:$0xff]
    %v2641 = vld [vmem:[#allocation3 + $0xb8] sm:$0xff]
    %v2642 = vld [vmem:[#allocation3 + $0xc0] sm:$0xff]
    %v2643 = vld [vmem:[#allocation3 + $0xc8] sm:$0xff]
    %v2644 = vld [vmem:[#allocation3 + $0xd0] sm:$0xff]
    %v2645 = vld [vmem:[#allocation3 + $0xd8] sm:$0xff]
    %v2646 = vld [vmem:[#allocation3 + $0xe0] sm:$0xff]
    %v2647 = vld [vmem:[#allocation3 + $0xe8] sm:$0xff]
    %v2648 = vld [vmem:[#allocation3 + $0xf0] sm:$0xff]
    %v2649 = vld [vmem:[#allocation3 + $0xf8] sm:$0xff]
    %v2650 = vld [vmem:[#allocation3 + $0x100] sm:$0xff]
    %v2651 = vld [vmem:[#allocation3 + $0x108] sm:$0xff]
    %v2652 = vld [vmem:[#allocation3 + $0x110] sm:$0xff]
    %v2653 = vld [vmem:[#allocation3 + $0x118] sm:$0xff]
    %v2654 = vld [vmem:[#allocation3 + $0x120] sm:$0xff]
    %v2655 = vld [vmem:[#allocation3 + $0x128] sm:$0xff]
    %v2656 = vld [vmem:[#allocation3 + $0x130] sm:$0xff]
    %v2657 = vld [vmem:[#allocation3 + $0x138] sm:$0xff]
    %v2658 = vld [vmem:[#allocation3 + $0x140] sm:$0xff]
    %v2659 = vld [vmem:[#allocation3 + $0x148] sm:$0xff]
    %v2660 = vld [vmem:[#allocation3 + $0x150] sm:$0xff]
    %v2661 = vld [vmem:[#allocation3 + $0x158] sm:$0xff]
    %v2662 = vld [vmem:[#allocation3 + $0x160] sm:$0xff]
    %v2663 = vld [vmem:[#allocation3 + $0x168] sm:$0xff]
    %v2664 = vld [vmem:[#allocation3 + $0x170] sm:$0xff]
    %v2665 = vld [vmem:[#allocation3 + $0x178] sm:$0xff]
    %v2666 = vld [vmem:[#allocation3 + $0x180] sm:$0xff]
    %v2667 = vld [vmem:[#allocation3 + $0x188] sm:$0xff]
    %v2668 = vld [vmem:[#allocation3 + $0x190] sm:$0xff]
    %v2669 = vld [vmem:[#allocation3 + $0x198] sm:$0xff]
    %v2670 = vld [vmem:[#allocation3 + $0x1a0] sm:$0xff]
    %v2671 = vld [vmem:[#allocation3 + $0x1a8] sm:$0xff]
    %v2672 = vld [vmem:[#allocation3 + $0x1b0] sm:$0xff]
    %v2673 = vld [vmem:[#allocation3 + $0x1b8] sm:$0xff]
    %v2674 = vld [vmem:[#allocation3 + $0x1c0] sm:$0xff]
    %v2675 = vld [vmem:[#allocation3 + $0x1c8] sm:$0xff]
    %v2676 = vld [vmem:[#allocation3 + $0x1d0] sm:$0xff]
    %v2677 = vld [vmem:[#allocation3 + $0x1d8] sm:$0xff]
    %v2678 = vld [vmem:[#allocation3 + $0x1e0] sm:$0xff]
    %v2679 = vld [vmem:[#allocation3 + $0x1e8] sm:$0xff]
    %v2680 = vld [vmem:[#allocation3 + $0x1f0] sm:$0xff]
    %v2681 = vld [vmem:[#allocation3 + $0x1f8] sm:$0xff]
    %v2682 = vld [vmem:[#allocation3 + $0x200] sm:$0xff]
    %v2683 = vld [vmem:[#allocation3 + $0x208] sm:$0xff]
    %v2684 = vld [vmem:[#allocation3 + $0x210] sm:$0xff]
    %v2685 = vld [vmem:[#allocation3 + $0x218] sm:$0xff]
    %v2686 = vld [vmem:[#allocation3 + $0x220] sm:$0xff]
    %v2687 = vld [vmem:[#allocation3 + $0x228] sm:$0xff]
    %v2688 = vld [vmem:[#allocation3 + $0x230] sm:$0xff]
    %v2689 = vld [vmem:[#allocation3 + $0x238] sm:$0xff]
    %v2690 = vld [vmem:[#allocation3 + $0x240] sm:$0xff]
    %v2691 = vld [vmem:[#allocation3 + $0x248] sm:$0xff]
    %v2692 = vld [vmem:[#allocation3 + $0x250] sm:$0xff]
    %v2693 = vld [vmem:[#allocation3 + $0x258] sm:$0xff]
    %v2694 = vld [vmem:[#allocation3 + $0x260] sm:$0xff]
    %v2695 = vld [vmem:[#allocation3 + $0x268] sm:$0xff]
    %v2696 = vld [vmem:[#allocation3 + $0x270] sm:$0xff]
    %v2697 = vld [vmem:[#allocation3 + $0x278] sm:$0xff]
    %v2698 = vld [vmem:[#allocation3 + $0x280] sm:$0xff]
    %v2699 = vld [vmem:[#allocation3 + $0x288] sm:$0xff]
    %v2700 = vld [vmem:[#allocation3 + $0x290] sm:$0xff]
    %v2701 = vld [vmem:[#allocation3 + $0x298] sm:$0xff]
    %v2702 = vld [vmem:[#allocation3 + $0x2a0] sm:$0xff]
    %v2703 = vld [vmem:[#allocation3 + $0x2a8] sm:$0xff]
    %v2704 = vld [vmem:[#allocation3 + $0x2b0] sm:$0xff]
    %v2705 = vld [vmem:[#allocation3 + $0x2b8] sm:$0xff]
    %v2706 = vld [vmem:[#allocation3 + $0x2c0] sm:$0xff]
    %v2707 = vld [vmem:[#allocation3 + $0x2c8] sm:$0xff]
    %v2708 = vld [vmem:[#allocation3 + $0x2d0] sm:$0xff]
    %v2709 = vld [vmem:[#allocation3 + $0x2d8] sm:$0xff]
    %v2710 = vld [vmem:[#allocation3 + $0x2e0] sm:$0xff]
    %v2711 = vld [vmem:[#allocation3 + $0x2e8] sm:$0xff]
    %v2712 = vld [vmem:[#allocation3 + $0x2f0] sm:$0xff]
    %v2713 = vld [vmem:[#allocation3 + $0x2f8] sm:$0xff]
    %v2714 = vld [vmem:[#allocation3 + $0x300] sm:$0xff]
    %v2715 = vld [vmem:[#allocation3 + $0x308] sm:$0xff]
    %v2716 = vld [vmem:[#allocation3 + $0x310] sm:$0xff]
    %v2717 = vld [vmem:[#allocation3 + $0x318] sm:$0xff]
    %v2718 = vld [vmem:[#allocation3 + $0x320] sm:$0xff]
    %v2719 = vld [vmem:[#allocation3 + $0x328] sm:$0xff]
    %v2720 = vld [vmem:[#allocation3 + $0x330] sm:$0xff]
    %v2721 = vld [vmem:[#allocation3 + $0x338] sm:$0xff]
    %v2722 = vld [vmem:[#allocation3 + $0x340] sm:$0xff]
    %v2723 = vld [vmem:[#allocation3 + $0x348] sm:$0xff]
    %v2724 = vld [vmem:[#allocation3 + $0x350] sm:$0xff]
    %v2725 = vld [vmem:[#allocation3 + $0x358] sm:$0xff]
    %v2726 = vld [vmem:[#allocation3 + $0x360] sm:$0xff]
    %v2727 = vld [vmem:[#allocation3 + $0x368] sm:$0xff]
    %v2728 = vld [vmem:[#allocation3 + $0x370] sm:$0xff]
    %v2729 = vld [vmem:[#allocation3 + $0x378] sm:$0xff]
    %v2730 = vld [vmem:[#allocation3 + $0x380] sm:$0xff]
    %v2731 = vld [vmem:[#allocation3 + $0x388] sm:$0xff]
    %v2732 = vld [vmem:[#allocation3 + $0x390] sm:$0xff]
    %v2733 = vld [vmem:[#allocation3 + $0x398] sm:$0xff]
    %v2734 = vld [vmem:[#allocation3 + $0x3a0] sm:$0xff]
    %v2735 = vld [vmem:[#allocation3 + $0x3a8] sm:$0xff]
    %v2736 = vld [vmem:[#allocation3 + $0x3b0] sm:$0xff]
    %v2737 = vld [vmem:[#allocation3 + $0x3b8] sm:$0xff]
    %v2738 = vld [vmem:[#allocation3 + $0x3c0] sm:$0xff]
    %v2739 = vld [vmem:[#allocation3 + $0x3c8] sm:$0xff]
    %v2740 = vld [vmem:[#allocation3 + $0x3d0] sm:$0xff]
    %v2741 = vld [vmem:[#allocation3 + $0x3d8] sm:$0xff]
    %v2742 = vld [vmem:[#allocation3 + $0x3e0] sm:$0xff]
    %v2743 = vld [vmem:[#allocation3 + $0x3e8] sm:$0xff]
    %v2744 = vld [vmem:[#allocation3 + $0x3f0] sm:$0xff]
    %v2745 = vld [vmem:[#allocation3 + $0x3f8] sm:$0xff]
    %v2746 = vld [vmem:[#allocation3 + $0x400] sm:$0xff]
    %v2747 = vld [vmem:[#allocation3 + $0x408] sm:$0xff]
    %v2748 = vld [vmem:[#allocation3 + $0x410] sm:$0xff]
    %v2749 = vld [vmem:[#allocation3 + $0x418] sm:$0xff]
    %v2750 = vld [vmem:[#allocation3 + $0x420] sm:$0xff]
    %v2751 = vld [vmem:[#allocation3 + $0x428] sm:$0xff]
    %v2752 = vld [vmem:[#allocation3 + $0x430] sm:$0xff]
    %v2753 = vld [vmem:[#allocation3 + $0x438] sm:$0xff]
    %v2754 = vld [vmem:[#allocation3 + $0x440] sm:$0xff]
    %v2755 = vld [vmem:[#allocation3 + $0x448] sm:$0xff]
    %v2756 = vld [vmem:[#allocation3 + $0x450] sm:$0xff]
    %v2757 = vld [vmem:[#allocation3 + $0x458] sm:$0xff]
    %v2758 = vld [vmem:[#allocation3 + $0x460] sm:$0xff]
    %v2759 = vld [vmem:[#allocation3 + $0x468] sm:$0xff]
    %v2760 = vld [vmem:[#allocation3 + $0x470] sm:$0xff]
    %v2761 = vld [vmem:[#allocation3 + $0x478] sm:$0xff]
    %v2762 = vld [vmem:[#allocation3 + $0x480] sm:$0xff]
    %v2763 = vld [vmem:[#allocation3 + $0x488] sm:$0xff]
    %v2764 = vld [vmem:[#allocation3 + $0x490] sm:$0xff]
    %v2765 = vld [vmem:[#allocation3 + $0x498] sm:$0xff]
    %v2766 = vld [vmem:[#allocation3 + $0x4a0] sm:$0xff]
    %v2767 = vld [vmem:[#allocation3 + $0x4a8] sm:$0xff]
    %v2768 = vld [vmem:[#allocation3 + $0x4b0] sm:$0xff]
    %v2769 = vld [vmem:[#allocation3 + $0x4b8] sm:$0xff]
    %v2770 = vld [vmem:[#allocation3 + $0x4c0] sm:$0xff]
    %v2771 = vld [vmem:[#allocation3 + $0x4c8] sm:$0xff]
    %v2772 = vld [vmem:[#allocation3 + $0x4d0] sm:$0xff]
    %v2773 = vld [vmem:[#allocation3 + $0x4d8] sm:$0xff]
    %v2774 = vld [vmem:[#allocation3 + $0x4e0] sm:$0xff]
    %v2775 = vld [vmem:[#allocation3 + $0x4e8] sm:$0xff]
    %v2776 = vld [vmem:[#allocation3 + $0x4f0] sm:$0xff]
    %v2777 = vld [vmem:[#allocation3 + $0x4f8] sm:$0xff]
    %v2778 = vld [vmem:[#allocation3 + $0x500] sm:$0xff]
    %v2779 = vld [vmem:[#allocation3 + $0x508] sm:$0xff]
    %v2780 = vld [vmem:[#allocation3 + $0x510] sm:$0xff]
    %v2781 = vld [vmem:[#allocation3 + $0x518] sm:$0xff]
    %v2782 = vld [vmem:[#allocation3 + $0x520] sm:$0xff]
    %v2783 = vld [vmem:[#allocation3 + $0x528] sm:$0xff]
    %v2784 = vld [vmem:[#allocation3 + $0x530] sm:$0xff]
    %v2785 = vld [vmem:[#allocation3 + $0x538] sm:$0xff]
    %v2786 = vld [vmem:[#allocation3 + $0x540] sm:$0xff]
    %v2787 = vld [vmem:[#allocation3 + $0x548] sm:$0xff]
    %v2788 = vld [vmem:[#allocation3 + $0x550] sm:$0xff]
    %v2789 = vld [vmem:[#allocation3 + $0x558] sm:$0xff]
    %v2790 = vld [vmem:[#allocation3 + $0x560] sm:$0xff]
    %v2791 = vld [vmem:[#allocation3 + $0x568] sm:$0xff]
    %v2792 = vld [vmem:[#allocation3 + $0x570] sm:$0xff]
    %v2793 = vld [vmem:[#allocation3 + $0x578] sm:$0xff]
    %v2794 = vld [vmem:[#allocation3 + $0x580] sm:$0xff]
    %v2795 = vld [vmem:[#allocation3 + $0x588] sm:$0xff]
    %v2796 = vld [vmem:[#allocation3 + $0x590] sm:$0xff]
    %v2797 = vld [vmem:[#allocation3 + $0x598] sm:$0xff]
    %v2798 = vld [vmem:[#allocation3 + $0x5a0] sm:$0xff]
    %v2799 = vld [vmem:[#allocation3 + $0x5a8] sm:$0xff]
    %v2800 = vld [vmem:[#allocation3 + $0x5b0] sm:$0xff]
    %v2801 = vld [vmem:[#allocation3 + $0x5b8] sm:$0xff]
    %v2802 = vld [vmem:[#allocation3 + $0x5c0] sm:$0xff]
    %v2803 = vld [vmem:[#allocation3 + $0x5c8] sm:$0xff]
    %v2804 = vld [vmem:[#allocation3 + $0x5d0] sm:$0xff]
    %v2805 = vld [vmem:[#allocation3 + $0x5d8] sm:$0xff]
    %v2806 = vld [vmem:[#allocation3 + $0x5e0] sm:$0xff]
    %v2807 = vld [vmem:[#allocation3 + $0x5e8] sm:$0xff]
    %v2808 = vld [vmem:[#allocation3 + $0x5f0] sm:$0xff]
    %v2809 = vld [vmem:[#allocation3 + $0x5f8] sm:$0xff]
    %v2810 = vld [vmem:[#allocation3 + $0x600] sm:$0xff]
    %v2811 = vld [vmem:[#allocation3 + $0x608] sm:$0xff]
    %v2812 = vld [vmem:[#allocation3 + $0x610] sm:$0xff]
    %v2813 = vld [vmem:[#allocation3 + $0x618] sm:$0xff]
    %v2814 = vld [vmem:[#allocation3 + $0x620] sm:$0xff]
    %v2815 = vld [vmem:[#allocation3 + $0x628] sm:$0xff]
    %v2816 = vld [vmem:[#allocation3 + $0x630] sm:$0xff]
    %v2817 = vld [vmem:[#allocation3 + $0x638] sm:$0xff]
    %v2818 = vld [vmem:[#allocation3 + $0x640] sm:$0xff]
    %v2819 = vld [vmem:[#allocation3 + $0x648] sm:$0xff]
    %v2820 = vld [vmem:[#allocation3 + $0x650] sm:$0xff]
    %v2821 = vld [vmem:[#allocation3 + $0x658] sm:$0xff]
    %v2822 = vld [vmem:[#allocation3 + $0x660] sm:$0xff]
    %v2823 = vld [vmem:[#allocation3 + $0x668] sm:$0xff]
    %v2824 = vld [vmem:[#allocation3 + $0x670] sm:$0xff]
    %v2825 = vld [vmem:[#allocation3 + $0x678] sm:$0xff]
    %v2826 = vld [vmem:[#allocation3 + $0x680] sm:$0xff]
    %v2827 = vld [vmem:[#allocation3 + $0x688] sm:$0xff]
    %v2828 = vld [vmem:[#allocation3 + $0x690] sm:$0xff]
    %v2829 = vld [vmem:[#allocation3 + $0x698] sm:$0xff]
    %v2830 = vld [vmem:[#allocation3 + $0x6a0] sm:$0xff]
    %v2831 = vld [vmem:[#allocation3 + $0x6a8] sm:$0xff]
    %v2832 = vld [vmem:[#allocation3 + $0x6b0] sm:$0xff]
    %v2833 = vld [vmem:[#allocation3 + $0x6b8] sm:$0xff]
    %v2834 = vld [vmem:[#allocation3 + $0x6c0] sm:$0xff]
    %v2835 = vld [vmem:[#allocation3 + $0x6c8] sm:$0xff]
    %v2836 = vld [vmem:[#allocation3 + $0x6d0] sm:$0xff]
    %v2837 = vld [vmem:[#allocation3 + $0x6d8] sm:$0xff]
    %v2838 = vld [vmem:[#allocation3 + $0x6e0] sm:$0xff]
    %v2839 = vld [vmem:[#allocation3 + $0x6e8] sm:$0xff]
    %v2840 = vld [vmem:[#allocation3 + $0x6f0] sm:$0xff]
    %v2841 = vld [vmem:[#allocation3 + $0x6f8] sm:$0xff]
    %v2842 = vld [vmem:[#allocation3 + $0x700] sm:$0xff]
    %v2843 = vld [vmem:[#allocation3 + $0x708] sm:$0xff]
    %v2844 = vld [vmem:[#allocation3 + $0x710] sm:$0xff]
    %v2845 = vld [vmem:[#allocation3 + $0x718] sm:$0xff]
    %v2846 = vld [vmem:[#allocation3 + $0x720] sm:$0xff]
    %v2847 = vld [vmem:[#allocation3 + $0x728] sm:$0xff]
    %v2848 = vld [vmem:[#allocation3 + $0x730] sm:$0xff]
    %v2849 = vld [vmem:[#allocation3 + $0x738] sm:$0xff]
    %v2850 = vld [vmem:[#allocation3 + $0x740] sm:$0xff]
    %v2851 = vld [vmem:[#allocation3 + $0x748] sm:$0xff]
    %v2852 = vld [vmem:[#allocation3 + $0x750] sm:$0xff]
    %v2853 = vld [vmem:[#allocation3 + $0x758] sm:$0xff]
    %v2854 = vld [vmem:[#allocation3 + $0x760] sm:$0xff]
    %v2855 = vld [vmem:[#allocation3 + $0x768] sm:$0xff]
    %v2856 = vld [vmem:[#allocation3 + $0x770] sm:$0xff]
    %v2857 = vld [vmem:[#allocation3 + $0x778] sm:$0xff]
    %v2858 = vld [vmem:[#allocation3 + $0x780] sm:$0xff]
    %v2859 = vld [vmem:[#allocation3 + $0x788] sm:$0xff]
    %v2860 = vld [vmem:[#allocation3 + $0x790] sm:$0xff]
    %v2861 = vld [vmem:[#allocation3 + $0x798] sm:$0xff]
    %v2862 = vld [vmem:[#allocation3 + $0x7a0] sm:$0xff]
    %v2863 = vld [vmem:[#allocation3 + $0x7a8] sm:$0xff]
    %v2864 = vld [vmem:[#allocation3 + $0x7b0] sm:$0xff]
    %v2865 = vld [vmem:[#allocation3 + $0x7b8] sm:$0xff]
    %v2866 = vld [vmem:[#allocation3 + $0x7c0] sm:$0xff]
    %v2867 = vld [vmem:[#allocation3 + $0x7c8] sm:$0xff]
    %v2868 = vld [vmem:[#allocation3 + $0x7d0] sm:$0xff]
    %v2869 = vld [vmem:[#allocation3 + $0x7d8] sm:$0xff]
    %v2870 = vld [vmem:[#allocation3 + $0x7e0] sm:$0xff]
    %v2871 = vld [vmem:[#allocation3 + $0x7e8] sm:$0xff]
    %v2872 = vld [vmem:[#allocation3 + $0x7f0] sm:$0xff]
    %v2873 = vld [vmem:[#allocation3 + $0x7f8] sm:$0xff]
    %v2874 = vld [vmem:[#allocation3 + $0x800] sm:$0xff]
    %v2875 = vld [vmem:[#allocation3 + $0x808] sm:$0xff]
    %v2876 = vld [vmem:[#allocation3 + $0x810] sm:$0xff]
    %v2877 = vld [vmem:[#allocation3 + $0x818] sm:$0xff]
    %v2878 = vld [vmem:[#allocation3 + $0x820] sm:$0xff]
    %v2879 = vld [vmem:[#allocation3 + $0x828] sm:$0xff]
    %v2880 = vld [vmem:[#allocation3 + $0x830] sm:$0xff]
    %v2881 = vld [vmem:[#allocation3 + $0x838] sm:$0xff]
    %v2882 = vld [vmem:[#allocation3 + $0x840] sm:$0xff]
    %v2883 = vld [vmem:[#allocation3 + $0x848] sm:$0xff]
    %v2884 = vld [vmem:[#allocation3 + $0x850] sm:$0xff]
    %v2885 = vld [vmem:[#allocation3 + $0x858] sm:$0xff]
    %v2886 = vld [vmem:[#allocation3 + $0x860] sm:$0xff]
    %v2887 = vld [vmem:[#allocation3 + $0x868] sm:$0xff]
    %v2888 = vld [vmem:[#allocation3 + $0x870] sm:$0xff]
    %v2889 = vld [vmem:[#allocation3 + $0x878] sm:$0xff]
    %v2890 = vld [vmem:[#allocation3 + $0x880] sm:$0xff]
    %v2891 = vld [vmem:[#allocation3 + $0x888] sm:$0xff]
    %v2892 = vld [vmem:[#allocation3 + $0x890] sm:$0xff]
    %v2893 = vld [vmem:[#allocation3 + $0x898] sm:$0xff]
    %v2894 = vld [vmem:[#allocation3 + $0x8a0] sm:$0xff]
    %v2895 = vld [vmem:[#allocation3 + $0x8a8] sm:$0xff]
    %v2896 = vld [vmem:[#allocation3 + $0x8b0] sm:$0xff]
    %v2897 = vld [vmem:[#allocation3 + $0x8b8] sm:$0xff]
    %v2898 = vld [vmem:[#allocation3 + $0x8c0] sm:$0xff]
    %v2899 = vld [vmem:[#allocation3 + $0x8c8] sm:$0xff]
    %v2900 = vld [vmem:[#allocation3 + $0x8d0] sm:$0xff]
    %v2901 = vld [vmem:[#allocation3 + $0x8d8] sm:$0xff]
    %v2902 = vld [vmem:[#allocation3 + $0x8e0] sm:$0xff]
    %v2903 = vld [vmem:[#allocation3 + $0x8e8] sm:$0xff]
    %v2904 = vld [vmem:[#allocation3 + $0x8f0] sm:$0xff]
    %v2905 = vld [vmem:[#allocation3 + $0x8f8] sm:$0xff]
    %v2906 = vld [vmem:[#allocation3 + $0x900] sm:$0xff]
    %v2907 = vld [vmem:[#allocation3 + $0x908] sm:$0xff]
    %v2908 = vld [vmem:[#allocation3 + $0x910] sm:$0xff]
    %v2909 = vld [vmem:[#allocation3 + $0x918] sm:$0xff]
    %v2910 = vld [vmem:[#allocation3 + $0x920] sm:$0xff]
    %v2911 = vld [vmem:[#allocation3 + $0x928] sm:$0xff]
    %v2912 = vld [vmem:[#allocation3 + $0x930] sm:$0xff]
    %v2913 = vld [vmem:[#allocation3 + $0x938] sm:$0xff]
    %v2914 = vld [vmem:[#allocation3 + $0x940] sm:$0xff]
    %v2915 = vld [vmem:[#allocation3 + $0x948] sm:$0xff]
    %v2916 = vld [vmem:[#allocation3 + $0x950] sm:$0xff]
    %v2917 = vld [vmem:[#allocation3 + $0x958] sm:$0xff]
    %v2918 = vld [vmem:[#allocation3 + $0x960] sm:$0xff]
    %v2919 = vld [vmem:[#allocation3 + $0x968] sm:$0xff]
    %v2920 = vld [vmem:[#allocation3 + $0x970] sm:$0xff]
    %v2921 = vld [vmem:[#allocation3 + $0x978] sm:$0xff]
    %v2922 = vld [vmem:[#allocation3 + $0x980] sm:$0xff]
    %v2923 = vld [vmem:[#allocation3 + $0x988] sm:$0xff]
    %v2924 = vld [vmem:[#allocation3 + $0x990] sm:$0xff]
    %v2925 = vld [vmem:[#allocation3 + $0x998] sm:$0xff]
    %v2926 = vld [vmem:[#allocation3 + $0x9a0] sm:$0xff]
    %v2927 = vld [vmem:[#allocation3 + $0x9a8] sm:$0xff]
    %v2928 = vld [vmem:[#allocation3 + $0x9b0] sm:$0xff]
    %v2929 = vld [vmem:[#allocation3 + $0x9b8] sm:$0xff]
    %v2930 = vld [vmem:[#allocation3 + $0x9c0] sm:$0xff]
    %v2931 = vld [vmem:[#allocation3 + $0x9c8] sm:$0xff]
    %v2932 = vld [vmem:[#allocation3 + $0x9d0] sm:$0xff]
    %v2933 = vld [vmem:[#allocation3 + $0x9d8] sm:$0xff]
    %v2934 = vld [vmem:[#allocation3 + $0x9e0] sm:$0xff]
    %v2935 = vld [vmem:[#allocation3 + $0x9e8] sm:$0xff]
    %v2936 = vld [vmem:[#allocation3 + $0x9f0] sm:$0xff]
    %v2937 = vld [vmem:[#allocation3 + $0x9f8] sm:$0xff]
    %v2938 = vld [vmem:[#allocation3 + $0xa00] sm:$0xff]
    %v2939 = vld [vmem:[#allocation3 + $0xa08] sm:$0xff]
    %v2940 = vld [vmem:[#allocation3 + $0xa10] sm:$0xff]
    %v2941 = vld [vmem:[#allocation3 + $0xa18] sm:$0xff]
    %v2942 = vld [vmem:[#allocation3 + $0xa20] sm:$0xff]
    %v2943 = vld [vmem:[#allocation3 + $0xa28] sm:$0xff]
    %v2944 = vld [vmem:[#allocation3 + $0xa30] sm:$0xff]
    %v2945 = vld [vmem:[#allocation3 + $0xa38] sm:$0xff]
    %v2946 = vld [vmem:[#allocation3 + $0xa40] sm:$0xff]
    %v2947 = vld [vmem:[#allocation3 + $0xa48] sm:$0xff]
    %v2948 = vld [vmem:[#allocation3 + $0xa50] sm:$0xff]
    %v2949 = vld [vmem:[#allocation3 + $0xa58] sm:$0xff]
    %v2950 = vld [vmem:[#allocation3 + $0xa60] sm:$0xff]
    %v2951 = vld [vmem:[#allocation3 + $0xa68] sm:$0xff]
    %v2952 = vld [vmem:[#allocation3 + $0xa70] sm:$0xff]
    %v2953 = vld [vmem:[#allocation3 + $0xa78] sm:$0xff]
    %v2954 = vld [vmem:[#allocation3 + $0xa80] sm:$0xff]
    %v2955 = vld [vmem:[#allocation3 + $0xa88] sm:$0xff]
    %v2956 = vld [vmem:[#allocation3 + $0xa90] sm:$0xff]
    %v2957 = vld [vmem:[#allocation3 + $0xa98] sm:$0xff]
    %v2958 = vld [vmem:[#allocation3 + $0xaa0] sm:$0xff]
    %v2959 = vld [vmem:[#allocation3 + $0xaa8] sm:$0xff]
    %v2960 = vld [vmem:[#allocation3 + $0xab0] sm:$0xff]
    %v2961 = vld [vmem:[#allocation3 + $0xab8] sm:$0xff]
    %v2962 = vld [vmem:[#allocation3 + $0xac0] sm:$0xff]
    %v2963 = vld [vmem:[#allocation3 + $0xac8] sm:$0xff]
    %v2964 = vld [vmem:[#allocation3 + $0xad0] sm:$0xff]
    %v2965 = vld [vmem:[#allocation3 + $0xad8] sm:$0xff]
    %v2966 = vld [vmem:[#allocation3 + $0xae0] sm:$0xff]
    %v2967 = vld [vmem:[#allocation3 + $0xae8] sm:$0xff]
    %v2968 = vld [vmem:[#allocation3 + $0xaf0] sm:$0xff]
    %v2969 = vld [vmem:[#allocation3 + $0xaf8] sm:$0xff]
    %v2970 = vld [vmem:[#allocation3 + $0xb00] sm:$0xff]
    %v2971 = vld [vmem:[#allocation3 + $0xb08] sm:$0xff]
    %v2972 = vld [vmem:[#allocation3 + $0xb10] sm:$0xff]
    %v2973 = vld [vmem:[#allocation3 + $0xb18] sm:$0xff]
    %v2974 = vld [vmem:[#allocation3 + $0xb20] sm:$0xff]
    %v2975 = vld [vmem:[#allocation3 + $0xb28] sm:$0xff]
    %v2976 = vld [vmem:[#allocation3 + $0xb30] sm:$0xff]
    %v2977 = vld [vmem:[#allocation3 + $0xb38] sm:$0xff]
    %v2978 = vld [vmem:[#allocation3 + $0xb40] sm:$0xff]
    %v2979 = vld [vmem:[#allocation3 + $0xb48] sm:$0xff]
    %v2980 = vld [vmem:[#allocation3 + $0xb50] sm:$0xff]
    %v2981 = vld [vmem:[#allocation3 + $0xb58] sm:$0xff]
    %v2982 = vld [vmem:[#allocation3 + $0xb60] sm:$0xff]
    %v2983 = vld [vmem:[#allocation3 + $0xb68] sm:$0xff]
    %v2984 = vld [vmem:[#allocation3 + $0xb70] sm:$0xff]
    %v2985 = vld [vmem:[#allocation3 + $0xb78] sm:$0xff]
    %v2986 = vld [vmem:[#allocation3 + $0xb80] sm:$0xff]
    %v2987 = vld [vmem:[#allocation3 + $0xb88] sm:$0xff]
    %v2988 = vld [vmem:[#allocation3 + $0xb90] sm:$0xff]
    %v2989 = vld [vmem:[#allocation3 + $0xb98] sm:$0xff]
    %v2990 = vld [vmem:[#allocation3 + $0xba0] sm:$0xff]
    %v2991 = vld [vmem:[#allocation3 + $0xba8] sm:$0xff]
    %v2992 = vld [vmem:[#allocation3 + $0xbb0] sm:$0xff]
    %v2993 = vld [vmem:[#allocation3 + $0xbb8] sm:$0xff]
    %v2994 = vld [vmem:[#allocation3 + $0xbc0] sm:$0xff]
    %v2995 = vld [vmem:[#allocation3 + $0xbc8] sm:$0xff]
    %v2996 = vld [vmem:[#allocation3 + $0xbd0] sm:$0xff]
    %v2997 = vld [vmem:[#allocation3 + $0xbd8] sm:$0xff]
    %v2998 = vld [vmem:[#allocation3 + $0xbe0] sm:$0xff]
    %v2999 = vld [vmem:[#allocation3 + $0xbe8] sm:$0xff]
    %v3000 = vld [vmem:[#allocation3 + $0xbf0] sm:$0xff]
    %v3001 = vld [vmem:[#allocation3 + $0xbf8] sm:$0xff]
    %v3002 = vld [vmem:[#allocation3 + $0xc00] sm:$0xff]
    %v3003 = vld [vmem:[#allocation3 + $0xc08] sm:$0xff]
    %v3004 = vld [vmem:[#allocation3 + $0xc10] sm:$0xff]
    %v3005 = vld [vmem:[#allocation3 + $0xc18] sm:$0xff]
    %v3006 = vld [vmem:[#allocation3 + $0xc20] sm:$0xff]
    %v3007 = vld [vmem:[#allocation3 + $0xc28] sm:$0xff]
    %v3008 = vld [vmem:[#allocation3 + $0xc30] sm:$0xff]
    %v3009 = vld [vmem:[#allocation3 + $0xc38] sm:$0xff]
    %v3010 = vld [vmem:[#allocation3 + $0xc40] sm:$0xff]
    %v3011 = vld [vmem:[#allocation3 + $0xc48] sm:$0xff]
    %v3012 = vld [vmem:[#allocation3 + $0xc50] sm:$0xff]
    %v3013 = vld [vmem:[#allocation3 + $0xc58] sm:$0xff]
    %v3014 = vld [vmem:[#allocation3 + $0xc60] sm:$0xff]
    %v3015 = vld [vmem:[#allocation3 + $0xc68] sm:$0xff]
    %v3016 = vld [vmem:[#allocation3 + $0xc70] sm:$0xff]
    %v3017 = vld [vmem:[#allocation3 + $0xc78] sm:$0xff]
    %v3018 = vld [vmem:[#allocation3 + $0xc80] sm:$0xff]
    %v3019 = vld [vmem:[#allocation3 + $0xc88] sm:$0xff]
    %v3020 = vld [vmem:[#allocation3 + $0xc90] sm:$0xff]
    %v3021 = vld [vmem:[#allocation3 + $0xc98] sm:$0xff]
    %v3022 = vld [vmem:[#allocation3 + $0xca0] sm:$0xff]
    %v3023 = vld [vmem:[#allocation3 + $0xca8] sm:$0xff]
    %v3024 = vld [vmem:[#allocation3 + $0xcb0] sm:$0xff]
    %v3025 = vld [vmem:[#allocation3 + $0xcb8] sm:$0xff]
    %v3026 = vld [vmem:[#allocation3 + $0xcc0] sm:$0xff]
    %v3027 = vld [vmem:[#allocation3 + $0xcc8] sm:$0xff]
    %v3028 = vld [vmem:[#allocation3 + $0xcd0] sm:$0xff]
    %v3029 = vld [vmem:[#allocation3 + $0xcd8] sm:$0xff]
    %v3030 = vld [vmem:[#allocation3 + $0xce0] sm:$0xff]
    %v3031 = vld [vmem:[#allocation3 + $0xce8] sm:$0xff]
    %v3032 = vld [vmem:[#allocation3 + $0xcf0] sm:$0xff]
    %v3033 = vld [vmem:[#allocation3 + $0xcf8] sm:$0xff]
    %v3034 = vld [vmem:[#allocation3 + $0xd00] sm:$0xff]
    %v3035 = vld [vmem:[#allocation3 + $0xd08] sm:$0xff]
    %v3036 = vld [vmem:[#allocation3 + $0xd10] sm:$0xff]
    %v3037 = vld [vmem:[#allocation3 + $0xd18] sm:$0xff]
    %v3038 = vld [vmem:[#allocation3 + $0xd20] sm:$0xff]
    %v3039 = vld [vmem:[#allocation3 + $0xd28] sm:$0xff]
    %v3040 = vld [vmem:[#allocation3 + $0xd30] sm:$0xff]
    %v3041 = vld [vmem:[#allocation3 + $0xd38] sm:$0xff]
    %v3042 = vld [vmem:[#allocation3 + $0xd40] sm:$0xff]
    %v3043 = vld [vmem:[#allocation3 + $0xd48] sm:$0xff]
    %v3044 = vld [vmem:[#allocation3 + $0xd50] sm:$0xff]
    %v3045 = vld [vmem:[#allocation3 + $0xd58] sm:$0xff]
    %v3046 = vld [vmem:[#allocation3 + $0xd60] sm:$0xff]
    %v3047 = vld [vmem:[#allocation3 + $0xd68] sm:$0xff]
    %v3048 = vld [vmem:[#allocation3 + $0xd70] sm:$0xff]
    %v3049 = vld [vmem:[#allocation3 + $0xd78] sm:$0xff]
    %v3050 = vld [vmem:[#allocation3 + $0xd80] sm:$0xff]
    %v3051 = vld [vmem:[#allocation3 + $0xd88] sm:$0xff]
    %v3052 = vld [vmem:[#allocation3 + $0xd90] sm:$0xff]
    %v3053 = vld [vmem:[#allocation3 + $0xd98] sm:$0xff]
    %v3054 = vld [vmem:[#allocation3 + $0xda0] sm:$0xff]
    %v3055 = vld [vmem:[#allocation3 + $0xda8] sm:$0xff]
    %v3056 = vld [vmem:[#allocation3 + $0xdb0] sm:$0xff]
    %v3057 = vld [vmem:[#allocation3 + $0xdb8] sm:$0xff]
    %v3058 = vld [vmem:[#allocation3 + $0xdc0] sm:$0xff]
    %v3059 = vld [vmem:[#allocation3 + $0xdc8] sm:$0xff]
    %v3060 = vld [vmem:[#allocation3 + $0xdd0] sm:$0xff]
    %v3061 = vld [vmem:[#allocation3 + $0xdd8] sm:$0xff]
    %v3062 = vld [vmem:[#allocation3 + $0xde0] sm:$0xff]
    %v3063 = vld [vmem:[#allocation3 + $0xde8] sm:$0xff]
    %v3064 = vld [vmem:[#allocation3 + $0xdf0] sm:$0xff]
    %v3065 = vld [vmem:[#allocation3 + $0xdf8] sm:$0xff]
    %v3066 = vld [vmem:[#allocation3 + $0xe00] sm:$0xff]
    %v3067 = vld [vmem:[#allocation3 + $0xe08] sm:$0xff]
    %v3068 = vld [vmem:[#allocation3 + $0xe10] sm:$0xff]
    %v3069 = vld [vmem:[#allocation3 + $0xe18] sm:$0xff]
    %v3070 = vld [vmem:[#allocation3 + $0xe20] sm:$0xff]
    %v3071 = vld [vmem:[#allocation3 + $0xe28] sm:$0xff]
    %v3072 = vld [vmem:[#allocation3 + $0xe30] sm:$0xff]
    %v3073 = vld [vmem:[#allocation3 + $0xe38] sm:$0xff]
    %v3074 = vld [vmem:[#allocation3 + $0xe40] sm:$0xff]
    %v3075 = vld [vmem:[#allocation3 + $0xe48] sm:$0xff]
    %v3076 = vld [vmem:[#allocation3 + $0xe50] sm:$0xff]
    %v3077 = vld [vmem:[#allocation3 + $0xe58] sm:$0xff]
    %v3078 = vld [vmem:[#allocation3 + $0xe60] sm:$0xff]
    %v3079 = vld [vmem:[#allocation3 + $0xe68] sm:$0xff]
    %v3080 = vld [vmem:[#allocation3 + $0xe70] sm:$0xff]
    %v3081 = vld [vmem:[#allocation3 + $0xe78] sm:$0xff]
    %v3082 = vld [vmem:[#allocation3 + $0xe80] sm:$0xff]
    %v3083 = vld [vmem:[#allocation3 + $0xe88] sm:$0xff]
    %v3084 = vld [vmem:[#allocation3 + $0xe90] sm:$0xff]
    %v3085 = vld [vmem:[#allocation3 + $0xe98] sm:$0xff]
    %v3086 = vld [vmem:[#allocation3 + $0xea0] sm:$0xff]
    %v3087 = vld [vmem:[#allocation3 + $0xea8] sm:$0xff]
    %v3088 = vld [vmem:[#allocation3 + $0xeb0] sm:$0xff]
    %v3089 = vld [vmem:[#allocation3 + $0xeb8] sm:$0xff]
    %v3090 = vld [vmem:[#allocation3 + $0xec0] sm:$0xff]
    %v3091 = vld [vmem:[#allocation3 + $0xec8] sm:$0xff]
    %v3092 = vld [vmem:[#allocation3 + $0xed0] sm:$0xff]
    %v3093 = vld [vmem:[#allocation3 + $0xed8] sm:$0xff]
    %v3094 = vld [vmem:[#allocation3 + $0xee0] sm:$0xff]
    %v3095 = vld [vmem:[#allocation3 + $0xee8] sm:$0xff]
    %v3096 = vld [vmem:[#allocation3 + $0xef0] sm:$0xff]
    %v3097 = vld [vmem:[#allocation3 + $0xef8] sm:$0xff]
    %v3098 = vld [vmem:[#allocation3 + $0xf00] sm:$0xff]
    %v3099 = vld [vmem:[#allocation3 + $0xf08] sm:$0xff]
    %v3100 = vld [vmem:[#allocation3 + $0xf10] sm:$0xff]
    %v3101 = vld [vmem:[#allocation3 + $0xf18] sm:$0xff]
    %v3102 = vld [vmem:[#allocation3 + $0xf20] sm:$0xff]
    %v3103 = vld [vmem:[#allocation3 + $0xf28] sm:$0xff]
    %v3104 = vld [vmem:[#allocation3 + $0xf30] sm:$0xff]
    %v3105 = vld [vmem:[#allocation3 + $0xf38] sm:$0xff]
    %v3106 = vld [vmem:[#allocation3 + $0xf40] sm:$0xff]
    %v3107 = vld [vmem:[#allocation3 + $0xf48] sm:$0xff]
    %v3108 = vld [vmem:[#allocation3 + $0xf50] sm:$0xff]
    %v3109 = vld [vmem:[#allocation3 + $0xf58] sm:$0xff]
    %v3110 = vld [vmem:[#allocation3 + $0xf60] sm:$0xff]
    %v3111 = vld [vmem:[#allocation3 + $0xf68] sm:$0xff]
    %v3112 = vld [vmem:[#allocation3 + $0xf70] sm:$0xff]
    %v3113 = vld [vmem:[#allocation3 + $0xf78] sm:$0xff]
    %v3114 = vld [vmem:[#allocation3 + $0xf80] sm:$0xff]
    %v3115 = vld [vmem:[#allocation3 + $0xf88] sm:$0xff]
    %v3116 = vld [vmem:[#allocation3 + $0xf90] sm:$0xff]
    %v3117 = vld [vmem:[#allocation3 + $0xf98] sm:$0xff]
    %v3118 = vld [vmem:[#allocation3 + $0xfa0] sm:$0xff]
    %v3119 = vld [vmem:[#allocation3 + $0xfa8] sm:$0xff]
    %v3120 = vld [vmem:[#allocation3 + $0xfb0] sm:$0xff]
    %v3121 = vld [vmem:[#allocation3 + $0xfb8] sm:$0xff]
    %v3122 = vld [vmem:[#allocation3 + $0xfc0] sm:$0xff]
    %v3123 = vld [vmem:[#allocation3 + $0xfc8] sm:$0xff]
    %v3124 = vld [vmem:[#allocation3 + $0xfd0] sm:$0xff]
    %v3125 = vld [vmem:[#allocation3 + $0xfd8] sm:$0xff]
    %v3126 = vld [vmem:[#allocation3 + $0xfe0] sm:$0xff]
    %v3127 = vld [vmem:[#allocation3 + $0xfe8] sm:$0xff]
    %v3128 = vld [vmem:[#allocation3 + $0xff0] sm:$0xff]
    %v3129 = vld [vmem:[#allocation3 + $0xff8] sm:$0xff]
    %v3130 = vld [vmem:[#allocation3 + $0x1000] sm:$0xff]
    %v3131 = vld [vmem:[#allocation3 + $0x1008] sm:$0xff]
    %v3132 = vld [vmem:[#allocation3 + $0x1010] sm:$0xff]
    %v3133 = vld [vmem:[#allocation3 + $0x1018] sm:$0xff]
    %v3134 = vld [vmem:[#allocation3 + $0x1020] sm:$0xff]
    %v3135 = vld [vmem:[#allocation3 + $0x1028] sm:$0xff]
    %v3136 = vld [vmem:[#allocation3 + $0x1030] sm:$0xff]
    %v3137 = vld [vmem:[#allocation3 + $0x1038] sm:$0xff]
    %v3138 = vld [vmem:[#allocation3 + $0x1040] sm:$0xff]
    %v3139 = vld [vmem:[#allocation3 + $0x1048] sm:$0xff]
    %v3140 = vld [vmem:[#allocation3 + $0x1050] sm:$0xff]
    %v3141 = vld [vmem:[#allocation3 + $0x1058] sm:$0xff]
    %v3142 = vld [vmem:[#allocation3 + $0x1060] sm:$0xff]
    %v3143 = vld [vmem:[#allocation3 + $0x1068] sm:$0xff]
    %v3144 = vld [vmem:[#allocation3 + $0x1070] sm:$0xff]
    %v3145 = vld [vmem:[#allocation3 + $0x1078] sm:$0xff]
    %v3146 = vld [vmem:[#allocation3 + $0x1080] sm:$0xff]
    %v3147 = vld [vmem:[#allocation3 + $0x1088] sm:$0xff]
    %v3148 = vld [vmem:[#allocation3 + $0x1090] sm:$0xff]
    %v3149 = vld [vmem:[#allocation3 + $0x1098] sm:$0xff]
    %v3150 = vld [vmem:[#allocation3 + $0x10a0] sm:$0xff]
    %v3151 = vld [vmem:[#allocation3 + $0x10a8] sm:$0xff]
    %v3152 = vld [vmem:[#allocation3 + $0x10b0] sm:$0xff]
    %v3153 = vld [vmem:[#allocation3 + $0x10b8] sm:$0xff]
    %v3154 = vld [vmem:[#allocation3 + $0x10c0] sm:$0xff]
    %v3155 = vld [vmem:[#allocation3 + $0x10c8] sm:$0xff]
    %v3156 = vld [vmem:[#allocation3 + $0x10d0] sm:$0xff]
    %v3157 = vld [vmem:[#allocation3 + $0x10d8] sm:$0xff]
    %v3158 = vld [vmem:[#allocation3 + $0x10e0] sm:$0xff]
    %v3159 = vld [vmem:[#allocation3 + $0x10e8] sm:$0xff]
    %v3160 = vld [vmem:[#allocation3 + $0x10f0] sm:$0xff]
    %v3161 = vld [vmem:[#allocation3 + $0x10f8] sm:$0xff]
    %v3162 = vld [vmem:[#allocation3 + $0x1100] sm:$0xff]
    %v3163 = vld [vmem:[#allocation3 + $0x1108] sm:$0xff]
    %v3164 = vld [vmem:[#allocation3 + $0x1110] sm:$0xff]
    %v3165 = vld [vmem:[#allocation3 + $0x1118] sm:$0xff]
    %v3166 = vld [vmem:[#allocation3 + $0x1120] sm:$0xff]
    %v3167 = vld [vmem:[#allocation3 + $0x1128] sm:$0xff]
    %v3168 = vld [vmem:[#allocation3 + $0x1130] sm:$0xff]
    %v3169 = vld [vmem:[#allocation3 + $0x1138] sm:$0xff]
    %v3170 = vld [vmem:[#allocation3 + $0x1140] sm:$0xff]
    %v3171 = vld [vmem:[#allocation3 + $0x1148] sm:$0xff]
    %v3172 = vld [vmem:[#allocation3 + $0x1150] sm:$0xff]
    %v3173 = vld [vmem:[#allocation3 + $0x1158] sm:$0xff]
    %v3174 = vld [vmem:[#allocation3 + $0x1160] sm:$0xff]
    %v3175 = vld [vmem:[#allocation3 + $0x1168] sm:$0xff]
    %v3176 = vld [vmem:[#allocation3 + $0x1170] sm:$0xff]
    %v3177 = vld [vmem:[#allocation3 + $0x1178] sm:$0xff]
    %v3178 = vld [vmem:[#allocation3 + $0x1180] sm:$0xff]
    %v3179 = vld [vmem:[#allocation3 + $0x1188] sm:$0xff]
    %v3180 = vld [vmem:[#allocation3 + $0x1190] sm:$0xff]
    %v3181 = vld [vmem:[#allocation3 + $0x1198] sm:$0xff]
    %v3182 = vld [vmem:[#allocation3 + $0x11a0] sm:$0xff]
    %v3183 = vld [vmem:[#allocation3 + $0x11a8] sm:$0xff]
    %v3184 = vld [vmem:[#allocation3 + $0x11b0] sm:$0xff]
    %v3185 = vld [vmem:[#allocation3 + $0x11b8] sm:$0xff]
    %v3186 = vld [vmem:[#allocation3 + $0x11c0] sm:$0xff]
    %v3187 = vld [vmem:[#allocation3 + $0x11c8] sm:$0xff]
    %v3188 = vld [vmem:[#allocation3 + $0x11d0] sm:$0xff]
    %v3189 = vld [vmem:[#allocation3 + $0x11d8] sm:$0xff]
    %v3190 = vld [vmem:[#allocation3 + $0x11e0] sm:$0xff]
    %v3191 = vld [vmem:[#allocation3 + $0x11e8] sm:$0xff]
    %v3192 = vld [vmem:[#allocation3 + $0x11f0] sm:$0xff]
    %v3193 = vld [vmem:[#allocation3 + $0x11f8] sm:$0xff]
    %v3194 = vpack.c.bf16 %v2608, %v2608
    %v3195 = vpack.c.bf16 %v2609, %v2609
    %v3196 = vpack.c.bf16 %v2610, %v2610
    %v3197 = vpack.c.bf16 %v2611, %v2611
    %v3198 = vpack.c.bf16 %v2612, %v2612
    %v3199 = vpack.c.bf16 %v2613, %v2613
    %v3200 = vld [vmem:[#allocation13] sm:$0xff]
    %v3201 = vld [vmem:[#allocation13 + $0x8] sm:$0xf]
    %v3204 = vlaneseq
    %v3205 = vshrl.u32 %v3204, 7
    %v3206 = vsub.s32 0, %v3205
    %v3207 = vrot.slane %v3200, %v3206
    %v3208 = vlaneseq
    %v3209 = vshrl.u32 %v3208, 7
    %v3210 = vsub.s32 1, %v3209
    %v3211 = vrot.slane %v3200, %v3210
    %v3212 = vlaneseq
    %v3213 = vshrl.u32 %v3212, 7
    %v3214 = vsub.s32 2, %v3213
    %v3215 = vrot.slane %v3200, %v3214
    %v3216 = vlaneseq
    %v3217 = vshrl.u32 %v3216, 7
    %v3218 = vsub.s32 3, %v3217
    %v3219 = vrot.slane %v3200, %v3218
    %v3220 = vlaneseq
    %v3221 = vshrl.u32 %v3220, 7
    %v3222 = vsub.s32 4, %v3221
    %v3223 = vrot.slane %v3200, %v3222
    %v3224 = vlaneseq
    %v3225 = vshrl.u32 %v3224, 7
    %v3226 = vsub.s32 5, %v3225
    %v3227 = vrot.slane %v3200, %v3226
    %v3228 = vlaneseq
    %v3229 = vshrl.u32 %v3228, 7
    %v3230 = vsub.s32 6, %v3229
    %v3231 = vrot.slane %v3200, %v3230
    %v3232 = vlaneseq
    %v3233 = vshrl.u32 %v3232, 7
    %v3234 = vsub.s32 7, %v3233
    %v3235 = vrot.slane %v3200, %v3234
    %v3236 = vlaneseq
    %v3237 = vshrl.u32 %v3236, 7
    %v3238 = vsub.s32 0, %v3237
    %v3239 = vrot.slane %v3201, %v3238
    %v3240 = vlaneseq
    %v3241 = vshrl.u32 %v3240, 7
    %v3242 = vsub.s32 1, %v3241
    %v3243 = vrot.slane %v3201, %v3242
    %v3244 = vlaneseq
    %v3245 = vshrl.u32 %v3244, 7
    %v3246 = vsub.s32 2, %v3245
    %v3247 = vrot.slane %v3201, %v3246
    %v3248 = vlaneseq
    %v3249 = vshrl.u32 %v3248, 7
    %v3250 = vsub.s32 3, %v3249
    %v3251 = vrot.slane %v3201, %v3250
    %3264 = vmatprep.subr.bf16.mxu0 %v2619
    %3265 = vmatpush1.bf16.msra.mxu0 %v2618
    %3266 = vmatprep.subr.bf16.mxu0 %v2631
    %3267 = vmatpush1.bf16.msra.mxu0 %v2630
    %3268 = vmatprep.subr.bf16.mxu0 %v2643
    %3269 = vmatpush1.bf16.msra.mxu0 %v2642
    %3270 = vmatprep.subr.bf16.mxu0 %v2655
    %3271 = vmatpush1.bf16.msra.mxu0 %v2654
    %3272 = vmatprep.subr.bf16.mxu0 %v2667
    %3273 = vmatpush1.bf16.msra.mxu0 %v2666
    %3274 = vmatprep.subr.bf16.mxu0 %v2679
    %3275 = vmatpush1.bf16.msra.mxu0 %v2678
    %3276 = vmatprep.subr.bf16.mxu0 %v2691
    %3277 = vmatpush1.bf16.msra.mxu0 %v2690
    %3278 = vmatprep.subr.bf16.mxu0 %v2703
    %3279 = vmatpush1.bf16.msra.mxu0 %v2702
    %3280 = vmatprep.subr.bf16.mxu0 %v2715
    %3281 = vmatpush1.bf16.msra.mxu0 %v2714
    %3282 = vmatprep.subr.bf16.mxu0 %v2727
    %3283 = vmatpush1.bf16.msra.mxu0 %v2726
    %3284 = vmatprep.subr.bf16.mxu0 %v2739
    %3285 = vmatpush1.bf16.msra.mxu0 %v2738
    %3286 = vmatprep.subr.bf16.mxu0 %v2751
    %3287 = vmatpush1.bf16.msra.mxu0 %v2750
    %3288 = vmatprep.subr.bf16.mxu0 %v2763
    %3289 = vmatpush1.bf16.msra.mxu0 %v2762
    %3290 = vmatprep.subr.bf16.mxu0 %v2775
    %3291 = vmatpush1.bf16.msra.mxu0 %v2774
    %3292 = vmatprep.subr.bf16.mxu0 %v2787
    %3293 = vmatpush1.bf16.msra.mxu0 %v2786
    %3294 = vmatprep.subr.bf16.mxu0 %v2799
    %3295 = vmatpush1.bf16.msra.mxu0 %v2798
    %3296 = vmatprep.mubr.bf16.mxu0 %v3195
    %3297 = vmatmul.mubr.bf16.gmra.mrb[0].mxu0 %v3194
    %v3298 = vpop.f32.mrb[0].mxu0
    %v3299 = vadd.f32 %v3207, %v3298
    %v3300 = vpop.f32.mrb[0].mxu0
    %v3301 = vadd.f32 %v3211, %v3300
    %v3302 = vpop.f32.mrb[0].mxu0
    %v3303 = vpop.f32.mrb[0].mxu0
    %3304 = vdwg.mxu0
    %3305 = vmatprep.subr.bf16.mxu0 %v2811
    %3306 = vmatpush1.bf16.msra.mxu0 %v2810
    %3307 = vmatprep.subr.bf16.mxu0 %v2823
    %3308 = vmatpush1.bf16.msra.mxu0 %v2822
    %3309 = vmatprep.subr.bf16.mxu0 %v2835
    %3310 = vmatpush1.bf16.msra.mxu0 %v2834
    %3311 = vmatprep.subr.bf16.mxu0 %v2847
    %3312 = vmatpush1.bf16.msra.mxu0 %v2846
    %3313 = vmatprep.subr.bf16.mxu0 %v2859
    %3314 = vmatpush1.bf16.msra.mxu0 %v2858
    %3315 = vmatprep.subr.bf16.mxu0 %v2871
    %3316 = vmatpush1.bf16.msra.mxu0 %v2870
    %3317 = vmatprep.subr.bf16.mxu0 %v2883
    %3318 = vmatpush1.bf16.msra.mxu0 %v2882
    %3319 = vmatprep.subr.bf16.mxu0 %v2895
    %3320 = vmatpush1.bf16.msra.mxu0 %v2894
    %3321 = vmatprep.subr.bf16.mxu0 %v2907
    %3322 = vmatpush1.bf16.msra.mxu0 %v2906
    %3323 = vmatprep.subr.bf16.mxu0 %v2919
    %3324 = vmatpush1.bf16.msra.mxu0 %v2918
    %3325 = vmatprep.subr.bf16.mxu0 %v2931
    %3326 = vmatpush1.bf16.msra.mxu0 %v2930
    %3327 = vmatprep.subr.bf16.mxu0 %v2943
    %3328 = vmatpush1.bf16.msra.mxu0 %v2942
    %3329 = vmatprep.subr.bf16.mxu0 %v2955
    %3330 = vmatpush1.bf16.msra.mxu0 %v2954
    %3331 = vmatprep.subr.bf16.mxu0 %v2967
    %3332 = vmatpush1.bf16.msra.mxu0 %v2966
    %3333 = vmatprep.subr.bf16.mxu0 %v2979
    %3334 = vmatpush1.bf16.msra.mxu0 %v2978
    %3335 = vmatprep.subr.bf16.mxu0 %v2991
    %3336 = vmatpush1.bf16.msra.mxu0 %v2990
    %3337 = vmatprep.mubr.bf16.mxu0 %v3197
    %3338 = vmatmul.mubr.bf16.gmra.mrb[0].mxu0 %v3196
    %v3339 = vpop.f32.mrb[0].mxu0
    %v3340 = vadd.f32 %v3299, %v3339
    %v3341 = vpop.f32.mrb[0].mxu0
    %v3342 = vadd.f32 %v3301, %v3341
    %v3343 = vpop.f32.mrb[0].mxu0
    %v3344 = vpop.f32.mrb[0].mxu0
    %3345 = vdwg.mxu0
    %3346 = vmatprep.subr.bf16.mxu0 %v3003
    %3347 = vmatpush1.bf16.msra.mxu0 %v3002
    %3348 = vmatprep.subr.bf16.mxu0 %v3015
    %3349 = vmatpush1.bf16.msra.mxu0 %v3014
    %3350 = vmatprep.subr.bf16.mxu0 %v3027
    %3351 = vmatpush1.bf16.msra.mxu0 %v3026
    %3352 = vmatprep.subr.bf16.mxu0 %v3039
    %3353 = vmatpush1.bf16.msra.mxu0 %v3038
    %3354 = vmatprep.subr.bf16.mxu0 %v3051
    %3355 = vmatpush1.bf16.msra.mxu0 %v3050
    %3356 = vmatprep.subr.bf16.mxu0 %v3063
    %3357 = vmatpush1.bf16.msra.mxu0 %v3062
    %3358 = vmatprep.subr.bf16.mxu0 %v3075
    %3359 = vmatpush1.bf16.msra.mxu0 %v3074
    %3360 = vmatprep.subr.bf16.mxu0 %v3087
    %3361 = vmatpush1.bf16.msra.mxu0 %v3086
    %3362 = vmatprep.subr.bf16.mxu0 %v3099
    %3363 = vmatpush1.bf16.msra.mxu0 %v3098
    %3364 = vmatprep.subr.bf16.mxu0 %v3111
    %3365 = vmatpush1.bf16.msra.mxu0 %v3110
    %3366 = vmatprep.subr.bf16.mxu0 %v3123
    %3367 = vmatpush1.bf16.msra.mxu0 %v3122
    %3368 = vmatprep.subr.bf16.mxu0 %v3135
    %3369 = vmatpush1.bf16.msra.mxu0 %v3134
    %3370 = vmatprep.subr.bf16.mxu0 %v3147
    %3371 = vmatpush1.bf16.msra.mxu0 %v3146
    %3372 = vmatprep.subr.bf16.mxu0 %v3159
    %3373 = vmatpush1.bf16.msra.mxu0 %v3158
    %3374 = vmatprep.subr.bf16.mxu0 %v3171
    %3375 = vmatpush1.bf16.msra.mxu0 %v3170
    %3376 = vmatprep.subr.bf16.mxu0 %v3183
    %3377 = vmatpush1.bf16.msra.mxu0 %v3182
    %3378 = vmatprep.mubr.bf16.mxu0 %v3199
    %3379 = vmatmul.mubr.bf16.gmra.mrb[0].mxu0 %v3198
    %v3380 = vpop.f32.mrb[0].mxu0
    %v3381 = vadd.f32 %v3340, %v3380
    %v3382 = vpop.f32.mrb[0].mxu0
    %v3383 = vadd.f32 %v3342, %v3382
    %v3384 = vpop.f32.mrb[0].mxu0
    %v3385 = vpop.f32.mrb[0].mxu0
    %3386 = vdwg.mxu0
    %3387 = vmatprep.subr.bf16.mxu0 %v2621
    %3388 = vmatpush1.bf16.msra.mxu0 %v2620
    %3389 = vmatprep.subr.bf16.mxu0 %v2633
    %3390 = vmatpush1.bf16.msra.mxu0 %v2632
    %3391 = vmatprep.subr.bf16.mxu0 %v2645
    %3392 = vmatpush1.bf16.msra.mxu0 %v2644
    %3393 = vmatprep.subr.bf16.mxu0 %v2657
    %3394 = vmatpush1.bf16.msra.mxu0 %v2656
    %3395 = vmatprep.subr.bf16.mxu0 %v2669
    %3396 = vmatpush1.bf16.msra.mxu0 %v2668
    %3397 = vmatprep.subr.bf16.mxu0 %v2681
    %3398 = vmatpush1.bf16.msra.mxu0 %v2680
    %3399 = vmatprep.subr.bf16.mxu0 %v2693
    %3400 = vmatpush1.bf16.msra.mxu0 %v2692
    %3401 = vmatprep.subr.bf16.mxu0 %v2705
    %3402 = vmatpush1.bf16.msra.mxu0 %v2704
    %3403 = vmatprep.subr.bf16.mxu0 %v2717
    %3404 = vmatpush1.bf16.msra.mxu0 %v2716
    %3405 = vmatprep.subr.bf16.mxu0 %v2729
    %3406 = vmatpush1.bf16.msra.mxu0 %v2728
    %3407 = vmatprep.subr.bf16.mxu0 %v2741
    %3408 = vmatpush1.bf16.msra.mxu0 %v2740
    %3409 = vmatprep.subr.bf16.mxu0 %v2753
    %3410 = vmatpush1.bf16.msra.mxu0 %v2752
    %3411 = vmatprep.subr.bf16.mxu0 %v2765
    %3412 = vmatpush1.bf16.msra.mxu0 %v2764
    %3413 = vmatprep.subr.bf16.mxu0 %v2777
    %3414 = vmatpush1.bf16.msra.mxu0 %v2776
    %3415 = vmatprep.subr.bf16.mxu0 %v2789
    %3416 = vmatpush1.bf16.msra.mxu0 %v2788
    %3417 = vmatprep.subr.bf16.mxu0 %v2801
    %3418 = vmatpush1.bf16.msra.mxu0 %v2800
    %3419 = vmatprep.mubr.bf16.mxu0 %v3195
    %3420 = vmatmul.mubr.bf16.gmra.mrb[0].mxu0 %v3194
    %v3421 = vpop.f32.mrb[0].mxu0
    %v3422 = vadd.f32 %v3215, %v3421
    %v3423 = vpop.f32.mrb[0].mxu0
    %v3424 = vadd.f32 %v3219, %v3423
    %v3425 = vpop.f32.mrb[0].mxu0
    %v3426 = vpop.f32.mrb[0].mxu0
    %3427 = vdwg.mxu0
    %3428 = vmatprep.subr.bf16.mxu0 %v2813
    %3429 = vmatpush1.bf16.msra.mxu0 %v2812
    %3430 = vmatprep.subr.bf16.mxu0 %v2825
    %3431 = vmatpush1.bf16.msra.mxu0 %v2824
    %3432 = vmatprep.subr.bf16.mxu0 %v2837
    %3433 = vmatpush1.bf16.msra.mxu0 %v2836
    %3434 = vmatprep.subr.bf16.mxu0 %v2849
    %3435 = vmatpush1.bf16.msra.mxu0 %v2848
    %3436 = vmatprep.subr.bf16.mxu0 %v2861
    %3437 = vmatpush1.bf16.msra.mxu0 %v2860
    %3438 = vmatprep.subr.bf16.mxu0 %v2873
    %3439 = vmatpush1.bf16.msra.mxu0 %v2872
    %3440 = vmatprep.subr.bf16.mxu0 %v2885
    %3441 = vmatpush1.bf16.msra.mxu0 %v2884
    %3442 = vmatprep.subr.bf16.mxu0 %v2897
    %3443 = vmatpush1.bf16.msra.mxu0 %v2896
    %3444 = vmatprep.subr.bf16.mxu0 %v2909
    %3445 = vmatpush1.bf16.msra.mxu0 %v2908
    %3446 = vmatprep.subr.bf16.mxu0 %v2921
    %3447 = vmatpush1.bf16.msra.mxu0 %v2920
    %3448 = vmatprep.subr.bf16.mxu0 %v2933
    %3449 = vmatpush1.bf16.msra.mxu0 %v2932
    %3450 = vmatprep.subr.bf16.mxu0 %v2945
    %3451 = vmatpush1.bf16.msra.mxu0 %v2944
    %3452 = vmatprep.subr.bf16.mxu0 %v2957
    %3453 = vmatpush1.bf16.msra.mxu0 %v2956
    %3454 = vmatprep.subr.bf16.mxu0 %v2969
    %3455 = vmatpush1.bf16.msra.mxu0 %v2968
    %3456 = vmatprep.subr.bf16.mxu0 %v2981
    %3457 = vmatpush1.bf16.msra.mxu0 %v2980
    %3458 = vmatprep.subr.bf16.mxu0 %v2993
    %3459 = vmatpush1.bf16.msra.mxu0 %v2992
    %3460 = vmatprep.mubr.bf16.mxu0 %v3197
    %3461 = vmatmul.mubr.bf16.gmra.mrb[0].mxu0 %v3196
    %v3462 = vpop.f32.mrb[0].mxu0
    %v3463 = vadd.f32 %v3422, %v3462
    %v3464 = vpop.f32.mrb[0].mxu0
    %v3465 = vadd.f32 %v3424, %v3464
    %v3466 = vpop.f32.mrb[0].mxu0
    %v3467 = vpop.f32.mrb[0].mxu0
    %3468 = vdwg.mxu0
    %3469 = vmatprep.subr.bf16.mxu0 %v3005
    %3470 = vmatpush1.bf16.msra.mxu0 %v3004
    %3471 = vmatprep.subr.bf16.mxu0 %v3017
    %3472 = vmatpush1.bf16.msra.mxu0 %v3016
    %3473 = vmatprep.subr.bf16.mxu0 %v3029
    %3474 = vmatpush1.bf16.msra.mxu0 %v3028
    %3475 = vmatprep.subr.bf16.mxu0 %v3041
    %3476 = vmatpush1.bf16.msra.mxu0 %v3040
    %3477 = vmatprep.subr.bf16.mxu0 %v3053
    %3478 = vmatpush1.bf16.msra.mxu0 %v3052
    %3479 = vmatprep.subr.bf16.mxu0 %v3065
    %3480 = vmatpush1.bf16.msra.mxu0 %v3064
    %3481 = vmatprep.subr.bf16.mxu0 %v3077
    %3482 = vmatpush1.bf16.msra.mxu0 %v3076
    %3483 = vmatprep.subr.bf16.mxu0 %v3089
    %3484 = vmatpush1.bf16.msra.mxu0 %v3088
    %3485 = vmatprep.subr.bf16.mxu0 %v3101
    %3486 = vmatpush1.bf16.msra.mxu0 %v3100
    %3487 = vmatprep.subr.bf16.mxu0 %v3113
    %3488 = vmatpush1.bf16.msra.mxu0 %v3112
    %3489 = vmatprep.subr.bf16.mxu0 %v3125
    %3490 = vmatpush1.bf16.msra.mxu0 %v3124
    %3491 = vmatprep.subr.bf16.mxu0 %v3137
    %3492 = vmatpush1.bf16.msra.mxu0 %v3136
    %3493 = vmatprep.subr.bf16.mxu0 %v3149
    %3494 = vmatpush1.bf16.msra.mxu0 %v3148
    %3495 = vmatprep.subr.bf16.mxu0 %v3161
    %3496 = vmatpush1.bf16.msra.mxu0 %v3160
    %3497 = vmatprep.subr.bf16.mxu0 %v3173
    %3498 = vmatpush1.bf16.msra.mxu0 %v3172
    %3499 = vmatprep.subr.bf16.mxu0 %v3185
    %3500 = vmatpush1.bf16.msra.mxu0 %v3184
    %3501 = vmatprep.mubr.bf16.mxu0 %v3199
    %3502 = vmatmul.mubr.bf16.gmra.mrb[0].mxu0 %v3198
    %v3503 = vpop.f32.mrb[0].mxu0
    %v3504 = vadd.f32 %v3463, %v3503
    %v3505 = vpop.f32.mrb[0].mxu0
    %v3506 = vadd.f32 %v3465, %v3505
    %v3507 = vpop.f32.mrb[0].mxu0
    %v3508 = vpop.f32.mrb[0].mxu0
    %3509 = vdwg.mxu0
    %3510 = vmatprep.subr.bf16.mxu0 %v2623
    %3511 = vmatpush1.bf16.msra.mxu0 %v2622
    %3512 = vmatprep.subr.bf16.mxu0 %v2635
    %3513 = vmatpush1.bf16.msra.mxu0 %v2634
    %3514 = vmatprep.subr.bf16.mxu0 %v2647
    %3515 = vmatpush1.bf16.msra.mxu0 %v2646
    %3516 = vmatprep.subr.bf16.mxu0 %v2659
    %3517 = vmatpush1.bf16.msra.mxu0 %v2658
    %3518 = vmatprep.subr.bf16.mxu0 %v2671
    %3519 = vmatpush1.bf16.msra.mxu0 %v2670
    %3520 = vmatprep.subr.bf16.mxu0 %v2683
    %3521 = vmatpush1.bf16.msra.mxu0 %v2682
    %3522 = vmatprep.subr.bf16.mxu0 %v2695
    %3523 = vmatpush1.bf16.msra.mxu0 %v2694
    %3524 = vmatprep.subr.bf16.mxu0 %v2707
    %3525 = vmatpush1.bf16.msra.mxu0 %v2706
    %3526 = vmatprep.subr.bf16.mxu0 %v2719
    %3527 = vmatpush1.bf16.msra.mxu0 %v2718
    %3528 = vmatprep.subr.bf16.mxu0 %v2731
    %3529 = vmatpush1.bf16.msra.mxu0 %v2730
    %3530 = vmatprep.subr.bf16.mxu0 %v2743
    %3531 = vmatpush1.bf16.msra.mxu0 %v2742
    %3532 = vmatprep.subr.bf16.mxu0 %v2755
    %3533 = vmatpush1.bf16.msra.mxu0 %v2754
    %3534 = vmatprep.subr.bf16.mxu0 %v2767
    %3535 = vmatpush1.bf16.msra.mxu0 %v2766
    %3536 = vmatprep.subr.bf16.mxu0 %v2779
    %3537 = vmatpush1.bf16.msra.mxu0 %v2778
    %3538 = vmatprep.subr.bf16.mxu0 %v2791
    %3539 = vmatpush1.bf16.msra.mxu0 %v2790
    %3540 = vmatprep.subr.bf16.mxu0 %v2803
    %3541 = vmatpush1.bf16.msra.mxu0 %v2802
    %3542 = vmatprep.mubr.bf16.mxu0 %v3195
    %3543 = vmatmul.mubr.bf16.gmra.mrb[0].mxu0 %v3194
    %v3544 = vpop.f32.mrb[0].mxu0
    %v3545 = vadd.f32 %v3223, %v3544
    %v3546 = vpop.f32.mrb[0].mxu0
    %v3547 = vadd.f32 %v3227, %v3546
    %v3548 = vpop.f32.mrb[0].mxu0
    %v3549 = vpop.f32.mrb[0].mxu0
    %3550 = vdwg.mxu0
    %3551 = vmatprep.subr.bf16.mxu0 %v2815
    %3552 = vmatpush1.bf16.msra.mxu0 %v2814
    %3553 = vmatprep.subr.bf16.mxu0 %v2827
    %3554 = vmatpush1.bf16.msra.mxu0 %v2826
    %3555 = vmatprep.subr.bf16.mxu0 %v2839
    %3556 = vmatpush1.bf16.msra.mxu0 %v2838
    %3557 = vmatprep.subr.bf16.mxu0 %v2851
    %3558 = vmatpush1.bf16.msra.mxu0 %v2850
    %3559 = vmatprep.subr.bf16.mxu0 %v2863
    %3560 = vmatpush1.bf16.msra.mxu0 %v2862
    %3561 = vmatprep.subr.bf16.mxu0 %v2875
    %3562 = vmatpush1.bf16.msra.mxu0 %v2874
    %3563 = vmatprep.subr.bf16.mxu0 %v2887
    %3564 = vmatpush1.bf16.msra.mxu0 %v2886
    %3565 = vmatprep.subr.bf16.mxu0 %v2899
    %3566 = vmatpush1.bf16.msra.mxu0 %v2898
    %3567 = vmatprep.subr.bf16.mxu0 %v2911
    %3568 = vmatpush1.bf16.msra.mxu0 %v2910
    %3569 = vmatprep.subr.bf16.mxu0 %v2923
    %3570 = vmatpush1.bf16.msra.mxu0 %v2922
    %3571 = vmatprep.subr.bf16.mxu0 %v2935
    %3572 = vmatpush1.bf16.msra.mxu0 %v2934
    %3573 = vmatprep.subr.bf16.mxu0 %v2947
    %3574 = vmatpush1.bf16.msra.mxu0 %v2946
    %3575 = vmatprep.subr.bf16.mxu0 %v2959
    %3576 = vmatpush1.bf16.msra.mxu0 %v2958
    %3577 = vmatprep.subr.bf16.mxu0 %v2971
    %3578 = vmatpush1.bf16.msra.mxu0 %v2970
    %3579 = vmatprep.subr.bf16.mxu0 %v2983
    %3580 = vmatpush1.bf16.msra.mxu0 %v2982
    %3581 = vmatprep.subr.bf16.mxu0 %v2995
    %3582 = vmatpush1.bf16.msra.mxu0 %v2994
    %3583 = vmatprep.mubr.bf16.mxu0 %v3197
    %3584 = vmatmul.mubr.bf16.gmra.mrb[0].mxu0 %v3196
    %v3585 = vpop.f32.mrb[0].mxu0
    %v3586 = vadd.f32 %v3545, %v3585
    %v3587 = vpop.f32.mrb[0].mxu0
    %v3588 = vadd.f32 %v3547, %v3587
    %v3589 = vpop.f32.mrb[0].mxu0
    %v3590 = vpop.f32.mrb[0].mxu0
    %3591 = vdwg.mxu0
    %3592 = vmatprep.subr.bf16.mxu0 %v3007
    %3593 = vmatpush1.bf16.msra.mxu0 %v3006
    %3594 = vmatprep.subr.bf16.mxu0 %v3019
    %3595 = vmatpush1.bf16.msra.mxu0 %v3018
    %3596 = vmatprep.subr.bf16.mxu0 %v3031
    %3597 = vmatpush1.bf16.msra.mxu0 %v3030
    %3598 = vmatprep.subr.bf16.mxu0 %v3043
    %3599 = vmatpush1.bf16.msra.mxu0 %v3042
    %3600 = vmatprep.subr.bf16.mxu0 %v3055
    %3601 = vmatpush1.bf16.msra.mxu0 %v3054
    %3602 = vmatprep.subr.bf16.mxu0 %v3067
    %3603 = vmatpush1.bf16.msra.mxu0 %v3066
    %3604 = vmatprep.subr.bf16.mxu0 %v3079
    %3605 = vmatpush1.bf16.msra.mxu0 %v3078
    %3606 = vmatprep.subr.bf16.mxu0 %v3091
    %3607 = vmatpush1.bf16.msra.mxu0 %v3090
    %3608 = vmatprep.subr.bf16.mxu0 %v3103
    %3609 = vmatpush1.bf16.msra.mxu0 %v3102
    %3610 = vmatprep.subr.bf16.mxu0 %v3115
    %3611 = vmatpush1.bf16.msra.mxu0 %v3114
    %3612 = vmatprep.subr.bf16.mxu0 %v3127
    %3613 = vmatpush1.bf16.msra.mxu0 %v3126
    %3614 = vmatprep.subr.bf16.mxu0 %v3139
    %3615 = vmatpush1.bf16.msra.mxu0 %v3138
    %3616 = vmatprep.subr.bf16.mxu0 %v3151
    %3617 = vmatpush1.bf16.msra.mxu0 %v3150
    %3618 = vmatprep.subr.bf16.mxu0 %v3163
    %3619 = vmatpush1.bf16.msra.mxu0 %v3162
    %3620 = vmatprep.subr.bf16.mxu0 %v3175
    %3621 = vmatpush1.bf16.msra.mxu0 %v3174
    %3622 = vmatprep.subr.bf16.mxu0 %v3187
    %3623 = vmatpush1.bf16.msra.mxu0 %v3186
    %3624 = vmatprep.mubr.bf16.mxu0 %v3199
    %3625 = vmatmul.mubr.bf16.gmra.mrb[0].mxu0 %v3198
    %v3626 = vpop.f32.mrb[0].mxu0
    %v3627 = vadd.f32 %v3586, %v3626
    %v3628 = vpop.f32.mrb[0].mxu0
    %v3629 = vadd.f32 %v3588, %v3628
    %v3630 = vpop.f32.mrb[0].mxu0
    %v3631 = vpop.f32.mrb[0].mxu0
    %3632 = vdwg.mxu0
    %3633 = vmatprep.subr.bf16.mxu0 %v2625
    %3634 = vmatpush1.bf16.msra.mxu0 %v2624
    %3635 = vmatprep.subr.bf16.mxu0 %v2637
    %3636 = vmatpush1.bf16.msra.mxu0 %v2636
    %3637 = vmatprep.subr.bf16.mxu0 %v2649
    %3638 = vmatpush1.bf16.msra.mxu0 %v2648
    %3639 = vmatprep.subr.bf16.mxu0 %v2661
    %3640 = vmatpush1.bf16.msra.mxu0 %v2660
    %3641 = vmatprep.subr.bf16.mxu0 %v2673
    %3642 = vmatpush1.bf16.msra.mxu0 %v2672
    %3643 = vmatprep.subr.bf16.mxu0 %v2685
    %3644 = vmatpush1.bf16.msra.mxu0 %v2684
    %3645 = vmatprep.subr.bf16.mxu0 %v2697
    %3646 = vmatpush1.bf16.msra.mxu0 %v2696
    %3647 = vmatprep.subr.bf16.mxu0 %v2709
    %3648 = vmatpush1.bf16.msra.mxu0 %v2708
    %3649 = vmatprep.subr.bf16.mxu0 %v2721
    %3650 = vmatpush1.bf16.msra.mxu0 %v2720
    %3651 = vmatprep.subr.bf16.mxu0 %v2733
    %3652 = vmatpush1.bf16.msra.mxu0 %v2732
    %3653 = vmatprep.subr.bf16.mxu0 %v2745
    %3654 = vmatpush1.bf16.msra.mxu0 %v2744
    %3655 = vmatprep.subr.bf16.mxu0 %v2757
    %3656 = vmatpush1.bf16.msra.mxu0 %v2756
    %3657 = vmatprep.subr.bf16.mxu0 %v2769
    %3658 = vmatpush1.bf16.msra.mxu0 %v2768
    %3659 = vmatprep.subr.bf16.mxu0 %v2781
    %3660 = vmatpush1.bf16.msra.mxu0 %v2780
    %3661 = vmatprep.subr.bf16.mxu0 %v2793
    %3662 = vmatpush1.bf16.msra.mxu0 %v2792
    %3663 = vmatprep.subr.bf16.mxu0 %v2805
    %3664 = vmatpush1.bf16.msra.mxu0 %v2804
    %3665 = vmatprep.mubr.bf16.mxu0 %v3195
    %3666 = vmatmul.mubr.bf16.gmra.mrb[0].mxu0 %v3194
    %v3667 = vpop.f32.mrb[0].mxu0
    %v3668 = vadd.f32 %v3231, %v3667
    %v3669 = vpop.f32.mrb[0].mxu0
    %v3670 = vadd.f32 %v3235, %v3669
    %v3671 = vpop.f32.mrb[0].mxu0
    %v3672 = vpop.f32.mrb[0].mxu0
    %3673 = vdwg.mxu0
    %3674 = vmatprep.subr.bf16.mxu0 %v2817
    %3675 = vmatpush1.bf16.msra.mxu0 %v2816
    %3676 = vmatprep.subr.bf16.mxu0 %v2829
    %3677 = vmatpush1.bf16.msra.mxu0 %v2828
    %3678 = vmatprep.subr.bf16.mxu0 %v2841
    %3679 = vmatpush1.bf16.msra.mxu0 %v2840
    %3680 = vmatprep.subr.bf16.mxu0 %v2853
    %3681 = vmatpush1.bf16.msra.mxu0 %v2852
    %3682 = vmatprep.subr.bf16.mxu0 %v2865
    %3683 = vmatpush1.bf16.msra.mxu0 %v2864
    %3684 = vmatprep.subr.bf16.mxu0 %v2877
    %3685 = vmatpush1.bf16.msra.mxu0 %v2876
    %3686 = vmatprep.subr.bf16.mxu0 %v2889
    %3687 = vmatpush1.bf16.msra.mxu0 %v2888
    %3688 = vmatprep.subr.bf16.mxu0 %v2901
    %3689 = vmatpush1.bf16.msra.mxu0 %v2900
    %3690 = vmatprep.subr.bf16.mxu0 %v2913
    %3691 = vmatpush1.bf16.msra.mxu0 %v2912
    %3692 = vmatprep.subr.bf16.mxu0 %v2925
    %3693 = vmatpush1.bf16.msra.mxu0 %v2924
    %3694 = vmatprep.subr.bf16.mxu0 %v2937
    %3695 = vmatpush1.bf16.msra.mxu0 %v2936
    %3696 = vmatprep.subr.bf16.mxu0 %v2949
    %3697 = vmatpush1.bf16.msra.mxu0 %v2948
    %3698 = vmatprep.subr.bf16.mxu0 %v2961
    %3699 = vmatpush1.bf16.msra.mxu0 %v2960
    %3700 = vmatprep.subr.bf16.mxu0 %v2973
    %3701 = vmatpush1.bf16.msra.mxu0 %v2972
    %3702 = vmatprep.subr.bf16.mxu0 %v2985
    %3703 = vmatpush1.bf16.msra.mxu0 %v2984
    %3704 = vmatprep.subr.bf16.mxu0 %v2997
    %3705 = vmatpush1.bf16.msra.mxu0 %v2996
    %3706 = vmatprep.mubr.bf16.mxu0 %v3197
    %3707 = vmatmul.mubr.bf16.gmra.mrb[0].mxu0 %v3196
    %v3708 = vpop.f32.mrb[0].mxu0
    %v3709 = vadd.f32 %v3668, %v3708
    %v3710 = vpop.f32.mrb[0].mxu0
    %v3711 = vadd.f32 %v3670, %v3710
    %v3712 = vpop.f32.mrb[0].mxu0
    %v3713 = vpop.f32.mrb[0].mxu0
    %3714 = vdwg.mxu0
    %3715 = vmatprep.subr.bf16.mxu0 %v3009
    %3716 = vmatpush1.bf16.msra.mxu0 %v3008
    %3717 = vmatprep.subr.bf16.mxu0 %v3021
    %3718 = vmatpush1.bf16.msra.mxu0 %v3020
    %3719 = vmatprep.subr.bf16.mxu0 %v3033
    %3720 = vmatpush1.bf16.msra.mxu0 %v3032
    %3721 = vmatprep.subr.bf16.mxu0 %v3045
    %3722 = vmatpush1.bf16.msra.mxu0 %v3044
    %3723 = vmatprep.subr.bf16.mxu0 %v3057
    %3724 = vmatpush1.bf16.msra.mxu0 %v3056
    %3725 = vmatprep.subr.bf16.mxu0 %v3069
    %3726 = vmatpush1.bf16.msra.mxu0 %v3068
    %3727 = vmatprep.subr.bf16.mxu0 %v3081
    %3728 = vmatpush1.bf16.msra.mxu0 %v3080
    %3729 = vmatprep.subr.bf16.mxu0 %v3093
    %3730 = vmatpush1.bf16.msra.mxu0 %v3092
    %3731 = vmatprep.subr.bf16.mxu0 %v3105
    %3732 = vmatpush1.bf16.msra.mxu0 %v3104
    %3733 = vmatprep.subr.bf16.mxu0 %v3117
    %3734 = vmatpush1.bf16.msra.mxu0 %v3116
    %3735 = vmatprep.subr.bf16.mxu0 %v3129
    %3736 = vmatpush1.bf16.msra.mxu0 %v3128
    %3737 = vmatprep.subr.bf16.mxu0 %v3141
    %3738 = vmatpush1.bf16.msra.mxu0 %v3140
    %3739 = vmatprep.subr.bf16.mxu0 %v3153
    %3740 = vmatpush1.bf16.msra.mxu0 %v3152
    %3741 = vmatprep.subr.bf16.mxu0 %v3165
    %3742 = vmatpush1.bf16.msra.mxu0 %v3164
    %3743 = vmatprep.subr.bf16.mxu0 %v3177
    %3744 = vmatpush1.bf16.msra.mxu0 %v3176
    %3745 = vmatprep.subr.bf16.mxu0 %v3189
    %3746 = vmatpush1.bf16.msra.mxu0 %v3188
    %3747 = vmatprep.mubr.bf16.mxu0 %v3199
    %3748 = vmatmul.mubr.bf16.gmra.mrb[0].mxu0 %v3198
    %v3749 = vpop.f32.mrb[0].mxu0
    %v3750 = vadd.f32 %v3709, %v3749
    %v3751 = vpop.f32.mrb[0].mxu0
    %v3752 = vadd.f32 %v3711, %v3751
    %v3753 = vpop.f32.mrb[0].mxu0
    %v3754 = vpop.f32.mrb[0].mxu0
    %3755 = vdwg.mxu0
    %3756 = vmatprep.subr.bf16.mxu0 %v2627
    %3757 = vmatpush1.bf16.msra.mxu0 %v2626
    %3758 = vmatprep.subr.bf16.mxu0 %v2639
    %3759 = vmatpush1.bf16.msra.mxu0 %v2638
    %3760 = vmatprep.subr.bf16.mxu0 %v2651
    %3761 = vmatpush1.bf16.msra.mxu0 %v2650
    %3762 = vmatprep.subr.bf16.mxu0 %v2663
    %3763 = vmatpush1.bf16.msra.mxu0 %v2662
    %3764 = vmatprep.subr.bf16.mxu0 %v2675
    %3765 = vmatpush1.bf16.msra.mxu0 %v2674
    %3766 = vmatprep.subr.bf16.mxu0 %v2687
    %3767 = vmatpush1.bf16.msra.mxu0 %v2686
    %3768 = vmatprep.subr.bf16.mxu0 %v2699
    %3769 = vmatpush1.bf16.msra.mxu0 %v2698
    %3770 = vmatprep.subr.bf16.mxu0 %v2711
    %3771 = vmatpush1.bf16.msra.mxu0 %v2710
    %3772 = vmatprep.subr.bf16.mxu0 %v2723
    %3773 = vmatpush1.bf16.msra.mxu0 %v2722
    %3774 = vmatprep.subr.bf16.mxu0 %v2735
    %3775 = vmatpush1.bf16.msra.mxu0 %v2734
    %3776 = vmatprep.subr.bf16.mxu0 %v2747
    %3777 = vmatpush1.bf16.msra.mxu0 %v2746
    %3778 = vmatprep.subr.bf16.mxu0 %v2759
    %3779 = vmatpush1.bf16.msra.mxu0 %v2758
    %3780 = vmatprep.subr.bf16.mxu0 %v2771
    %3781 = vmatpush1.bf16.msra.mxu0 %v2770
    %3782 = vmatprep.subr.bf16.mxu0 %v2783
    %3783 = vmatpush1.bf16.msra.mxu0 %v2782
    %3784 = vmatprep.subr.bf16.mxu0 %v2795
    %3785 = vmatpush1.bf16.msra.mxu0 %v2794
    %3786 = vmatprep.subr.bf16.mxu0 %v2807
    %3787 = vmatpush1.bf16.msra.mxu0 %v2806
    %3788 = vmatprep.mubr.bf16.mxu0 %v3195
    %3789 = vmatmul.mubr.bf16.gmra.mrb[0].mxu0 %v3194
    %v3790 = vpop.f32.mrb[0].mxu0
    %v3791 = vadd.f32 %v3239, %v3790
    %v3792 = vpop.f32.mrb[0].mxu0
    %v3793 = vadd.f32 %v3243, %v3792
    %v3794 = vpop.f32.mrb[0].mxu0
    %v3795 = vpop.f32.mrb[0].mxu0
    %3796 = vdwg.mxu0
    %3797 = vmatprep.subr.bf16.mxu0 %v2819
    %3798 = vmatpush1.bf16.msra.mxu0 %v2818
    %3799 = vmatprep.subr.bf16.mxu0 %v2831
    %3800 = vmatpush1.bf16.msra.mxu0 %v2830
    %3801 = vmatprep.subr.bf16.mxu0 %v2843
    %3802 = vmatpush1.bf16.msra.mxu0 %v2842
    %3803 = vmatprep.subr.bf16.mxu0 %v2855
    %3804 = vmatpush1.bf16.msra.mxu0 %v2854
    %3805 = vmatprep.subr.bf16.mxu0 %v2867
    %3806 = vmatpush1.bf16.msra.mxu0 %v2866
    %3807 = vmatprep.subr.bf16.mxu0 %v2879
    %3808 = vmatpush1.bf16.msra.mxu0 %v2878
    %3809 = vmatprep.subr.bf16.mxu0 %v2891
    %3810 = vmatpush1.bf16.msra.mxu0 %v2890
    %3811 = vmatprep.subr.bf16.mxu0 %v2903
    %3812 = vmatpush1.bf16.msra.mxu0 %v2902
    %3813 = vmatprep.subr.bf16.mxu0 %v2915
    %3814 = vmatpush1.bf16.msra.mxu0 %v2914
    %3815 = vmatprep.subr.bf16.mxu0 %v2927
    %3816 = vmatpush1.bf16.msra.mxu0 %v2926
    %3817 = vmatprep.subr.bf16.mxu0 %v2939
    %3818 = vmatpush1.bf16.msra.mxu0 %v2938
    %3819 = vmatprep.subr.bf16.mxu0 %v2951
    %3820 = vmatpush1.bf16.msra.mxu0 %v2950
    %3821 = vmatprep.subr.bf16.mxu0 %v2963
    %3822 = vmatpush1.bf16.msra.mxu0 %v2962
    %3823 = vmatprep.subr.bf16.mxu0 %v2975
    %3824 = vmatpush1.bf16.msra.mxu0 %v2974
    %3825 = vmatprep.subr.bf16.mxu0 %v2987
    %3826 = vmatpush1.bf16.msra.mxu0 %v2986
    %3827 = vmatprep.subr.bf16.mxu0 %v2999
    %3828 = vmatpush1.bf16.msra.mxu0 %v2998
    %3829 = vmatprep.mubr.bf16.mxu0 %v3197
    %3830 = vmatmul.mubr.bf16.gmra.mrb[0].mxu0 %v3196
    %v3831 = vpop.f32.mrb[0].mxu0
    %v3832 = vadd.f32 %v3791, %v3831
    %v3833 = vpop.f32.mrb[0].mxu0
    %v3834 = vadd.f32 %v3793, %v3833
    %v3835 = vpop.f32.mrb[0].mxu0
    %v3836 = vpop.f32.mrb[0].mxu0
    %3837 = vdwg.mxu0
    %3838 = vmatprep.subr.bf16.mxu0 %v3011
    %3839 = vmatpush1.bf16.msra.mxu0 %v3010
    %3840 = vmatprep.subr.bf16.mxu0 %v3023
    %3841 = vmatpush1.bf16.msra.mxu0 %v3022
    %3842 = vmatprep.subr.bf16.mxu0 %v3035
    %3843 = vmatpush1.bf16.msra.mxu0 %v3034
    %3844 = vmatprep.subr.bf16.mxu0 %v3047
    %3845 = vmatpush1.bf16.msra.mxu0 %v3046
    %3846 = vmatprep.subr.bf16.mxu0 %v3059
    %3847 = vmatpush1.bf16.msra.mxu0 %v3058
    %3848 = vmatprep.subr.bf16.mxu0 %v3071
    %3849 = vmatpush1.bf16.msra.mxu0 %v3070
    %3850 = vmatprep.subr.bf16.mxu0 %v3083
    %3851 = vmatpush1.bf16.msra.mxu0 %v3082
    %3852 = vmatprep.subr.bf16.mxu0 %v3095
    %3853 = vmatpush1.bf16.msra.mxu0 %v3094
    %3854 = vmatprep.subr.bf16.mxu0 %v3107
    %3855 = vmatpush1.bf16.msra.mxu0 %v3106
    %3856 = vmatprep.subr.bf16.mxu0 %v3119
    %3857 = vmatpush1.bf16.msra.mxu0 %v3118
    %3858 = vmatprep.subr.bf16.mxu0 %v3131
    %3859 = vmatpush1.bf16.msra.mxu0 %v3130
    %3860 = vmatprep.subr.bf16.mxu0 %v3143
    %3861 = vmatpush1.bf16.msra.mxu0 %v3142
    %3862 = vmatprep.subr.bf16.mxu0 %v3155
    %3863 = vmatpush1.bf16.msra.mxu0 %v3154
    %3864 = vmatprep.subr.bf16.mxu0 %v3167
    %3865 = vmatpush1.bf16.msra.mxu0 %v3166
    %3866 = vmatprep.subr.bf16.mxu0 %v3179
    %3867 = vmatpush1.bf16.msra.mxu0 %v3178
    %3868 = vmatprep.subr.bf16.mxu0 %v3191
    %3869 = vmatpush1.bf16.msra.mxu0 %v3190
    %3870 = vmatprep.mubr.bf16.mxu0 %v3199
    %3871 = vmatmul.mubr.bf16.gmra.mrb[0].mxu0 %v3198
    %v3872 = vpop.f32.mrb[0].mxu0
    %v3873 = vadd.f32 %v3832, %v3872
    %v3874 = vpop.f32.mrb[0].mxu0
    %v3875 = vadd.f32 %v3834, %v3874
    %v3876 = vpop.f32.mrb[0].mxu0
    %v3877 = vpop.f32.mrb[0].mxu0
    %3878 = vdwg.mxu0
    %3879 = vmatprep.subr.bf16.mxu0 %v2629
    %3880 = vmatpush1.bf16.msra.mxu0 %v2628
    %3881 = vmatprep.subr.bf16.mxu0 %v2641
    %3882 = vmatpush1.bf16.msra.mxu0 %v2640
    %3883 = vmatprep.subr.bf16.mxu0 %v2653
    %3884 = vmatpush1.bf16.msra.mxu0 %v2652
    %3885 = vmatprep.subr.bf16.mxu0 %v2665
    %3886 = vmatpush1.bf16.msra.mxu0 %v2664
    %3887 = vmatprep.subr.bf16.mxu0 %v2677
    %3888 = vmatpush1.bf16.msra.mxu0 %v2676
    %3889 = vmatprep.subr.bf16.mxu0 %v2689
    %3890 = vmatpush1.bf16.msra.mxu0 %v2688
    %3891 = vmatprep.subr.bf16.mxu0 %v2701
    %3892 = vmatpush1.bf16.msra.mxu0 %v2700
    %3893 = vmatprep.subr.bf16.mxu0 %v2713
    %3894 = vmatpush1.bf16.msra.mxu0 %v2712
    %3895 = vmatprep.subr.bf16.mxu0 %v2725
    %3896 = vmatpush1.bf16.msra.mxu0 %v2724
    %3897 = vmatprep.subr.bf16.mxu0 %v2737
    %3898 = vmatpush1.bf16.msra.mxu0 %v2736
    %3899 = vmatprep.subr.bf16.mxu0 %v2749
    %3900 = vmatpush1.bf16.msra.mxu0 %v2748
    %3901 = vmatprep.subr.bf16.mxu0 %v2761
    %3902 = vmatpush1.bf16.msra.mxu0 %v2760
    %3903 = vmatprep.subr.bf16.mxu0 %v2773
    %3904 = vmatpush1.bf16.msra.mxu0 %v2772
    %3905 = vmatprep.subr.bf16.mxu0 %v2785
    %3906 = vmatpush1.bf16.msra.mxu0 %v2784
    %3907 = vmatprep.subr.bf16.mxu0 %v2797
    %3908 = vmatpush1.bf16.msra.mxu0 %v2796
    %3909 = vmatprep.subr.bf16.mxu0 %v2809
    %3910 = vmatpush1.bf16.msra.mxu0 %v2808
    %3911 = vmatprep.mubr.bf16.mxu0 %v3195
    %3912 = vmatmul.mubr.bf16.gmra.mrb[0].mxu0 %v3194
    %v3913 = vpop.f32.mrb[0].mxu0
    %v3914 = vadd.f32 %v3247, %v3913
    %v3915 = vpop.f32.mrb[0].mxu0
    %v3916 = vadd.f32 %v3251, %v3915
    %v3917 = vpop.f32.mrb[0].mxu0
    %v3918 = vpop.f32.mrb[0].mxu0
    %3919 = vdwg.mxu0
    %3920 = vmatprep.subr.bf16.mxu0 %v2821
    %3921 = vmatpush1.bf16.msra.mxu0 %v2820
    %3922 = vmatprep.subr.bf16.mxu0 %v2833
    %3923 = vmatpush1.bf16.msra.mxu0 %v2832
    %3924 = vmatprep.subr.bf16.mxu0 %v2845
    %3925 = vmatpush1.bf16.msra.mxu0 %v2844
    %3926 = vmatprep.subr.bf16.mxu0 %v2857
    %3927 = vmatpush1.bf16.msra.mxu0 %v2856
    %3928 = vmatprep.subr.bf16.mxu0 %v2869
    %3929 = vmatpush1.bf16.msra.mxu0 %v2868
    %3930 = vmatprep.subr.bf16.mxu0 %v2881
    %3931 = vmatpush1.bf16.msra.mxu0 %v2880
    %3932 = vmatprep.subr.bf16.mxu0 %v2893
    %3933 = vmatpush1.bf16.msra.mxu0 %v2892
    %3934 = vmatprep.subr.bf16.mxu0 %v2905
    %3935 = vmatpush1.bf16.msra.mxu0 %v2904
    %3936 = vmatprep.subr.bf16.mxu0 %v2917
    %3937 = vmatpush1.bf16.msra.mxu0 %v2916
    %3938 = vmatprep.subr.bf16.mxu0 %v2929
    %3939 = vmatpush1.bf16.msra.mxu0 %v2928
    %3940 = vmatprep.subr.bf16.mxu0 %v2941
    %3941 = vmatpush1.bf16.msra.mxu0 %v2940
    %3942 = vmatprep.subr.bf16.mxu0 %v2953
    %3943 = vmatpush1.bf16.msra.mxu0 %v2952
    %3944 = vmatprep.subr.bf16.mxu0 %v2965
    %3945 = vmatpush1.bf16.msra.mxu0 %v2964
    %3946 = vmatprep.subr.bf16.mxu0 %v2977
    %3947 = vmatpush1.bf16.msra.mxu0 %v2976
    %3948 = vmatprep.subr.bf16.mxu0 %v2989
    %3949 = vmatpush1.bf16.msra.mxu0 %v2988
    %3950 = vmatprep.subr.bf16.mxu0 %v3001
    %3951 = vmatpush1.bf16.msra.mxu0 %v3000
    %3952 = vmatprep.mubr.bf16.mxu0 %v3197
    %3953 = vmatmul.mubr.bf16.gmra.mrb[0].mxu0 %v3196
    %v3954 = vpop.f32.mrb[0].mxu0
    %v3955 = vadd.f32 %v3914, %v3954
    %v3956 = vpop.f32.mrb[0].mxu0
    %v3957 = vadd.f32 %v3916, %v3956
    %v3958 = vpop.f32.mrb[0].mxu0
    %v3959 = vpop.f32.mrb[0].mxu0
    %3960 = vdwg.mxu0
    %3961 = vmatprep.subr.bf16.mxu0 %v3013
    %3962 = vmatpush1.bf16.msra.mxu0 %v3012
    %3963 = vmatprep.subr.bf16.mxu0 %v3025
    %3964 = vmatpush1.bf16.msra.mxu0 %v3024
    %3965 = vmatprep.subr.bf16.mxu0 %v3037
    %3966 = vmatpush1.bf16.msra.mxu0 %v3036
    %3967 = vmatprep.subr.bf16.mxu0 %v3049
    %3968 = vmatpush1.bf16.msra.mxu0 %v3048
    %3969 = vmatprep.subr.bf16.mxu0 %v3061
    %3970 = vmatpush1.bf16.msra.mxu0 %v3060
    %3971 = vmatprep.subr.bf16.mxu0 %v3073
    %3972 = vmatpush1.bf16.msra.mxu0 %v3072
    %3973 = vmatprep.subr.bf16.mxu0 %v3085
    %3974 = vmatpush1.bf16.msra.mxu0 %v3084
    %3975 = vmatprep.subr.bf16.mxu0 %v3097
    %3976 = vmatpush1.bf16.msra.mxu0 %v3096
    %3977 = vmatprep.subr.bf16.mxu0 %v3109
    %3978 = vmatpush1.bf16.msra.mxu0 %v3108
    %3979 = vmatprep.subr.bf16.mxu0 %v3121
    %3980 = vmatpush1.bf16.msra.mxu0 %v3120
    %3981 = vmatprep.subr.bf16.mxu0 %v3133
    %3982 = vmatpush1.bf16.msra.mxu0 %v3132
    %3983 = vmatprep.subr.bf16.mxu0 %v3145
    %3984 = vmatpush1.bf16.msra.mxu0 %v3144
    %3985 = vmatprep.subr.bf16.mxu0 %v3157
    %3986 = vmatpush1.bf16.msra.mxu0 %v3156
    %3987 = vmatprep.subr.bf16.mxu0 %v3169
    %3988 = vmatpush1.bf16.msra.mxu0 %v3168
    %3989 = vmatprep.subr.bf16.mxu0 %v3181
    %3990 = vmatpush1.bf16.msra.mxu0 %v3180
    %3991 = vmatprep.subr.bf16.mxu0 %v3193
    %3992 = vmatpush1.bf16.msra.mxu0 %v3192
    %3993 = vmatprep.mubr.bf16.mxu0 %v3199
    %3994 = vmatmul.mubr.bf16.gmra.mrb[0].mxu0 %v3198
    %v3995 = vpop.f32.mrb[0].mxu0
    %v3996 = vadd.f32 %v3955, %v3995
    %v3997 = vpop.f32.mrb[0].mxu0
    %v3998 = vadd.f32 %v3957, %v3997
    %v3999 = vpop.f32.mrb[0].mxu0
    %v4000 = vpop.f32.mrb[0].mxu0
    %4001 = vdwg.mxu0
    %v4002 = vmax.f32 %v3381, 0.0
    %v4003 = vmax.f32 %v3383, 0.0
    %v4004 = vmax.f32 %v3504, 0.0
    %v4005 = vmax.f32 %v3506, 0.0
    %v4006 = vmax.f32 %v3627, 0.0
    %v4007 = vmax.f32 %v3629, 0.0
    %v4008 = vmax.f32 %v3750, 0.0
    %v4009 = vmax.f32 %v3752, 0.0
    %v4010 = vmax.f32 %v3873, 0.0
    %v4011 = vmax.f32 %v3875, 0.0
    %v4012 = vmax.f32 %v3996, 0.0
    %v4013 = vmax.f32 %v3998, 0.0
    %s4014 = smul.u32 4, 192
    %s4015 = smul.u32 %s4014, 8
    %s4016 = sshll.u32 %s4015, 4
    %4017 = dma.done %s267, %s4016
    %v4018 = vld [vmem:[#allocation4] sm:$0xff]
    %v4019 = vld [vmem:[#allocation4 + $0x8] sm:$0xff]
    %v4020 = vld [vmem:[#allocation4 + $0x10] sm:$0xff]
    %v4021 = vld [vmem:[#allocation4 + $0x18] sm:$0xff]
    %v4022 = vld [vmem:[#allocation4 + $0x20] sm:$0xff]
    %v4023 = vld [vmem:[#allocation4 + $0x28] sm:$0xff]
    %v4024 = vld [vmem:[#allocation4 + $0x30] sm:$0xff]
    %v4025 = vld [vmem:[#allocation4 + $0x38] sm:$0xff]
    %v4026 = vld [vmem:[#allocation4 + $0x40] sm:$0xff]
    %v4027 = vld [vmem:[#allocation4 + $0x48] sm:$0xff]
    %v4028 = vld [vmem:[#allocation4 + $0x50] sm:$0xff]
    %v4029 = vld [vmem:[#allocation4 + $0x58] sm:$0xff]
    %v4030 = vld [vmem:[#allocation4 + $0x60] sm:$0xff]
    %v4031 = vld [vmem:[#allocation4 + $0x68] sm:$0xff]
    %v4032 = vld [vmem:[#allocation4 + $0x70] sm:$0xff]
    %v4033 = vld [vmem:[#allocation4 + $0x78] sm:$0xff]
    %v4034 = vld [vmem:[#allocation4 + $0x80] sm:$0xff]
    %v4035 = vld [vmem:[#allocation4 + $0x88] sm:$0xff]
    %v4036 = vld [vmem:[#allocation4 + $0x90] sm:$0xff]
    %v4037 = vld [vmem:[#allocation4 + $0x98] sm:$0xff]
    %v4038 = vld [vmem:[#allocation4 + $0xa0] sm:$0xff]
    %v4039 = vld [vmem:[#allocation4 + $0xa8] sm:$0xff]
    %v4040 = vld [vmem:[#allocation4 + $0xb0] sm:$0xff]
    %v4041 = vld [vmem:[#allocation4 + $0xb8] sm:$0xff]
    %v4042 = vld [vmem:[#allocation4 + $0xc0] sm:$0xff]
    %v4043 = vld [vmem:[#allocation4 + $0xc8] sm:$0xff]
    %v4044 = vld [vmem:[#allocation4 + $0xd0] sm:$0xff]
    %v4045 = vld [vmem:[#allocation4 + $0xd8] sm:$0xff]
    %v4046 = vld [vmem:[#allocation4 + $0xe0] sm:$0xff]
    %v4047 = vld [vmem:[#allocation4 + $0xe8] sm:$0xff]
    %v4048 = vld [vmem:[#allocation4 + $0xf0] sm:$0xff]
    %v4049 = vld [vmem:[#allocation4 + $0xf8] sm:$0xff]
    %v4050 = vld [vmem:[#allocation4 + $0x100] sm:$0xff]
    %v4051 = vld [vmem:[#allocation4 + $0x108] sm:$0xff]
    %v4052 = vld [vmem:[#allocation4 + $0x110] sm:$0xff]
    %v4053 = vld [vmem:[#allocation4 + $0x118] sm:$0xff]
    %v4054 = vld [vmem:[#allocation4 + $0x120] sm:$0xff]
    %v4055 = vld [vmem:[#allocation4 + $0x128] sm:$0xff]
    %v4056 = vld [vmem:[#allocation4 + $0x130] sm:$0xff]
    %v4057 = vld [vmem:[#allocation4 + $0x138] sm:$0xff]
    %v4058 = vld [vmem:[#allocation4 + $0x140] sm:$0xff]
    %v4059 = vld [vmem:[#allocation4 + $0x148] sm:$0xff]
    %v4060 = vld [vmem:[#allocation4 + $0x150] sm:$0xff]
    %v4061 = vld [vmem:[#allocation4 + $0x158] sm:$0xff]
    %v4062 = vld [vmem:[#allocation4 + $0x160] sm:$0xff]
    %v4063 = vld [vmem:[#allocation4 + $0x168] sm:$0xff]
    %v4064 = vld [vmem:[#allocation4 + $0x170] sm:$0xff]
    %v4065 = vld [vmem:[#allocation4 + $0x178] sm:$0xff]
    %v4066 = vld [vmem:[#allocation4 + $0x180] sm:$0xff]
    %v4067 = vld [vmem:[#allocation4 + $0x188] sm:$0xff]
    %v4068 = vld [vmem:[#allocation4 + $0x190] sm:$0xff]
    %v4069 = vld [vmem:[#allocation4 + $0x198] sm:$0xff]
    %v4070 = vld [vmem:[#allocation4 + $0x1a0] sm:$0xff]
    %v4071 = vld [vmem:[#allocation4 + $0x1a8] sm:$0xff]
    %v4072 = vld [vmem:[#allocation4 + $0x1b0] sm:$0xff]
    %v4073 = vld [vmem:[#allocation4 + $0x1b8] sm:$0xff]
    %v4074 = vld [vmem:[#allocation4 + $0x1c0] sm:$0xff]
    %v4075 = vld [vmem:[#allocation4 + $0x1c8] sm:$0xff]
    %v4076 = vld [vmem:[#allocation4 + $0x1d0] sm:$0xff]
    %v4077 = vld [vmem:[#allocation4 + $0x1d8] sm:$0xff]
    %v4078 = vld [vmem:[#allocation4 + $0x1e0] sm:$0xff]
    %v4079 = vld [vmem:[#allocation4 + $0x1e8] sm:$0xff]
    %v4080 = vld [vmem:[#allocation4 + $0x1f0] sm:$0xff]
    %v4081 = vld [vmem:[#allocation4 + $0x1f8] sm:$0xff]
    %v4082 = vld [vmem:[#allocation4 + $0x200] sm:$0xff]
    %v4083 = vld [vmem:[#allocation4 + $0x208] sm:$0xff]
    %v4084 = vld [vmem:[#allocation4 + $0x210] sm:$0xff]
    %v4085 = vld [vmem:[#allocation4 + $0x218] sm:$0xff]
    %v4086 = vld [vmem:[#allocation4 + $0x220] sm:$0xff]
    %v4087 = vld [vmem:[#allocation4 + $0x228] sm:$0xff]
    %v4088 = vld [vmem:[#allocation4 + $0x230] sm:$0xff]
    %v4089 = vld [vmem:[#allocation4 + $0x238] sm:$0xff]
    %v4090 = vld [vmem:[#allocation4 + $0x240] sm:$0xff]
    %v4091 = vld [vmem:[#allocation4 + $0x248] sm:$0xff]
    %v4092 = vld [vmem:[#allocation4 + $0x250] sm:$0xff]
    %v4093 = vld [vmem:[#allocation4 + $0x258] sm:$0xff]
    %v4094 = vld [vmem:[#allocation4 + $0x260] sm:$0xff]
    %v4095 = vld [vmem:[#allocation4 + $0x268] sm:$0xff]
    %v4096 = vld [vmem:[#allocation4 + $0x270] sm:$0xff]
    %v4097 = vld [vmem:[#allocation4 + $0x278] sm:$0xff]
    %v4098 = vld [vmem:[#allocation4 + $0x280] sm:$0xff]
    %v4099 = vld [vmem:[#allocation4 + $0x288] sm:$0xff]
    %v4100 = vld [vmem:[#allocation4 + $0x290] sm:$0xff]
    %v4101 = vld [vmem:[#allocation4 + $0x298] sm:$0xff]
    %v4102 = vld [vmem:[#allocation4 + $0x2a0] sm:$0xff]
    %v4103 = vld [vmem:[#allocation4 + $0x2a8] sm:$0xff]
    %v4104 = vld [vmem:[#allocation4 + $0x2b0] sm:$0xff]
    %v4105 = vld [vmem:[#allocation4 + $0x2b8] sm:$0xff]
    %v4106 = vld [vmem:[#allocation4 + $0x2c0] sm:$0xff]
    %v4107 = vld [vmem:[#allocation4 + $0x2c8] sm:$0xff]
    %v4108 = vld [vmem:[#allocation4 + $0x2d0] sm:$0xff]
    %v4109 = vld [vmem:[#allocation4 + $0x2d8] sm:$0xff]
    %v4110 = vld [vmem:[#allocation4 + $0x2e0] sm:$0xff]
    %v4111 = vld [vmem:[#allocation4 + $0x2e8] sm:$0xff]
    %v4112 = vld [vmem:[#allocation4 + $0x2f0] sm:$0xff]
    %v4113 = vld [vmem:[#allocation4 + $0x2f8] sm:$0xff]
    %v4114 = vld [vmem:[#allocation4 + $0x300] sm:$0xff]
    %v4115 = vld [vmem:[#allocation4 + $0x308] sm:$0xff]
    %v4116 = vld [vmem:[#allocation4 + $0x310] sm:$0xff]
    %v4117 = vld [vmem:[#allocation4 + $0x318] sm:$0xff]
    %v4118 = vld [vmem:[#allocation4 + $0x320] sm:$0xff]
    %v4119 = vld [vmem:[#allocation4 + $0x328] sm:$0xff]
    %v4120 = vld [vmem:[#allocation4 + $0x330] sm:$0xff]
    %v4121 = vld [vmem:[#allocation4 + $0x338] sm:$0xff]
    %v4122 = vld [vmem:[#allocation4 + $0x340] sm:$0xff]
    %v4123 = vld [vmem:[#allocation4 + $0x348] sm:$0xff]
    %v4124 = vld [vmem:[#allocation4 + $0x350] sm:$0xff]
    %v4125 = vld [vmem:[#allocation4 + $0x358] sm:$0xff]
    %v4126 = vld [vmem:[#allocation4 + $0x360] sm:$0xff]
    %v4127 = vld [vmem:[#allocation4 + $0x368] sm:$0xff]
    %v4128 = vld [vmem:[#allocation4 + $0x370] sm:$0xff]
    %v4129 = vld [vmem:[#allocation4 + $0x378] sm:$0xff]
    %v4130 = vld [vmem:[#allocation4 + $0x380] sm:$0xff]
    %v4131 = vld [vmem:[#allocation4 + $0x388] sm:$0xff]
    %v4132 = vld [vmem:[#allocation4 + $0x390] sm:$0xff]
    %v4133 = vld [vmem:[#allocation4 + $0x398] sm:$0xff]
    %v4134 = vld [vmem:[#allocation4 + $0x3a0] sm:$0xff]
    %v4135 = vld [vmem:[#allocation4 + $0x3a8] sm:$0xff]
    %v4136 = vld [vmem:[#allocation4 + $0x3b0] sm:$0xff]
    %v4137 = vld [vmem:[#allocation4 + $0x3b8] sm:$0xff]
    %v4138 = vld [vmem:[#allocation4 + $0x3c0] sm:$0xff]
    %v4139 = vld [vmem:[#allocation4 + $0x3c8] sm:$0xff]
    %v4140 = vld [vmem:[#allocation4 + $0x3d0] sm:$0xff]
    %v4141 = vld [vmem:[#allocation4 + $0x3d8] sm:$0xff]
    %v4142 = vld [vmem:[#allocation4 + $0x3e0] sm:$0xff]
    %v4143 = vld [vmem:[#allocation4 + $0x3e8] sm:$0xff]
    %v4144 = vld [vmem:[#allocation4 + $0x3f0] sm:$0xff]
    %v4145 = vld [vmem:[#allocation4 + $0x3f8] sm:$0xff]
    %v4146 = vld [vmem:[#allocation4 + $0x400] sm:$0xff]
    %v4147 = vld [vmem:[#allocation4 + $0x408] sm:$0xff]
    %v4148 = vld [vmem:[#allocation4 + $0x410] sm:$0xff]
    %v4149 = vld [vmem:[#allocation4 + $0x418] sm:$0xff]
    %v4150 = vld [vmem:[#allocation4 + $0x420] sm:$0xff]
    %v4151 = vld [vmem:[#allocation4 + $0x428] sm:$0xff]
    %v4152 = vld [vmem:[#allocation4 + $0x430] sm:$0xff]
    %v4153 = vld [vmem:[#allocation4 + $0x438] sm:$0xff]
    %v4154 = vld [vmem:[#allocation4 + $0x440] sm:$0xff]
    %v4155 = vld [vmem:[#allocation4 + $0x448] sm:$0xff]
    %v4156 = vld [vmem:[#allocation4 + $0x450] sm:$0xff]
    %v4157 = vld [vmem:[#allocation4 + $0x458] sm:$0xff]
    %v4158 = vld [vmem:[#allocation4 + $0x460] sm:$0xff]
    %v4159 = vld [vmem:[#allocation4 + $0x468] sm:$0xff]
    %v4160 = vld [vmem:[#allocation4 + $0x470] sm:$0xff]
    %v4161 = vld [vmem:[#allocation4 + $0x478] sm:$0xff]
    %v4162 = vld [vmem:[#allocation4 + $0x480] sm:$0xff]
    %v4163 = vld [vmem:[#allocation4 + $0x488] sm:$0xff]
    %v4164 = vld [vmem:[#allocation4 + $0x490] sm:$0xff]
    %v4165 = vld [vmem:[#allocation4 + $0x498] sm:$0xff]
    %v4166 = vld [vmem:[#allocation4 + $0x4a0] sm:$0xff]
    %v4167 = vld [vmem:[#allocation4 + $0x4a8] sm:$0xff]
    %v4168 = vld [vmem:[#allocation4 + $0x4b0] sm:$0xff]
    %v4169 = vld [vmem:[#allocation4 + $0x4b8] sm:$0xff]
    %v4170 = vld [vmem:[#allocation4 + $0x4c0] sm:$0xff]
    %v4171 = vld [vmem:[#allocation4 + $0x4c8] sm:$0xff]
    %v4172 = vld [vmem:[#allocation4 + $0x4d0] sm:$0xff]
    %v4173 = vld [vmem:[#allocation4 + $0x4d8] sm:$0xff]
    %v4174 = vld [vmem:[#allocation4 + $0x4e0] sm:$0xff]
    %v4175 = vld [vmem:[#allocation4 + $0x4e8] sm:$0xff]
    %v4176 = vld [vmem:[#allocation4 + $0x4f0] sm:$0xff]
    %v4177 = vld [vmem:[#allocation4 + $0x4f8] sm:$0xff]
    %v4178 = vld [vmem:[#allocation4 + $0x500] sm:$0xff]
    %v4179 = vld [vmem:[#allocation4 + $0x508] sm:$0xff]
    %v4180 = vld [vmem:[#allocation4 + $0x510] sm:$0xff]
    %v4181 = vld [vmem:[#allocation4 + $0x518] sm:$0xff]
    %v4182 = vld [vmem:[#allocation4 + $0x520] sm:$0xff]
    %v4183 = vld [vmem:[#allocation4 + $0x528] sm:$0xff]
    %v4184 = vld [vmem:[#allocation4 + $0x530] sm:$0xff]
    %v4185 = vld [vmem:[#allocation4 + $0x538] sm:$0xff]
    %v4186 = vld [vmem:[#allocation4 + $0x540] sm:$0xff]
    %v4187 = vld [vmem:[#allocation4 + $0x548] sm:$0xff]
    %v4188 = vld [vmem:[#allocation4 + $0x550] sm:$0xff]
    %v4189 = vld [vmem:[#allocation4 + $0x558] sm:$0xff]
    %v4190 = vld [vmem:[#allocation4 + $0x560] sm:$0xff]
    %v4191 = vld [vmem:[#allocation4 + $0x568] sm:$0xff]
    %v4192 = vld [vmem:[#allocation4 + $0x570] sm:$0xff]
    %v4193 = vld [vmem:[#allocation4 + $0x578] sm:$0xff]
    %v4194 = vld [vmem:[#allocation4 + $0x580] sm:$0xff]
    %v4195 = vld [vmem:[#allocation4 + $0x588] sm:$0xff]
    %v4196 = vld [vmem:[#allocation4 + $0x590] sm:$0xff]
    %v4197 = vld [vmem:[#allocation4 + $0x598] sm:$0xff]
    %v4198 = vld [vmem:[#allocation4 + $0x5a0] sm:$0xff]
    %v4199 = vld [vmem:[#allocation4 + $0x5a8] sm:$0xff]
    %v4200 = vld [vmem:[#allocation4 + $0x5b0] sm:$0xff]
    %v4201 = vld [vmem:[#allocation4 + $0x5b8] sm:$0xff]
    %v4202 = vld [vmem:[#allocation4 + $0x5c0] sm:$0xff]
    %v4203 = vld [vmem:[#allocation4 + $0x5c8] sm:$0xff]
    %v4204 = vld [vmem:[#allocation4 + $0x5d0] sm:$0xff]
    %v4205 = vld [vmem:[#allocation4 + $0x5d8] sm:$0xff]
    %v4206 = vld [vmem:[#allocation4 + $0x5e0] sm:$0xff]
    %v4207 = vld [vmem:[#allocation4 + $0x5e8] sm:$0xff]
    %v4208 = vld [vmem:[#allocation4 + $0x5f0] sm:$0xff]
    %v4209 = vld [vmem:[#allocation4 + $0x5f8] sm:$0xff]
    %v4210 = vld [vmem:[#allocation4 + $0x600] sm:$0xff]
    %v4211 = vld [vmem:[#allocation4 + $0x608] sm:$0xff]
    %v4212 = vld [vmem:[#allocation4 + $0x610] sm:$0xff]
    %v4213 = vld [vmem:[#allocation4 + $0x618] sm:$0xff]
    %v4214 = vld [vmem:[#allocation4 + $0x620] sm:$0xff]
    %v4215 = vld [vmem:[#allocation4 + $0x628] sm:$0xff]
    %v4216 = vld [vmem:[#allocation4 + $0x630] sm:$0xff]
    %v4217 = vld [vmem:[#allocation4 + $0x638] sm:$0xff]
    %v4218 = vld [vmem:[#allocation4 + $0x640] sm:$0xff]
    %v4219 = vld [vmem:[#allocation4 + $0x648] sm:$0xff]
    %v4220 = vld [vmem:[#allocation4 + $0x650] sm:$0xff]
    %v4221 = vld [vmem:[#allocation4 + $0x658] sm:$0xff]
    %v4222 = vld [vmem:[#allocation4 + $0x660] sm:$0xff]
    %v4223 = vld [vmem:[#allocation4 + $0x668] sm:$0xff]
    %v4224 = vld [vmem:[#allocation4 + $0x670] sm:$0xff]
    %v4225 = vld [vmem:[#allocation4 + $0x678] sm:$0xff]
    %v4226 = vld [vmem:[#allocation4 + $0x680] sm:$0xff]
    %v4227 = vld [vmem:[#allocation4 + $0x688] sm:$0xff]
    %v4228 = vld [vmem:[#allocation4 + $0x690] sm:$0xff]
    %v4229 = vld [vmem:[#allocation4 + $0x698] sm:$0xff]
    %v4230 = vld [vmem:[#allocation4 + $0x6a0] sm:$0xff]
    %v4231 = vld [vmem:[#allocation4 + $0x6a8] sm:$0xff]
    %v4232 = vld [vmem:[#allocation4 + $0x6b0] sm:$0xff]
    %v4233 = vld [vmem:[#allocation4 + $0x6b8] sm:$0xff]
    %v4234 = vld [vmem:[#allocation4 + $0x6c0] sm:$0xff]
    %v4235 = vld [vmem:[#allocation4 + $0x6c8] sm:$0xff]
    %v4236 = vld [vmem:[#allocation4 + $0x6d0] sm:$0xff]
    %v4237 = vld [vmem:[#allocation4 + $0x6d8] sm:$0xff]
    %v4238 = vld [vmem:[#allocation4 + $0x6e0] sm:$0xff]
    %v4239 = vld [vmem:[#allocation4 + $0x6e8] sm:$0xff]
    %v4240 = vld [vmem:[#allocation4 + $0x6f0] sm:$0xff]
    %v4241 = vld [vmem:[#allocation4 + $0x6f8] sm:$0xff]
    %v4242 = vld [vmem:[#allocation4 + $0x700] sm:$0xff]
    %v4243 = vld [vmem:[#allocation4 + $0x708] sm:$0xff]
    %v4244 = vld [vmem:[#allocation4 + $0x710] sm:$0xff]
    %v4245 = vld [vmem:[#allocation4 + $0x718] sm:$0xff]
    %v4246 = vld [vmem:[#allocation4 + $0x720] sm:$0xff]
    %v4247 = vld [vmem:[#allocation4 + $0x728] sm:$0xff]
    %v4248 = vld [vmem:[#allocation4 + $0x730] sm:$0xff]
    %v4249 = vld [vmem:[#allocation4 + $0x738] sm:$0xff]
    %v4250 = vld [vmem:[#allocation4 + $0x740] sm:$0xff]
    %v4251 = vld [vmem:[#allocation4 + $0x748] sm:$0xff]
    %v4252 = vld [vmem:[#allocation4 + $0x750] sm:$0xff]
    %v4253 = vld [vmem:[#allocation4 + $0x758] sm:$0xff]
    %v4254 = vld [vmem:[#allocation4 + $0x760] sm:$0xff]
    %v4255 = vld [vmem:[#allocation4 + $0x768] sm:$0xff]
    %v4256 = vld [vmem:[#allocation4 + $0x770] sm:$0xff]
    %v4257 = vld [vmem:[#allocation4 + $0x778] sm:$0xff]
    %v4258 = vld [vmem:[#allocation4 + $0x780] sm:$0xff]
    %v4259 = vld [vmem:[#allocation4 + $0x788] sm:$0xff]
    %v4260 = vld [vmem:[#allocation4 + $0x790] sm:$0xff]
    %v4261 = vld [vmem:[#allocation4 + $0x798] sm:$0xff]
    %v4262 = vld [vmem:[#allocation4 + $0x7a0] sm:$0xff]
    %v4263 = vld [vmem:[#allocation4 + $0x7a8] sm:$0xff]
    %v4264 = vld [vmem:[#allocation4 + $0x7b0] sm:$0xff]
    %v4265 = vld [vmem:[#allocation4 + $0x7b8] sm:$0xff]
    %v4266 = vld [vmem:[#allocation4 + $0x7c0] sm:$0xff]
    %v4267 = vld [vmem:[#allocation4 + $0x7c8] sm:$0xff]
    %v4268 = vld [vmem:[#allocation4 + $0x7d0] sm:$0xff]
    %v4269 = vld [vmem:[#allocation4 + $0x7d8] sm:$0xff]
    %v4270 = vld [vmem:[#allocation4 + $0x7e0] sm:$0xff]
    %v4271 = vld [vmem:[#allocation4 + $0x7e8] sm:$0xff]
    %v4272 = vld [vmem:[#allocation4 + $0x7f0] sm:$0xff]
    %v4273 = vld [vmem:[#allocation4 + $0x7f8] sm:$0xff]
    %v4274 = vld [vmem:[#allocation4 + $0x800] sm:$0xff]
    %v4275 = vld [vmem:[#allocation4 + $0x808] sm:$0xff]
    %v4276 = vld [vmem:[#allocation4 + $0x810] sm:$0xff]
    %v4277 = vld [vmem:[#allocation4 + $0x818] sm:$0xff]
    %v4278 = vld [vmem:[#allocation4 + $0x820] sm:$0xff]
    %v4279 = vld [vmem:[#allocation4 + $0x828] sm:$0xff]
    %v4280 = vld [vmem:[#allocation4 + $0x830] sm:$0xff]
    %v4281 = vld [vmem:[#allocation4 + $0x838] sm:$0xff]
    %v4282 = vld [vmem:[#allocation4 + $0x840] sm:$0xff]
    %v4283 = vld [vmem:[#allocation4 + $0x848] sm:$0xff]
    %v4284 = vld [vmem:[#allocation4 + $0x850] sm:$0xff]
    %v4285 = vld [vmem:[#allocation4 + $0x858] sm:$0xff]
    %v4286 = vld [vmem:[#allocation4 + $0x860] sm:$0xff]
    %v4287 = vld [vmem:[#allocation4 + $0x868] sm:$0xff]
    %v4288 = vld [vmem:[#allocation4 + $0x870] sm:$0xff]
    %v4289 = vld [vmem:[#allocation4 + $0x878] sm:$0xff]
    %v4290 = vld [vmem:[#allocation4 + $0x880] sm:$0xff]
    %v4291 = vld [vmem:[#allocation4 + $0x888] sm:$0xff]
    %v4292 = vld [vmem:[#allocation4 + $0x890] sm:$0xff]
    %v4293 = vld [vmem:[#allocation4 + $0x898] sm:$0xff]
    %v4294 = vld [vmem:[#allocation4 + $0x8a0] sm:$0xff]
    %v4295 = vld [vmem:[#allocation4 + $0x8a8] sm:$0xff]
    %v4296 = vld [vmem:[#allocation4 + $0x8b0] sm:$0xff]
    %v4297 = vld [vmem:[#allocation4 + $0x8b8] sm:$0xff]
    %v4298 = vld [vmem:[#allocation4 + $0x8c0] sm:$0xff]
    %v4299 = vld [vmem:[#allocation4 + $0x8c8] sm:$0xff]
    %v4300 = vld [vmem:[#allocation4 + $0x8d0] sm:$0xff]
    %v4301 = vld [vmem:[#allocation4 + $0x8d8] sm:$0xff]
    %v4302 = vld [vmem:[#allocation4 + $0x8e0] sm:$0xff]
    %v4303 = vld [vmem:[#allocation4 + $0x8e8] sm:$0xff]
    %v4304 = vld [vmem:[#allocation4 + $0x8f0] sm:$0xff]
    %v4305 = vld [vmem:[#allocation4 + $0x8f8] sm:$0xff]
    %v4306 = vld [vmem:[#allocation4 + $0x900] sm:$0xff]
    %v4307 = vld [vmem:[#allocation4 + $0x908] sm:$0xff]
    %v4308 = vld [vmem:[#allocation4 + $0x910] sm:$0xff]
    %v4309 = vld [vmem:[#allocation4 + $0x918] sm:$0xff]
    %v4310 = vld [vmem:[#allocation4 + $0x920] sm:$0xff]
    %v4311 = vld [vmem:[#allocation4 + $0x928] sm:$0xff]
    %v4312 = vld [vmem:[#allocation4 + $0x930] sm:$0xff]
    %v4313 = vld [vmem:[#allocation4 + $0x938] sm:$0xff]
    %v4314 = vld [vmem:[#allocation4 + $0x940] sm:$0xff]
    %v4315 = vld [vmem:[#allocation4 + $0x948] sm:$0xff]
    %v4316 = vld [vmem:[#allocation4 + $0x950] sm:$0xff]
    %v4317 = vld [vmem:[#allocation4 + $0x958] sm:$0xff]
    %v4318 = vld [vmem:[#allocation4 + $0x960] sm:$0xff]
    %v4319 = vld [vmem:[#allocation4 + $0x968] sm:$0xff]
    %v4320 = vld [vmem:[#allocation4 + $0x970] sm:$0xff]
    %v4321 = vld [vmem:[#allocation4 + $0x978] sm:$0xff]
    %v4322 = vld [vmem:[#allocation4 + $0x980] sm:$0xff]
    %v4323 = vld [vmem:[#allocation4 + $0x988] sm:$0xff]
    %v4324 = vld [vmem:[#allocation4 + $0x990] sm:$0xff]
    %v4325 = vld [vmem:[#allocation4 + $0x998] sm:$0xff]
    %v4326 = vld [vmem:[#allocation4 + $0x9a0] sm:$0xff]
    %v4327 = vld [vmem:[#allocation4 + $0x9a8] sm:$0xff]
    %v4328 = vld [vmem:[#allocation4 + $0x9b0] sm:$0xff]
    %v4329 = vld [vmem:[#allocation4 + $0x9b8] sm:$0xff]
    %v4330 = vld [vmem:[#allocation4 + $0x9c0] sm:$0xff]
    %v4331 = vld [vmem:[#allocation4 + $0x9c8] sm:$0xff]
    %v4332 = vld [vmem:[#allocation4 + $0x9d0] sm:$0xff]
    %v4333 = vld [vmem:[#allocation4 + $0x9d8] sm:$0xff]
    %v4334 = vld [vmem:[#allocation4 + $0x9e0] sm:$0xff]
    %v4335 = vld [vmem:[#allocation4 + $0x9e8] sm:$0xff]
    %v4336 = vld [vmem:[#allocation4 + $0x9f0] sm:$0xff]
    %v4337 = vld [vmem:[#allocation4 + $0x9f8] sm:$0xff]
    %v4338 = vld [vmem:[#allocation4 + $0xa00] sm:$0xff]
    %v4339 = vld [vmem:[#allocation4 + $0xa08] sm:$0xff]
    %v4340 = vld [vmem:[#allocation4 + $0xa10] sm:$0xff]
    %v4341 = vld [vmem:[#allocation4 + $0xa18] sm:$0xff]
    %v4342 = vld [vmem:[#allocation4 + $0xa20] sm:$0xff]
    %v4343 = vld [vmem:[#allocation4 + $0xa28] sm:$0xff]
    %v4344 = vld [vmem:[#allocation4 + $0xa30] sm:$0xff]
    %v4345 = vld [vmem:[#allocation4 + $0xa38] sm:$0xff]
    %v4346 = vld [vmem:[#allocation4 + $0xa40] sm:$0xff]
    %v4347 = vld [vmem:[#allocation4 + $0xa48] sm:$0xff]
    %v4348 = vld [vmem:[#allocation4 + $0xa50] sm:$0xff]
    %v4349 = vld [vmem:[#allocation4 + $0xa58] sm:$0xff]
    %v4350 = vld [vmem:[#allocation4 + $0xa60] sm:$0xff]
    %v4351 = vld [vmem:[#allocation4 + $0xa68] sm:$0xff]
    %v4352 = vld [vmem:[#allocation4 + $0xa70] sm:$0xff]
    %v4353 = vld [vmem:[#allocation4 + $0xa78] sm:$0xff]
    %v4354 = vld [vmem:[#allocation4 + $0xa80] sm:$0xff]
    %v4355 = vld [vmem:[#allocation4 + $0xa88] sm:$0xff]
    %v4356 = vld [vmem:[#allocation4 + $0xa90] sm:$0xff]
    %v4357 = vld [vmem:[#allocation4 + $0xa98] sm:$0xff]
    %v4358 = vld [vmem:[#allocation4 + $0xaa0] sm:$0xff]
    %v4359 = vld [vmem:[#allocation4 + $0xaa8] sm:$0xff]
    %v4360 = vld [vmem:[#allocation4 + $0xab0] sm:$0xff]
    %v4361 = vld [vmem:[#allocation4 + $0xab8] sm:$0xff]
    %v4362 = vld [vmem:[#allocation4 + $0xac0] sm:$0xff]
    %v4363 = vld [vmem:[#allocation4 + $0xac8] sm:$0xff]
    %v4364 = vld [vmem:[#allocation4 + $0xad0] sm:$0xff]
    %v4365 = vld [vmem:[#allocation4 + $0xad8] sm:$0xff]
    %v4366 = vld [vmem:[#allocation4 + $0xae0] sm:$0xff]
    %v4367 = vld [vmem:[#allocation4 + $0xae8] sm:$0xff]
    %v4368 = vld [vmem:[#allocation4 + $0xaf0] sm:$0xff]
    %v4369 = vld [vmem:[#allocation4 + $0xaf8] sm:$0xff]
    %v4370 = vld [vmem:[#allocation4 + $0xb00] sm:$0xff]
    %v4371 = vld [vmem:[#allocation4 + $0xb08] sm:$0xff]
    %v4372 = vld [vmem:[#allocation4 + $0xb10] sm:$0xff]
    %v4373 = vld [vmem:[#allocation4 + $0xb18] sm:$0xff]
    %v4374 = vld [vmem:[#allocation4 + $0xb20] sm:$0xff]
    %v4375 = vld [vmem:[#allocation4 + $0xb28] sm:$0xff]
    %v4376 = vld [vmem:[#allocation4 + $0xb30] sm:$0xff]
    %v4377 = vld [vmem:[#allocation4 + $0xb38] sm:$0xff]
    %v4378 = vld [vmem:[#allocation4 + $0xb40] sm:$0xff]
    %v4379 = vld [vmem:[#allocation4 + $0xb48] sm:$0xff]
    %v4380 = vld [vmem:[#allocation4 + $0xb50] sm:$0xff]
    %v4381 = vld [vmem:[#allocation4 + $0xb58] sm:$0xff]
    %v4382 = vld [vmem:[#allocation4 + $0xb60] sm:$0xff]
    %v4383 = vld [vmem:[#allocation4 + $0xb68] sm:$0xff]
    %v4384 = vld [vmem:[#allocation4 + $0xb70] sm:$0xff]
    %v4385 = vld [vmem:[#allocation4 + $0xb78] sm:$0xff]
    %v4386 = vld [vmem:[#allocation4 + $0xb80] sm:$0xff]
    %v4387 = vld [vmem:[#allocation4 + $0xb88] sm:$0xff]
    %v4388 = vld [vmem:[#allocation4 + $0xb90] sm:$0xff]
    %v4389 = vld [vmem:[#allocation4 + $0xb98] sm:$0xff]
    %v4390 = vld [vmem:[#allocation4 + $0xba0] sm:$0xff]
    %v4391 = vld [vmem:[#allocation4 + $0xba8] sm:$0xff]
    %v4392 = vld [vmem:[#allocation4 + $0xbb0] sm:$0xff]
    %v4393 = vld [vmem:[#allocation4 + $0xbb8] sm:$0xff]
    %v4394 = vld [vmem:[#allocation4 + $0xbc0] sm:$0xff]
    %v4395 = vld [vmem:[#allocation4 + $0xbc8] sm:$0xff]
    %v4396 = vld [vmem:[#allocation4 + $0xbd0] sm:$0xff]
    %v4397 = vld [vmem:[#allocation4 + $0xbd8] sm:$0xff]
    %v4398 = vld [vmem:[#allocation4 + $0xbe0] sm:$0xff]
    %v4399 = vld [vmem:[#allocation4 + $0xbe8] sm:$0xff]
    %v4400 = vld [vmem:[#allocation4 + $0xbf0] sm:$0xff]
    %v4401 = vld [vmem:[#allocation4 + $0xbf8] sm:$0xff]
    %v4402 = vld [vmem:[#allocation4 + $0xc00] sm:$0xff]
    %v4403 = vld [vmem:[#allocation4 + $0xc08] sm:$0xff]
    %v4404 = vld [vmem:[#allocation4 + $0xc10] sm:$0xff]
    %v4405 = vld [vmem:[#allocation4 + $0xc18] sm:$0xff]
    %v4406 = vld [vmem:[#allocation4 + $0xc20] sm:$0xff]
    %v4407 = vld [vmem:[#allocation4 + $0xc28] sm:$0xff]
    %v4408 = vld [vmem:[#allocation4 + $0xc30] sm:$0xff]
    %v4409 = vld [vmem:[#allocation4 + $0xc38] sm:$0xff]
    %v4410 = vld [vmem:[#allocation4 + $0xc40] sm:$0xff]
    %v4411 = vld [vmem:[#allocation4 + $0xc48] sm:$0xff]
    %v4412 = vld [vmem:[#allocation4 + $0xc50] sm:$0xff]
    %v4413 = vld [vmem:[#allocation4 + $0xc58] sm:$0xff]
    %v4414 = vld [vmem:[#allocation4 + $0xc60] sm:$0xff]
    %v4415 = vld [vmem:[#allocation4 + $0xc68] sm:$0xff]
    %v4416 = vld [vmem:[#allocation4 + $0xc70] sm:$0xff]
    %v4417 = vld [vmem:[#allocation4 + $0xc78] sm:$0xff]
    %v4418 = vld [vmem:[#allocation4 + $0xc80] sm:$0xff]
    %v4419 = vld [vmem:[#allocation4 + $0xc88] sm:$0xff]
    %v4420 = vld [vmem:[#allocation4 + $0xc90] sm:$0xff]
    %v4421 = vld [vmem:[#allocation4 + $0xc98] sm:$0xff]
    %v4422 = vld [vmem:[#allocation4 + $0xca0] sm:$0xff]
    %v4423 = vld [vmem:[#allocation4 + $0xca8] sm:$0xff]
    %v4424 = vld [vmem:[#allocation4 + $0xcb0] sm:$0xff]
    %v4425 = vld [vmem:[#allocation4 + $0xcb8] sm:$0xff]
    %v4426 = vld [vmem:[#allocation4 + $0xcc0] sm:$0xff]
    %v4427 = vld [vmem:[#allocation4 + $0xcc8] sm:$0xff]
    %v4428 = vld [vmem:[#allocation4 + $0xcd0] sm:$0xff]
    %v4429 = vld [vmem:[#allocation4 + $0xcd8] sm:$0xff]
    %v4430 = vld [vmem:[#allocation4 + $0xce0] sm:$0xff]
    %v4431 = vld [vmem:[#allocation4 + $0xce8] sm:$0xff]
    %v4432 = vld [vmem:[#allocation4 + $0xcf0] sm:$0xff]
    %v4433 = vld [vmem:[#allocation4 + $0xcf8] sm:$0xff]
    %v4434 = vld [vmem:[#allocation4 + $0xd00] sm:$0xff]
    %v4435 = vld [vmem:[#allocation4 + $0xd08] sm:$0xff]
    %v4436 = vld [vmem:[#allocation4 + $0xd10] sm:$0xff]
    %v4437 = vld [vmem:[#allocation4 + $0xd18] sm:$0xff]
    %v4438 = vld [vmem:[#allocation4 + $0xd20] sm:$0xff]
    %v4439 = vld [vmem:[#allocation4 + $0xd28] sm:$0xff]
    %v4440 = vld [vmem:[#allocation4 + $0xd30] sm:$0xff]
    %v4441 = vld [vmem:[#allocation4 + $0xd38] sm:$0xff]
    %v4442 = vld [vmem:[#allocation4 + $0xd40] sm:$0xff]
    %v4443 = vld [vmem:[#allocation4 + $0xd48] sm:$0xff]
    %v4444 = vld [vmem:[#allocation4 + $0xd50] sm:$0xff]
    %v4445 = vld [vmem:[#allocation4 + $0xd58] sm:$0xff]
    %v4446 = vld [vmem:[#allocation4 + $0xd60] sm:$0xff]
    %v4447 = vld [vmem:[#allocation4 + $0xd68] sm:$0xff]
    %v4448 = vld [vmem:[#allocation4 + $0xd70] sm:$0xff]
    %v4449 = vld [vmem:[#allocation4 + $0xd78] sm:$0xff]
    %v4450 = vld [vmem:[#allocation4 + $0xd80] sm:$0xff]
    %v4451 = vld [vmem:[#allocation4 + $0xd88] sm:$0xff]
    %v4452 = vld [vmem:[#allocation4 + $0xd90] sm:$0xff]
    %v4453 = vld [vmem:[#allocation4 + $0xd98] sm:$0xff]
    %v4454 = vld [vmem:[#allocation4 + $0xda0] sm:$0xff]
    %v4455 = vld [vmem:[#allocation4 + $0xda8] sm:$0xff]
    %v4456 = vld [vmem:[#allocation4 + $0xdb0] sm:$0xff]
    %v4457 = vld [vmem:[#allocation4 + $0xdb8] sm:$0xff]
    %v4458 = vld [vmem:[#allocation4 + $0xdc0] sm:$0xff]
    %v4459 = vld [vmem:[#allocation4 + $0xdc8] sm:$0xff]
    %v4460 = vld [vmem:[#allocation4 + $0xdd0] sm:$0xff]
    %v4461 = vld [vmem:[#allocation4 + $0xdd8] sm:$0xff]
    %v4462 = vld [vmem:[#allocation4 + $0xde0] sm:$0xff]
    %v4463 = vld [vmem:[#allocation4 + $0xde8] sm:$0xff]
    %v4464 = vld [vmem:[#allocation4 + $0xdf0] sm:$0xff]
    %v4465 = vld [vmem:[#allocation4 + $0xdf8] sm:$0xff]
    %v4466 = vld [vmem:[#allocation4 + $0xe00] sm:$0xff]
    %v4467 = vld [vmem:[#allocation4 + $0xe08] sm:$0xff]
    %v4468 = vld [vmem:[#allocation4 + $0xe10] sm:$0xff]
    %v4469 = vld [vmem:[#allocation4 + $0xe18] sm:$0xff]
    %v4470 = vld [vmem:[#allocation4 + $0xe20] sm:$0xff]
    %v4471 = vld [vmem:[#allocation4 + $0xe28] sm:$0xff]
    %v4472 = vld [vmem:[#allocation4 + $0xe30] sm:$0xff]
    %v4473 = vld [vmem:[#allocation4 + $0xe38] sm:$0xff]
    %v4474 = vld [vmem:[#allocation4 + $0xe40] sm:$0xff]
    %v4475 = vld [vmem:[#allocation4 + $0xe48] sm:$0xff]
    %v4476 = vld [vmem:[#allocation4 + $0xe50] sm:$0xff]
    %v4477 = vld [vmem:[#allocation4 + $0xe58] sm:$0xff]
    %v4478 = vld [vmem:[#allocation4 + $0xe60] sm:$0xff]
    %v4479 = vld [vmem:[#allocation4 + $0xe68] sm:$0xff]
    %v4480 = vld [vmem:[#allocation4 + $0xe70] sm:$0xff]
    %v4481 = vld [vmem:[#allocation4 + $0xe78] sm:$0xff]
    %v4482 = vld [vmem:[#allocation4 + $0xe80] sm:$0xff]
    %v4483 = vld [vmem:[#allocation4 + $0xe88] sm:$0xff]
    %v4484 = vld [vmem:[#allocation4 + $0xe90] sm:$0xff]
    %v4485 = vld [vmem:[#allocation4 + $0xe98] sm:$0xff]
    %v4486 = vld [vmem:[#allocation4 + $0xea0] sm:$0xff]
    %v4487 = vld [vmem:[#allocation4 + $0xea8] sm:$0xff]
    %v4488 = vld [vmem:[#allocation4 + $0xeb0] sm:$0xff]
    %v4489 = vld [vmem:[#allocation4 + $0xeb8] sm:$0xff]
    %v4490 = vld [vmem:[#allocation4 + $0xec0] sm:$0xff]
    %v4491 = vld [vmem:[#allocation4 + $0xec8] sm:$0xff]
    %v4492 = vld [vmem:[#allocation4 + $0xed0] sm:$0xff]
    %v4493 = vld [vmem:[#allocation4 + $0xed8] sm:$0xff]
    %v4494 = vld [vmem:[#allocation4 + $0xee0] sm:$0xff]
    %v4495 = vld [vmem:[#allocation4 + $0xee8] sm:$0xff]
    %v4496 = vld [vmem:[#allocation4 + $0xef0] sm:$0xff]
    %v4497 = vld [vmem:[#allocation4 + $0xef8] sm:$0xff]
    %v4498 = vld [vmem:[#allocation4 + $0xf00] sm:$0xff]
    %v4499 = vld [vmem:[#allocation4 + $0xf08] sm:$0xff]
    %v4500 = vld [vmem:[#allocation4 + $0xf10] sm:$0xff]
    %v4501 = vld [vmem:[#allocation4 + $0xf18] sm:$0xff]
    %v4502 = vld [vmem:[#allocation4 + $0xf20] sm:$0xff]
    %v4503 = vld [vmem:[#allocation4 + $0xf28] sm:$0xff]
    %v4504 = vld [vmem:[#allocation4 + $0xf30] sm:$0xff]
    %v4505 = vld [vmem:[#allocation4 + $0xf38] sm:$0xff]
    %v4506 = vld [vmem:[#allocation4 + $0xf40] sm:$0xff]
    %v4507 = vld [vmem:[#allocation4 + $0xf48] sm:$0xff]
    %v4508 = vld [vmem:[#allocation4 + $0xf50] sm:$0xff]
    %v4509 = vld [vmem:[#allocation4 + $0xf58] sm:$0xff]
    %v4510 = vld [vmem:[#allocation4 + $0xf60] sm:$0xff]
    %v4511 = vld [vmem:[#allocation4 + $0xf68] sm:$0xff]
    %v4512 = vld [vmem:[#allocation4 + $0xf70] sm:$0xff]
    %v4513 = vld [vmem:[#allocation4 + $0xf78] sm:$0xff]
    %v4514 = vld [vmem:[#allocation4 + $0xf80] sm:$0xff]
    %v4515 = vld [vmem:[#allocation4 + $0xf88] sm:$0xff]
    %v4516 = vld [vmem:[#allocation4 + $0xf90] sm:$0xff]
    %v4517 = vld [vmem:[#allocation4 + $0xf98] sm:$0xff]
    %v4518 = vld [vmem:[#allocation4 + $0xfa0] sm:$0xff]
    %v4519 = vld [vmem:[#allocation4 + $0xfa8] sm:$0xff]
    %v4520 = vld [vmem:[#allocation4 + $0xfb0] sm:$0xff]
    %v4521 = vld [vmem:[#allocation4 + $0xfb8] sm:$0xff]
    %v4522 = vld [vmem:[#allocation4 + $0xfc0] sm:$0xff]
    %v4523 = vld [vmem:[#allocation4 + $0xfc8] sm:$0xff]
    %v4524 = vld [vmem:[#allocation4 + $0xfd0] sm:$0xff]
    %v4525 = vld [vmem:[#allocation4 + $0xfd8] sm:$0xff]
    %v4526 = vld [vmem:[#allocation4 + $0xfe0] sm:$0xff]
    %v4527 = vld [vmem:[#allocation4 + $0xfe8] sm:$0xff]
    %v4528 = vld [vmem:[#allocation4 + $0xff0] sm:$0xff]
    %v4529 = vld [vmem:[#allocation4 + $0xff8] sm:$0xff]
    %v4530 = vld [vmem:[#allocation4 + $0x1000] sm:$0xff]
    %v4531 = vld [vmem:[#allocation4 + $0x1008] sm:$0xff]
    %v4532 = vld [vmem:[#allocation4 + $0x1010] sm:$0xff]
    %v4533 = vld [vmem:[#allocation4 + $0x1018] sm:$0xff]
    %v4534 = vld [vmem:[#allocation4 + $0x1020] sm:$0xff]
    %v4535 = vld [vmem:[#allocation4 + $0x1028] sm:$0xff]
    %v4536 = vld [vmem:[#allocation4 + $0x1030] sm:$0xff]
    %v4537 = vld [vmem:[#allocation4 + $0x1038] sm:$0xff]
    %v4538 = vld [vmem:[#allocation4 + $0x1040] sm:$0xff]
    %v4539 = vld [vmem:[#allocation4 + $0x1048] sm:$0xff]
    %v4540 = vld [vmem:[#allocation4 + $0x1050] sm:$0xff]
    %v4541 = vld [vmem:[#allocation4 + $0x1058] sm:$0xff]
    %v4542 = vld [vmem:[#allocation4 + $0x1060] sm:$0xff]
    %v4543 = vld [vmem:[#allocation4 + $0x1068] sm:$0xff]
    %v4544 = vld [vmem:[#allocation4 + $0x1070] sm:$0xff]
    %v4545 = vld [vmem:[#allocation4 + $0x1078] sm:$0xff]
    %v4546 = vld [vmem:[#allocation4 + $0x1080] sm:$0xff]
    %v4547 = vld [vmem:[#allocation4 + $0x1088] sm:$0xff]
    %v4548 = vld [vmem:[#allocation4 + $0x1090] sm:$0xff]
    %v4549 = vld [vmem:[#allocation4 + $0x1098] sm:$0xff]
    %v4550 = vld [vmem:[#allocation4 + $0x10a0] sm:$0xff]
    %v4551 = vld [vmem:[#allocation4 + $0x10a8] sm:$0xff]
    %v4552 = vld [vmem:[#allocation4 + $0x10b0] sm:$0xff]
    %v4553 = vld [vmem:[#allocation4 + $0x10b8] sm:$0xff]
    %v4554 = vld [vmem:[#allocation4 + $0x10c0] sm:$0xff]
    %v4555 = vld [vmem:[#allocation4 + $0x10c8] sm:$0xff]
    %v4556 = vld [vmem:[#allocation4 + $0x10d0] sm:$0xff]
    %v4557 = vld [vmem:[#allocation4 + $0x10d8] sm:$0xff]
    %v4558 = vld [vmem:[#allocation4 + $0x10e0] sm:$0xff]
    %v4559 = vld [vmem:[#allocation4 + $0x10e8] sm:$0xff]
    %v4560 = vld [vmem:[#allocation4 + $0x10f0] sm:$0xff]
    %v4561 = vld [vmem:[#allocation4 + $0x10f8] sm:$0xff]
    %v4562 = vld [vmem:[#allocation4 + $0x1100] sm:$0xff]
    %v4563 = vld [vmem:[#allocation4 + $0x1108] sm:$0xff]
    %v4564 = vld [vmem:[#allocation4 + $0x1110] sm:$0xff]
    %v4565 = vld [vmem:[#allocation4 + $0x1118] sm:$0xff]
    %v4566 = vld [vmem:[#allocation4 + $0x1120] sm:$0xff]
    %v4567 = vld [vmem:[#allocation4 + $0x1128] sm:$0xff]
    %v4568 = vld [vmem:[#allocation4 + $0x1130] sm:$0xff]
    %v4569 = vld [vmem:[#allocation4 + $0x1138] sm:$0xff]
    %v4570 = vld [vmem:[#allocation4 + $0x1140] sm:$0xff]
    %v4571 = vld [vmem:[#allocation4 + $0x1148] sm:$0xff]
    %v4572 = vld [vmem:[#allocation4 + $0x1150] sm:$0xff]
    %v4573 = vld [vmem:[#allocation4 + $0x1158] sm:$0xff]
    %v4574 = vld [vmem:[#allocation4 + $0x1160] sm:$0xff]
    %v4575 = vld [vmem:[#allocation4 + $0x1168] sm:$0xff]
    %v4576 = vld [vmem:[#allocation4 + $0x1170] sm:$0xff]
    %v4577 = vld [vmem:[#allocation4 + $0x1178] sm:$0xff]
    %v4578 = vld [vmem:[#allocation4 + $0x1180] sm:$0xff]
    %v4579 = vld [vmem:[#allocation4 + $0x1188] sm:$0xff]
    %v4580 = vld [vmem:[#allocation4 + $0x1190] sm:$0xff]
    %v4581 = vld [vmem:[#allocation4 + $0x1198] sm:$0xff]
    %v4582 = vld [vmem:[#allocation4 + $0x11a0] sm:$0xff]
    %v4583 = vld [vmem:[#allocation4 + $0x11a8] sm:$0xff]
    %v4584 = vld [vmem:[#allocation4 + $0x11b0] sm:$0xff]
    %v4585 = vld [vmem:[#allocation4 + $0x11b8] sm:$0xff]
    %v4586 = vld [vmem:[#allocation4 + $0x11c0] sm:$0xff]
    %v4587 = vld [vmem:[#allocation4 + $0x11c8] sm:$0xff]
    %v4588 = vld [vmem:[#allocation4 + $0x11d0] sm:$0xff]
    %v4589 = vld [vmem:[#allocation4 + $0x11d8] sm:$0xff]
    %v4590 = vld [vmem:[#allocation4 + $0x11e0] sm:$0xff]
    %v4591 = vld [vmem:[#allocation4 + $0x11e8] sm:$0xff]
    %v4592 = vld [vmem:[#allocation4 + $0x11f0] sm:$0xff]
    %v4593 = vld [vmem:[#allocation4 + $0x11f8] sm:$0xff]
    %v4594 = vld [vmem:[#allocation4 + $0x1200] sm:$0xff]
    %v4595 = vld [vmem:[#allocation4 + $0x1208] sm:$0xff]
    %v4596 = vld [vmem:[#allocation4 + $0x1210] sm:$0xff]
    %v4597 = vld [vmem:[#allocation4 + $0x1218] sm:$0xff]
    %v4598 = vld [vmem:[#allocation4 + $0x1220] sm:$0xff]
    %v4599 = vld [vmem:[#allocation4 + $0x1228] sm:$0xff]
    %v4600 = vld [vmem:[#allocation4 + $0x1230] sm:$0xff]
    %v4601 = vld [vmem:[#allocation4 + $0x1238] sm:$0xff]
    %v4602 = vld [vmem:[#allocation4 + $0x1240] sm:$0xff]
    %v4603 = vld [vmem:[#allocation4 + $0x1248] sm:$0xff]
    %v4604 = vld [vmem:[#allocation4 + $0x1250] sm:$0xff]
    %v4605 = vld [vmem:[#allocation4 + $0x1258] sm:$0xff]
    %v4606 = vld [vmem:[#allocation4 + $0x1260] sm:$0xff]
    %v4607 = vld [vmem:[#allocation4 + $0x1268] sm:$0xff]
    %v4608 = vld [vmem:[#allocation4 + $0x1270] sm:$0xff]
    %v4609 = vld [vmem:[#allocation4 + $0x1278] sm:$0xff]
    %v4610 = vld [vmem:[#allocation4 + $0x1280] sm:$0xff]
    %v4611 = vld [vmem:[#allocation4 + $0x1288] sm:$0xff]
    %v4612 = vld [vmem:[#allocation4 + $0x1290] sm:$0xff]
    %v4613 = vld [vmem:[#allocation4 + $0x1298] sm:$0xff]
    %v4614 = vld [vmem:[#allocation4 + $0x12a0] sm:$0xff]
    %v4615 = vld [vmem:[#allocation4 + $0x12a8] sm:$0xff]
    %v4616 = vld [vmem:[#allocation4 + $0x12b0] sm:$0xff]
    %v4617 = vld [vmem:[#allocation4 + $0x12b8] sm:$0xff]
    %v4618 = vld [vmem:[#allocation4 + $0x12c0] sm:$0xff]
    %v4619 = vld [vmem:[#allocation4 + $0x12c8] sm:$0xff]
    %v4620 = vld [vmem:[#allocation4 + $0x12d0] sm:$0xff]
    %v4621 = vld [vmem:[#allocation4 + $0x12d8] sm:$0xff]
    %v4622 = vld [vmem:[#allocation4 + $0x12e0] sm:$0xff]
    %v4623 = vld [vmem:[#allocation4 + $0x12e8] sm:$0xff]
    %v4624 = vld [vmem:[#allocation4 + $0x12f0] sm:$0xff]
    %v4625 = vld [vmem:[#allocation4 + $0x12f8] sm:$0xff]
    %v4626 = vld [vmem:[#allocation4 + $0x1300] sm:$0xff]
    %v4627 = vld [vmem:[#allocation4 + $0x1308] sm:$0xff]
    %v4628 = vld [vmem:[#allocation4 + $0x1310] sm:$0xff]
    %v4629 = vld [vmem:[#allocation4 + $0x1318] sm:$0xff]
    %v4630 = vld [vmem:[#allocation4 + $0x1320] sm:$0xff]
    %v4631 = vld [vmem:[#allocation4 + $0x1328] sm:$0xff]
    %v4632 = vld [vmem:[#allocation4 + $0x1330] sm:$0xff]
    %v4633 = vld [vmem:[#allocation4 + $0x1338] sm:$0xff]
    %v4634 = vld [vmem:[#allocation4 + $0x1340] sm:$0xff]
    %v4635 = vld [vmem:[#allocation4 + $0x1348] sm:$0xff]
    %v4636 = vld [vmem:[#allocation4 + $0x1350] sm:$0xff]
    %v4637 = vld [vmem:[#allocation4 + $0x1358] sm:$0xff]
    %v4638 = vld [vmem:[#allocation4 + $0x1360] sm:$0xff]
    %v4639 = vld [vmem:[#allocation4 + $0x1368] sm:$0xff]
    %v4640 = vld [vmem:[#allocation4 + $0x1370] sm:$0xff]
    %v4641 = vld [vmem:[#allocation4 + $0x1378] sm:$0xff]
    %v4642 = vld [vmem:[#allocation4 + $0x1380] sm:$0xff]
    %v4643 = vld [vmem:[#allocation4 + $0x1388] sm:$0xff]
    %v4644 = vld [vmem:[#allocation4 + $0x1390] sm:$0xff]
    %v4645 = vld [vmem:[#allocation4 + $0x1398] sm:$0xff]
    %v4646 = vld [vmem:[#allocation4 + $0x13a0] sm:$0xff]
    %v4647 = vld [vmem:[#allocation4 + $0x13a8] sm:$0xff]
    %v4648 = vld [vmem:[#allocation4 + $0x13b0] sm:$0xff]
    %v4649 = vld [vmem:[#allocation4 + $0x13b8] sm:$0xff]
    %v4650 = vld [vmem:[#allocation4 + $0x13c0] sm:$0xff]
    %v4651 = vld [vmem:[#allocation4 + $0x13c8] sm:$0xff]
    %v4652 = vld [vmem:[#allocation4 + $0x13d0] sm:$0xff]
    %v4653 = vld [vmem:[#allocation4 + $0x13d8] sm:$0xff]
    %v4654 = vld [vmem:[#allocation4 + $0x13e0] sm:$0xff]
    %v4655 = vld [vmem:[#allocation4 + $0x13e8] sm:$0xff]
    %v4656 = vld [vmem:[#allocation4 + $0x13f0] sm:$0xff]
    %v4657 = vld [vmem:[#allocation4 + $0x13f8] sm:$0xff]
    %v4658 = vld [vmem:[#allocation4 + $0x1400] sm:$0xff]
    %v4659 = vld [vmem:[#allocation4 + $0x1408] sm:$0xff]
    %v4660 = vld [vmem:[#allocation4 + $0x1410] sm:$0xff]
    %v4661 = vld [vmem:[#allocation4 + $0x1418] sm:$0xff]
    %v4662 = vld [vmem:[#allocation4 + $0x1420] sm:$0xff]
    %v4663 = vld [vmem:[#allocation4 + $0x1428] sm:$0xff]
    %v4664 = vld [vmem:[#allocation4 + $0x1430] sm:$0xff]
    %v4665 = vld [vmem:[#allocation4 + $0x1438] sm:$0xff]
    %v4666 = vld [vmem:[#allocation4 + $0x1440] sm:$0xff]
    %v4667 = vld [vmem:[#allocation4 + $0x1448] sm:$0xff]
    %v4668 = vld [vmem:[#allocation4 + $0x1450] sm:$0xff]
    %v4669 = vld [vmem:[#allocation4 + $0x1458] sm:$0xff]
    %v4670 = vld [vmem:[#allocation4 + $0x1460] sm:$0xff]
    %v4671 = vld [vmem:[#allocation4 + $0x1468] sm:$0xff]
    %v4672 = vld [vmem:[#allocation4 + $0x1470] sm:$0xff]
    %v4673 = vld [vmem:[#allocation4 + $0x1478] sm:$0xff]
    %v4674 = vld [vmem:[#allocation4 + $0x1480] sm:$0xff]
    %v4675 = vld [vmem:[#allocation4 + $0x1488] sm:$0xff]
    %v4676 = vld [vmem:[#allocation4 + $0x1490] sm:$0xff]
    %v4677 = vld [vmem:[#allocation4 + $0x1498] sm:$0xff]
    %v4678 = vld [vmem:[#allocation4 + $0x14a0] sm:$0xff]
    %v4679 = vld [vmem:[#allocation4 + $0x14a8] sm:$0xff]
    %v4680 = vld [vmem:[#allocation4 + $0x14b0] sm:$0xff]
    %v4681 = vld [vmem:[#allocation4 + $0x14b8] sm:$0xff]
    %v4682 = vld [vmem:[#allocation4 + $0x14c0] sm:$0xff]
    %v4683 = vld [vmem:[#allocation4 + $0x14c8] sm:$0xff]
    %v4684 = vld [vmem:[#allocation4 + $0x14d0] sm:$0xff]
    %v4685 = vld [vmem:[#allocation4 + $0x14d8] sm:$0xff]
    %v4686 = vld [vmem:[#allocation4 + $0x14e0] sm:$0xff]
    %v4687 = vld [vmem:[#allocation4 + $0x14e8] sm:$0xff]
    %v4688 = vld [vmem:[#allocation4 + $0x14f0] sm:$0xff]
    %v4689 = vld [vmem:[#allocation4 + $0x14f8] sm:$0xff]
    %v4690 = vld [vmem:[#allocation4 + $0x1500] sm:$0xff]
    %v4691 = vld [vmem:[#allocation4 + $0x1508] sm:$0xff]
    %v4692 = vld [vmem:[#allocation4 + $0x1510] sm:$0xff]
    %v4693 = vld [vmem:[#allocation4 + $0x1518] sm:$0xff]
    %v4694 = vld [vmem:[#allocation4 + $0x1520] sm:$0xff]
    %v4695 = vld [vmem:[#allocation4 + $0x1528] sm:$0xff]
    %v4696 = vld [vmem:[#allocation4 + $0x1530] sm:$0xff]
    %v4697 = vld [vmem:[#allocation4 + $0x1538] sm:$0xff]
    %v4698 = vld [vmem:[#allocation4 + $0x1540] sm:$0xff]
    %v4699 = vld [vmem:[#allocation4 + $0x1548] sm:$0xff]
    %v4700 = vld [vmem:[#allocation4 + $0x1550] sm:$0xff]
    %v4701 = vld [vmem:[#allocation4 + $0x1558] sm:$0xff]
    %v4702 = vld [vmem:[#allocation4 + $0x1560] sm:$0xff]
    %v4703 = vld [vmem:[#allocation4 + $0x1568] sm:$0xff]
    %v4704 = vld [vmem:[#allocation4 + $0x1570] sm:$0xff]
    %v4705 = vld [vmem:[#allocation4 + $0x1578] sm:$0xff]
    %v4706 = vld [vmem:[#allocation4 + $0x1580] sm:$0xff]
    %v4707 = vld [vmem:[#allocation4 + $0x1588] sm:$0xff]
    %v4708 = vld [vmem:[#allocation4 + $0x1590] sm:$0xff]
    %v4709 = vld [vmem:[#allocation4 + $0x1598] sm:$0xff]
    %v4710 = vld [vmem:[#allocation4 + $0x15a0] sm:$0xff]
    %v4711 = vld [vmem:[#allocation4 + $0x15a8] sm:$0xff]
    %v4712 = vld [vmem:[#allocation4 + $0x15b0] sm:$0xff]
    %v4713 = vld [vmem:[#allocation4 + $0x15b8] sm:$0xff]
    %v4714 = vld [vmem:[#allocation4 + $0x15c0] sm:$0xff]
    %v4715 = vld [vmem:[#allocation4 + $0x15c8] sm:$0xff]
    %v4716 = vld [vmem:[#allocation4 + $0x15d0] sm:$0xff]
    %v4717 = vld [vmem:[#allocation4 + $0x15d8] sm:$0xff]
    %v4718 = vld [vmem:[#allocation4 + $0x15e0] sm:$0xff]
    %v4719 = vld [vmem:[#allocation4 + $0x15e8] sm:$0xff]
    %v4720 = vld [vmem:[#allocation4 + $0x15f0] sm:$0xff]
    %v4721 = vld [vmem:[#allocation4 + $0x15f8] sm:$0xff]
    %v4722 = vld [vmem:[#allocation4 + $0x1600] sm:$0xff]
    %v4723 = vld [vmem:[#allocation4 + $0x1608] sm:$0xff]
    %v4724 = vld [vmem:[#allocation4 + $0x1610] sm:$0xff]
    %v4725 = vld [vmem:[#allocation4 + $0x1618] sm:$0xff]
    %v4726 = vld [vmem:[#allocation4 + $0x1620] sm:$0xff]
    %v4727 = vld [vmem:[#allocation4 + $0x1628] sm:$0xff]
    %v4728 = vld [vmem:[#allocation4 + $0x1630] sm:$0xff]
    %v4729 = vld [vmem:[#allocation4 + $0x1638] sm:$0xff]
    %v4730 = vld [vmem:[#allocation4 + $0x1640] sm:$0xff]
    %v4731 = vld [vmem:[#allocation4 + $0x1648] sm:$0xff]
    %v4732 = vld [vmem:[#allocation4 + $0x1650] sm:$0xff]
    %v4733 = vld [vmem:[#allocation4 + $0x1658] sm:$0xff]
    %v4734 = vld [vmem:[#allocation4 + $0x1660] sm:$0xff]
    %v4735 = vld [vmem:[#allocation4 + $0x1668] sm:$0xff]
    %v4736 = vld [vmem:[#allocation4 + $0x1670] sm:$0xff]
    %v4737 = vld [vmem:[#allocation4 + $0x1678] sm:$0xff]
    %v4738 = vld [vmem:[#allocation4 + $0x1680] sm:$0xff]
    %v4739 = vld [vmem:[#allocation4 + $0x1688] sm:$0xff]
    %v4740 = vld [vmem:[#allocation4 + $0x1690] sm:$0xff]
    %v4741 = vld [vmem:[#allocation4 + $0x1698] sm:$0xff]
    %v4742 = vld [vmem:[#allocation4 + $0x16a0] sm:$0xff]
    %v4743 = vld [vmem:[#allocation4 + $0x16a8] sm:$0xff]
    %v4744 = vld [vmem:[#allocation4 + $0x16b0] sm:$0xff]
    %v4745 = vld [vmem:[#allocation4 + $0x16b8] sm:$0xff]
    %v4746 = vld [vmem:[#allocation4 + $0x16c0] sm:$0xff]
    %v4747 = vld [vmem:[#allocation4 + $0x16c8] sm:$0xff]
    %v4748 = vld [vmem:[#allocation4 + $0x16d0] sm:$0xff]
    %v4749 = vld [vmem:[#allocation4 + $0x16d8] sm:$0xff]
    %v4750 = vld [vmem:[#allocation4 + $0x16e0] sm:$0xff]
    %v4751 = vld [vmem:[#allocation4 + $0x16e8] sm:$0xff]
    %v4752 = vld [vmem:[#allocation4 + $0x16f0] sm:$0xff]
    %v4753 = vld [vmem:[#allocation4 + $0x16f8] sm:$0xff]
    %v4754 = vld [vmem:[#allocation4 + $0x1700] sm:$0xff]
    %v4755 = vld [vmem:[#allocation4 + $0x1708] sm:$0xff]
    %v4756 = vld [vmem:[#allocation4 + $0x1710] sm:$0xff]
    %v4757 = vld [vmem:[#allocation4 + $0x1718] sm:$0xff]
    %v4758 = vld [vmem:[#allocation4 + $0x1720] sm:$0xff]
    %v4759 = vld [vmem:[#allocation4 + $0x1728] sm:$0xff]
    %v4760 = vld [vmem:[#allocation4 + $0x1730] sm:$0xff]
    %v4761 = vld [vmem:[#allocation4 + $0x1738] sm:$0xff]
    %v4762 = vld [vmem:[#allocation4 + $0x1740] sm:$0xff]
    %v4763 = vld [vmem:[#allocation4 + $0x1748] sm:$0xff]
    %v4764 = vld [vmem:[#allocation4 + $0x1750] sm:$0xff]
    %v4765 = vld [vmem:[#allocation4 + $0x1758] sm:$0xff]
    %v4766 = vld [vmem:[#allocation4 + $0x1760] sm:$0xff]
    %v4767 = vld [vmem:[#allocation4 + $0x1768] sm:$0xff]
    %v4768 = vld [vmem:[#allocation4 + $0x1770] sm:$0xff]
    %v4769 = vld [vmem:[#allocation4 + $0x1778] sm:$0xff]
    %v4770 = vld [vmem:[#allocation4 + $0x1780] sm:$0xff]
    %v4771 = vld [vmem:[#allocation4 + $0x1788] sm:$0xff]
    %v4772 = vld [vmem:[#allocation4 + $0x1790] sm:$0xff]
    %v4773 = vld [vmem:[#allocation4 + $0x1798] sm:$0xff]
    %v4774 = vld [vmem:[#allocation4 + $0x17a0] sm:$0xff]
    %v4775 = vld [vmem:[#allocation4 + $0x17a8] sm:$0xff]
    %v4776 = vld [vmem:[#allocation4 + $0x17b0] sm:$0xff]
    %v4777 = vld [vmem:[#allocation4 + $0x17b8] sm:$0xff]
    %v4778 = vld [vmem:[#allocation4 + $0x17c0] sm:$0xff]
    %v4779 = vld [vmem:[#allocation4 + $0x17c8] sm:$0xff]
    %v4780 = vld [vmem:[#allocation4 + $0x17d0] sm:$0xff]
    %v4781 = vld [vmem:[#allocation4 + $0x17d8] sm:$0xff]
    %v4782 = vld [vmem:[#allocation4 + $0x17e0] sm:$0xff]
    %v4783 = vld [vmem:[#allocation4 + $0x17e8] sm:$0xff]
    %v4784 = vld [vmem:[#allocation4 + $0x17f0] sm:$0xff]
    %v4785 = vld [vmem:[#allocation4 + $0x17f8] sm:$0xff]
    %v4786 = vpack.c.bf16 %v4002, %v4002
    %v4787 = vpack.c.bf16 %v4003, %v4003
    %v4788 = vpack.c.bf16 %v4004, %v4004
    %v4789 = vpack.c.bf16 %v4005, %v4005
    %v4790 = vpack.c.bf16 %v4006, %v4006
    %v4791 = vpack.c.bf16 %v4007, %v4007
    %v4792 = vpack.c.bf16 %v4008, %v4008
    %v4793 = vpack.c.bf16 %v4009, %v4009
    %v4794 = vpack.c.bf16 %v4010, %v4010
    %v4795 = vpack.c.bf16 %v4011, %v4011
    %v4796 = vpack.c.bf16 %v4012, %v4012
    %v4797 = vpack.c.bf16 %v4013, %v4013
    %v4798 = vld [vmem:[#allocation15] sm:$0xff]
    %v4800 = vlaneseq
    %v4801 = vshrl.u32 %v4800, 7
    %v4802 = vsub.s32 0, %v4801
    %v4803 = vrot.slane %v4798, %v4802
    %v4804 = vlaneseq
    %v4805 = vshrl.u32 %v4804, 7
    %v4806 = vsub.s32 1, %v4805
    %v4807 = vrot.slane %v4798, %v4806
    %v4808 = vlaneseq
    %v4809 = vshrl.u32 %v4808, 7
    %v4810 = vsub.s32 2, %v4809
    %v4811 = vrot.slane %v4798, %v4810
    %v4812 = vlaneseq
    %v4813 = vshrl.u32 %v4812, 7
    %v4814 = vsub.s32 3, %v4813
    %v4815 = vrot.slane %v4798, %v4814
    %v4816 = vlaneseq
    %v4817 = vshrl.u32 %v4816, 7
    %v4818 = vsub.s32 4, %v4817
    %v4819 = vrot.slane %v4798, %v4818
    %v4820 = vlaneseq
    %v4821 = vshrl.u32 %v4820, 7
    %v4822 = vsub.s32 5, %v4821
    %v4823 = vrot.slane %v4798, %v4822
    %v4824 = vlaneseq
    %v4825 = vshrl.u32 %v4824, 7
    %v4826 = vsub.s32 6, %v4825
    %v4827 = vrot.slane %v4798, %v4826
    %v4828 = vlaneseq
    %v4829 = vshrl.u32 %v4828, 7
    %v4830 = vsub.s32 7, %v4829
    %v4831 = vrot.slane %v4798, %v4830
    %4840 = vmatprep.subr.bf16.mxu0 %v4019
    %4841 = vmatpush1.bf16.msra.mxu0 %v4018
    %4842 = vmatprep.subr.bf16.mxu0 %v4027
    %4843 = vmatpush1.bf16.msra.mxu0 %v4026
    %4844 = vmatprep.subr.bf16.mxu0 %v4035
    %4845 = vmatpush1.bf16.msra.mxu0 %v4034
    %4846 = vmatprep.subr.bf16.mxu0 %v4043
    %4847 = vmatpush1.bf16.msra.mxu0 %v4042
    %4848 = vmatprep.subr.bf16.mxu0 %v4051
    %4849 = vmatpush1.bf16.msra.mxu0 %v4050
    %4850 = vmatprep.subr.bf16.mxu0 %v4059
    %4851 = vmatpush1.bf16.msra.mxu0 %v4058
    %4852 = vmatprep.subr.bf16.mxu0 %v4067
    %4853 = vmatpush1.bf16.msra.mxu0 %v4066
    %4854 = vmatprep.subr.bf16.mxu0 %v4075
    %4855 = vmatpush1.bf16.msra.mxu0 %v4074
    %4856 = vmatprep.subr.bf16.mxu0 %v4083
    %4857 = vmatpush1.bf16.msra.mxu0 %v4082
    %4858 = vmatprep.subr.bf16.mxu0 %v4091
    %4859 = vmatpush1.bf16.msra.mxu0 %v4090
    %4860 = vmatprep.subr.bf16.mxu0 %v4099
    %4861 = vmatpush1.bf16.msra.mxu0 %v4098
    %4862 = vmatprep.subr.bf16.mxu0 %v4107
    %4863 = vmatpush1.bf16.msra.mxu0 %v4106
    %4864 = vmatprep.subr.bf16.mxu0 %v4115
    %4865 = vmatpush1.bf16.msra.mxu0 %v4114
    %4866 = vmatprep.subr.bf16.mxu0 %v4123
    %4867 = vmatpush1.bf16.msra.mxu0 %v4122
    %4868 = vmatprep.subr.bf16.mxu0 %v4131
    %4869 = vmatpush1.bf16.msra.mxu0 %v4130
    %4870 = vmatprep.subr.bf16.mxu0 %v4139
    %4871 = vmatpush1.bf16.msra.mxu0 %v4138
    %4872 = vmatprep.mubr.bf16.mxu0 %v4787
    %4873 = vmatmul.mubr.bf16.gmra.mrb[0].mxu0 %v4786
    %v4874 = vpop.f32.mrb[0].mxu0
    %v4875 = vadd.f32 %v4803, %v4874
    %v4876 = vpop.f32.mrb[0].mxu0
    %v4877 = vadd.f32 %v4807, %v4876
    %v4878 = vpop.f32.mrb[0].mxu0
    %v4879 = vpop.f32.mrb[0].mxu0
    %4880 = vdwg.mxu0
    %4881 = vmatprep.subr.bf16.mxu0 %v4147
    %4882 = vmatpush1.bf16.msra.mxu0 %v4146
    %4883 = vmatprep.subr.bf16.mxu0 %v4155
    %4884 = vmatpush1.bf16.msra.mxu0 %v4154
    %4885 = vmatprep.subr.bf16.mxu0 %v4163
    %4886 = vmatpush1.bf16.msra.mxu0 %v4162
    %4887 = vmatprep.subr.bf16.mxu0 %v4171
    %4888 = vmatpush1.bf16.msra.mxu0 %v4170
    %4889 = vmatprep.subr.bf16.mxu0 %v4179
    %4890 = vmatpush1.bf16.msra.mxu0 %v4178
    %4891 = vmatprep.subr.bf16.mxu0 %v4187
    %4892 = vmatpush1.bf16.msra.mxu0 %v4186
    %4893 = vmatprep.subr.bf16.mxu0 %v4195
    %4894 = vmatpush1.bf16.msra.mxu0 %v4194
    %4895 = vmatprep.subr.bf16.mxu0 %v4203
    %4896 = vmatpush1.bf16.msra.mxu0 %v4202
    %4897 = vmatprep.subr.bf16.mxu0 %v4211
    %4898 = vmatpush1.bf16.msra.mxu0 %v4210
    %4899 = vmatprep.subr.bf16.mxu0 %v4219
    %4900 = vmatpush1.bf16.msra.mxu0 %v4218
    %4901 = vmatprep.subr.bf16.mxu0 %v4227
    %4902 = vmatpush1.bf16.msra.mxu0 %v4226
    %4903 = vmatprep.subr.bf16.mxu0 %v4235
    %4904 = vmatpush1.bf16.msra.mxu0 %v4234
    %4905 = vmatprep.subr.bf16.mxu0 %v4243
    %4906 = vmatpush1.bf16.msra.mxu0 %v4242
    %4907 = vmatprep.subr.bf16.mxu0 %v4251
    %4908 = vmatpush1.bf16.msra.mxu0 %v4250
    %4909 = vmatprep.subr.bf16.mxu0 %v4259
    %4910 = vmatpush1.bf16.msra.mxu0 %v4258
    %4911 = vmatprep.subr.bf16.mxu0 %v4267
    %4912 = vmatpush1.bf16.msra.mxu0 %v4266
    %4913 = vmatprep.mubr.bf16.mxu0 %v4789
    %4914 = vmatmul.mubr.bf16.gmra.mrb[0].mxu0 %v4788
    %v4915 = vpop.f32.mrb[0].mxu0
    %v4916 = vadd.f32 %v4875, %v4915
    %v4917 = vpop.f32.mrb[0].mxu0
    %v4918 = vadd.f32 %v4877, %v4917
    %v4919 = vpop.f32.mrb[0].mxu0
    %v4920 = vpop.f32.mrb[0].mxu0
    %4921 = vdwg.mxu0
    %4922 = vmatprep.subr.bf16.mxu0 %v4275
    %4923 = vmatpush1.bf16.msra.mxu0 %v4274
    %4924 = vmatprep.subr.bf16.mxu0 %v4283
    %4925 = vmatpush1.bf16.msra.mxu0 %v4282
    %4926 = vmatprep.subr.bf16.mxu0 %v4291
    %4927 = vmatpush1.bf16.msra.mxu0 %v4290
    %4928 = vmatprep.subr.bf16.mxu0 %v4299
    %4929 = vmatpush1.bf16.msra.mxu0 %v4298
    %4930 = vmatprep.subr.bf16.mxu0 %v4307
    %4931 = vmatpush1.bf16.msra.mxu0 %v4306
    %4932 = vmatprep.subr.bf16.mxu0 %v4315
    %4933 = vmatpush1.bf16.msra.mxu0 %v4314
    %4934 = vmatprep.subr.bf16.mxu0 %v4323
    %4935 = vmatpush1.bf16.msra.mxu0 %v4322
    %4936 = vmatprep.subr.bf16.mxu0 %v4331
    %4937 = vmatpush1.bf16.msra.mxu0 %v4330
    %4938 = vmatprep.subr.bf16.mxu0 %v4339
    %4939 = vmatpush1.bf16.msra.mxu0 %v4338
    %4940 = vmatprep.subr.bf16.mxu0 %v4347
    %4941 = vmatpush1.bf16.msra.mxu0 %v4346
    %4942 = vmatprep.subr.bf16.mxu0 %v4355
    %4943 = vmatpush1.bf16.msra.mxu0 %v4354
    %4944 = vmatprep.subr.bf16.mxu0 %v4363
    %4945 = vmatpush1.bf16.msra.mxu0 %v4362
    %4946 = vmatprep.subr.bf16.mxu0 %v4371
    %4947 = vmatpush1.bf16.msra.mxu0 %v4370
    %4948 = vmatprep.subr.bf16.mxu0 %v4379
    %4949 = vmatpush1.bf16.msra.mxu0 %v4378
    %4950 = vmatprep.subr.bf16.mxu0 %v4387
    %4951 = vmatpush1.bf16.msra.mxu0 %v4386
    %4952 = vmatprep.subr.bf16.mxu0 %v4395
    %4953 = vmatpush1.bf16.msra.mxu0 %v4394
    %4954 = vmatprep.mubr.bf16.mxu0 %v4791
    %4955 = vmatmul.mubr.bf16.gmra.mrb[0].mxu0 %v4790
    %v4956 = vpop.f32.mrb[0].mxu0
    %v4957 = vadd.f32 %v4916, %v4956
    %v4958 = vpop.f32.mrb[0].mxu0
    %v4959 = vadd.f32 %v4918, %v4958
    %v4960 = vpop.f32.mrb[0].mxu0
    %v4961 = vpop.f32.mrb[0].mxu0
    %4962 = vdwg.mxu0
    %4963 = vmatprep.subr.bf16.mxu0 %v4403
    %4964 = vmatpush1.bf16.msra.mxu0 %v4402
    %4965 = vmatprep.subr.bf16.mxu0 %v4411
    %4966 = vmatpush1.bf16.msra.mxu0 %v4410
    %4967 = vmatprep.subr.bf16.mxu0 %v4419
    %4968 = vmatpush1.bf16.msra.mxu0 %v4418
    %4969 = vmatprep.subr.bf16.mxu0 %v4427
    %4970 = vmatpush1.bf16.msra.mxu0 %v4426
    %4971 = vmatprep.subr.bf16.mxu0 %v4435
    %4972 = vmatpush1.bf16.msra.mxu0 %v4434
    %4973 = vmatprep.subr.bf16.mxu0 %v4443
    %4974 = vmatpush1.bf16.msra.mxu0 %v4442
    %4975 = vmatprep.subr.bf16.mxu0 %v4451
    %4976 = vmatpush1.bf16.msra.mxu0 %v4450
    %4977 = vmatprep.subr.bf16.mxu0 %v4459
    %4978 = vmatpush1.bf16.msra.mxu0 %v4458
    %4979 = vmatprep.subr.bf16.mxu0 %v4467
    %4980 = vmatpush1.bf16.msra.mxu0 %v4466
    %4981 = vmatprep.subr.bf16.mxu0 %v4475
    %4982 = vmatpush1.bf16.msra.mxu0 %v4474
    %4983 = vmatprep.subr.bf16.mxu0 %v4483
    %4984 = vmatpush1.bf16.msra.mxu0 %v4482
    %4985 = vmatprep.subr.bf16.mxu0 %v4491
    %4986 = vmatpush1.bf16.msra.mxu0 %v4490
    %4987 = vmatprep.subr.bf16.mxu0 %v4499
    %4988 = vmatpush1.bf16.msra.mxu0 %v4498
    %4989 = vmatprep.subr.bf16.mxu0 %v4507
    %4990 = vmatpush1.bf16.msra.mxu0 %v4506
    %4991 = vmatprep.subr.bf16.mxu0 %v4515
    %4992 = vmatpush1.bf16.msra.mxu0 %v4514
    %4993 = vmatprep.subr.bf16.mxu0 %v4523
    %4994 = vmatpush1.bf16.msra.mxu0 %v4522
    %4995 = vmatprep.mubr.bf16.mxu0 %v4793
    %4996 = vmatmul.mubr.bf16.gmra.mrb[0].mxu0 %v4792
    %v4997 = vpop.f32.mrb[0].mxu0
    %v4998 = vadd.f32 %v4957, %v4997
    %v4999 = vpop.f32.mrb[0].mxu0
    %v5000 = vadd.f32 %v4959, %v4999
    %v5001 = vpop.f32.mrb[0].mxu0
    %v5002 = vpop.f32.mrb[0].mxu0
    %5003 = vdwg.mxu0
    %5004 = vmatprep.subr.bf16.mxu0 %v4531
    %5005 = vmatpush1.bf16.msra.mxu0 %v4530
    %5006 = vmatprep.subr.bf16.mxu0 %v4539
    %5007 = vmatpush1.bf16.msra.mxu0 %v4538
    %5008 = vmatprep.subr.bf16.mxu0 %v4547
    %5009 = vmatpush1.bf16.msra.mxu0 %v4546
    %5010 = vmatprep.subr.bf16.mxu0 %v4555
    %5011 = vmatpush1.bf16.msra.mxu0 %v4554
    %5012 = vmatprep.subr.bf16.mxu0 %v4563
    %5013 = vmatpush1.bf16.msra.mxu0 %v4562
    %5014 = vmatprep.subr.bf16.mxu0 %v4571
    %5015 = vmatpush1.bf16.msra.mxu0 %v4570
    %5016 = vmatprep.subr.bf16.mxu0 %v4579
    %5017 = vmatpush1.bf16.msra.mxu0 %v4578
    %5018 = vmatprep.subr.bf16.mxu0 %v4587
    %5019 = vmatpush1.bf16.msra.mxu0 %v4586
    %5020 = vmatprep.subr.bf16.mxu0 %v4595
    %5021 = vmatpush1.bf16.msra.mxu0 %v4594
    %5022 = vmatprep.subr.bf16.mxu0 %v4603
    %5023 = vmatpush1.bf16.msra.mxu0 %v4602
    %5024 = vmatprep.subr.bf16.mxu0 %v4611
    %5025 = vmatpush1.bf16.msra.mxu0 %v4610
    %5026 = vmatprep.subr.bf16.mxu0 %v4619
    %5027 = vmatpush1.bf16.msra.mxu0 %v4618
    %5028 = vmatprep.subr.bf16.mxu0 %v4627
    %5029 = vmatpush1.bf16.msra.mxu0 %v4626
    %5030 = vmatprep.subr.bf16.mxu0 %v4635
    %5031 = vmatpush1.bf16.msra.mxu0 %v4634
    %5032 = vmatprep.subr.bf16.mxu0 %v4643
    %5033 = vmatpush1.bf16.msra.mxu0 %v4642
    %5034 = vmatprep.subr.bf16.mxu0 %v4651
    %5035 = vmatpush1.bf16.msra.mxu0 %v4650
    %5036 = vmatprep.mubr.bf16.mxu0 %v4795
    %5037 = vmatmul.mubr.bf16.gmra.mrb[0].mxu0 %v4794
    %v5038 = vpop.f32.mrb[0].mxu0
    %v5039 = vadd.f32 %v4998, %v5038
    %v5040 = vpop.f32.mrb[0].mxu0
    %v5041 = vadd.f32 %v5000, %v5040
    %v5042 = vpop.f32.mrb[0].mxu0
    %v5043 = vpop.f32.mrb[0].mxu0
    %5044 = vdwg.mxu0
    %5045 = vmatprep.subr.bf16.mxu0 %v4659
    %5046 = vmatpush1.bf16.msra.mxu0 %v4658
    %5047 = vmatprep.subr.bf16.mxu0 %v4667
    %5048 = vmatpush1.bf16.msra.mxu0 %v4666
    %5049 = vmatprep.subr.bf16.mxu0 %v4675
    %5050 = vmatpush1.bf16.msra.mxu0 %v4674
    %5051 = vmatprep.subr.bf16.mxu0 %v4683
    %5052 = vmatpush1.bf16.msra.mxu0 %v4682
    %5053 = vmatprep.subr.bf16.mxu0 %v4691
    %5054 = vmatpush1.bf16.msra.mxu0 %v4690
    %5055 = vmatprep.subr.bf16.mxu0 %v4699
    %5056 = vmatpush1.bf16.msra.mxu0 %v4698
    %5057 = vmatprep.subr.bf16.mxu0 %v4707
    %5058 = vmatpush1.bf16.msra.mxu0 %v4706
    %5059 = vmatprep.subr.bf16.mxu0 %v4715
    %5060 = vmatpush1.bf16.msra.mxu0 %v4714
    %5061 = vmatprep.subr.bf16.mxu0 %v4723
    %5062 = vmatpush1.bf16.msra.mxu0 %v4722
    %5063 = vmatprep.subr.bf16.mxu0 %v4731
    %5064 = vmatpush1.bf16.msra.mxu0 %v4730
    %5065 = vmatprep.subr.bf16.mxu0 %v4739
    %5066 = vmatpush1.bf16.msra.mxu0 %v4738
    %5067 = vmatprep.subr.bf16.mxu0 %v4747
    %5068 = vmatpush1.bf16.msra.mxu0 %v4746
    %5069 = vmatprep.subr.bf16.mxu0 %v4755
    %5070 = vmatpush1.bf16.msra.mxu0 %v4754
    %5071 = vmatprep.subr.bf16.mxu0 %v4763
    %5072 = vmatpush1.bf16.msra.mxu0 %v4762
    %5073 = vmatprep.subr.bf16.mxu0 %v4771
    %5074 = vmatpush1.bf16.msra.mxu0 %v4770
    %5075 = vmatprep.subr.bf16.mxu0 %v4779
    %5076 = vmatpush1.bf16.msra.mxu0 %v4778
    %5077 = vmatprep.mubr.bf16.mxu0 %v4797
    %5078 = vmatmul.mubr.bf16.gmra.mrb[0].mxu0 %v4796
    %v5079 = vpop.f32.mrb[0].mxu0
    %v5080 = vadd.f32 %v5039, %v5079
    %v5081 = vpop.f32.mrb[0].mxu0
    %v5082 = vadd.f32 %v5041, %v5081
    %v5083 = vpop.f32.mrb[0].mxu0
    %v5084 = vpop.f32.mrb[0].mxu0
    %5085 = vdwg.mxu0
    %5086 = vmatprep.subr.bf16.mxu0 %v4021
    %5087 = vmatpush1.bf16.msra.mxu0 %v4020
    %5088 = vmatprep.subr.bf16.mxu0 %v4029
    %5089 = vmatpush1.bf16.msra.mxu0 %v4028
    %5090 = vmatprep.subr.bf16.mxu0 %v4037
    %5091 = vmatpush1.bf16.msra.mxu0 %v4036
    %5092 = vmatprep.subr.bf16.mxu0 %v4045
    %5093 = vmatpush1.bf16.msra.mxu0 %v4044
    %5094 = vmatprep.subr.bf16.mxu0 %v4053
    %5095 = vmatpush1.bf16.msra.mxu0 %v4052
    %5096 = vmatprep.subr.bf16.mxu0 %v4061
    %5097 = vmatpush1.bf16.msra.mxu0 %v4060
    %5098 = vmatprep.subr.bf16.mxu0 %v4069
    %5099 = vmatpush1.bf16.msra.mxu0 %v4068
    %5100 = vmatprep.subr.bf16.mxu0 %v4077
    %5101 = vmatpush1.bf16.msra.mxu0 %v4076
    %5102 = vmatprep.subr.bf16.mxu0 %v4085
    %5103 = vmatpush1.bf16.msra.mxu0 %v4084
    %5104 = vmatprep.subr.bf16.mxu0 %v4093
    %5105 = vmatpush1.bf16.msra.mxu0 %v4092
    %5106 = vmatprep.subr.bf16.mxu0 %v4101
    %5107 = vmatpush1.bf16.msra.mxu0 %v4100
    %5108 = vmatprep.subr.bf16.mxu0 %v4109
    %5109 = vmatpush1.bf16.msra.mxu0 %v4108
    %5110 = vmatprep.subr.bf16.mxu0 %v4117
    %5111 = vmatpush1.bf16.msra.mxu0 %v4116
    %5112 = vmatprep.subr.bf16.mxu0 %v4125
    %5113 = vmatpush1.bf16.msra.mxu0 %v4124
    %5114 = vmatprep.subr.bf16.mxu0 %v4133
    %5115 = vmatpush1.bf16.msra.mxu0 %v4132
    %5116 = vmatprep.subr.bf16.mxu0 %v4141
    %5117 = vmatpush1.bf16.msra.mxu0 %v4140
    %5118 = vmatprep.mubr.bf16.mxu0 %v4787
    %5119 = vmatmul.mubr.bf16.gmra.mrb[0].mxu0 %v4786
    %v5120 = vpop.f32.mrb[0].mxu0
    %v5121 = vadd.f32 %v4811, %v5120
    %v5122 = vpop.f32.mrb[0].mxu0
    %v5123 = vadd.f32 %v4815, %v5122
    %v5124 = vpop.f32.mrb[0].mxu0
    %v5125 = vpop.f32.mrb[0].mxu0
    %5126 = vdwg.mxu0
    %5127 = vmatprep.subr.bf16.mxu0 %v4149
    %5128 = vmatpush1.bf16.msra.mxu0 %v4148
    %5129 = vmatprep.subr.bf16.mxu0 %v4157
    %5130 = vmatpush1.bf16.msra.mxu0 %v4156
    %5131 = vmatprep.subr.bf16.mxu0 %v4165
    %5132 = vmatpush1.bf16.msra.mxu0 %v4164
    %5133 = vmatprep.subr.bf16.mxu0 %v4173
    %5134 = vmatpush1.bf16.msra.mxu0 %v4172
    %5135 = vmatprep.subr.bf16.mxu0 %v4181
    %5136 = vmatpush1.bf16.msra.mxu0 %v4180
    %5137 = vmatprep.subr.bf16.mxu0 %v4189
    %5138 = vmatpush1.bf16.msra.mxu0 %v4188
    %5139 = vmatprep.subr.bf16.mxu0 %v4197
    %5140 = vmatpush1.bf16.msra.mxu0 %v4196
    %5141 = vmatprep.subr.bf16.mxu0 %v4205
    %5142 = vmatpush1.bf16.msra.mxu0 %v4204
    %5143 = vmatprep.subr.bf16.mxu0 %v4213
    %5144 = vmatpush1.bf16.msra.mxu0 %v4212
    %5145 = vmatprep.subr.bf16.mxu0 %v4221
    %5146 = vmatpush1.bf16.msra.mxu0 %v4220
    %5147 = vmatprep.subr.bf16.mxu0 %v4229
    %5148 = vmatpush1.bf16.msra.mxu0 %v4228
    %5149 = vmatprep.subr.bf16.mxu0 %v4237
    %5150 = vmatpush1.bf16.msra.mxu0 %v4236
    %5151 = vmatprep.subr.bf16.mxu0 %v4245
    %5152 = vmatpush1.bf16.msra.mxu0 %v4244
    %5153 = vmatprep.subr.bf16.mxu0 %v4253
    %5154 = vmatpush1.bf16.msra.mxu0 %v4252
    %5155 = vmatprep.subr.bf16.mxu0 %v4261
    %5156 = vmatpush1.bf16.msra.mxu0 %v4260
    %5157 = vmatprep.subr.bf16.mxu0 %v4269
    %5158 = vmatpush1.bf16.msra.mxu0 %v4268
    %5159 = vmatprep.mubr.bf16.mxu0 %v4789
    %5160 = vmatmul.mubr.bf16.gmra.mrb[0].mxu0 %v4788
    %v5161 = vpop.f32.mrb[0].mxu0
    %v5162 = vadd.f32 %v5121, %v5161
    %v5163 = vpop.f32.mrb[0].mxu0
    %v5164 = vadd.f32 %v5123, %v5163
    %v5165 = vpop.f32.mrb[0].mxu0
    %v5166 = vpop.f32.mrb[0].mxu0
    %5167 = vdwg.mxu0
    %5168 = vmatprep.subr.bf16.mxu0 %v4277
    %5169 = vmatpush1.bf16.msra.mxu0 %v4276
    %5170 = vmatprep.subr.bf16.mxu0 %v4285
    %5171 = vmatpush1.bf16.msra.mxu0 %v4284
    %5172 = vmatprep.subr.bf16.mxu0 %v4293
    %5173 = vmatpush1.bf16.msra.mxu0 %v4292
    %5174 = vmatprep.subr.bf16.mxu0 %v4301
    %5175 = vmatpush1.bf16.msra.mxu0 %v4300
    %5176 = vmatprep.subr.bf16.mxu0 %v4309
    %5177 = vmatpush1.bf16.msra.mxu0 %v4308
    %5178 = vmatprep.subr.bf16.mxu0 %v4317
    %5179 = vmatpush1.bf16.msra.mxu0 %v4316
    %5180 = vmatprep.subr.bf16.mxu0 %v4325
    %5181 = vmatpush1.bf16.msra.mxu0 %v4324
    %5182 = vmatprep.subr.bf16.mxu0 %v4333
    %5183 = vmatpush1.bf16.msra.mxu0 %v4332
    %5184 = vmatprep.subr.bf16.mxu0 %v4341
    %5185 = vmatpush1.bf16.msra.mxu0 %v4340
    %5186 = vmatprep.subr.bf16.mxu0 %v4349
    %5187 = vmatpush1.bf16.msra.mxu0 %v4348
    %5188 = vmatprep.subr.bf16.mxu0 %v4357
    %5189 = vmatpush1.bf16.msra.mxu0 %v4356
    %5190 = vmatprep.subr.bf16.mxu0 %v4365
    %5191 = vmatpush1.bf16.msra.mxu0 %v4364
    %5192 = vmatprep.subr.bf16.mxu0 %v4373
    %5193 = vmatpush1.bf16.msra.mxu0 %v4372
    %5194 = vmatprep.subr.bf16.mxu0 %v4381
    %5195 = vmatpush1.bf16.msra.mxu0 %v4380
    %5196 = vmatprep.subr.bf16.mxu0 %v4389
    %5197 = vmatpush1.bf16.msra.mxu0 %v4388
    %5198 = vmatprep.subr.bf16.mxu0 %v4397
    %5199 = vmatpush1.bf16.msra.mxu0 %v4396
    %5200 = vmatprep.mubr.bf16.mxu0 %v4791
    %5201 = vmatmul.mubr.bf16.gmra.mrb[0].mxu0 %v4790
    %v5202 = vpop.f32.mrb[0].mxu0
    %v5203 = vadd.f32 %v5162, %v5202
    %v5204 = vpop.f32.mrb[0].mxu0
    %v5205 = vadd.f32 %v5164, %v5204
    %v5206 = vpop.f32.mrb[0].mxu0
    %v5207 = vpop.f32.mrb[0].mxu0
    %5208 = vdwg.mxu0
    %5209 = vmatprep.subr.bf16.mxu0 %v4405
    %5210 = vmatpush1.bf16.msra.mxu0 %v4404
    %5211 = vmatprep.subr.bf16.mxu0 %v4413
    %5212 = vmatpush1.bf16.msra.mxu0 %v4412
    %5213 = vmatprep.subr.bf16.mxu0 %v4421
    %5214 = vmatpush1.bf16.msra.mxu0 %v4420
    %5215 = vmatprep.subr.bf16.mxu0 %v4429
    %5216 = vmatpush1.bf16.msra.mxu0 %v4428
    %5217 = vmatprep.subr.bf16.mxu0 %v4437
    %5218 = vmatpush1.bf16.msra.mxu0 %v4436
    %5219 = vmatprep.subr.bf16.mxu0 %v4445
    %5220 = vmatpush1.bf16.msra.mxu0 %v4444
    %5221 = vmatprep.subr.bf16.mxu0 %v4453
    %5222 = vmatpush1.bf16.msra.mxu0 %v4452
    %5223 = vmatprep.subr.bf16.mxu0 %v4461
    %5224 = vmatpush1.bf16.msra.mxu0 %v4460
    %5225 = vmatprep.subr.bf16.mxu0 %v4469
    %5226 = vmatpush1.bf16.msra.mxu0 %v4468
    %5227 = vmatprep.subr.bf16.mxu0 %v4477
    %5228 = vmatpush1.bf16.msra.mxu0 %v4476
    %5229 = vmatprep.subr.bf16.mxu0 %v4485
    %5230 = vmatpush1.bf16.msra.mxu0 %v4484
    %5231 = vmatprep.subr.bf16.mxu0 %v4493
    %5232 = vmatpush1.bf16.msra.mxu0 %v4492
    %5233 = vmatprep.subr.bf16.mxu0 %v4501
    %5234 = vmatpush1.bf16.msra.mxu0 %v4500
    %5235 = vmatprep.subr.bf16.mxu0 %v4509
    %5236 = vmatpush1.bf16.msra.mxu0 %v4508
    %5237 = vmatprep.subr.bf16.mxu0 %v4517
    %5238 = vmatpush1.bf16.msra.mxu0 %v4516
    %5239 = vmatprep.subr.bf16.mxu0 %v4525
    %5240 = vmatpush1.bf16.msra.mxu0 %v4524
    %5241 = vmatprep.mubr.bf16.mxu0 %v4793
    %5242 = vmatmul.mubr.bf16.gmra.mrb[0].mxu0 %v4792
    %v5243 = vpop.f32.mrb[0].mxu0
    %v5244 = vadd.f32 %v5203, %v5243
    %v5245 = vpop.f32.mrb[0].mxu0
    %v5246 = vadd.f32 %v5205, %v5245
    %v5247 = vpop.f32.mrb[0].mxu0
    %v5248 = vpop.f32.mrb[0].mxu0
    %5249 = vdwg.mxu0
    %5250 = vmatprep.subr.bf16.mxu0 %v4533
    %5251 = vmatpush1.bf16.msra.mxu0 %v4532
    %5252 = vmatprep.subr.bf16.mxu0 %v4541
    %5253 = vmatpush1.bf16.msra.mxu0 %v4540
    %5254 = vmatprep.subr.bf16.mxu0 %v4549
    %5255 = vmatpush1.bf16.msra.mxu0 %v4548
    %5256 = vmatprep.subr.bf16.mxu0 %v4557
    %5257 = vmatpush1.bf16.msra.mxu0 %v4556
    %5258 = vmatprep.subr.bf16.mxu0 %v4565
    %5259 = vmatpush1.bf16.msra.mxu0 %v4564
    %5260 = vmatprep.subr.bf16.mxu0 %v4573
    %5261 = vmatpush1.bf16.msra.mxu0 %v4572
    %5262 = vmatprep.subr.bf16.mxu0 %v4581
    %5263 = vmatpush1.bf16.msra.mxu0 %v4580
    %5264 = vmatprep.subr.bf16.mxu0 %v4589
    %5265 = vmatpush1.bf16.msra.mxu0 %v4588
    %5266 = vmatprep.subr.bf16.mxu0 %v4597
    %5267 = vmatpush1.bf16.msra.mxu0 %v4596
    %5268 = vmatprep.subr.bf16.mxu0 %v4605
    %5269 = vmatpush1.bf16.msra.mxu0 %v4604
    %5270 = vmatprep.subr.bf16.mxu0 %v4613
    %5271 = vmatpush1.bf16.msra.mxu0 %v4612
    %5272 = vmatprep.subr.bf16.mxu0 %v4621
    %5273 = vmatpush1.bf16.msra.mxu0 %v4620
    %5274 = vmatprep.subr.bf16.mxu0 %v4629
    %5275 = vmatpush1.bf16.msra.mxu0 %v4628
    %5276 = vmatprep.subr.bf16.mxu0 %v4637
    %5277 = vmatpush1.bf16.msra.mxu0 %v4636
    %5278 = vmatprep.subr.bf16.mxu0 %v4645
    %5279 = vmatpush1.bf16.msra.mxu0 %v4644
    %5280 = vmatprep.subr.bf16.mxu0 %v4653
    %5281 = vmatpush1.bf16.msra.mxu0 %v4652
    %5282 = vmatprep.mubr.bf16.mxu0 %v4795
    %5283 = vmatmul.mubr.bf16.gmra.mrb[0].mxu0 %v4794
    %v5284 = vpop.f32.mrb[0].mxu0
    %v5285 = vadd.f32 %v5244, %v5284
    %v5286 = vpop.f32.mrb[0].mxu0
    %v5287 = vadd.f32 %v5246, %v5286
    %v5288 = vpop.f32.mrb[0].mxu0
    %v5289 = vpop.f32.mrb[0].mxu0
    %5290 = vdwg.mxu0
    %5291 = vmatprep.subr.bf16.mxu0 %v4661
    %5292 = vmatpush1.bf16.msra.mxu0 %v4660
    %5293 = vmatprep.subr.bf16.mxu0 %v4669
    %5294 = vmatpush1.bf16.msra.mxu0 %v4668
    %5295 = vmatprep.subr.bf16.mxu0 %v4677
    %5296 = vmatpush1.bf16.msra.mxu0 %v4676
    %5297 = vmatprep.subr.bf16.mxu0 %v4685
    %5298 = vmatpush1.bf16.msra.mxu0 %v4684
    %5299 = vmatprep.subr.bf16.mxu0 %v4693
    %5300 = vmatpush1.bf16.msra.mxu0 %v4692
    %5301 = vmatprep.subr.bf16.mxu0 %v4701
    %5302 = vmatpush1.bf16.msra.mxu0 %v4700
    %5303 = vmatprep.subr.bf16.mxu0 %v4709
    %5304 = vmatpush1.bf16.msra.mxu0 %v4708
    %5305 = vmatprep.subr.bf16.mxu0 %v4717
    %5306 = vmatpush1.bf16.msra.mxu0 %v4716
    %5307 = vmatprep.subr.bf16.mxu0 %v4725
    %5308 = vmatpush1.bf16.msra.mxu0 %v4724
    %5309 = vmatprep.subr.bf16.mxu0 %v4733
    %5310 = vmatpush1.bf16.msra.mxu0 %v4732
    %5311 = vmatprep.subr.bf16.mxu0 %v4741
    %5312 = vmatpush1.bf16.msra.mxu0 %v4740
    %5313 = vmatprep.subr.bf16.mxu0 %v4749
    %5314 = vmatpush1.bf16.msra.mxu0 %v4748
    %5315 = vmatprep.subr.bf16.mxu0 %v4757
    %5316 = vmatpush1.bf16.msra.mxu0 %v4756
    %5317 = vmatprep.subr.bf16.mxu0 %v4765
    %5318 = vmatpush1.bf16.msra.mxu0 %v4764
    %5319 = vmatprep.subr.bf16.mxu0 %v4773
    %5320 = vmatpush1.bf16.msra.mxu0 %v4772
    %5321 = vmatprep.subr.bf16.mxu0 %v4781
    %5322 = vmatpush1.bf16.msra.mxu0 %v4780
    %5323 = vmatprep.mubr.bf16.mxu0 %v4797
    %5324 = vmatmul.mubr.bf16.gmra.mrb[0].mxu0 %v4796
    %v5325 = vpop.f32.mrb[0].mxu0
    %v5326 = vadd.f32 %v5285, %v5325
    %v5327 = vpop.f32.mrb[0].mxu0
    %v5328 = vadd.f32 %v5287, %v5327
    %v5329 = vpop.f32.mrb[0].mxu0
    %v5330 = vpop.f32.mrb[0].mxu0
    %5331 = vdwg.mxu0
    %5332 = vmatprep.subr.bf16.mxu0 %v4023
    %5333 = vmatpush1.bf16.msra.mxu0 %v4022
    %5334 = vmatprep.subr.bf16.mxu0 %v4031
    %5335 = vmatpush1.bf16.msra.mxu0 %v4030
    %5336 = vmatprep.subr.bf16.mxu0 %v4039
    %5337 = vmatpush1.bf16.msra.mxu0 %v4038
    %5338 = vmatprep.subr.bf16.mxu0 %v4047
    %5339 = vmatpush1.bf16.msra.mxu0 %v4046
    %5340 = vmatprep.subr.bf16.mxu0 %v4055
    %5341 = vmatpush1.bf16.msra.mxu0 %v4054
    %5342 = vmatprep.subr.bf16.mxu0 %v4063
    %5343 = vmatpush1.bf16.msra.mxu0 %v4062
    %5344 = vmatprep.subr.bf16.mxu0 %v4071
    %5345 = vmatpush1.bf16.msra.mxu0 %v4070
    %5346 = vmatprep.subr.bf16.mxu0 %v4079
    %5347 = vmatpush1.bf16.msra.mxu0 %v4078
    %5348 = vmatprep.subr.bf16.mxu0 %v4087
    %5349 = vmatpush1.bf16.msra.mxu0 %v4086
    %5350 = vmatprep.subr.bf16.mxu0 %v4095
    %5351 = vmatpush1.bf16.msra.mxu0 %v4094
    %5352 = vmatprep.subr.bf16.mxu0 %v4103
    %5353 = vmatpush1.bf16.msra.mxu0 %v4102
    %5354 = vmatprep.subr.bf16.mxu0 %v4111
    %5355 = vmatpush1.bf16.msra.mxu0 %v4110
    %5356 = vmatprep.subr.bf16.mxu0 %v4119
    %5357 = vmatpush1.bf16.msra.mxu0 %v4118
    %5358 = vmatprep.subr.bf16.mxu0 %v4127
    %5359 = vmatpush1.bf16.msra.mxu0 %v4126
    %5360 = vmatprep.subr.bf16.mxu0 %v4135
    %5361 = vmatpush1.bf16.msra.mxu0 %v4134
    %5362 = vmatprep.subr.bf16.mxu0 %v4143
    %5363 = vmatpush1.bf16.msra.mxu0 %v4142
    %5364 = vmatprep.mubr.bf16.mxu0 %v4787
    %5365 = vmatmul.mubr.bf16.gmra.mrb[0].mxu0 %v4786
    %v5366 = vpop.f32.mrb[0].mxu0
    %v5367 = vadd.f32 %v4819, %v5366
    %v5368 = vpop.f32.mrb[0].mxu0
    %v5369 = vadd.f32 %v4823, %v5368
    %v5370 = vpop.f32.mrb[0].mxu0
    %v5371 = vpop.f32.mrb[0].mxu0
    %5372 = vdwg.mxu0
    %5373 = vmatprep.subr.bf16.mxu0 %v4151
    %5374 = vmatpush1.bf16.msra.mxu0 %v4150
    %5375 = vmatprep.subr.bf16.mxu0 %v4159
    %5376 = vmatpush1.bf16.msra.mxu0 %v4158
    %5377 = vmatprep.subr.bf16.mxu0 %v4167
    %5378 = vmatpush1.bf16.msra.mxu0 %v4166
    %5379 = vmatprep.subr.bf16.mxu0 %v4175
    %5380 = vmatpush1.bf16.msra.mxu0 %v4174
    %5381 = vmatprep.subr.bf16.mxu0 %v4183
    %5382 = vmatpush1.bf16.msra.mxu0 %v4182
    %5383 = vmatprep.subr.bf16.mxu0 %v4191
    %5384 = vmatpush1.bf16.msra.mxu0 %v4190
    %5385 = vmatprep.subr.bf16.mxu0 %v4199
    %5386 = vmatpush1.bf16.msra.mxu0 %v4198
    %5387 = vmatprep.subr.bf16.mxu0 %v4207
    %5388 = vmatpush1.bf16.msra.mxu0 %v4206
    %5389 = vmatprep.subr.bf16.mxu0 %v4215
    %5390 = vmatpush1.bf16.msra.mxu0 %v4214
    %5391 = vmatprep.subr.bf16.mxu0 %v4223
    %5392 = vmatpush1.bf16.msra.mxu0 %v4222
    %5393 = vmatprep.subr.bf16.mxu0 %v4231
    %5394 = vmatpush1.bf16.msra.mxu0 %v4230
    %5395 = vmatprep.subr.bf16.mxu0 %v4239
    %5396 = vmatpush1.bf16.msra.mxu0 %v4238
    %5397 = vmatprep.subr.bf16.mxu0 %v4247
    %5398 = vmatpush1.bf16.msra.mxu0 %v4246
    %5399 = vmatprep.subr.bf16.mxu0 %v4255
    %5400 = vmatpush1.bf16.msra.mxu0 %v4254
    %5401 = vmatprep.subr.bf16.mxu0 %v4263
    %5402 = vmatpush1.bf16.msra.mxu0 %v4262
    %5403 = vmatprep.subr.bf16.mxu0 %v4271
    %5404 = vmatpush1.bf16.msra.mxu0 %v4270
    %5405 = vmatprep.mubr.bf16.mxu0 %v4789
    %5406 = vmatmul.mubr.bf16.gmra.mrb[0].mxu0 %v4788
    %v5407 = vpop.f32.mrb[0].mxu0
    %v5408 = vadd.f32 %v5367, %v5407
    %v5409 = vpop.f32.mrb[0].mxu0
    %v5410 = vadd.f32 %v5369, %v5409
    %v5411 = vpop.f32.mrb[0].mxu0
    %v5412 = vpop.f32.mrb[0].mxu0
    %5413 = vdwg.mxu0
    %5414 = vmatprep.subr.bf16.mxu0 %v4279
    %5415 = vmatpush1.bf16.msra.mxu0 %v4278
    %5416 = vmatprep.subr.bf16.mxu0 %v4287
    %5417 = vmatpush1.bf16.msra.mxu0 %v4286
    %5418 = vmatprep.subr.bf16.mxu0 %v4295
    %5419 = vmatpush1.bf16.msra.mxu0 %v4294
    %5420 = vmatprep.subr.bf16.mxu0 %v4303
    %5421 = vmatpush1.bf16.msra.mxu0 %v4302
    %5422 = vmatprep.subr.bf16.mxu0 %v4311
    %5423 = vmatpush1.bf16.msra.mxu0 %v4310
    %5424 = vmatprep.subr.bf16.mxu0 %v4319
    %5425 = vmatpush1.bf16.msra.mxu0 %v4318
    %5426 = vmatprep.subr.bf16.mxu0 %v4327
    %5427 = vmatpush1.bf16.msra.mxu0 %v4326
    %5428 = vmatprep.subr.bf16.mxu0 %v4335
    %5429 = vmatpush1.bf16.msra.mxu0 %v4334
    %5430 = vmatprep.subr.bf16.mxu0 %v4343
    %5431 = vmatpush1.bf16.msra.mxu0 %v4342
    %5432 = vmatprep.subr.bf16.mxu0 %v4351
    %5433 = vmatpush1.bf16.msra.mxu0 %v4350
    %5434 = vmatprep.subr.bf16.mxu0 %v4359
    %5435 = vmatpush1.bf16.msra.mxu0 %v4358
    %5436 = vmatprep.subr.bf16.mxu0 %v4367
    %5437 = vmatpush1.bf16.msra.mxu0 %v4366
    %5438 = vmatprep.subr.bf16.mxu0 %v4375
    %5439 = vmatpush1.bf16.msra.mxu0 %v4374
    %5440 = vmatprep.subr.bf16.mxu0 %v4383
    %5441 = vmatpush1.bf16.msra.mxu0 %v4382
    %5442 = vmatprep.subr.bf16.mxu0 %v4391
    %5443 = vmatpush1.bf16.msra.mxu0 %v4390
    %5444 = vmatprep.subr.bf16.mxu0 %v4399
    %5445 = vmatpush1.bf16.msra.mxu0 %v4398
    %5446 = vmatprep.mubr.bf16.mxu0 %v4791
    %5447 = vmatmul.mubr.bf16.gmra.mrb[0].mxu0 %v4790
    %v5448 = vpop.f32.mrb[0].mxu0
    %v5449 = vadd.f32 %v5408, %v5448
    %v5450 = vpop.f32.mrb[0].mxu0
    %v5451 = vadd.f32 %v5410, %v5450
    %v5452 = vpop.f32.mrb[0].mxu0
    %v5453 = vpop.f32.mrb[0].mxu0
    %5454 = vdwg.mxu0
    %5455 = vmatprep.subr.bf16.mxu0 %v4407
    %5456 = vmatpush1.bf16.msra.mxu0 %v4406
    %5457 = vmatprep.subr.bf16.mxu0 %v4415
    %5458 = vmatpush1.bf16.msra.mxu0 %v4414
    %5459 = vmatprep.subr.bf16.mxu0 %v4423
    %5460 = vmatpush1.bf16.msra.mxu0 %v4422
    %5461 = vmatprep.subr.bf16.mxu0 %v4431
    %5462 = vmatpush1.bf16.msra.mxu0 %v4430
    %5463 = vmatprep.subr.bf16.mxu0 %v4439
    %5464 = vmatpush1.bf16.msra.mxu0 %v4438
    %5465 = vmatprep.subr.bf16.mxu0 %v4447
    %5466 = vmatpush1.bf16.msra.mxu0 %v4446
    %5467 = vmatprep.subr.bf16.mxu0 %v4455
    %5468 = vmatpush1.bf16.msra.mxu0 %v4454
    %5469 = vmatprep.subr.bf16.mxu0 %v4463
    %5470 = vmatpush1.bf16.msra.mxu0 %v4462
    %5471 = vmatprep.subr.bf16.mxu0 %v4471
    %5472 = vmatpush1.bf16.msra.mxu0 %v4470
    %5473 = vmatprep.subr.bf16.mxu0 %v4479
    %5474 = vmatpush1.bf16.msra.mxu0 %v4478
    %5475 = vmatprep.subr.bf16.mxu0 %v4487
    %5476 = vmatpush1.bf16.msra.mxu0 %v4486
    %5477 = vmatprep.subr.bf16.mxu0 %v4495
    %5478 = vmatpush1.bf16.msra.mxu0 %v4494
    %5479 = vmatprep.subr.bf16.mxu0 %v4503
    %5480 = vmatpush1.bf16.msra.mxu0 %v4502
    %5481 = vmatprep.subr.bf16.mxu0 %v4511
    %5482 = vmatpush1.bf16.msra.mxu0 %v4510
    %5483 = vmatprep.subr.bf16.mxu0 %v4519
    %5484 = vmatpush1.bf16.msra.mxu0 %v4518
    %5485 = vmatprep.subr.bf16.mxu0 %v4527
    %5486 = vmatpush1.bf16.msra.mxu0 %v4526
    %5487 = vmatprep.mubr.bf16.mxu0 %v4793
    %5488 = vmatmul.mubr.bf16.gmra.mrb[0].mxu0 %v4792
    %v5489 = vpop.f32.mrb[0].mxu0
    %v5490 = vadd.f32 %v5449, %v5489
    %v5491 = vpop.f32.mrb[0].mxu0
    %v5492 = vadd.f32 %v5451, %v5491
    %v5493 = vpop.f32.mrb[0].mxu0
    %v5494 = vpop.f32.mrb[0].mxu0
    %5495 = vdwg.mxu0
    %5496 = vmatprep.subr.bf16.mxu0 %v4535
    %5497 = vmatpush1.bf16.msra.mxu0 %v4534
    %5498 = vmatprep.subr.bf16.mxu0 %v4543
    %5499 = vmatpush1.bf16.msra.mxu0 %v4542
    %5500 = vmatprep.subr.bf16.mxu0 %v4551
    %5501 = vmatpush1.bf16.msra.mxu0 %v4550
    %5502 = vmatprep.subr.bf16.mxu0 %v4559
    %5503 = vmatpush1.bf16.msra.mxu0 %v4558
    %5504 = vmatprep.subr.bf16.mxu0 %v4567
    %5505 = vmatpush1.bf16.msra.mxu0 %v4566
    %5506 = vmatprep.subr.bf16.mxu0 %v4575
    %5507 = vmatpush1.bf16.msra.mxu0 %v4574
    %5508 = vmatprep.subr.bf16.mxu0 %v4583
    %5509 = vmatpush1.bf16.msra.mxu0 %v4582
    %5510 = vmatprep.subr.bf16.mxu0 %v4591
    %5511 = vmatpush1.bf16.msra.mxu0 %v4590
    %5512 = vmatprep.subr.bf16.mxu0 %v4599
    %5513 = vmatpush1.bf16.msra.mxu0 %v4598
    %5514 = vmatprep.subr.bf16.mxu0 %v4607
    %5515 = vmatpush1.bf16.msra.mxu0 %v4606
    %5516 = vmatprep.subr.bf16.mxu0 %v4615
    %5517 = vmatpush1.bf16.msra.mxu0 %v4614
    %5518 = vmatprep.subr.bf16.mxu0 %v4623
    %5519 = vmatpush1.bf16.msra.mxu0 %v4622
    %5520 = vmatprep.subr.bf16.mxu0 %v4631
    %5521 = vmatpush1.bf16.msra.mxu0 %v4630
    %5522 = vmatprep.subr.bf16.mxu0 %v4639
    %5523 = vmatpush1.bf16.msra.mxu0 %v4638
    %5524 = vmatprep.subr.bf16.mxu0 %v4647
    %5525 = vmatpush1.bf16.msra.mxu0 %v4646
    %5526 = vmatprep.subr.bf16.mxu0 %v4655
    %5527 = vmatpush1.bf16.msra.mxu0 %v4654
    %5528 = vmatprep.mubr.bf16.mxu0 %v4795
    %5529 = vmatmul.mubr.bf16.gmra.mrb[0].mxu0 %v4794
    %v5530 = vpop.f32.mrb[0].mxu0
    %v5531 = vadd.f32 %v5490, %v5530
    %v5532 = vpop.f32.mrb[0].mxu0
    %v5533 = vadd.f32 %v5492, %v5532
    %v5534 = vpop.f32.mrb[0].mxu0
    %v5535 = vpop.f32.mrb[0].mxu0
    %5536 = vdwg.mxu0
    %5537 = vmatprep.subr.bf16.mxu0 %v4663
    %5538 = vmatpush1.bf16.msra.mxu0 %v4662
    %5539 = vmatprep.subr.bf16.mxu0 %v4671
    %5540 = vmatpush1.bf16.msra.mxu0 %v4670
    %5541 = vmatprep.subr.bf16.mxu0 %v4679
    %5542 = vmatpush1.bf16.msra.mxu0 %v4678
    %5543 = vmatprep.subr.bf16.mxu0 %v4687
    %5544 = vmatpush1.bf16.msra.mxu0 %v4686
    %5545 = vmatprep.subr.bf16.mxu0 %v4695
    %5546 = vmatpush1.bf16.msra.mxu0 %v4694
    %5547 = vmatprep.subr.bf16.mxu0 %v4703
    %5548 = vmatpush1.bf16.msra.mxu0 %v4702
    %5549 = vmatprep.subr.bf16.mxu0 %v4711
    %5550 = vmatpush1.bf16.msra.mxu0 %v4710
    %5551 = vmatprep.subr.bf16.mxu0 %v4719
    %5552 = vmatpush1.bf16.msra.mxu0 %v4718
    %5553 = vmatprep.subr.bf16.mxu0 %v4727
    %5554 = vmatpush1.bf16.msra.mxu0 %v4726
    %5555 = vmatprep.subr.bf16.mxu0 %v4735
    %5556 = vmatpush1.bf16.msra.mxu0 %v4734
    %5557 = vmatprep.subr.bf16.mxu0 %v4743
    %5558 = vmatpush1.bf16.msra.mxu0 %v4742
    %5559 = vmatprep.subr.bf16.mxu0 %v4751
    %5560 = vmatpush1.bf16.msra.mxu0 %v4750
    %5561 = vmatprep.subr.bf16.mxu0 %v4759
    %5562 = vmatpush1.bf16.msra.mxu0 %v4758
    %5563 = vmatprep.subr.bf16.mxu0 %v4767
    %5564 = vmatpush1.bf16.msra.mxu0 %v4766
    %5565 = vmatprep.subr.bf16.mxu0 %v4775
    %5566 = vmatpush1.bf16.msra.mxu0 %v4774
    %5567 = vmatprep.subr.bf16.mxu0 %v4783
    %5568 = vmatpush1.bf16.msra.mxu0 %v4782
    %5569 = vmatprep.mubr.bf16.mxu0 %v4797
    %5570 = vmatmul.mubr.bf16.gmra.mrb[0].mxu0 %v4796
    %v5571 = vpop.f32.mrb[0].mxu0
    %v5572 = vadd.f32 %v5531, %v5571
    %v5573 = vpop.f32.mrb[0].mxu0
    %v5574 = vadd.f32 %v5533, %v5573
    %v5575 = vpop.f32.mrb[0].mxu0
    %v5576 = vpop.f32.mrb[0].mxu0
    %5577 = vdwg.mxu0
    %5578 = vmatprep.subr.bf16.mxu0 %v4025
    %5579 = vmatpush1.bf16.msra.mxu0 %v4024
    %5580 = vmatprep.subr.bf16.mxu0 %v4033
    %5581 = vmatpush1.bf16.msra.mxu0 %v4032
    %5582 = vmatprep.subr.bf16.mxu0 %v4041
    %5583 = vmatpush1.bf16.msra.mxu0 %v4040
    %5584 = vmatprep.subr.bf16.mxu0 %v4049
    %5585 = vmatpush1.bf16.msra.mxu0 %v4048
    %5586 = vmatprep.subr.bf16.mxu0 %v4057
    %5587 = vmatpush1.bf16.msra.mxu0 %v4056
    %5588 = vmatprep.subr.bf16.mxu0 %v4065
    %5589 = vmatpush1.bf16.msra.mxu0 %v4064
    %5590 = vmatprep.subr.bf16.mxu0 %v4073
    %5591 = vmatpush1.bf16.msra.mxu0 %v4072
    %5592 = vmatprep.subr.bf16.mxu0 %v4081
    %5593 = vmatpush1.bf16.msra.mxu0 %v4080
    %5594 = vmatprep.subr.bf16.mxu0 %v4089
    %5595 = vmatpush1.bf16.msra.mxu0 %v4088
    %5596 = vmatprep.subr.bf16.mxu0 %v4097
    %5597 = vmatpush1.bf16.msra.mxu0 %v4096
    %5598 = vmatprep.subr.bf16.mxu0 %v4105
    %5599 = vmatpush1.bf16.msra.mxu0 %v4104
    %5600 = vmatprep.subr.bf16.mxu0 %v4113
    %5601 = vmatpush1.bf16.msra.mxu0 %v4112
    %5602 = vmatprep.subr.bf16.mxu0 %v4121
    %5603 = vmatpush1.bf16.msra.mxu0 %v4120
    %5604 = vmatprep.subr.bf16.mxu0 %v4129
    %5605 = vmatpush1.bf16.msra.mxu0 %v4128
    %5606 = vmatprep.subr.bf16.mxu0 %v4137
    %5607 = vmatpush1.bf16.msra.mxu0 %v4136
    %5608 = vmatprep.subr.bf16.mxu0 %v4145
    %5609 = vmatpush1.bf16.msra.mxu0 %v4144
    %5610 = vmatprep.mubr.bf16.mxu0 %v4787
    %5611 = vmatmul.mubr.bf16.gmra.mrb[0].mxu0 %v4786
    %v5612 = vpop.f32.mrb[0].mxu0
    %v5613 = vadd.f32 %v4827, %v5612
    %v5614 = vpop.f32.mrb[0].mxu0
    %v5615 = vadd.f32 %v4831, %v5614
    %v5616 = vpop.f32.mrb[0].mxu0
    %v5617 = vpop.f32.mrb[0].mxu0
    %5618 = vdwg.mxu0
    %5619 = vmatprep.subr.bf16.mxu0 %v4153
    %5620 = vmatpush1.bf16.msra.mxu0 %v4152
    %5621 = vmatprep.subr.bf16.mxu0 %v4161
    %5622 = vmatpush1.bf16.msra.mxu0 %v4160
    %5623 = vmatprep.subr.bf16.mxu0 %v4169
    %5624 = vmatpush1.bf16.msra.mxu0 %v4168
    %5625 = vmatprep.subr.bf16.mxu0 %v4177
    %5626 = vmatpush1.bf16.msra.mxu0 %v4176
    %5627 = vmatprep.subr.bf16.mxu0 %v4185
    %5628 = vmatpush1.bf16.msra.mxu0 %v4184
    %5629 = vmatprep.subr.bf16.mxu0 %v4193
    %5630 = vmatpush1.bf16.msra.mxu0 %v4192
    %5631 = vmatprep.subr.bf16.mxu0 %v4201
    %5632 = vmatpush1.bf16.msra.mxu0 %v4200
    %5633 = vmatprep.subr.bf16.mxu0 %v4209
    %5634 = vmatpush1.bf16.msra.mxu0 %v4208
    %5635 = vmatprep.subr.bf16.mxu0 %v4217
    %5636 = vmatpush1.bf16.msra.mxu0 %v4216
    %5637 = vmatprep.subr.bf16.mxu0 %v4225
    %5638 = vmatpush1.bf16.msra.mxu0 %v4224
    %5639 = vmatprep.subr.bf16.mxu0 %v4233
    %5640 = vmatpush1.bf16.msra.mxu0 %v4232
    %5641 = vmatprep.subr.bf16.mxu0 %v4241
    %5642 = vmatpush1.bf16.msra.mxu0 %v4240
    %5643 = vmatprep.subr.bf16.mxu0 %v4249
    %5644 = vmatpush1.bf16.msra.mxu0 %v4248
    %5645 = vmatprep.subr.bf16.mxu0 %v4257
    %5646 = vmatpush1.bf16.msra.mxu0 %v4256
    %5647 = vmatprep.subr.bf16.mxu0 %v4265
    %5648 = vmatpush1.bf16.msra.mxu0 %v4264
    %5649 = vmatprep.subr.bf16.mxu0 %v4273
    %5650 = vmatpush1.bf16.msra.mxu0 %v4272
    %5651 = vmatprep.mubr.bf16.mxu0 %v4789
    %5652 = vmatmul.mubr.bf16.gmra.mrb[0].mxu0 %v4788
    %v5653 = vpop.f32.mrb[0].mxu0
    %v5654 = vadd.f32 %v5613, %v5653
    %v5655 = vpop.f32.mrb[0].mxu0
    %v5656 = vadd.f32 %v5615, %v5655
    %v5657 = vpop.f32.mrb[0].mxu0
    %v5658 = vpop.f32.mrb[0].mxu0
    %5659 = vdwg.mxu0
    %5660 = vmatprep.subr.bf16.mxu0 %v4281
    %5661 = vmatpush1.bf16.msra.mxu0 %v4280
    %5662 = vmatprep.subr.bf16.mxu0 %v4289
    %5663 = vmatpush1.bf16.msra.mxu0 %v4288
    %5664 = vmatprep.subr.bf16.mxu0 %v4297
    %5665 = vmatpush1.bf16.msra.mxu0 %v4296
    %5666 = vmatprep.subr.bf16.mxu0 %v4305
    %5667 = vmatpush1.bf16.msra.mxu0 %v4304
    %5668 = vmatprep.subr.bf16.mxu0 %v4313
    %5669 = vmatpush1.bf16.msra.mxu0 %v4312
    %5670 = vmatprep.subr.bf16.mxu0 %v4321
    %5671 = vmatpush1.bf16.msra.mxu0 %v4320
    %5672 = vmatprep.subr.bf16.mxu0 %v4329
    %5673 = vmatpush1.bf16.msra.mxu0 %v4328
    %5674 = vmatprep.subr.bf16.mxu0 %v4337
    %5675 = vmatpush1.bf16.msra.mxu0 %v4336
    %5676 = vmatprep.subr.bf16.mxu0 %v4345
    %5677 = vmatpush1.bf16.msra.mxu0 %v4344
    %5678 = vmatprep.subr.bf16.mxu0 %v4353
    %5679 = vmatpush1.bf16.msra.mxu0 %v4352
    %5680 = vmatprep.subr.bf16.mxu0 %v4361
    %5681 = vmatpush1.bf16.msra.mxu0 %v4360
    %5682 = vmatprep.subr.bf16.mxu0 %v4369
    %5683 = vmatpush1.bf16.msra.mxu0 %v4368
    %5684 = vmatprep.subr.bf16.mxu0 %v4377
    %5685 = vmatpush1.bf16.msra.mxu0 %v4376
    %5686 = vmatprep.subr.bf16.mxu0 %v4385
    %5687 = vmatpush1.bf16.msra.mxu0 %v4384
    %5688 = vmatprep.subr.bf16.mxu0 %v4393
    %5689 = vmatpush1.bf16.msra.mxu0 %v4392
    %5690 = vmatprep.subr.bf16.mxu0 %v4401
    %5691 = vmatpush1.bf16.msra.mxu0 %v4400
    %5692 = vmatprep.mubr.bf16.mxu0 %v4791
    %5693 = vmatmul.mubr.bf16.gmra.mrb[0].mxu0 %v4790
    %v5694 = vpop.f32.mrb[0].mxu0
    %v5695 = vadd.f32 %v5654, %v5694
    %v5696 = vpop.f32.mrb[0].mxu0
    %v5697 = vadd.f32 %v5656, %v5696
    %v5698 = vpop.f32.mrb[0].mxu0
    %v5699 = vpop.f32.mrb[0].mxu0
    %5700 = vdwg.mxu0
    %5701 = vmatprep.subr.bf16.mxu0 %v4409
    %5702 = vmatpush1.bf16.msra.mxu0 %v4408
    %5703 = vmatprep.subr.bf16.mxu0 %v4417
    %5704 = vmatpush1.bf16.msra.mxu0 %v4416
    %5705 = vmatprep.subr.bf16.mxu0 %v4425
    %5706 = vmatpush1.bf16.msra.mxu0 %v4424
    %5707 = vmatprep.subr.bf16.mxu0 %v4433
    %5708 = vmatpush1.bf16.msra.mxu0 %v4432
    %5709 = vmatprep.subr.bf16.mxu0 %v4441
    %5710 = vmatpush1.bf16.msra.mxu0 %v4440
    %5711 = vmatprep.subr.bf16.mxu0 %v4449
    %5712 = vmatpush1.bf16.msra.mxu0 %v4448
    %5713 = vmatprep.subr.bf16.mxu0 %v4457
    %5714 = vmatpush1.bf16.msra.mxu0 %v4456
    %5715 = vmatprep.subr.bf16.mxu0 %v4465
    %5716 = vmatpush1.bf16.msra.mxu0 %v4464
    %5717 = vmatprep.subr.bf16.mxu0 %v4473
    %5718 = vmatpush1.bf16.msra.mxu0 %v4472
    %5719 = vmatprep.subr.bf16.mxu0 %v4481
    %5720 = vmatpush1.bf16.msra.mxu0 %v4480
    %5721 = vmatprep.subr.bf16.mxu0 %v4489
    %5722 = vmatpush1.bf16.msra.mxu0 %v4488
    %5723 = vmatprep.subr.bf16.mxu0 %v4497
    %5724 = vmatpush1.bf16.msra.mxu0 %v4496
    %5725 = vmatprep.subr.bf16.mxu0 %v4505
    %5726 = vmatpush1.bf16.msra.mxu0 %v4504
    %5727 = vmatprep.subr.bf16.mxu0 %v4513
    %5728 = vmatpush1.bf16.msra.mxu0 %v4512
    %5729 = vmatprep.subr.bf16.mxu0 %v4521
    %5730 = vmatpush1.bf16.msra.mxu0 %v4520
    %5731 = vmatprep.subr.bf16.mxu0 %v4529
    %5732 = vmatpush1.bf16.msra.mxu0 %v4528
    %5733 = vmatprep.mubr.bf16.mxu0 %v4793
    %5734 = vmatmul.mubr.bf16.gmra.mrb[0].mxu0 %v4792
    %v5735 = vpop.f32.mrb[0].mxu0
    %v5736 = vadd.f32 %v5695, %v5735
    %v5737 = vpop.f32.mrb[0].mxu0
    %v5738 = vadd.f32 %v5697, %v5737
    %v5739 = vpop.f32.mrb[0].mxu0
    %v5740 = vpop.f32.mrb[0].mxu0
    %5741 = vdwg.mxu0
    %5742 = vmatprep.subr.bf16.mxu0 %v4537
    %5743 = vmatpush1.bf16.msra.mxu0 %v4536
    %5744 = vmatprep.subr.bf16.mxu0 %v4545
    %5745 = vmatpush1.bf16.msra.mxu0 %v4544
    %5746 = vmatprep.subr.bf16.mxu0 %v4553
    %5747 = vmatpush1.bf16.msra.mxu0 %v4552
    %5748 = vmatprep.subr.bf16.mxu0 %v4561
    %5749 = vmatpush1.bf16.msra.mxu0 %v4560
    %5750 = vmatprep.subr.bf16.mxu0 %v4569
    %5751 = vmatpush1.bf16.msra.mxu0 %v4568
    %5752 = vmatprep.subr.bf16.mxu0 %v4577
    %5753 = vmatpush1.bf16.msra.mxu0 %v4576
    %5754 = vmatprep.subr.bf16.mxu0 %v4585
    %5755 = vmatpush1.bf16.msra.mxu0 %v4584
    %5756 = vmatprep.subr.bf16.mxu0 %v4593
    %5757 = vmatpush1.bf16.msra.mxu0 %v4592
    %5758 = vmatprep.subr.bf16.mxu0 %v4601
    %5759 = vmatpush1.bf16.msra.mxu0 %v4600
    %5760 = vmatprep.subr.bf16.mxu0 %v4609
    %5761 = vmatpush1.bf16.msra.mxu0 %v4608
    %5762 = vmatprep.subr.bf16.mxu0 %v4617
    %5763 = vmatpush1.bf16.msra.mxu0 %v4616
    %5764 = vmatprep.subr.bf16.mxu0 %v4625
    %5765 = vmatpush1.bf16.msra.mxu0 %v4624
    %5766 = vmatprep.subr.bf16.mxu0 %v4633
    %5767 = vmatpush1.bf16.msra.mxu0 %v4632
    %5768 = vmatprep.subr.bf16.mxu0 %v4641
    %5769 = vmatpush1.bf16.msra.mxu0 %v4640
    %5770 = vmatprep.subr.bf16.mxu0 %v4649
    %5771 = vmatpush1.bf16.msra.mxu0 %v4648
    %5772 = vmatprep.subr.bf16.mxu0 %v4657
    %5773 = vmatpush1.bf16.msra.mxu0 %v4656
    %5774 = vmatprep.mubr.bf16.mxu0 %v4795
    %5775 = vmatmul.mubr.bf16.gmra.mrb[0].mxu0 %v4794
    %v5776 = vpop.f32.mrb[0].mxu0
    %v5777 = vadd.f32 %v5736, %v5776
    %v5778 = vpop.f32.mrb[0].mxu0
    %v5779 = vadd.f32 %v5738, %v5778
    %v5780 = vpop.f32.mrb[0].mxu0
    %v5781 = vpop.f32.mrb[0].mxu0
    %5782 = vdwg.mxu0
    %5783 = vmatprep.subr.bf16.mxu0 %v4665
    %5784 = vmatpush1.bf16.msra.mxu0 %v4664
    %5785 = vmatprep.subr.bf16.mxu0 %v4673
    %5786 = vmatpush1.bf16.msra.mxu0 %v4672
    %5787 = vmatprep.subr.bf16.mxu0 %v4681
    %5788 = vmatpush1.bf16.msra.mxu0 %v4680
    %5789 = vmatprep.subr.bf16.mxu0 %v4689
    %5790 = vmatpush1.bf16.msra.mxu0 %v4688
    %5791 = vmatprep.subr.bf16.mxu0 %v4697
    %5792 = vmatpush1.bf16.msra.mxu0 %v4696
    %5793 = vmatprep.subr.bf16.mxu0 %v4705
    %5794 = vmatpush1.bf16.msra.mxu0 %v4704
    %5795 = vmatprep.subr.bf16.mxu0 %v4713
    %5796 = vmatpush1.bf16.msra.mxu0 %v4712
    %5797 = vmatprep.subr.bf16.mxu0 %v4721
    %5798 = vmatpush1.bf16.msra.mxu0 %v4720
    %5799 = vmatprep.subr.bf16.mxu0 %v4729
    %5800 = vmatpush1.bf16.msra.mxu0 %v4728
    %5801 = vmatprep.subr.bf16.mxu0 %v4737
    %5802 = vmatpush1.bf16.msra.mxu0 %v4736
    %5803 = vmatprep.subr.bf16.mxu0 %v4745
    %5804 = vmatpush1.bf16.msra.mxu0 %v4744
    %5805 = vmatprep.subr.bf16.mxu0 %v4753
    %5806 = vmatpush1.bf16.msra.mxu0 %v4752
    %5807 = vmatprep.subr.bf16.mxu0 %v4761
    %5808 = vmatpush1.bf16.msra.mxu0 %v4760
    %5809 = vmatprep.subr.bf16.mxu0 %v4769
    %5810 = vmatpush1.bf16.msra.mxu0 %v4768
    %5811 = vmatprep.subr.bf16.mxu0 %v4777
    %5812 = vmatpush1.bf16.msra.mxu0 %v4776
    %5813 = vmatprep.subr.bf16.mxu0 %v4785
    %5814 = vmatpush1.bf16.msra.mxu0 %v4784
    %5815 = vmatprep.mubr.bf16.mxu0 %v4797
    %5816 = vmatmul.mubr.bf16.gmra.mrb[0].mxu0 %v4796
    %v5817 = vpop.f32.mrb[0].mxu0
    %v5818 = vadd.f32 %v5777, %v5817
    %v5819 = vpop.f32.mrb[0].mxu0
    %v5820 = vadd.f32 %v5779, %v5819
    %v5821 = vpop.f32.mrb[0].mxu0
    %v5822 = vpop.f32.mrb[0].mxu0
    %5823 = vdwg.mxu0
    %v5824 = vmax.f32 %v5080, 0.0
    %v5825 = vmax.f32 %v5082, 0.0
    %v5826 = vmax.f32 %v5326, 0.0
    %v5827 = vmax.f32 %v5328, 0.0
    %v5828 = vmax.f32 %v5572, 0.0
    %v5829 = vmax.f32 %v5574, 0.0
    %v5830 = vmax.f32 %v5818, 0.0
    %v5831 = vmax.f32 %v5820, 0.0
    %s5832 = smul.u32 4, 128
    %s5833 = smul.u32 %s5832, 8
    %s5834 = sshll.u32 %s5833, 4
    %5835 = dma.done %s302, %s5834
    %v5836 = vld [vmem:[#allocation5] sm:$0xff]
    %v5837 = vld [vmem:[#allocation5 + $0x8] sm:$0xff]
    %v5838 = vld [vmem:[#allocation5 + $0x10] sm:$0xff]
    %v5839 = vld [vmem:[#allocation5 + $0x18] sm:$0xff]
    %v5840 = vld [vmem:[#allocation5 + $0x20] sm:$0xff]
    %v5841 = vld [vmem:[#allocation5 + $0x28] sm:$0xff]
    %v5842 = vld [vmem:[#allocation5 + $0x30] sm:$0xff]
    %v5843 = vld [vmem:[#allocation5 + $0x38] sm:$0xff]
    %v5844 = vld [vmem:[#allocation5 + $0x40] sm:$0xff]
    %v5845 = vld [vmem:[#allocation5 + $0x48] sm:$0xff]
    %v5846 = vld [vmem:[#allocation5 + $0x50] sm:$0xff]
    %v5847 = vld [vmem:[#allocation5 + $0x58] sm:$0xff]
    %v5848 = vld [vmem:[#allocation5 + $0x60] sm:$0xff]
    %v5849 = vld [vmem:[#allocation5 + $0x68] sm:$0xff]
    %v5850 = vld [vmem:[#allocation5 + $0x70] sm:$0xff]
    %v5851 = vld [vmem:[#allocation5 + $0x78] sm:$0xff]
    %v5852 = vld [vmem:[#allocation5 + $0x80] sm:$0xff]
    %v5853 = vld [vmem:[#allocation5 + $0x88] sm:$0xff]
    %v5854 = vld [vmem:[#allocation5 + $0x90] sm:$0xff]
    %v5855 = vld [vmem:[#allocation5 + $0x98] sm:$0xff]
    %v5856 = vld [vmem:[#allocation5 + $0xa0] sm:$0xff]
    %v5857 = vld [vmem:[#allocation5 + $0xa8] sm:$0xff]
    %v5858 = vld [vmem:[#allocation5 + $0xb0] sm:$0xff]
    %v5859 = vld [vmem:[#allocation5 + $0xb8] sm:$0xff]
    %v5860 = vld [vmem:[#allocation5 + $0xc0] sm:$0xff]
    %v5861 = vld [vmem:[#allocation5 + $0xc8] sm:$0xff]
    %v5862 = vld [vmem:[#allocation5 + $0xd0] sm:$0xff]
    %v5863 = vld [vmem:[#allocation5 + $0xd8] sm:$0xff]
    %v5864 = vld [vmem:[#allocation5 + $0xe0] sm:$0xff]
    %v5865 = vld [vmem:[#allocation5 + $0xe8] sm:$0xff]
    %v5866 = vld [vmem:[#allocation5 + $0xf0] sm:$0xff]
    %v5867 = vld [vmem:[#allocation5 + $0xf8] sm:$0xff]
    %v5868 = vld [vmem:[#allocation5 + $0x100] sm:$0xff]
    %v5869 = vld [vmem:[#allocation5 + $0x108] sm:$0xff]
    %v5870 = vld [vmem:[#allocation5 + $0x110] sm:$0xff]
    %v5871 = vld [vmem:[#allocation5 + $0x118] sm:$0xff]
    %v5872 = vld [vmem:[#allocation5 + $0x120] sm:$0xff]
    %v5873 = vld [vmem:[#allocation5 + $0x128] sm:$0xff]
    %v5874 = vld [vmem:[#allocation5 + $0x130] sm:$0xff]
    %v5875 = vld [vmem:[#allocation5 + $0x138] sm:$0xff]
    %v5876 = vld [vmem:[#allocation5 + $0x140] sm:$0xff]
    %v5877 = vld [vmem:[#allocation5 + $0x148] sm:$0xff]
    %v5878 = vld [vmem:[#allocation5 + $0x150] sm:$0xff]
    %v5879 = vld [vmem:[#allocation5 + $0x158] sm:$0xff]
    %v5880 = vld [vmem:[#allocation5 + $0x160] sm:$0xff]
    %v5881 = vld [vmem:[#allocation5 + $0x168] sm:$0xff]
    %v5882 = vld [vmem:[#allocation5 + $0x170] sm:$0xff]
    %v5883 = vld [vmem:[#allocation5 + $0x178] sm:$0xff]
    %v5884 = vld [vmem:[#allocation5 + $0x180] sm:$0xff]
    %v5885 = vld [vmem:[#allocation5 + $0x188] sm:$0xff]
    %v5886 = vld [vmem:[#allocation5 + $0x190] sm:$0xff]
    %v5887 = vld [vmem:[#allocation5 + $0x198] sm:$0xff]
    %v5888 = vld [vmem:[#allocation5 + $0x1a0] sm:$0xff]
    %v5889 = vld [vmem:[#allocation5 + $0x1a8] sm:$0xff]
    %v5890 = vld [vmem:[#allocation5 + $0x1b0] sm:$0xff]
    %v5891 = vld [vmem:[#allocation5 + $0x1b8] sm:$0xff]
    %v5892 = vld [vmem:[#allocation5 + $0x1c0] sm:$0xff]
    %v5893 = vld [vmem:[#allocation5 + $0x1c8] sm:$0xff]
    %v5894 = vld [vmem:[#allocation5 + $0x1d0] sm:$0xff]
    %v5895 = vld [vmem:[#allocation5 + $0x1d8] sm:$0xff]
    %v5896 = vld [vmem:[#allocation5 + $0x1e0] sm:$0xff]
    %v5897 = vld [vmem:[#allocation5 + $0x1e8] sm:$0xff]
    %v5898 = vld [vmem:[#allocation5 + $0x1f0] sm:$0xff]
    %v5899 = vld [vmem:[#allocation5 + $0x1f8] sm:$0xff]
    %v5900 = vld [vmem:[#allocation5 + $0x200] sm:$0xff]
    %v5901 = vld [vmem:[#allocation5 + $0x208] sm:$0xff]
    %v5902 = vld [vmem:[#allocation5 + $0x210] sm:$0xff]
    %v5903 = vld [vmem:[#allocation5 + $0x218] sm:$0xff]
    %v5904 = vld [vmem:[#allocation5 + $0x220] sm:$0xff]
    %v5905 = vld [vmem:[#allocation5 + $0x228] sm:$0xff]
    %v5906 = vld [vmem:[#allocation5 + $0x230] sm:$0xff]
    %v5907 = vld [vmem:[#allocation5 + $0x238] sm:$0xff]
    %v5908 = vld [vmem:[#allocation5 + $0x240] sm:$0xff]
    %v5909 = vld [vmem:[#allocation5 + $0x248] sm:$0xff]
    %v5910 = vld [vmem:[#allocation5 + $0x250] sm:$0xff]
    %v5911 = vld [vmem:[#allocation5 + $0x258] sm:$0xff]
    %v5912 = vld [vmem:[#allocation5 + $0x260] sm:$0xff]
    %v5913 = vld [vmem:[#allocation5 + $0x268] sm:$0xff]
    %v5914 = vld [vmem:[#allocation5 + $0x270] sm:$0xff]
    %v5915 = vld [vmem:[#allocation5 + $0x278] sm:$0xff]
    %v5916 = vld [vmem:[#allocation5 + $0x280] sm:$0xff]
    %v5917 = vld [vmem:[#allocation5 + $0x288] sm:$0xff]
    %v5918 = vld [vmem:[#allocation5 + $0x290] sm:$0xff]
    %v5919 = vld [vmem:[#allocation5 + $0x298] sm:$0xff]
    %v5920 = vld [vmem:[#allocation5 + $0x2a0] sm:$0xff]
    %v5921 = vld [vmem:[#allocation5 + $0x2a8] sm:$0xff]
    %v5922 = vld [vmem:[#allocation5 + $0x2b0] sm:$0xff]
    %v5923 = vld [vmem:[#allocation5 + $0x2b8] sm:$0xff]
    %v5924 = vld [vmem:[#allocation5 + $0x2c0] sm:$0xff]
    %v5925 = vld [vmem:[#allocation5 + $0x2c8] sm:$0xff]
    %v5926 = vld [vmem:[#allocation5 + $0x2d0] sm:$0xff]
    %v5927 = vld [vmem:[#allocation5 + $0x2d8] sm:$0xff]
    %v5928 = vld [vmem:[#allocation5 + $0x2e0] sm:$0xff]
    %v5929 = vld [vmem:[#allocation5 + $0x2e8] sm:$0xff]
    %v5930 = vld [vmem:[#allocation5 + $0x2f0] sm:$0xff]
    %v5931 = vld [vmem:[#allocation5 + $0x2f8] sm:$0xff]
    %v5932 = vld [vmem:[#allocation5 + $0x300] sm:$0xff]
    %v5933 = vld [vmem:[#allocation5 + $0x308] sm:$0xff]
    %v5934 = vld [vmem:[#allocation5 + $0x310] sm:$0xff]
    %v5935 = vld [vmem:[#allocation5 + $0x318] sm:$0xff]
    %v5936 = vld [vmem:[#allocation5 + $0x320] sm:$0xff]
    %v5937 = vld [vmem:[#allocation5 + $0x328] sm:$0xff]
    %v5938 = vld [vmem:[#allocation5 + $0x330] sm:$0xff]
    %v5939 = vld [vmem:[#allocation5 + $0x338] sm:$0xff]
    %v5940 = vld [vmem:[#allocation5 + $0x340] sm:$0xff]
    %v5941 = vld [vmem:[#allocation5 + $0x348] sm:$0xff]
    %v5942 = vld [vmem:[#allocation5 + $0x350] sm:$0xff]
    %v5943 = vld [vmem:[#allocation5 + $0x358] sm:$0xff]
    %v5944 = vld [vmem:[#allocation5 + $0x360] sm:$0xff]
    %v5945 = vld [vmem:[#allocation5 + $0x368] sm:$0xff]
    %v5946 = vld [vmem:[#allocation5 + $0x370] sm:$0xff]
    %v5947 = vld [vmem:[#allocation5 + $0x378] sm:$0xff]
    %v5948 = vld [vmem:[#allocation5 + $0x380] sm:$0xff]
    %v5949 = vld [vmem:[#allocation5 + $0x388] sm:$0xff]
    %v5950 = vld [vmem:[#allocation5 + $0x390] sm:$0xff]
    %v5951 = vld [vmem:[#allocation5 + $0x398] sm:$0xff]
    %v5952 = vld [vmem:[#allocation5 + $0x3a0] sm:$0xff]
    %v5953 = vld [vmem:[#allocation5 + $0x3a8] sm:$0xff]
    %v5954 = vld [vmem:[#allocation5 + $0x3b0] sm:$0xff]
    %v5955 = vld [vmem:[#allocation5 + $0x3b8] sm:$0xff]
    %v5956 = vld [vmem:[#allocation5 + $0x3c0] sm:$0xff]
    %v5957 = vld [vmem:[#allocation5 + $0x3c8] sm:$0xff]
    %v5958 = vld [vmem:[#allocation5 + $0x3d0] sm:$0xff]
    %v5959 = vld [vmem:[#allocation5 + $0x3d8] sm:$0xff]
    %v5960 = vld [vmem:[#allocation5 + $0x3e0] sm:$0xff]
    %v5961 = vld [vmem:[#allocation5 + $0x3e8] sm:$0xff]
    %v5962 = vld [vmem:[#allocation5 + $0x3f0] sm:$0xff]
    %v5963 = vld [vmem:[#allocation5 + $0x3f8] sm:$0xff]
    %v5964 = vld [vmem:[#allocation5 + $0x400] sm:$0xff]
    %v5965 = vld [vmem:[#allocation5 + $0x408] sm:$0xff]
    %v5966 = vld [vmem:[#allocation5 + $0x410] sm:$0xff]
    %v5967 = vld [vmem:[#allocation5 + $0x418] sm:$0xff]
    %v5968 = vld [vmem:[#allocation5 + $0x420] sm:$0xff]
    %v5969 = vld [vmem:[#allocation5 + $0x428] sm:$0xff]
    %v5970 = vld [vmem:[#allocation5 + $0x430] sm:$0xff]
    %v5971 = vld [vmem:[#allocation5 + $0x438] sm:$0xff]
    %v5972 = vld [vmem:[#allocation5 + $0x440] sm:$0xff]
    %v5973 = vld [vmem:[#allocation5 + $0x448] sm:$0xff]
    %v5974 = vld [vmem:[#allocation5 + $0x450] sm:$0xff]
    %v5975 = vld [vmem:[#allocation5 + $0x458] sm:$0xff]
    %v5976 = vld [vmem:[#allocation5 + $0x460] sm:$0xff]
    %v5977 = vld [vmem:[#allocation5 + $0x468] sm:$0xff]
    %v5978 = vld [vmem:[#allocation5 + $0x470] sm:$0xff]
    %v5979 = vld [vmem:[#allocation5 + $0x478] sm:$0xff]
    %v5980 = vld [vmem:[#allocation5 + $0x480] sm:$0xff]
    %v5981 = vld [vmem:[#allocation5 + $0x488] sm:$0xff]
    %v5982 = vld [vmem:[#allocation5 + $0x490] sm:$0xff]
    %v5983 = vld [vmem:[#allocation5 + $0x498] sm:$0xff]
    %v5984 = vld [vmem:[#allocation5 + $0x4a0] sm:$0xff]
    %v5985 = vld [vmem:[#allocation5 + $0x4a8] sm:$0xff]
    %v5986 = vld [vmem:[#allocation5 + $0x4b0] sm:$0xff]
    %v5987 = vld [vmem:[#allocation5 + $0x4b8] sm:$0xff]
    %v5988 = vld [vmem:[#allocation5 + $0x4c0] sm:$0xff]
    %v5989 = vld [vmem:[#allocation5 + $0x4c8] sm:$0xff]
    %v5990 = vld [vmem:[#allocation5 + $0x4d0] sm:$0xff]
    %v5991 = vld [vmem:[#allocation5 + $0x4d8] sm:$0xff]
    %v5992 = vld [vmem:[#allocation5 + $0x4e0] sm:$0xff]
    %v5993 = vld [vmem:[#allocation5 + $0x4e8] sm:$0xff]
    %v5994 = vld [vmem:[#allocation5 + $0x4f0] sm:$0xff]
    %v5995 = vld [vmem:[#allocation5 + $0x4f8] sm:$0xff]
    %v5996 = vld [vmem:[#allocation5 + $0x500] sm:$0xff]
    %v5997 = vld [vmem:[#allocation5 + $0x508] sm:$0xff]
    %v5998 = vld [vmem:[#allocation5 + $0x510] sm:$0xff]
    %v5999 = vld [vmem:[#allocation5 + $0x518] sm:$0xff]
    %v6000 = vld [vmem:[#allocation5 + $0x520] sm:$0xff]
    %v6001 = vld [vmem:[#allocation5 + $0x528] sm:$0xff]
    %v6002 = vld [vmem:[#allocation5 + $0x530] sm:$0xff]
    %v6003 = vld [vmem:[#allocation5 + $0x538] sm:$0xff]
    %v6004 = vld [vmem:[#allocation5 + $0x540] sm:$0xff]
    %v6005 = vld [vmem:[#allocation5 + $0x548] sm:$0xff]
    %v6006 = vld [vmem:[#allocation5 + $0x550] sm:$0xff]
    %v6007 = vld [vmem:[#allocation5 + $0x558] sm:$0xff]
    %v6008 = vld [vmem:[#allocation5 + $0x560] sm:$0xff]
    %v6009 = vld [vmem:[#allocation5 + $0x568] sm:$0xff]
    %v6010 = vld [vmem:[#allocation5 + $0x570] sm:$0xff]
    %v6011 = vld [vmem:[#allocation5 + $0x578] sm:$0xff]
    %v6012 = vld [vmem:[#allocation5 + $0x580] sm:$0xff]
    %v6013 = vld [vmem:[#allocation5 + $0x588] sm:$0xff]
    %v6014 = vld [vmem:[#allocation5 + $0x590] sm:$0xff]
    %v6015 = vld [vmem:[#allocation5 + $0x598] sm:$0xff]
    %v6016 = vld [vmem:[#allocation5 + $0x5a0] sm:$0xff]
    %v6017 = vld [vmem:[#allocation5 + $0x5a8] sm:$0xff]
    %v6018 = vld [vmem:[#allocation5 + $0x5b0] sm:$0xff]
    %v6019 = vld [vmem:[#allocation5 + $0x5b8] sm:$0xff]
    %v6020 = vld [vmem:[#allocation5 + $0x5c0] sm:$0xff]
    %v6021 = vld [vmem:[#allocation5 + $0x5c8] sm:$0xff]
    %v6022 = vld [vmem:[#allocation5 + $0x5d0] sm:$0xff]
    %v6023 = vld [vmem:[#allocation5 + $0x5d8] sm:$0xff]
    %v6024 = vld [vmem:[#allocation5 + $0x5e0] sm:$0xff]
    %v6025 = vld [vmem:[#allocation5 + $0x5e8] sm:$0xff]
    %v6026 = vld [vmem:[#allocation5 + $0x5f0] sm:$0xff]
    %v6027 = vld [vmem:[#allocation5 + $0x5f8] sm:$0xff]
    %v6028 = vld [vmem:[#allocation5 + $0x600] sm:$0xff]
    %v6029 = vld [vmem:[#allocation5 + $0x608] sm:$0xff]
    %v6030 = vld [vmem:[#allocation5 + $0x610] sm:$0xff]
    %v6031 = vld [vmem:[#allocation5 + $0x618] sm:$0xff]
    %v6032 = vld [vmem:[#allocation5 + $0x620] sm:$0xff]
    %v6033 = vld [vmem:[#allocation5 + $0x628] sm:$0xff]
    %v6034 = vld [vmem:[#allocation5 + $0x630] sm:$0xff]
    %v6035 = vld [vmem:[#allocation5 + $0x638] sm:$0xff]
    %v6036 = vld [vmem:[#allocation5 + $0x640] sm:$0xff]
    %v6037 = vld [vmem:[#allocation5 + $0x648] sm:$0xff]
    %v6038 = vld [vmem:[#allocation5 + $0x650] sm:$0xff]
    %v6039 = vld [vmem:[#allocation5 + $0x658] sm:$0xff]
    %v6040 = vld [vmem:[#allocation5 + $0x660] sm:$0xff]
    %v6041 = vld [vmem:[#allocation5 + $0x668] sm:$0xff]
    %v6042 = vld [vmem:[#allocation5 + $0x670] sm:$0xff]
    %v6043 = vld [vmem:[#allocation5 + $0x678] sm:$0xff]
    %v6044 = vld [vmem:[#allocation5 + $0x680] sm:$0xff]
    %v6045 = vld [vmem:[#allocation5 + $0x688] sm:$0xff]
    %v6046 = vld [vmem:[#allocation5 + $0x690] sm:$0xff]
    %v6047 = vld [vmem:[#allocation5 + $0x698] sm:$0xff]
    %v6048 = vld [vmem:[#allocation5 + $0x6a0] sm:$0xff]
    %v6049 = vld [vmem:[#allocation5 + $0x6a8] sm:$0xff]
    %v6050 = vld [vmem:[#allocation5 + $0x6b0] sm:$0xff]
    %v6051 = vld [vmem:[#allocation5 + $0x6b8] sm:$0xff]
    %v6052 = vld [vmem:[#allocation5 + $0x6c0] sm:$0xff]
    %v6053 = vld [vmem:[#allocation5 + $0x6c8] sm:$0xff]
    %v6054 = vld [vmem:[#allocation5 + $0x6d0] sm:$0xff]
    %v6055 = vld [vmem:[#allocation5 + $0x6d8] sm:$0xff]
    %v6056 = vld [vmem:[#allocation5 + $0x6e0] sm:$0xff]
    %v6057 = vld [vmem:[#allocation5 + $0x6e8] sm:$0xff]
    %v6058 = vld [vmem:[#allocation5 + $0x6f0] sm:$0xff]
    %v6059 = vld [vmem:[#allocation5 + $0x6f8] sm:$0xff]
    %v6060 = vld [vmem:[#allocation5 + $0x700] sm:$0xff]
    %v6061 = vld [vmem:[#allocation5 + $0x708] sm:$0xff]
    %v6062 = vld [vmem:[#allocation5 + $0x710] sm:$0xff]
    %v6063 = vld [vmem:[#allocation5 + $0x718] sm:$0xff]
    %v6064 = vld [vmem:[#allocation5 + $0x720] sm:$0xff]
    %v6065 = vld [vmem:[#allocation5 + $0x728] sm:$0xff]
    %v6066 = vld [vmem:[#allocation5 + $0x730] sm:$0xff]
    %v6067 = vld [vmem:[#allocation5 + $0x738] sm:$0xff]
    %v6068 = vld [vmem:[#allocation5 + $0x740] sm:$0xff]
    %v6069 = vld [vmem:[#allocation5 + $0x748] sm:$0xff]
    %v6070 = vld [vmem:[#allocation5 + $0x750] sm:$0xff]
    %v6071 = vld [vmem:[#allocation5 + $0x758] sm:$0xff]
    %v6072 = vld [vmem:[#allocation5 + $0x760] sm:$0xff]
    %v6073 = vld [vmem:[#allocation5 + $0x768] sm:$0xff]
    %v6074 = vld [vmem:[#allocation5 + $0x770] sm:$0xff]
    %v6075 = vld [vmem:[#allocation5 + $0x778] sm:$0xff]
    %v6076 = vld [vmem:[#allocation5 + $0x780] sm:$0xff]
    %v6077 = vld [vmem:[#allocation5 + $0x788] sm:$0xff]
    %v6078 = vld [vmem:[#allocation5 + $0x790] sm:$0xff]
    %v6079 = vld [vmem:[#allocation5 + $0x798] sm:$0xff]
    %v6080 = vld [vmem:[#allocation5 + $0x7a0] sm:$0xff]
    %v6081 = vld [vmem:[#allocation5 + $0x7a8] sm:$0xff]
    %v6082 = vld [vmem:[#allocation5 + $0x7b0] sm:$0xff]
    %v6083 = vld [vmem:[#allocation5 + $0x7b8] sm:$0xff]
    %v6084 = vld [vmem:[#allocation5 + $0x7c0] sm:$0xff]
    %v6085 = vld [vmem:[#allocation5 + $0x7c8] sm:$0xff]
    %v6086 = vld [vmem:[#allocation5 + $0x7d0] sm:$0xff]
    %v6087 = vld [vmem:[#allocation5 + $0x7d8] sm:$0xff]
    %v6088 = vld [vmem:[#allocation5 + $0x7e0] sm:$0xff]
    %v6089 = vld [vmem:[#allocation5 + $0x7e8] sm:$0xff]
    %v6090 = vld [vmem:[#allocation5 + $0x7f0] sm:$0xff]
    %v6091 = vld [vmem:[#allocation5 + $0x7f8] sm:$0xff]
    %v6092 = vld [vmem:[#allocation5 + $0x800] sm:$0xff]
    %v6093 = vld [vmem:[#allocation5 + $0x808] sm:$0xff]
    %v6094 = vld [vmem:[#allocation5 + $0x810] sm:$0xff]
    %v6095 = vld [vmem:[#allocation5 + $0x818] sm:$0xff]
    %v6096 = vld [vmem:[#allocation5 + $0x820] sm:$0xff]
    %v6097 = vld [vmem:[#allocation5 + $0x828] sm:$0xff]
    %v6098 = vld [vmem:[#allocation5 + $0x830] sm:$0xff]
    %v6099 = vld [vmem:[#allocation5 + $0x838] sm:$0xff]
    %v6100 = vld [vmem:[#allocation5 + $0x840] sm:$0xff]
    %v6101 = vld [vmem:[#allocation5 + $0x848] sm:$0xff]
    %v6102 = vld [vmem:[#allocation5 + $0x850] sm:$0xff]
    %v6103 = vld [vmem:[#allocation5 + $0x858] sm:$0xff]
    %v6104 = vld [vmem:[#allocation5 + $0x860] sm:$0xff]
    %v6105 = vld [vmem:[#allocation5 + $0x868] sm:$0xff]
    %v6106 = vld [vmem:[#allocation5 + $0x870] sm:$0xff]
    %v6107 = vld [vmem:[#allocation5 + $0x878] sm:$0xff]
    %v6108 = vld [vmem:[#allocation5 + $0x880] sm:$0xff]
    %v6109 = vld [vmem:[#allocation5 + $0x888] sm:$0xff]
    %v6110 = vld [vmem:[#allocation5 + $0x890] sm:$0xff]
    %v6111 = vld [vmem:[#allocation5 + $0x898] sm:$0xff]
    %v6112 = vld [vmem:[#allocation5 + $0x8a0] sm:$0xff]
    %v6113 = vld [vmem:[#allocation5 + $0x8a8] sm:$0xff]
    %v6114 = vld [vmem:[#allocation5 + $0x8b0] sm:$0xff]
    %v6115 = vld [vmem:[#allocation5 + $0x8b8] sm:$0xff]
    %v6116 = vld [vmem:[#allocation5 + $0x8c0] sm:$0xff]
    %v6117 = vld [vmem:[#allocation5 + $0x8c8] sm:$0xff]
    %v6118 = vld [vmem:[#allocation5 + $0x8d0] sm:$0xff]
    %v6119 = vld [vmem:[#allocation5 + $0x8d8] sm:$0xff]
    %v6120 = vld [vmem:[#allocation5 + $0x8e0] sm:$0xff]
    %v6121 = vld [vmem:[#allocation5 + $0x8e8] sm:$0xff]
    %v6122 = vld [vmem:[#allocation5 + $0x8f0] sm:$0xff]
    %v6123 = vld [vmem:[#allocation5 + $0x8f8] sm:$0xff]
    %v6124 = vld [vmem:[#allocation5 + $0x900] sm:$0xff]
    %v6125 = vld [vmem:[#allocation5 + $0x908] sm:$0xff]
    %v6126 = vld [vmem:[#allocation5 + $0x910] sm:$0xff]
    %v6127 = vld [vmem:[#allocation5 + $0x918] sm:$0xff]
    %v6128 = vld [vmem:[#allocation5 + $0x920] sm:$0xff]
    %v6129 = vld [vmem:[#allocation5 + $0x928] sm:$0xff]
    %v6130 = vld [vmem:[#allocation5 + $0x930] sm:$0xff]
    %v6131 = vld [vmem:[#allocation5 + $0x938] sm:$0xff]
    %v6132 = vld [vmem:[#allocation5 + $0x940] sm:$0xff]
    %v6133 = vld [vmem:[#allocation5 + $0x948] sm:$0xff]
    %v6134 = vld [vmem:[#allocation5 + $0x950] sm:$0xff]
    %v6135 = vld [vmem:[#allocation5 + $0x958] sm:$0xff]
    %v6136 = vld [vmem:[#allocation5 + $0x960] sm:$0xff]
    %v6137 = vld [vmem:[#allocation5 + $0x968] sm:$0xff]
    %v6138 = vld [vmem:[#allocation5 + $0x970] sm:$0xff]
    %v6139 = vld [vmem:[#allocation5 + $0x978] sm:$0xff]
    %v6140 = vld [vmem:[#allocation5 + $0x980] sm:$0xff]
    %v6141 = vld [vmem:[#allocation5 + $0x988] sm:$0xff]
    %v6142 = vld [vmem:[#allocation5 + $0x990] sm:$0xff]
    %v6143 = vld [vmem:[#allocation5 + $0x998] sm:$0xff]
    %v6144 = vld [vmem:[#allocation5 + $0x9a0] sm:$0xff]
    %v6145 = vld [vmem:[#allocation5 + $0x9a8] sm:$0xff]
    %v6146 = vld [vmem:[#allocation5 + $0x9b0] sm:$0xff]
    %v6147 = vld [vmem:[#allocation5 + $0x9b8] sm:$0xff]
    %v6148 = vld [vmem:[#allocation5 + $0x9c0] sm:$0xff]
    %v6149 = vld [vmem:[#allocation5 + $0x9c8] sm:$0xff]
    %v6150 = vld [vmem:[#allocation5 + $0x9d0] sm:$0xff]
    %v6151 = vld [vmem:[#allocation5 + $0x9d8] sm:$0xff]
    %v6152 = vld [vmem:[#allocation5 + $0x9e0] sm:$0xff]
    %v6153 = vld [vmem:[#allocation5 + $0x9e8] sm:$0xff]
    %v6154 = vld [vmem:[#allocation5 + $0x9f0] sm:$0xff]
    %v6155 = vld [vmem:[#allocation5 + $0x9f8] sm:$0xff]
    %v6156 = vld [vmem:[#allocation5 + $0xa00] sm:$0xff]
    %v6157 = vld [vmem:[#allocation5 + $0xa08] sm:$0xff]
    %v6158 = vld [vmem:[#allocation5 + $0xa10] sm:$0xff]
    %v6159 = vld [vmem:[#allocation5 + $0xa18] sm:$0xff]
    %v6160 = vld [vmem:[#allocation5 + $0xa20] sm:$0xff]
    %v6161 = vld [vmem:[#allocation5 + $0xa28] sm:$0xff]
    %v6162 = vld [vmem:[#allocation5 + $0xa30] sm:$0xff]
    %v6163 = vld [vmem:[#allocation5 + $0xa38] sm:$0xff]
    %v6164 = vld [vmem:[#allocation5 + $0xa40] sm:$0xff]
    %v6165 = vld [vmem:[#allocation5 + $0xa48] sm:$0xff]
    %v6166 = vld [vmem:[#allocation5 + $0xa50] sm:$0xff]
    %v6167 = vld [vmem:[#allocation5 + $0xa58] sm:$0xff]
    %v6168 = vld [vmem:[#allocation5 + $0xa60] sm:$0xff]
    %v6169 = vld [vmem:[#allocation5 + $0xa68] sm:$0xff]
    %v6170 = vld [vmem:[#allocation5 + $0xa70] sm:$0xff]
    %v6171 = vld [vmem:[#allocation5 + $0xa78] sm:$0xff]
    %v6172 = vld [vmem:[#allocation5 + $0xa80] sm:$0xff]
    %v6173 = vld [vmem:[#allocation5 + $0xa88] sm:$0xff]
    %v6174 = vld [vmem:[#allocation5 + $0xa90] sm:$0xff]
    %v6175 = vld [vmem:[#allocation5 + $0xa98] sm:$0xff]
    %v6176 = vld [vmem:[#allocation5 + $0xaa0] sm:$0xff]
    %v6177 = vld [vmem:[#allocation5 + $0xaa8] sm:$0xff]
    %v6178 = vld [vmem:[#allocation5 + $0xab0] sm:$0xff]
    %v6179 = vld [vmem:[#allocation5 + $0xab8] sm:$0xff]
    %v6180 = vld [vmem:[#allocation5 + $0xac0] sm:$0xff]
    %v6181 = vld [vmem:[#allocation5 + $0xac8] sm:$0xff]
    %v6182 = vld [vmem:[#allocation5 + $0xad0] sm:$0xff]
    %v6183 = vld [vmem:[#allocation5 + $0xad8] sm:$0xff]
    %v6184 = vld [vmem:[#allocation5 + $0xae0] sm:$0xff]
    %v6185 = vld [vmem:[#allocation5 + $0xae8] sm:$0xff]
    %v6186 = vld [vmem:[#allocation5 + $0xaf0] sm:$0xff]
    %v6187 = vld [vmem:[#allocation5 + $0xaf8] sm:$0xff]
    %v6188 = vld [vmem:[#allocation5 + $0xb00] sm:$0xff]
    %v6189 = vld [vmem:[#allocation5 + $0xb08] sm:$0xff]
    %v6190 = vld [vmem:[#allocation5 + $0xb10] sm:$0xff]
    %v6191 = vld [vmem:[#allocation5 + $0xb18] sm:$0xff]
    %v6192 = vld [vmem:[#allocation5 + $0xb20] sm:$0xff]
    %v6193 = vld [vmem:[#allocation5 + $0xb28] sm:$0xff]
    %v6194 = vld [vmem:[#allocation5 + $0xb30] sm:$0xff]
    %v6195 = vld [vmem:[#allocation5 + $0xb38] sm:$0xff]
    %v6196 = vld [vmem:[#allocation5 + $0xb40] sm:$0xff]
    %v6197 = vld [vmem:[#allocation5 + $0xb48] sm:$0xff]
    %v6198 = vld [vmem:[#allocation5 + $0xb50] sm:$0xff]
    %v6199 = vld [vmem:[#allocation5 + $0xb58] sm:$0xff]
    %v6200 = vld [vmem:[#allocation5 + $0xb60] sm:$0xff]
    %v6201 = vld [vmem:[#allocation5 + $0xb68] sm:$0xff]
    %v6202 = vld [vmem:[#allocation5 + $0xb70] sm:$0xff]
    %v6203 = vld [vmem:[#allocation5 + $0xb78] sm:$0xff]
    %v6204 = vld [vmem:[#allocation5 + $0xb80] sm:$0xff]
    %v6205 = vld [vmem:[#allocation5 + $0xb88] sm:$0xff]
    %v6206 = vld [vmem:[#allocation5 + $0xb90] sm:$0xff]
    %v6207 = vld [vmem:[#allocation5 + $0xb98] sm:$0xff]
    %v6208 = vld [vmem:[#allocation5 + $0xba0] sm:$0xff]
    %v6209 = vld [vmem:[#allocation5 + $0xba8] sm:$0xff]
    %v6210 = vld [vmem:[#allocation5 + $0xbb0] sm:$0xff]
    %v6211 = vld [vmem:[#allocation5 + $0xbb8] sm:$0xff]
    %v6212 = vld [vmem:[#allocation5 + $0xbc0] sm:$0xff]
    %v6213 = vld [vmem:[#allocation5 + $0xbc8] sm:$0xff]
    %v6214 = vld [vmem:[#allocation5 + $0xbd0] sm:$0xff]
    %v6215 = vld [vmem:[#allocation5 + $0xbd8] sm:$0xff]
    %v6216 = vld [vmem:[#allocation5 + $0xbe0] sm:$0xff]
    %v6217 = vld [vmem:[#allocation5 + $0xbe8] sm:$0xff]
    %v6218 = vld [vmem:[#allocation5 + $0xbf0] sm:$0xff]
    %v6219 = vld [vmem:[#allocation5 + $0xbf8] sm:$0xff]
    %v6220 = vld [vmem:[#allocation5 + $0xc00] sm:$0xff]
    %v6221 = vld [vmem:[#allocation5 + $0xc08] sm:$0xff]
    %v6222 = vld [vmem:[#allocation5 + $0xc10] sm:$0xff]
    %v6223 = vld [vmem:[#allocation5 + $0xc18] sm:$0xff]
    %v6224 = vld [vmem:[#allocation5 + $0xc20] sm:$0xff]
    %v6225 = vld [vmem:[#allocation5 + $0xc28] sm:$0xff]
    %v6226 = vld [vmem:[#allocation5 + $0xc30] sm:$0xff]
    %v6227 = vld [vmem:[#allocation5 + $0xc38] sm:$0xff]
    %v6228 = vld [vmem:[#allocation5 + $0xc40] sm:$0xff]
    %v6229 = vld [vmem:[#allocation5 + $0xc48] sm:$0xff]
    %v6230 = vld [vmem:[#allocation5 + $0xc50] sm:$0xff]
    %v6231 = vld [vmem:[#allocation5 + $0xc58] sm:$0xff]
    %v6232 = vld [vmem:[#allocation5 + $0xc60] sm:$0xff]
    %v6233 = vld [vmem:[#allocation5 + $0xc68] sm:$0xff]
    %v6234 = vld [vmem:[#allocation5 + $0xc70] sm:$0xff]
    %v6235 = vld [vmem:[#allocation5 + $0xc78] sm:$0xff]
    %v6236 = vld [vmem:[#allocation5 + $0xc80] sm:$0xff]
    %v6237 = vld [vmem:[#allocation5 + $0xc88] sm:$0xff]
    %v6238 = vld [vmem:[#allocation5 + $0xc90] sm:$0xff]
    %v6239 = vld [vmem:[#allocation5 + $0xc98] sm:$0xff]
    %v6240 = vld [vmem:[#allocation5 + $0xca0] sm:$0xff]
    %v6241 = vld [vmem:[#allocation5 + $0xca8] sm:$0xff]
    %v6242 = vld [vmem:[#allocation5 + $0xcb0] sm:$0xff]
    %v6243 = vld [vmem:[#allocation5 + $0xcb8] sm:$0xff]
    %v6244 = vld [vmem:[#allocation5 + $0xcc0] sm:$0xff]
    %v6245 = vld [vmem:[#allocation5 + $0xcc8] sm:$0xff]
    %v6246 = vld [vmem:[#allocation5 + $0xcd0] sm:$0xff]
    %v6247 = vld [vmem:[#allocation5 + $0xcd8] sm:$0xff]
    %v6248 = vld [vmem:[#allocation5 + $0xce0] sm:$0xff]
    %v6249 = vld [vmem:[#allocation5 + $0xce8] sm:$0xff]
    %v6250 = vld [vmem:[#allocation5 + $0xcf0] sm:$0xff]
    %v6251 = vld [vmem:[#allocation5 + $0xcf8] sm:$0xff]
    %v6252 = vld [vmem:[#allocation5 + $0xd00] sm:$0xff]
    %v6253 = vld [vmem:[#allocation5 + $0xd08] sm:$0xff]
    %v6254 = vld [vmem:[#allocation5 + $0xd10] sm:$0xff]
    %v6255 = vld [vmem:[#allocation5 + $0xd18] sm:$0xff]
    %v6256 = vld [vmem:[#allocation5 + $0xd20] sm:$0xff]
    %v6257 = vld [vmem:[#allocation5 + $0xd28] sm:$0xff]
    %v6258 = vld [vmem:[#allocation5 + $0xd30] sm:$0xff]
    %v6259 = vld [vmem:[#allocation5 + $0xd38] sm:$0xff]
    %v6260 = vld [vmem:[#allocation5 + $0xd40] sm:$0xff]
    %v6261 = vld [vmem:[#allocation5 + $0xd48] sm:$0xff]
    %v6262 = vld [vmem:[#allocation5 + $0xd50] sm:$0xff]
    %v6263 = vld [vmem:[#allocation5 + $0xd58] sm:$0xff]
    %v6264 = vld [vmem:[#allocation5 + $0xd60] sm:$0xff]
    %v6265 = vld [vmem:[#allocation5 + $0xd68] sm:$0xff]
    %v6266 = vld [vmem:[#allocation5 + $0xd70] sm:$0xff]
    %v6267 = vld [vmem:[#allocation5 + $0xd78] sm:$0xff]
    %v6268 = vld [vmem:[#allocation5 + $0xd80] sm:$0xff]
    %v6269 = vld [vmem:[#allocation5 + $0xd88] sm:$0xff]
    %v6270 = vld [vmem:[#allocation5 + $0xd90] sm:$0xff]
    %v6271 = vld [vmem:[#allocation5 + $0xd98] sm:$0xff]
    %v6272 = vld [vmem:[#allocation5 + $0xda0] sm:$0xff]
    %v6273 = vld [vmem:[#allocation5 + $0xda8] sm:$0xff]
    %v6274 = vld [vmem:[#allocation5 + $0xdb0] sm:$0xff]
    %v6275 = vld [vmem:[#allocation5 + $0xdb8] sm:$0xff]
    %v6276 = vld [vmem:[#allocation5 + $0xdc0] sm:$0xff]
    %v6277 = vld [vmem:[#allocation5 + $0xdc8] sm:$0xff]
    %v6278 = vld [vmem:[#allocation5 + $0xdd0] sm:$0xff]
    %v6279 = vld [vmem:[#allocation5 + $0xdd8] sm:$0xff]
    %v6280 = vld [vmem:[#allocation5 + $0xde0] sm:$0xff]
    %v6281 = vld [vmem:[#allocation5 + $0xde8] sm:$0xff]
    %v6282 = vld [vmem:[#allocation5 + $0xdf0] sm:$0xff]
    %v6283 = vld [vmem:[#allocation5 + $0xdf8] sm:$0xff]
    %v6284 = vld [vmem:[#allocation5 + $0xe00] sm:$0xff]
    %v6285 = vld [vmem:[#allocation5 + $0xe08] sm:$0xff]
    %v6286 = vld [vmem:[#allocation5 + $0xe10] sm:$0xff]
    %v6287 = vld [vmem:[#allocation5 + $0xe18] sm:$0xff]
    %v6288 = vld [vmem:[#allocation5 + $0xe20] sm:$0xff]
    %v6289 = vld [vmem:[#allocation5 + $0xe28] sm:$0xff]
    %v6290 = vld [vmem:[#allocation5 + $0xe30] sm:$0xff]
    %v6291 = vld [vmem:[#allocation5 + $0xe38] sm:$0xff]
    %v6292 = vld [vmem:[#allocation5 + $0xe40] sm:$0xff]
    %v6293 = vld [vmem:[#allocation5 + $0xe48] sm:$0xff]
    %v6294 = vld [vmem:[#allocation5 + $0xe50] sm:$0xff]
    %v6295 = vld [vmem:[#allocation5 + $0xe58] sm:$0xff]
    %v6296 = vld [vmem:[#allocation5 + $0xe60] sm:$0xff]
    %v6297 = vld [vmem:[#allocation5 + $0xe68] sm:$0xff]
    %v6298 = vld [vmem:[#allocation5 + $0xe70] sm:$0xff]
    %v6299 = vld [vmem:[#allocation5 + $0xe78] sm:$0xff]
    %v6300 = vld [vmem:[#allocation5 + $0xe80] sm:$0xff]
    %v6301 = vld [vmem:[#allocation5 + $0xe88] sm:$0xff]
    %v6302 = vld [vmem:[#allocation5 + $0xe90] sm:$0xff]
    %v6303 = vld [vmem:[#allocation5 + $0xe98] sm:$0xff]
    %v6304 = vld [vmem:[#allocation5 + $0xea0] sm:$0xff]
    %v6305 = vld [vmem:[#allocation5 + $0xea8] sm:$0xff]
    %v6306 = vld [vmem:[#allocation5 + $0xeb0] sm:$0xff]
    %v6307 = vld [vmem:[#allocation5 + $0xeb8] sm:$0xff]
    %v6308 = vld [vmem:[#allocation5 + $0xec0] sm:$0xff]
    %v6309 = vld [vmem:[#allocation5 + $0xec8] sm:$0xff]
    %v6310 = vld [vmem:[#allocation5 + $0xed0] sm:$0xff]
    %v6311 = vld [vmem:[#allocation5 + $0xed8] sm:$0xff]
    %v6312 = vld [vmem:[#allocation5 + $0xee0] sm:$0xff]
    %v6313 = vld [vmem:[#allocation5 + $0xee8] sm:$0xff]
    %v6314 = vld [vmem:[#allocation5 + $0xef0] sm:$0xff]
    %v6315 = vld [vmem:[#allocation5 + $0xef8] sm:$0xff]
    %v6316 = vld [vmem:[#allocation5 + $0xf00] sm:$0xff]
    %v6317 = vld [vmem:[#allocation5 + $0xf08] sm:$0xff]
    %v6318 = vld [vmem:[#allocation5 + $0xf10] sm:$0xff]
    %v6319 = vld [vmem:[#allocation5 + $0xf18] sm:$0xff]
    %v6320 = vld [vmem:[#allocation5 + $0xf20] sm:$0xff]
    %v6321 = vld [vmem:[#allocation5 + $0xf28] sm:$0xff]
    %v6322 = vld [vmem:[#allocation5 + $0xf30] sm:$0xff]
    %v6323 = vld [vmem:[#allocation5 + $0xf38] sm:$0xff]
    %v6324 = vld [vmem:[#allocation5 + $0xf40] sm:$0xff]
    %v6325 = vld [vmem:[#allocation5 + $0xf48] sm:$0xff]
    %v6326 = vld [vmem:[#allocation5 + $0xf50] sm:$0xff]
    %v6327 = vld [vmem:[#allocation5 + $0xf58] sm:$0xff]
    %v6328 = vld [vmem:[#allocation5 + $0xf60] sm:$0xff]
    %v6329 = vld [vmem:[#allocation5 + $0xf68] sm:$0xff]
    %v6330 = vld [vmem:[#allocation5 + $0xf70] sm:$0xff]
    %v6331 = vld [vmem:[#allocation5 + $0xf78] sm:$0xff]
    %v6332 = vld [vmem:[#allocation5 + $0xf80] sm:$0xff]
    %v6333 = vld [vmem:[#allocation5 + $0xf88] sm:$0xff]
    %v6334 = vld [vmem:[#allocation5 + $0xf90] sm:$0xff]
    %v6335 = vld [vmem:[#allocation5 + $0xf98] sm:$0xff]
    %v6336 = vld [vmem:[#allocation5 + $0xfa0] sm:$0xff]
    %v6337 = vld [vmem:[#allocation5 + $0xfa8] sm:$0xff]
    %v6338 = vld [vmem:[#allocation5 + $0xfb0] sm:$0xff]
    %v6339 = vld [vmem:[#allocation5 + $0xfb8] sm:$0xff]
    %v6340 = vld [vmem:[#allocation5 + $0xfc0] sm:$0xff]
    %v6341 = vld [vmem:[#allocation5 + $0xfc8] sm:$0xff]
    %v6342 = vld [vmem:[#allocation5 + $0xfd0] sm:$0xff]
    %v6343 = vld [vmem:[#allocation5 + $0xfd8] sm:$0xff]
    %v6344 = vld [vmem:[#allocation5 + $0xfe0] sm:$0xff]
    %v6345 = vld [vmem:[#allocation5 + $0xfe8] sm:$0xff]
    %v6346 = vld [vmem:[#allocation5 + $0xff0] sm:$0xff]
    %v6347 = vld [vmem:[#allocation5 + $0xff8] sm:$0xff]
    %v6348 = vpack.c.bf16 %v5824, %v5824
    %v6349 = vpack.c.bf16 %v5825, %v5825
    %v6350 = vpack.c.bf16 %v5826, %v5826
    %v6351 = vpack.c.bf16 %v5827, %v5827
    %v6352 = vpack.c.bf16 %v5828, %v5828
    %v6353 = vpack.c.bf16 %v5829, %v5829
    %v6354 = vpack.c.bf16 %v5830, %v5830
    %v6355 = vpack.c.bf16 %v5831, %v5831
    %6356 = vmatprep.subr.bf16.mxu0 %v5837
    %6357 = vmatpush1.bf16.msra.mxu0 %v5836
    %6358 = vmatprep.subr.bf16.mxu0 %v5845
    %6359 = vmatpush1.bf16.msra.mxu0 %v5844
    %6360 = vmatprep.subr.bf16.mxu0 %v5853
    %6361 = vmatpush1.bf16.msra.mxu0 %v5852
    %6362 = vmatprep.subr.bf16.mxu0 %v5861
    %6363 = vmatpush1.bf16.msra.mxu0 %v5860
    %6364 = vmatprep.subr.bf16.mxu0 %v5869
    %6365 = vmatpush1.bf16.msra.mxu0 %v5868
    %6366 = vmatprep.subr.bf16.mxu0 %v5877
    %6367 = vmatpush1.bf16.msra.mxu0 %v5876
    %6368 = vmatprep.subr.bf16.mxu0 %v5885
    %6369 = vmatpush1.bf16.msra.mxu0 %v5884
    %6370 = vmatprep.subr.bf16.mxu0 %v5893
    %6371 = vmatpush1.bf16.msra.mxu0 %v5892
    %6372 = vmatprep.subr.bf16.mxu0 %v5901
    %6373 = vmatpush1.bf16.msra.mxu0 %v5900
    %6374 = vmatprep.subr.bf16.mxu0 %v5909
    %6375 = vmatpush1.bf16.msra.mxu0 %v5908
    %6376 = vmatprep.subr.bf16.mxu0 %v5917
    %6377 = vmatpush1.bf16.msra.mxu0 %v5916
    %6378 = vmatprep.subr.bf16.mxu0 %v5925
    %6379 = vmatpush1.bf16.msra.mxu0 %v5924
    %6380 = vmatprep.subr.bf16.mxu0 %v5933
    %6381 = vmatpush1.bf16.msra.mxu0 %v5932
    %6382 = vmatprep.subr.bf16.mxu0 %v5941
    %6383 = vmatpush1.bf16.msra.mxu0 %v5940
    %6384 = vmatprep.subr.bf16.mxu0 %v5949
    %6385 = vmatpush1.bf16.msra.mxu0 %v5948
    %6386 = vmatprep.subr.bf16.mxu0 %v5957
    %6387 = vmatpush1.bf16.msra.mxu0 %v5956
    %6388 = vmatprep.mubr.bf16.mxu0 %v6349
    %6389 = vmatmul.mubr.bf16.gmra.mrb[0].mxu0 %v6348
    %v6390 = vpop.f32.mrb[0].mxu0
    %v6391 = vadd.f32 0.0, %v6390
    %v6392 = vpop.f32.mrb[0].mxu0
    %v6393 = vadd.f32 0.0, %v6392
    %v6394 = vpop.f32.mrb[0].mxu0
    %v6395 = vpop.f32.mrb[0].mxu0
    %6396 = vdwg.mxu0
    %6397 = vmatprep.subr.bf16.mxu0 %v5965
    %6398 = vmatpush1.bf16.msra.mxu0 %v5964
    %6399 = vmatprep.subr.bf16.mxu0 %v5973
    %6400 = vmatpush1.bf16.msra.mxu0 %v5972
    %6401 = vmatprep.subr.bf16.mxu0 %v5981
    %6402 = vmatpush1.bf16.msra.mxu0 %v5980
    %6403 = vmatprep.subr.bf16.mxu0 %v5989
    %6404 = vmatpush1.bf16.msra.mxu0 %v5988
    %6405 = vmatprep.subr.bf16.mxu0 %v5997
    %6406 = vmatpush1.bf16.msra.mxu0 %v5996
    %6407 = vmatprep.subr.bf16.mxu0 %v6005
    %6408 = vmatpush1.bf16.msra.mxu0 %v6004
    %6409 = vmatprep.subr.bf16.mxu0 %v6013
    %6410 = vmatpush1.bf16.msra.mxu0 %v6012
    %6411 = vmatprep.subr.bf16.mxu0 %v6021
    %6412 = vmatpush1.bf16.msra.mxu0 %v6020
    %6413 = vmatprep.subr.bf16.mxu0 %v6029
    %6414 = vmatpush1.bf16.msra.mxu0 %v6028
    %6415 = vmatprep.subr.bf16.mxu0 %v6037
    %6416 = vmatpush1.bf16.msra.mxu0 %v6036
    %6417 = vmatprep.subr.bf16.mxu0 %v6045
    %6418 = vmatpush1.bf16.msra.mxu0 %v6044
    %6419 = vmatprep.subr.bf16.mxu0 %v6053
    %6420 = vmatpush1.bf16.msra.mxu0 %v6052
    %6421 = vmatprep.subr.bf16.mxu0 %v6061
    %6422 = vmatpush1.bf16.msra.mxu0 %v6060
    %6423 = vmatprep.subr.bf16.mxu0 %v6069
    %6424 = vmatpush1.bf16.msra.mxu0 %v6068
    %6425 = vmatprep.subr.bf16.mxu0 %v6077
    %6426 = vmatpush1.bf16.msra.mxu0 %v6076
    %6427 = vmatprep.subr.bf16.mxu0 %v6085
    %6428 = vmatpush1.bf16.msra.mxu0 %v6084
    %6429 = vmatprep.mubr.bf16.mxu0 %v6351
    %6430 = vmatmul.mubr.bf16.gmra.mrb[0].mxu0 %v6350
    %v6431 = vpop.f32.mrb[0].mxu0
    %v6432 = vadd.f32 %v6391, %v6431
    %v6433 = vpop.f32.mrb[0].mxu0
    %v6434 = vadd.f32 %v6393, %v6433
    %v6435 = vpop.f32.mrb[0].mxu0
    %v6436 = vpop.f32.mrb[0].mxu0
    %6437 = vdwg.mxu0
    %6438 = vmatprep.subr.bf16.mxu0 %v6093
    %6439 = vmatpush1.bf16.msra.mxu0 %v6092
    %6440 = vmatprep.subr.bf16.mxu0 %v6101
    %6441 = vmatpush1.bf16.msra.mxu0 %v6100
    %6442 = vmatprep.subr.bf16.mxu0 %v6109
    %6443 = vmatpush1.bf16.msra.mxu0 %v6108
    %6444 = vmatprep.subr.bf16.mxu0 %v6117
    %6445 = vmatpush1.bf16.msra.mxu0 %v6116
    %6446 = vmatprep.subr.bf16.mxu0 %v6125
    %6447 = vmatpush1.bf16.msra.mxu0 %v6124
    %6448 = vmatprep.subr.bf16.mxu0 %v6133
    %6449 = vmatpush1.bf16.msra.mxu0 %v6132
    %6450 = vmatprep.subr.bf16.mxu0 %v6141
    %6451 = vmatpush1.bf16.msra.mxu0 %v6140
    %6452 = vmatprep.subr.bf16.mxu0 %v6149
    %6453 = vmatpush1.bf16.msra.mxu0 %v6148
    %6454 = vmatprep.subr.bf16.mxu0 %v6157
    %6455 = vmatpush1.bf16.msra.mxu0 %v6156
    %6456 = vmatprep.subr.bf16.mxu0 %v6165
    %6457 = vmatpush1.bf16.msra.mxu0 %v6164
    %6458 = vmatprep.subr.bf16.mxu0 %v6173
    %6459 = vmatpush1.bf16.msra.mxu0 %v6172
    %6460 = vmatprep.subr.bf16.mxu0 %v6181
    %6461 = vmatpush1.bf16.msra.mxu0 %v6180
    %6462 = vmatprep.subr.bf16.mxu0 %v6189
    %6463 = vmatpush1.bf16.msra.mxu0 %v6188
    %6464 = vmatprep.subr.bf16.mxu0 %v6197
    %6465 = vmatpush1.bf16.msra.mxu0 %v6196
    %6466 = vmatprep.subr.bf16.mxu0 %v6205
    %6467 = vmatpush1.bf16.msra.mxu0 %v6204
    %6468 = vmatprep.subr.bf16.mxu0 %v6213
    %6469 = vmatpush1.bf16.msra.mxu0 %v6212
    %6470 = vmatprep.mubr.bf16.mxu0 %v6353
    %6471 = vmatmul.mubr.bf16.gmra.mrb[0].mxu0 %v6352
    %v6472 = vpop.f32.mrb[0].mxu0
    %v6473 = vadd.f32 %v6432, %v6472
    %v6474 = vpop.f32.mrb[0].mxu0
    %v6475 = vadd.f32 %v6434, %v6474
    %v6476 = vpop.f32.mrb[0].mxu0
    %v6477 = vpop.f32.mrb[0].mxu0
    %6478 = vdwg.mxu0
    %6479 = vmatprep.subr.bf16.mxu0 %v6221
    %6480 = vmatpush1.bf16.msra.mxu0 %v6220
    %6481 = vmatprep.subr.bf16.mxu0 %v6229
    %6482 = vmatpush1.bf16.msra.mxu0 %v6228
    %6483 = vmatprep.subr.bf16.mxu0 %v6237
    %6484 = vmatpush1.bf16.msra.mxu0 %v6236
    %6485 = vmatprep.subr.bf16.mxu0 %v6245
    %6486 = vmatpush1.bf16.msra.mxu0 %v6244
    %6487 = vmatprep.subr.bf16.mxu0 %v6253
    %6488 = vmatpush1.bf16.msra.mxu0 %v6252
    %6489 = vmatprep.subr.bf16.mxu0 %v6261
    %6490 = vmatpush1.bf16.msra.mxu0 %v6260
    %6491 = vmatprep.subr.bf16.mxu0 %v6269
    %6492 = vmatpush1.bf16.msra.mxu0 %v6268
    %6493 = vmatprep.subr.bf16.mxu0 %v6277
    %6494 = vmatpush1.bf16.msra.mxu0 %v6276
    %6495 = vmatprep.subr.bf16.mxu0 %v6285
    %6496 = vmatpush1.bf16.msra.mxu0 %v6284
    %6497 = vmatprep.subr.bf16.mxu0 %v6293
    %6498 = vmatpush1.bf16.msra.mxu0 %v6292
    %6499 = vmatprep.subr.bf16.mxu0 %v6301
    %6500 = vmatpush1.bf16.msra.mxu0 %v6300
    %6501 = vmatprep.subr.bf16.mxu0 %v6309
    %6502 = vmatpush1.bf16.msra.mxu0 %v6308
    %6503 = vmatprep.subr.bf16.mxu0 %v6317
    %6504 = vmatpush1.bf16.msra.mxu0 %v6316
    %6505 = vmatprep.subr.bf16.mxu0 %v6325
    %6506 = vmatpush1.bf16.msra.mxu0 %v6324
    %6507 = vmatprep.subr.bf16.mxu0 %v6333
    %6508 = vmatpush1.bf16.msra.mxu0 %v6332
    %6509 = vmatprep.subr.bf16.mxu0 %v6341
    %6510 = vmatpush1.bf16.msra.mxu0 %v6340
    %6511 = vmatprep.mubr.bf16.mxu0 %v6355
    %6512 = vmatmul.mubr.bf16.gmra.mrb[0].mxu0 %v6354
    %v6513 = vpop.f32.mrb[0].mxu0
    %v6514 = vadd.f32 %v6473, %v6513
    %v6515 = vpop.f32.mrb[0].mxu0
    %v6516 = vadd.f32 %v6475, %v6515
    %v6517 = vpop.f32.mrb[0].mxu0
    %v6518 = vpop.f32.mrb[0].mxu0
    %6519 = vdwg.mxu0
    %6520 = vmatprep.subr.bf16.mxu0 %v5839
    %6521 = vmatpush1.bf16.msra.mxu0 %v5838
    %6522 = vmatprep.subr.bf16.mxu0 %v5847
    %6523 = vmatpush1.bf16.msra.mxu0 %v5846
    %6524 = vmatprep.subr.bf16.mxu0 %v5855
    %6525 = vmatpush1.bf16.msra.mxu0 %v5854
    %6526 = vmatprep.subr.bf16.mxu0 %v5863
    %6527 = vmatpush1.bf16.msra.mxu0 %v5862
    %6528 = vmatprep.subr.bf16.mxu0 %v5871
    %6529 = vmatpush1.bf16.msra.mxu0 %v5870
    %6530 = vmatprep.subr.bf16.mxu0 %v5879
    %6531 = vmatpush1.bf16.msra.mxu0 %v5878
    %6532 = vmatprep.subr.bf16.mxu0 %v5887
    %6533 = vmatpush1.bf16.msra.mxu0 %v5886
    %6534 = vmatprep.subr.bf16.mxu0 %v5895
    %6535 = vmatpush1.bf16.msra.mxu0 %v5894
    %6536 = vmatprep.subr.bf16.mxu0 %v5903
    %6537 = vmatpush1.bf16.msra.mxu0 %v5902
    %6538 = vmatprep.subr.bf16.mxu0 %v5911
    %6539 = vmatpush1.bf16.msra.mxu0 %v5910
    %6540 = vmatprep.subr.bf16.mxu0 %v5919
    %6541 = vmatpush1.bf16.msra.mxu0 %v5918
    %6542 = vmatprep.subr.bf16.mxu0 %v5927
    %6543 = vmatpush1.bf16.msra.mxu0 %v5926
    %6544 = vmatprep.subr.bf16.mxu0 %v5935
    %6545 = vmatpush1.bf16.msra.mxu0 %v5934
    %6546 = vmatprep.subr.bf16.mxu0 %v5943
    %6547 = vmatpush1.bf16.msra.mxu0 %v5942
    %6548 = vmatprep.subr.bf16.mxu0 %v5951
    %6549 = vmatpush1.bf16.msra.mxu0 %v5950
    %6550 = vmatprep.subr.bf16.mxu0 %v5959
    %6551 = vmatpush1.bf16.msra.mxu0 %v5958
    %6552 = vmatprep.mubr.bf16.mxu0 %v6349
    %6553 = vmatmul.mubr.bf16.gmra.mrb[0].mxu0 %v6348
    %v6554 = vpop.f32.mrb[0].mxu0
    %v6555 = vadd.f32 0.0, %v6554
    %v6556 = vpop.f32.mrb[0].mxu0
    %v6557 = vadd.f32 0.0, %v6556
    %v6558 = vpop.f32.mrb[0].mxu0
    %v6559 = vpop.f32.mrb[0].mxu0
    %6560 = vdwg.mxu0
    %6561 = vmatprep.subr.bf16.mxu0 %v5967
    %6562 = vmatpush1.bf16.msra.mxu0 %v5966
    %6563 = vmatprep.subr.bf16.mxu0 %v5975
    %6564 = vmatpush1.bf16.msra.mxu0 %v5974
    %6565 = vmatprep.subr.bf16.mxu0 %v5983
    %6566 = vmatpush1.bf16.msra.mxu0 %v5982
    %6567 = vmatprep.subr.bf16.mxu0 %v5991
    %6568 = vmatpush1.bf16.msra.mxu0 %v5990
    %6569 = vmatprep.subr.bf16.mxu0 %v5999
    %6570 = vmatpush1.bf16.msra.mxu0 %v5998
    %6571 = vmatprep.subr.bf16.mxu0 %v6007
    %6572 = vmatpush1.bf16.msra.mxu0 %v6006
    %6573 = vmatprep.subr.bf16.mxu0 %v6015
    %6574 = vmatpush1.bf16.msra.mxu0 %v6014
    %6575 = vmatprep.subr.bf16.mxu0 %v6023
    %6576 = vmatpush1.bf16.msra.mxu0 %v6022
    %6577 = vmatprep.subr.bf16.mxu0 %v6031
    %6578 = vmatpush1.bf16.msra.mxu0 %v6030
    %6579 = vmatprep.subr.bf16.mxu0 %v6039
    %6580 = vmatpush1.bf16.msra.mxu0 %v6038
    %6581 = vmatprep.subr.bf16.mxu0 %v6047
    %6582 = vmatpush1.bf16.msra.mxu0 %v6046
    %6583 = vmatprep.subr.bf16.mxu0 %v6055
    %6584 = vmatpush1.bf16.msra.mxu0 %v6054
    %6585 = vmatprep.subr.bf16.mxu0 %v6063
    %6586 = vmatpush1.bf16.msra.mxu0 %v6062
    %6587 = vmatprep.subr.bf16.mxu0 %v6071
    %6588 = vmatpush1.bf16.msra.mxu0 %v6070
    %6589 = vmatprep.subr.bf16.mxu0 %v6079
    %6590 = vmatpush1.bf16.msra.mxu0 %v6078
    %6591 = vmatprep.subr.bf16.mxu0 %v6087
    %6592 = vmatpush1.bf16.msra.mxu0 %v6086
    %6593 = vmatprep.mubr.bf16.mxu0 %v6351
    %6594 = vmatmul.mubr.bf16.gmra.mrb[0].mxu0 %v6350
    %v6595 = vpop.f32.mrb[0].mxu0
    %v6596 = vadd.f32 %v6555, %v6595
    %v6597 = vpop.f32.mrb[0].mxu0
    %v6598 = vadd.f32 %v6557, %v6597
    %v6599 = vpop.f32.mrb[0].mxu0
    %v6600 = vpop.f32.mrb[0].mxu0
    %6601 = vdwg.mxu0
    %6602 = vmatprep.subr.bf16.mxu0 %v6095
    %6603 = vmatpush1.bf16.msra.mxu0 %v6094
    %6604 = vmatprep.subr.bf16.mxu0 %v6103
    %6605 = vmatpush1.bf16.msra.mxu0 %v6102
    %6606 = vmatprep.subr.bf16.mxu0 %v6111
    %6607 = vmatpush1.bf16.msra.mxu0 %v6110
    %6608 = vmatprep.subr.bf16.mxu0 %v6119
    %6609 = vmatpush1.bf16.msra.mxu0 %v6118
    %6610 = vmatprep.subr.bf16.mxu0 %v6127
    %6611 = vmatpush1.bf16.msra.mxu0 %v6126
    %6612 = vmatprep.subr.bf16.mxu0 %v6135
    %6613 = vmatpush1.bf16.msra.mxu0 %v6134
    %6614 = vmatprep.subr.bf16.mxu0 %v6143
    %6615 = vmatpush1.bf16.msra.mxu0 %v6142
    %6616 = vmatprep.subr.bf16.mxu0 %v6151
    %6617 = vmatpush1.bf16.msra.mxu0 %v6150
    %6618 = vmatprep.subr.bf16.mxu0 %v6159
    %6619 = vmatpush1.bf16.msra.mxu0 %v6158
    %6620 = vmatprep.subr.bf16.mxu0 %v6167
    %6621 = vmatpush1.bf16.msra.mxu0 %v6166
    %6622 = vmatprep.subr.bf16.mxu0 %v6175
    %6623 = vmatpush1.bf16.msra.mxu0 %v6174
    %6624 = vmatprep.subr.bf16.mxu0 %v6183
    %6625 = vmatpush1.bf16.msra.mxu0 %v6182
    %6626 = vmatprep.subr.bf16.mxu0 %v6191
    %6627 = vmatpush1.bf16.msra.mxu0 %v6190
    %6628 = vmatprep.subr.bf16.mxu0 %v6199
    %6629 = vmatpush1.bf16.msra.mxu0 %v6198
    %6630 = vmatprep.subr.bf16.mxu0 %v6207
    %6631 = vmatpush1.bf16.msra.mxu0 %v6206
    %6632 = vmatprep.subr.bf16.mxu0 %v6215
    %6633 = vmatpush1.bf16.msra.mxu0 %v6214
    %6634 = vmatprep.mubr.bf16.mxu0 %v6353
    %6635 = vmatmul.mubr.bf16.gmra.mrb[0].mxu0 %v6352
    %v6636 = vpop.f32.mrb[0].mxu0
    %v6637 = vadd.f32 %v6596, %v6636
    %v6638 = vpop.f32.mrb[0].mxu0
    %v6639 = vadd.f32 %v6598, %v6638
    %v6640 = vpop.f32.mrb[0].mxu0
    %v6641 = vpop.f32.mrb[0].mxu0
    %6642 = vdwg.mxu0
    %6643 = vmatprep.subr.bf16.mxu0 %v6223
    %6644 = vmatpush1.bf16.msra.mxu0 %v6222
    %6645 = vmatprep.subr.bf16.mxu0 %v6231
    %6646 = vmatpush1.bf16.msra.mxu0 %v6230
    %6647 = vmatprep.subr.bf16.mxu0 %v6239
    %6648 = vmatpush1.bf16.msra.mxu0 %v6238
    %6649 = vmatprep.subr.bf16.mxu0 %v6247
    %6650 = vmatpush1.bf16.msra.mxu0 %v6246
    %6651 = vmatprep.subr.bf16.mxu0 %v6255
    %6652 = vmatpush1.bf16.msra.mxu0 %v6254
    %6653 = vmatprep.subr.bf16.mxu0 %v6263
    %6654 = vmatpush1.bf16.msra.mxu0 %v6262
    %6655 = vmatprep.subr.bf16.mxu0 %v6271
    %6656 = vmatpush1.bf16.msra.mxu0 %v6270
    %6657 = vmatprep.subr.bf16.mxu0 %v6279
    %6658 = vmatpush1.bf16.msra.mxu0 %v6278
    %6659 = vmatprep.subr.bf16.mxu0 %v6287
    %6660 = vmatpush1.bf16.msra.mxu0 %v6286
    %6661 = vmatprep.subr.bf16.mxu0 %v6295
    %6662 = vmatpush1.bf16.msra.mxu0 %v6294
    %6663 = vmatprep.subr.bf16.mxu0 %v6303
    %6664 = vmatpush1.bf16.msra.mxu0 %v6302
    %6665 = vmatprep.subr.bf16.mxu0 %v6311
    %6666 = vmatpush1.bf16.msra.mxu0 %v6310
    %6667 = vmatprep.subr.bf16.mxu0 %v6319
    %6668 = vmatpush1.bf16.msra.mxu0 %v6318
    %6669 = vmatprep.subr.bf16.mxu0 %v6327
    %6670 = vmatpush1.bf16.msra.mxu0 %v6326
    %6671 = vmatprep.subr.bf16.mxu0 %v6335
    %6672 = vmatpush1.bf16.msra.mxu0 %v6334
    %6673 = vmatprep.subr.bf16.mxu0 %v6343
    %6674 = vmatpush1.bf16.msra.mxu0 %v6342
    %6675 = vmatprep.mubr.bf16.mxu0 %v6355
    %6676 = vmatmul.mubr.bf16.gmra.mrb[0].mxu0 %v6354
    %v6677 = vpop.f32.mrb[0].mxu0
    %v6678 = vadd.f32 %v6637, %v6677
    %v6679 = vpop.f32.mrb[0].mxu0
    %v6680 = vadd.f32 %v6639, %v6679
    %v6681 = vpop.f32.mrb[0].mxu0
    %v6682 = vpop.f32.mrb[0].mxu0
    %6683 = vdwg.mxu0
    %6684 = vmatprep.subr.bf16.mxu0 %v5841
    %6685 = vmatpush1.bf16.msra.mxu0 %v5840
    %6686 = vmatprep.subr.bf16.mxu0 %v5849
    %6687 = vmatpush1.bf16.msra.mxu0 %v5848
    %6688 = vmatprep.subr.bf16.mxu0 %v5857
    %6689 = vmatpush1.bf16.msra.mxu0 %v5856
    %6690 = vmatprep.subr.bf16.mxu0 %v5865
    %6691 = vmatpush1.bf16.msra.mxu0 %v5864
    %6692 = vmatprep.subr.bf16.mxu0 %v5873
    %6693 = vmatpush1.bf16.msra.mxu0 %v5872
    %6694 = vmatprep.subr.bf16.mxu0 %v5881
    %6695 = vmatpush1.bf16.msra.mxu0 %v5880
    %6696 = vmatprep.subr.bf16.mxu0 %v5889
    %6697 = vmatpush1.bf16.msra.mxu0 %v5888
    %6698 = vmatprep.subr.bf16.mxu0 %v5897
    %6699 = vmatpush1.bf16.msra.mxu0 %v5896
    %6700 = vmatprep.subr.bf16.mxu0 %v5905
    %6701 = vmatpush1.bf16.msra.mxu0 %v5904
    %6702 = vmatprep.subr.bf16.mxu0 %v5913
    %6703 = vmatpush1.bf16.msra.mxu0 %v5912
    %6704 = vmatprep.subr.bf16.mxu0 %v5921
    %6705 = vmatpush1.bf16.msra.mxu0 %v5920
    %6706 = vmatprep.subr.bf16.mxu0 %v5929
    %6707 = vmatpush1.bf16.msra.mxu0 %v5928
    %6708 = vmatprep.subr.bf16.mxu0 %v5937
    %6709 = vmatpush1.bf16.msra.mxu0 %v5936
    %6710 = vmatprep.subr.bf16.mxu0 %v5945
    %6711 = vmatpush1.bf16.msra.mxu0 %v5944
    %6712 = vmatprep.subr.bf16.mxu0 %v5953
    %6713 = vmatpush1.bf16.msra.mxu0 %v5952
    %6714 = vmatprep.subr.bf16.mxu0 %v5961
    %6715 = vmatpush1.bf16.msra.mxu0 %v5960
    %6716 = vmatprep.mubr.bf16.mxu0 %v6349
    %6717 = vmatmul.mubr.bf16.gmra.mrb[0].mxu0 %v6348
    %v6718 = vpop.f32.mrb[0].mxu0
    %v6719 = vadd.f32 0.0, %v6718
    %v6720 = vpop.f32.mrb[0].mxu0
    %v6721 = vadd.f32 0.0, %v6720
    %v6722 = vpop.f32.mrb[0].mxu0
    %v6723 = vpop.f32.mrb[0].mxu0
    %6724 = vdwg.mxu0
    %6725 = vmatprep.subr.bf16.mxu0 %v5969
    %6726 = vmatpush1.bf16.msra.mxu0 %v5968
    %6727 = vmatprep.subr.bf16.mxu0 %v5977
    %6728 = vmatpush1.bf16.msra.mxu0 %v5976
    %6729 = vmatprep.subr.bf16.mxu0 %v5985
    %6730 = vmatpush1.bf16.msra.mxu0 %v5984
    %6731 = vmatprep.subr.bf16.mxu0 %v5993
    %6732 = vmatpush1.bf16.msra.mxu0 %v5992
    %6733 = vmatprep.subr.bf16.mxu0 %v6001
    %6734 = vmatpush1.bf16.msra.mxu0 %v6000
    %6735 = vmatprep.subr.bf16.mxu0 %v6009
    %6736 = vmatpush1.bf16.msra.mxu0 %v6008
    %6737 = vmatprep.subr.bf16.mxu0 %v6017
    %6738 = vmatpush1.bf16.msra.mxu0 %v6016
    %6739 = vmatprep.subr.bf16.mxu0 %v6025
    %6740 = vmatpush1.bf16.msra.mxu0 %v6024
    %6741 = vmatprep.subr.bf16.mxu0 %v6033
    %6742 = vmatpush1.bf16.msra.mxu0 %v6032
    %6743 = vmatprep.subr.bf16.mxu0 %v6041
    %6744 = vmatpush1.bf16.msra.mxu0 %v6040
    %6745 = vmatprep.subr.bf16.mxu0 %v6049
    %6746 = vmatpush1.bf16.msra.mxu0 %v6048
    %6747 = vmatprep.subr.bf16.mxu0 %v6057
    %6748 = vmatpush1.bf16.msra.mxu0 %v6056
    %6749 = vmatprep.subr.bf16.mxu0 %v6065
    %6750 = vmatpush1.bf16.msra.mxu0 %v6064
    %6751 = vmatprep.subr.bf16.mxu0 %v6073
    %6752 = vmatpush1.bf16.msra.mxu0 %v6072
    %6753 = vmatprep.subr.bf16.mxu0 %v6081
    %6754 = vmatpush1.bf16.msra.mxu0 %v6080
    %6755 = vmatprep.subr.bf16.mxu0 %v6089
    %6756 = vmatpush1.bf16.msra.mxu0 %v6088
    %6757 = vmatprep.mubr.bf16.mxu0 %v6351
    %6758 = vmatmul.mubr.bf16.gmra.mrb[0].mxu0 %v6350
    %v6759 = vpop.f32.mrb[0].mxu0
    %v6760 = vadd.f32 %v6719, %v6759
    %v6761 = vpop.f32.mrb[0].mxu0
    %v6762 = vadd.f32 %v6721, %v6761
    %v6763 = vpop.f32.mrb[0].mxu0
    %v6764 = vpop.f32.mrb[0].mxu0
    %6765 = vdwg.mxu0
    %6766 = vmatprep.subr.bf16.mxu0 %v6097
    %6767 = vmatpush1.bf16.msra.mxu0 %v6096
    %6768 = vmatprep.subr.bf16.mxu0 %v6105
    %6769 = vmatpush1.bf16.msra.mxu0 %v6104
    %6770 = vmatprep.subr.bf16.mxu0 %v6113
    %6771 = vmatpush1.bf16.msra.mxu0 %v6112
    %6772 = vmatprep.subr.bf16.mxu0 %v6121
    %6773 = vmatpush1.bf16.msra.mxu0 %v6120
    %6774 = vmatprep.subr.bf16.mxu0 %v6129
    %6775 = vmatpush1.bf16.msra.mxu0 %v6128
    %6776 = vmatprep.subr.bf16.mxu0 %v6137
    %6777 = vmatpush1.bf16.msra.mxu0 %v6136
    %6778 = vmatprep.subr.bf16.mxu0 %v6145
    %6779 = vmatpush1.bf16.msra.mxu0 %v6144
    %6780 = vmatprep.subr.bf16.mxu0 %v6153
    %6781 = vmatpush1.bf16.msra.mxu0 %v6152
    %6782 = vmatprep.subr.bf16.mxu0 %v6161
    %6783 = vmatpush1.bf16.msra.mxu0 %v6160
    %6784 = vmatprep.subr.bf16.mxu0 %v6169
    %6785 = vmatpush1.bf16.msra.mxu0 %v6168
    %6786 = vmatprep.subr.bf16.mxu0 %v6177
    %6787 = vmatpush1.bf16.msra.mxu0 %v6176
    %6788 = vmatprep.subr.bf16.mxu0 %v6185
    %6789 = vmatpush1.bf16.msra.mxu0 %v6184
    %6790 = vmatprep.subr.bf16.mxu0 %v6193
    %6791 = vmatpush1.bf16.msra.mxu0 %v6192
    %6792 = vmatprep.subr.bf16.mxu0 %v6201
    %6793 = vmatpush1.bf16.msra.mxu0 %v6200
    %6794 = vmatprep.subr.bf16.mxu0 %v6209
    %6795 = vmatpush1.bf16.msra.mxu0 %v6208
    %6796 = vmatprep.subr.bf16.mxu0 %v6217
    %6797 = vmatpush1.bf16.msra.mxu0 %v6216
    %6798 = vmatprep.mubr.bf16.mxu0 %v6353
    %6799 = vmatmul.mubr.bf16.gmra.mrb[0].mxu0 %v6352
    %v6800 = vpop.f32.mrb[0].mxu0
    %v6801 = vadd.f32 %v6760, %v6800
    %v6802 = vpop.f32.mrb[0].mxu0
    %v6803 = vadd.f32 %v6762, %v6802
    %v6804 = vpop.f32.mrb[0].mxu0
    %v6805 = vpop.f32.mrb[0].mxu0
    %6806 = vdwg.mxu0
    %6807 = vmatprep.subr.bf16.mxu0 %v6225
    %6808 = vmatpush1.bf16.msra.mxu0 %v6224
    %6809 = vmatprep.subr.bf16.mxu0 %v6233
    %6810 = vmatpush1.bf16.msra.mxu0 %v6232
    %6811 = vmatprep.subr.bf16.mxu0 %v6241
    %6812 = vmatpush1.bf16.msra.mxu0 %v6240
    %6813 = vmatprep.subr.bf16.mxu0 %v6249
    %6814 = vmatpush1.bf16.msra.mxu0 %v6248
    %6815 = vmatprep.subr.bf16.mxu0 %v6257
    %6816 = vmatpush1.bf16.msra.mxu0 %v6256
    %6817 = vmatprep.subr.bf16.mxu0 %v6265
    %6818 = vmatpush1.bf16.msra.mxu0 %v6264
    %6819 = vmatprep.subr.bf16.mxu0 %v6273
    %6820 = vmatpush1.bf16.msra.mxu0 %v6272
    %6821 = vmatprep.subr.bf16.mxu0 %v6281
    %6822 = vmatpush1.bf16.msra.mxu0 %v6280
    %6823 = vmatprep.subr.bf16.mxu0 %v6289
    %6824 = vmatpush1.bf16.msra.mxu0 %v6288
    %6825 = vmatprep.subr.bf16.mxu0 %v6297
    %6826 = vmatpush1.bf16.msra.mxu0 %v6296
    %6827 = vmatprep.subr.bf16.mxu0 %v6305
    %6828 = vmatpush1.bf16.msra.mxu0 %v6304
    %6829 = vmatprep.subr.bf16.mxu0 %v6313
    %6830 = vmatpush1.bf16.msra.mxu0 %v6312
    %6831 = vmatprep.subr.bf16.mxu0 %v6321
    %6832 = vmatpush1.bf16.msra.mxu0 %v6320
    %6833 = vmatprep.subr.bf16.mxu0 %v6329
    %6834 = vmatpush1.bf16.msra.mxu0 %v6328
    %6835 = vmatprep.subr.bf16.mxu0 %v6337
    %6836 = vmatpush1.bf16.msra.mxu0 %v6336
    %6837 = vmatprep.subr.bf16.mxu0 %v6345
    %6838 = vmatpush1.bf16.msra.mxu0 %v6344
    %6839 = vmatprep.mubr.bf16.mxu0 %v6355
    %6840 = vmatmul.mubr.bf16.gmra.mrb[0].mxu0 %v6354
    %v6841 = vpop.f32.mrb[0].mxu0
    %v6842 = vadd.f32 %v6801, %v6841
    %v6843 = vpop.f32.mrb[0].mxu0
    %v6844 = vadd.f32 %v6803, %v6843
    %v6845 = vpop.f32.mrb[0].mxu0
    %v6846 = vpop.f32.mrb[0].mxu0
    %6847 = vdwg.mxu0
    %6848 = vmatprep.subr.bf16.mxu0 %v5843
    %6849 = vmatpush1.bf16.msra.mxu0 %v5842
    %6850 = vmatprep.subr.bf16.mxu0 %v5851
    %6851 = vmatpush1.bf16.msra.mxu0 %v5850
    %6852 = vmatprep.subr.bf16.mxu0 %v5859
    %6853 = vmatpush1.bf16.msra.mxu0 %v5858
    %6854 = vmatprep.subr.bf16.mxu0 %v5867
    %6855 = vmatpush1.bf16.msra.mxu0 %v5866
    %6856 = vmatprep.subr.bf16.mxu0 %v5875
    %6857 = vmatpush1.bf16.msra.mxu0 %v5874
    %6858 = vmatprep.subr.bf16.mxu0 %v5883
    %6859 = vmatpush1.bf16.msra.mxu0 %v5882
    %6860 = vmatprep.subr.bf16.mxu0 %v5891
    %6861 = vmatpush1.bf16.msra.mxu0 %v5890
    %6862 = vmatprep.subr.bf16.mxu0 %v5899
    %6863 = vmatpush1.bf16.msra.mxu0 %v5898
    %6864 = vmatprep.subr.bf16.mxu0 %v5907
    %6865 = vmatpush1.bf16.msra.mxu0 %v5906
    %6866 = vmatprep.subr.bf16.mxu0 %v5915
    %6867 = vmatpush1.bf16.msra.mxu0 %v5914
    %6868 = vmatprep.subr.bf16.mxu0 %v5923
    %6869 = vmatpush1.bf16.msra.mxu0 %v5922
    %6870 = vmatprep.subr.bf16.mxu0 %v5931
    %6871 = vmatpush1.bf16.msra.mxu0 %v5930
    %6872 = vmatprep.subr.bf16.mxu0 %v5939
    %6873 = vmatpush1.bf16.msra.mxu0 %v5938
    %6874 = vmatprep.subr.bf16.mxu0 %v5947
    %6875 = vmatpush1.bf16.msra.mxu0 %v5946
    %6876 = vmatprep.subr.bf16.mxu0 %v5955
    %6877 = vmatpush1.bf16.msra.mxu0 %v5954
    %6878 = vmatprep.subr.bf16.mxu0 %v5963
    %6879 = vmatpush1.bf16.msra.mxu0 %v5962
    %6880 = vmatprep.mubr.bf16.mxu0 %v6349
    %6881 = vmatmul.mubr.bf16.gmra.mrb[0].mxu0 %v6348
    %v6882 = vpop.f32.mrb[0].mxu0
    %v6883 = vadd.f32 0.0, %v6882
    %v6884 = vpop.f32.mrb[0].mxu0
    %v6885 = vadd.f32 0.0, %v6884
    %v6886 = vpop.f32.mrb[0].mxu0
    %v6887 = vpop.f32.mrb[0].mxu0
    %6888 = vdwg.mxu0
    %6889 = vmatprep.subr.bf16.mxu0 %v5971
    %6890 = vmatpush1.bf16.msra.mxu0 %v5970
    %6891 = vmatprep.subr.bf16.mxu0 %v5979
    %6892 = vmatpush1.bf16.msra.mxu0 %v5978
    %6893 = vmatprep.subr.bf16.mxu0 %v5987
    %6894 = vmatpush1.bf16.msra.mxu0 %v5986
    %6895 = vmatprep.subr.bf16.mxu0 %v5995
    %6896 = vmatpush1.bf16.msra.mxu0 %v5994
    %6897 = vmatprep.subr.bf16.mxu0 %v6003
    %6898 = vmatpush1.bf16.msra.mxu0 %v6002
    %6899 = vmatprep.subr.bf16.mxu0 %v6011
    %6900 = vmatpush1.bf16.msra.mxu0 %v6010
    %6901 = vmatprep.subr.bf16.mxu0 %v6019
    %6902 = vmatpush1.bf16.msra.mxu0 %v6018
    %6903 = vmatprep.subr.bf16.mxu0 %v6027
    %6904 = vmatpush1.bf16.msra.mxu0 %v6026
    %6905 = vmatprep.subr.bf16.mxu0 %v6035
    %6906 = vmatpush1.bf16.msra.mxu0 %v6034
    %6907 = vmatprep.subr.bf16.mxu0 %v6043
    %6908 = vmatpush1.bf16.msra.mxu0 %v6042
    %6909 = vmatprep.subr.bf16.mxu0 %v6051
    %6910 = vmatpush1.bf16.msra.mxu0 %v6050
    %6911 = vmatprep.subr.bf16.mxu0 %v6059
    %6912 = vmatpush1.bf16.msra.mxu0 %v6058
    %6913 = vmatprep.subr.bf16.mxu0 %v6067
    %6914 = vmatpush1.bf16.msra.mxu0 %v6066
    %6915 = vmatprep.subr.bf16.mxu0 %v6075
    %6916 = vmatpush1.bf16.msra.mxu0 %v6074
    %6917 = vmatprep.subr.bf16.mxu0 %v6083
    %6918 = vmatpush1.bf16.msra.mxu0 %v6082
    %6919 = vmatprep.subr.bf16.mxu0 %v6091
    %6920 = vmatpush1.bf16.msra.mxu0 %v6090
    %6921 = vmatprep.mubr.bf16.mxu0 %v6351
    %6922 = vmatmul.mubr.bf16.gmra.mrb[0].mxu0 %v6350
    %v6923 = vpop.f32.mrb[0].mxu0
    %v6924 = vadd.f32 %v6883, %v6923
    %v6925 = vpop.f32.mrb[0].mxu0
    %v6926 = vadd.f32 %v6885, %v6925
    %v6927 = vpop.f32.mrb[0].mxu0
    %v6928 = vpop.f32.mrb[0].mxu0
    %6929 = vdwg.mxu0
    %6930 = vmatprep.subr.bf16.mxu0 %v6099
    %6931 = vmatpush1.bf16.msra.mxu0 %v6098
    %6932 = vmatprep.subr.bf16.mxu0 %v6107
    %6933 = vmatpush1.bf16.msra.mxu0 %v6106
    %6934 = vmatprep.subr.bf16.mxu0 %v6115
    %6935 = vmatpush1.bf16.msra.mxu0 %v6114
    %6936 = vmatprep.subr.bf16.mxu0 %v6123
    %6937 = vmatpush1.bf16.msra.mxu0 %v6122
    %6938 = vmatprep.subr.bf16.mxu0 %v6131
    %6939 = vmatpush1.bf16.msra.mxu0 %v6130
    %6940 = vmatprep.subr.bf16.mxu0 %v6139
    %6941 = vmatpush1.bf16.msra.mxu0 %v6138
    %6942 = vmatprep.subr.bf16.mxu0 %v6147
    %6943 = vmatpush1.bf16.msra.mxu0 %v6146
    %6944 = vmatprep.subr.bf16.mxu0 %v6155
    %6945 = vmatpush1.bf16.msra.mxu0 %v6154
    %6946 = vmatprep.subr.bf16.mxu0 %v6163
    %6947 = vmatpush1.bf16.msra.mxu0 %v6162
    %6948 = vmatprep.subr.bf16.mxu0 %v6171
    %6949 = vmatpush1.bf16.msra.mxu0 %v6170
    %6950 = vmatprep.subr.bf16.mxu0 %v6179
    %6951 = vmatpush1.bf16.msra.mxu0 %v6178
    %6952 = vmatprep.subr.bf16.mxu0 %v6187
    %6953 = vmatpush1.bf16.msra.mxu0 %v6186
    %6954 = vmatprep.subr.bf16.mxu0 %v6195
    %6955 = vmatpush1.bf16.msra.mxu0 %v6194
    %6956 = vmatprep.subr.bf16.mxu0 %v6203
    %6957 = vmatpush1.bf16.msra.mxu0 %v6202
    %6958 = vmatprep.subr.bf16.mxu0 %v6211
    %6959 = vmatpush1.bf16.msra.mxu0 %v6210
    %6960 = vmatprep.subr.bf16.mxu0 %v6219
    %6961 = vmatpush1.bf16.msra.mxu0 %v6218
    %6962 = vmatprep.mubr.bf16.mxu0 %v6353
    %6963 = vmatmul.mubr.bf16.gmra.mrb[0].mxu0 %v6352
    %v6964 = vpop.f32.mrb[0].mxu0
    %v6965 = vadd.f32 %v6924, %v6964
    %v6966 = vpop.f32.mrb[0].mxu0
    %v6967 = vadd.f32 %v6926, %v6966
    %v6968 = vpop.f32.mrb[0].mxu0
    %v6969 = vpop.f32.mrb[0].mxu0
    %6970 = vdwg.mxu0
    %6971 = vmatprep.subr.bf16.mxu0 %v6227
    %6972 = vmatpush1.bf16.msra.mxu0 %v6226
    %6973 = vmatprep.subr.bf16.mxu0 %v6235
    %6974 = vmatpush1.bf16.msra.mxu0 %v6234
    %6975 = vmatprep.subr.bf16.mxu0 %v6243
    %6976 = vmatpush1.bf16.msra.mxu0 %v6242
    %6977 = vmatprep.subr.bf16.mxu0 %v6251
    %6978 = vmatpush1.bf16.msra.mxu0 %v6250
    %6979 = vmatprep.subr.bf16.mxu0 %v6259
    %6980 = vmatpush1.bf16.msra.mxu0 %v6258
    %6981 = vmatprep.subr.bf16.mxu0 %v6267
    %6982 = vmatpush1.bf16.msra.mxu0 %v6266
    %6983 = vmatprep.subr.bf16.mxu0 %v6275
    %6984 = vmatpush1.bf16.msra.mxu0 %v6274
    %6985 = vmatprep.subr.bf16.mxu0 %v6283
    %6986 = vmatpush1.bf16.msra.mxu0 %v6282
    %6987 = vmatprep.subr.bf16.mxu0 %v6291
    %6988 = vmatpush1.bf16.msra.mxu0 %v6290
    %6989 = vmatprep.subr.bf16.mxu0 %v6299
    %6990 = vmatpush1.bf16.msra.mxu0 %v6298
    %6991 = vmatprep.subr.bf16.mxu0 %v6307
    %6992 = vmatpush1.bf16.msra.mxu0 %v6306
    %6993 = vmatprep.subr.bf16.mxu0 %v6315
    %6994 = vmatpush1.bf16.msra.mxu0 %v6314
    %6995 = vmatprep.subr.bf16.mxu0 %v6323
    %6996 = vmatpush1.bf16.msra.mxu0 %v6322
    %6997 = vmatprep.subr.bf16.mxu0 %v6331
    %6998 = vmatpush1.bf16.msra.mxu0 %v6330
    %6999 = vmatprep.subr.bf16.mxu0 %v6339
    %7000 = vmatpush1.bf16.msra.mxu0 %v6338
    %7001 = vmatprep.subr.bf16.mxu0 %v6347
    %7002 = vmatpush1.bf16.msra.mxu0 %v6346
    %7003 = vmatprep.mubr.bf16.mxu0 %v6355
    %7004 = vmatmul.mubr.bf16.gmra.mrb[0].mxu0 %v6354
    %v7005 = vpop.f32.mrb[0].mxu0
    %v7006 = vadd.f32 %v6965, %v7005
    %v7007 = vpop.f32.mrb[0].mxu0
    %v7008 = vadd.f32 %v6967, %v7007
    %v7009 = vpop.f32.mrb[0].mxu0
    %v7010 = vpop.f32.mrb[0].mxu0
    %7011 = vdwg.mxu0
    %v7012 = vmax.f32 %v6514, %v6678
    %v7013 = vmax.f32 %v6516, %v6680
    %v7014 = vmax.f32 %v6842, %v7006
    %v7015 = vmax.f32 %v6844, %v7008
    %v7016 = vmax.f32 %v7012, %v7014
    %v7017 = vmax.f32 %v7013, %v7015
    %v7018 = vld [vmem:[#allocation16] sm:$0x3]
    %v7020 = vlaneseq
    %v7021 = vshrl.u32 %v7020, 7
    %v7022 = vsub.s32 0, %v7021
    %v7023 = vrot.slane %v7018, %v7022
    %v7024 = vlaneseq
    %v7025 = vshrl.u32 %v7024, 7
    %v7026 = vsub.s32 1, %v7025
    %v7027 = vrot.slane %v7018, %v7026
    %v7030 = vadd.f32 %v7016, %v7023
    %v7031 = vadd.f32 %v7017, %v7027
    %v7032 = vmax.f32 %v7030, 0.0
    %v7033 = vmax.f32 %v7031, 0.0
    %v7034 = vld [vmem:[#allocation18] sm:$0xf]
    %v7035 = vld [vmem:[#allocation18 + $0x4] sm:$0xf]
    %v7036 = vld [vmem:[#allocation18 + $0x8] sm:$0xf]
    %v7037 = vld [vmem:[#allocation18 + $0xc] sm:$0xf]
    %v7038 = vld [vmem:[#allocation18 + $0x10] sm:$0xf]
    %v7039 = vld [vmem:[#allocation18 + $0x14] sm:$0xf]
    %v7040 = vld [vmem:[#allocation18 + $0x18] sm:$0xf]
    %v7041 = vld [vmem:[#allocation18 + $0x1c] sm:$0xf]
    %v7042 = vld [vmem:[#allocation18 + $0x20] sm:$0xf]
    %v7043 = vld [vmem:[#allocation18 + $0x24] sm:$0xf]
    %v7044 = vld [vmem:[#allocation18 + $0x28] sm:$0xf]
    %v7045 = vld [vmem:[#allocation18 + $0x2c] sm:$0xf]
    %v7046 = vld [vmem:[#allocation18 + $0x30] sm:$0xf]
    %v7047 = vld [vmem:[#allocation18 + $0x34] sm:$0xf]
    %v7048 = vld [vmem:[#allocation18 + $0x38] sm:$0xf]
    %v7049 = vld [vmem:[#allocation18 + $0x3c] sm:$0xf]
    %v7050 = vld [vmem:[#allocation18 + $0x40] sm:$0xf]
    %v7051 = vld [vmem:[#allocation18 + $0x44] sm:$0xf]
    %v7052 = vld [vmem:[#allocation18 + $0x48] sm:$0xf]
    %v7053 = vld [vmem:[#allocation18 + $0x4c] sm:$0xf]
    %v7054 = vld [vmem:[#allocation18 + $0x50] sm:$0xf]
    %v7055 = vld [vmem:[#allocation18 + $0x54] sm:$0xf]
    %v7056 = vld [vmem:[#allocation18 + $0x58] sm:$0xf]
    %v7057 = vld [vmem:[#allocation18 + $0x5c] sm:$0xf]
    %v7058 = vld [vmem:[#allocation18 + $0x60] sm:$0xf]
    %v7059 = vld [vmem:[#allocation18 + $0x64] sm:$0xf]
    %v7060 = vld [vmem:[#allocation18 + $0x68] sm:$0xf]
    %v7061 = vld [vmem:[#allocation18 + $0x6c] sm:$0xf]
    %v7062 = vld [vmem:[#allocation18 + $0x70] sm:$0xf]
    %v7063 = vld [vmem:[#allocation18 + $0x74] sm:$0xf]
    %v7064 = vld [vmem:[#allocation18 + $0x78] sm:$0xf]
    %v7065 = vld [vmem:[#allocation18 + $0x7c] sm:$0xf]
    %v7066 = vpack.c.bf16 %v7032, %v7032
    %v7067 = vpack.c.bf16 %v7033, %v7033
    %v7068 = vld [vmem:[#allocation19] sm:$0x1]
    %v7070 = vlaneseq
    %v7071 = vshrl.u32 %v7070, 7
    %v7072 = vsub.s32 0, %v7071
    %v7073 = vrot.slane %v7068, %v7072
    %v7107 = vunpack.c.l.b16 %v7034
    %v7108 = vunpack.c.l.b16 %v7035
    %v7109 = vunpack.c.l.b16 %v7036
    %v7110 = vunpack.c.l.b16 %v7037
    %v7111 = vunpack.c.l.b16 %v7038
    %v7112 = vunpack.c.l.b16 %v7039
    %v7113 = vunpack.c.l.b16 %v7040
    %v7114 = vunpack.c.l.b16 %v7041
    %v7115 = vunpack.c.l.b16 %v7042
    %v7116 = vunpack.c.l.b16 %v7043
    %v7117 = vunpack.c.l.b16 %v7044
    %v7118 = vunpack.c.l.b16 %v7045
    %v7119 = vunpack.c.l.b16 %v7046
    %v7120 = vunpack.c.l.b16 %v7047
    %v7121 = vunpack.c.l.b16 %v7048
    %v7122 = vunpack.c.l.b16 %v7049
    %v7123 = vunpack.c.l.b16 %v7050
    %v7124 = vunpack.c.l.b16 %v7051
    %v7125 = vunpack.c.l.b16 %v7052
    %v7126 = vunpack.c.l.b16 %v7053
    %v7127 = vunpack.c.l.b16 %v7054
    %v7128 = vunpack.c.l.b16 %v7055
    %v7129 = vunpack.c.l.b16 %v7056
    %v7130 = vunpack.c.l.b16 %v7057
    %v7131 = vunpack.c.l.b16 %v7058
    %v7132 = vunpack.c.l.b16 %v7059
    %v7133 = vunpack.c.l.b16 %v7060
    %v7134 = vunpack.c.l.b16 %v7061
    %v7135 = vunpack.c.l.b16 %v7062
    %v7136 = vunpack.c.l.b16 %v7063
    %v7137 = vunpack.c.l.b16 %v7064
    %v7138 = vunpack.c.l.b16 %v7065
    %v7139 = vpack.c.b16 %v7108, %v7107
    %v7140 = vpack.c.b16 %v7110, %v7109
    %v7141 = vpack.c.b16 %v7112, %v7111
    %v7142 = vpack.c.b16 %v7114, %v7113
    %v7143 = vpack.c.b16 %v7116, %v7115
    %v7144 = vpack.c.b16 %v7118, %v7117
    %v7145 = vpack.c.b16 %v7120, %v7119
    %v7146 = vpack.c.b16 %v7122, %v7121
    %v7147 = vpack.c.b16 %v7124, %v7123
    %v7148 = vpack.c.b16 %v7126, %v7125
    %v7149 = vpack.c.b16 %v7128, %v7127
    %v7150 = vpack.c.b16 %v7130, %v7129
    %v7151 = vpack.c.b16 %v7132, %v7131
    %v7152 = vpack.c.b16 %v7134, %v7133
    %v7153 = vpack.c.b16 %v7136, %v7135
    %v7154 = vpack.c.b16 %v7138, %v7137
    %7171 = vmatprep.subr.bf16.mxu0 0
    %7172 = vmatpush1.bf16.msra.mxu0 %v7139
    %7173 = vmatprep.subr.bf16.mxu0 0
    %7174 = vmatpush1.bf16.msra.mxu0 %v7140
    %7175 = vmatprep.subr.bf16.mxu0 0
    %7176 = vmatpush1.bf16.msra.mxu0 %v7141
    %7177 = vmatprep.subr.bf16.mxu0 0
    %7178 = vmatpush1.bf16.msra.mxu0 %v7142
    %7179 = vmatprep.subr.bf16.mxu0 0
    %7180 = vmatpush1.bf16.msra.mxu0 %v7143
    %7181 = vmatprep.subr.bf16.mxu0 0
    %7182 = vmatpush1.bf16.msra.mxu0 %v7144
    %7183 = vmatprep.subr.bf16.mxu0 0
    %7184 = vmatpush1.bf16.msra.mxu0 %v7145
    %7185 = vmatprep.subr.bf16.mxu0 0
    %7186 = vmatpush1.bf16.msra.mxu0 %v7146
    %7187 = vmatprep.subr.bf16.mxu0 0
    %7188 = vmatpush1.bf16.msra.mxu0 %v7147
    %7189 = vmatprep.subr.bf16.mxu0 0
    %7190 = vmatpush1.bf16.msra.mxu0 %v7148
    %7191 = vmatprep.subr.bf16.mxu0 0
    %7192 = vmatpush1.bf16.msra.mxu0 %v7149
    %7193 = vmatprep.subr.bf16.mxu0 0
    %7194 = vmatpush1.bf16.msra.mxu0 %v7150
    %7195 = vmatprep.subr.bf16.mxu0 0
    %7196 = vmatpush1.bf16.msra.mxu0 %v7151
    %7197 = vmatprep.subr.bf16.mxu0 0
    %7198 = vmatpush1.bf16.msra.mxu0 %v7152
    %7199 = vmatprep.subr.bf16.mxu0 0
    %7200 = vmatpush1.bf16.msra.mxu0 %v7153
    %7201 = vmatprep.subr.bf16.mxu0 0
    %7202 = vmatpush1.bf16.msra.mxu0 %v7154
    %7203 = vmatprep.mubr.bf16.mxu0 %v7067
    %7204 = vmatmul.mubr.bf16.gmra.mrb[0].mxu0 %v7066
    %v7205 = vpop.f32.mrb[0].mxu0
    %v7206 = vadd.f32 %v7073, %v7205
    %v7207 = vpop.f32.mrb[0].mxu0
    %v7208 = vpop.f32.mrb[0].mxu0
    %v7209 = vpop.f32.mrb[0].mxu0
    %7210 = vdwg.mxu0
    %v7211 = vmax.f32 %v7206, 0.0
    %v7212 = vld [vmem:[#allocation21] sm:$0xf]
    %v7213 = vld [vmem:[#allocation21 + $0x4] sm:$0xf]
    %v7214 = vld [vmem:[#allocation21 + $0x8] sm:$0xf]
    %v7215 = vld [vmem:[#allocation21 + $0xc] sm:$0xf]
    %v7216 = vld [vmem:[#allocation21 + $0x10] sm:$0xf]
    %v7217 = vld [vmem:[#allocation21 + $0x14] sm:$0xf]
    %v7218 = vld [vmem:[#allocation21 + $0x18] sm:$0xf]
    %v7219 = vld [vmem:[#allocation21 + $0x1c] sm:$0xf]
    %v7220 = vld [vmem:[#allocation21 + $0x20] sm:$0xf]
    %v7221 = vld [vmem:[#allocation21 + $0x24] sm:$0xf]
    %v7222 = vld [vmem:[#allocation21 + $0x28] sm:$0xf]
    %v7223 = vld [vmem:[#allocation21 + $0x2c] sm:$0xf]
    %v7224 = vld [vmem:[#allocation21 + $0x30] sm:$0xf]
    %v7225 = vld [vmem:[#allocation21 + $0x34] sm:$0xf]
    %v7226 = vld [vmem:[#allocation21 + $0x38] sm:$0xf]
    %v7227 = vld [vmem:[#allocation21 + $0x3c] sm:$0xf]
    %v7228 = vpack.c.bf16 %v7211, %v7211
    %v7229 = vld [vmem:[#allocation22] sm:$0x1]
    %v7231 = vlaneseq
    %v7232 = vshrl.u32 %v7231, 7
    %v7233 = vsub.s32 0, %v7232
    %v7234 = vrot.slane %v7229, %v7233
    %v7252 = vunpack.c.l.b16 %v7212
    %v7253 = vunpack.c.l.b16 %v7213
    %v7254 = vunpack.c.l.b16 %v7214
    %v7255 = vunpack.c.l.b16 %v7215
    %v7256 = vunpack.c.l.b16 %v7216
    %v7257 = vunpack.c.l.b16 %v7217
    %v7258 = vunpack.c.l.b16 %v7218
    %v7259 = vunpack.c.l.b16 %v7219
    %v7260 = vunpack.c.l.b16 %v7220
    %v7261 = vunpack.c.l.b16 %v7221
    %v7262 = vunpack.c.l.b16 %v7222
    %v7263 = vunpack.c.l.b16 %v7223
    %v7264 = vunpack.c.l.b16 %v7224
    %v7265 = vunpack.c.l.b16 %v7225
    %v7266 = vunpack.c.l.b16 %v7226
    %v7267 = vunpack.c.l.b16 %v7227
    %v7268 = vpack.c.b16 %v7253, %v7252
    %v7269 = vpack.c.b16 %v7255, %v7254
    %v7270 = vpack.c.b16 %v7257, %v7256
    %v7271 = vpack.c.b16 %v7259, %v7258
    %v7272 = vpack.c.b16 %v7261, %v7260
    %v7273 = vpack.c.b16 %v7263, %v7262
    %v7274 = vpack.c.b16 %v7265, %v7264
    %v7275 = vpack.c.b16 %v7267, %v7266
    %7284 = vmatprep.subr.bf16.mxu0 0
    %7285 = vmatpush1.bf16.msra.mxu0 %v7268
    %7286 = vmatprep.subr.bf16.mxu0 0
    %7287 = vmatpush1.bf16.msra.mxu0 %v7269
    %7288 = vmatprep.subr.bf16.mxu0 0
    %7289 = vmatpush1.bf16.msra.mxu0 %v7270
    %7290 = vmatprep.subr.bf16.mxu0 0
    %7291 = vmatpush1.bf16.msra.mxu0 %v7271
    %7292 = vmatprep.subr.bf16.mxu0 0
    %7293 = vmatpush1.bf16.msra.mxu0 %v7272
    %7294 = vmatprep.subr.bf16.mxu0 0
    %7295 = vmatpush1.bf16.msra.mxu0 %v7273
    %7296 = vmatprep.subr.bf16.mxu0 0
    %7297 = vmatpush1.bf16.msra.mxu0 %v7274
    %7298 = vmatprep.subr.bf16.mxu0 0
    %7299 = vmatpush1.bf16.msra.mxu0 %v7275
    %7300 = vmatprep.subr.bf16.mxu0 0
    %7301 = vmatpush1.bf16.msra.mxu0 0
    %7302 = vmatprep.subr.bf16.mxu0 0
    %7303 = vmatpush1.bf16.msra.mxu0 0
    %7304 = vmatprep.subr.bf16.mxu0 0
    %7305 = vmatpush1.bf16.msra.mxu0 0
    %7306 = vmatprep.subr.bf16.mxu0 0
    %7307 = vmatpush1.bf16.msra.mxu0 0
    %7308 = vmatprep.subr.bf16.mxu0 0
    %7309 = vmatpush1.bf16.msra.mxu0 0
    %7310 = vmatprep.subr.bf16.mxu0 0
    %7311 = vmatpush1.bf16.msra.mxu0 0
    %7312 = vmatprep.subr.bf16.mxu0 0
    %7313 = vmatpush1.bf16.msra.mxu0 0
    %7314 = vmatprep.subr.bf16.mxu0 0
    %7315 = vmatpush1.bf16.msra.mxu0 0
    %7316 = vmatprep.mubr.bf16.mxu0 0
    %7317 = vmatmul.mubr.bf16.gmra.mrb[0].mxu0 %v7228
    %v7318 = vpop.f32.mrb[0].mxu0
    %v7319 = vadd.f32 %v7234, %v7318
    %v7320 = vpop.f32.mrb[0].mxu0
    %v7321 = vpop.f32.mrb[0].mxu0
    %v7322 = vpop.f32.mrb[0].mxu0
    %7323 = vdwg.mxu0
    %v7324 = vmax.f32 %v7319, 0.0
    %v7325 = vld [vmem:[#allocation24] sm:$0xf]
    %v7326 = vld [vmem:[#allocation24 + $0x4] sm:$0xf]
    %v7327 = vld [vmem:[#allocation24 + $0x8] sm:$0xf]
    %v7328 = vld [vmem:[#allocation24 + $0xc] sm:$0xf]
    %v7329 = vld [vmem:[#allocation24 + $0x10] sm:$0xf]
    %v7330 = vld [vmem:[#allocation24 + $0x14] sm:$0xf]
    %v7331 = vld [vmem:[#allocation24 + $0x18] sm:$0xf]
    %v7332 = vld [vmem:[#allocation24 + $0x1c] sm:$0xf]
    %v7333 = vld [vmem:[#allocation24 + $0x20] sm:$0xf]
    %v7334 = vld [vmem:[#allocation24 + $0x24] sm:$0xf]
    %v7335 = vld [vmem:[#allocation24 + $0x28] sm:$0xf]
    %v7336 = vld [vmem:[#allocation24 + $0x2c] sm:$0xf]
    %v7337 = vld [vmem:[#allocation24 + $0x30] sm:$0xf]
    %v7338 = vld [vmem:[#allocation24 + $0x34] sm:$0xf]
    %v7339 = vld [vmem:[#allocation24 + $0x38] sm:$0xf]
    %v7340 = vld [vmem:[#allocation24 + $0x3c] sm:$0xf]
    %v7341 = vpack.c.bf16 %v7324, %v7324
    %v7342 = vld [vmem:[#allocation25] sm:$0x1]
    %v7344 = vlaneseq
    %v7345 = vshrl.u32 %v7344, 7
    %v7346 = vsub.s32 0, %v7345
    %v7347 = vrot.slane %v7342, %v7346
    %v7365 = vunpack.c.l.b16 %v7325
    %v7366 = vunpack.c.l.b16 %v7326
    %v7367 = vunpack.c.l.b16 %v7327
    %v7368 = vunpack.c.l.b16 %v7328
    %v7369 = vunpack.c.l.b16 %v7329
    %v7370 = vunpack.c.l.b16 %v7330
    %v7371 = vunpack.c.l.b16 %v7331
    %v7372 = vunpack.c.l.b16 %v7332
    %v7373 = vunpack.c.l.b16 %v7333
    %v7374 = vunpack.c.l.b16 %v7334
    %v7375 = vunpack.c.l.b16 %v7335
    %v7376 = vunpack.c.l.b16 %v7336
    %v7377 = vunpack.c.l.b16 %v7337
    %v7378 = vunpack.c.l.b16 %v7338
    %v7379 = vunpack.c.l.b16 %v7339
    %v7380 = vunpack.c.l.b16 %v7340
    %v7381 = vpack.c.b16 %v7366, %v7365
    %v7382 = vpack.c.b16 %v7368, %v7367
    %v7383 = vpack.c.b16 %v7370, %v7369
    %v7384 = vpack.c.b16 %v7372, %v7371
    %v7385 = vpack.c.b16 %v7374, %v7373
    %v7386 = vpack.c.b16 %v7376, %v7375
    %v7387 = vpack.c.b16 %v7378, %v7377
    %v7388 = vpack.c.b16 %v7380, %v7379
    %7397 = vmatprep.subr.bf16.mxu0 0
    %7398 = vmatpush1.bf16.msra.mxu0 %v7381
    %7399 = vmatprep.subr.bf16.mxu0 0
    %7400 = vmatpush1.bf16.msra.mxu0 %v7382
    %7401 = vmatprep.subr.bf16.mxu0 0
    %7402 = vmatpush1.bf16.msra.mxu0 %v7383
    %7403 = vmatprep.subr.bf16.mxu0 0
    %7404 = vmatpush1.bf16.msra.mxu0 %v7384
    %7405 = vmatprep.subr.bf16.mxu0 0
    %7406 = vmatpush1.bf16.msra.mxu0 %v7385
    %7407 = vmatprep.subr.bf16.mxu0 0
    %7408 = vmatpush1.bf16.msra.mxu0 %v7386
    %7409 = vmatprep.subr.bf16.mxu0 0
    %7410 = vmatpush1.bf16.msra.mxu0 %v7387
    %7411 = vmatprep.subr.bf16.mxu0 0
    %7412 = vmatpush1.bf16.msra.mxu0 %v7388
    %7413 = vmatprep.subr.bf16.mxu0 0
    %7414 = vmatpush1.bf16.msra.mxu0 0
    %7415 = vmatprep.subr.bf16.mxu0 0
    %7416 = vmatpush1.bf16.msra.mxu0 0
    %7417 = vmatprep.subr.bf16.mxu0 0
    %7418 = vmatpush1.bf16.msra.mxu0 0
    %7419 = vmatprep.subr.bf16.mxu0 0
    %7420 = vmatpush1.bf16.msra.mxu0 0
    %7421 = vmatprep.subr.bf16.mxu0 0
    %7422 = vmatpush1.bf16.msra.mxu0 0
    %7423 = vmatprep.subr.bf16.mxu0 0
    %7424 = vmatpush1.bf16.msra.mxu0 0
    %7425 = vmatprep.subr.bf16.mxu0 0
    %7426 = vmatpush1.bf16.msra.mxu0 0
    %7427 = vmatprep.subr.bf16.mxu0 0
    %7428 = vmatpush1.bf16.msra.mxu0 0
    %7429 = vmatprep.mubr.bf16.mxu0 0
    %7430 = vmatmul.mubr.bf16.gmra.mrb[0].mxu0 %v7341
    %v7431 = vpop.f32.mrb[0].mxu0
    %v7432 = vadd.f32 %v7347, %v7431
    %v7433 = vpop.f32.mrb[0].mxu0
    %v7434 = vpop.f32.mrb[0].mxu0
    %v7435 = vpop.f32.mrb[0].mxu0
    %7436 = vdwg.mxu0
    %7437 = vst [vmem:[#allocation27] sm:$0x3] %v7432
    // Predicated region
    $region102: #{alex_fmnist_forward.1} parent=1 // pred_check
      _
    $region103: #{alex_fmnist_forward.1} parent=1 // pred_check_branch
      %7439 = sbr.rel (0) target = $region105
    $region104: #{alex_fmnist_forward.1} parent=1 // pred_region
      %s7441 = ssub.s32 32, 32
      %7442 = vsyncadd [#allocation9], %s7441
      %s7444 = sshll.u32 [#allocation27], 4
      %s7445 = int_to_ptr.vmem [resolvable:$true] %s7444
      %7447 = dma.vmem_to_hbm [thread:$0]  %s7445, 32, %s17, [#allocation9]
    $region105: #{alex_fmnist_forward.1} parent=1 // pred_fallthru
      _
    // Predicated region
    $region106: #{alex_fmnist_forward.1} parent=1 // pred_check
      _
    $region107: #{alex_fmnist_forward.1} parent=1 // pred_check_branch
      %7449 = sbr.rel (0) target = $region109
    $region108: #{alex_fmnist_forward.1} parent=1 // pred_region
      %7450 = dma.done [#allocation9], 32
    $region109: #{alex_fmnist_forward.1} parent=1 // pred_fallthru
      _
    %7451 = vsyncpa [#allocation8], 1
    %7452 = vsyncpa [#allocation11], 1
    %7453 = vsyncpa [#allocation14], 1
    %7454 = vsyncpa [#allocation17], 1
    %7455 = vsyncpa [#allocation20], 1
    %7456 = vsyncpa [#allocation23], 1
    %7457 = vsyncpa [#allocation26], 1
    %7458 = vsyncpa [#allocation9], 1
  %7459 = vsyncmov [#allocation6]
  %s7460 = vpop.sfrf %7459
  %p7461 = scmp.eq.s32.totalorder %s7460, 0
  %p7462 = pneg %p7461
  %7464 = shalt.err (%p7462)
  %s7465 = scalar_lea.sflag [#allocation6], 1
  %7466 = vsyncmov %s7465
  %s7467 = vpop.sfrf %7466
  %p7468 = scmp.eq.s32.totalorder %s7467, 0
  %p7469 = pneg %p7468
  %7471 = shalt.err (%p7469)
  %s7472 = scalar_lea.sflag [#allocation6], 2
  %7473 = vsyncmov %s7472
  %s7474 = vpop.sfrf %7473
  %p7475 = scmp.eq.s32.totalorder %s7474, 0
  %p7476 = pneg %p7475
  %7478 = shalt.err (%p7476)
  %s7479 = scalar_lea.sflag [#allocation6], 3
  %7480 = vsyncmov %s7479
  %s7481 = vpop.sfrf %7480
  %p7482 = scmp.eq.s32.totalorder %s7481, 0
  %p7483 = pneg %p7482
  %7485 = shalt.err (%p7483)

</llo_original>
